<compile_context>
chip_gen: v6e
topology: v6e:2x2x1
jax: 0.10.0
libtpu: 0.0.40
codegen_flags: <defaults>
</compile_context>

<pallas_src>
import functools

import jax
import jax.numpy as jnp
from jax.experimental import pallas as pl
from jax.experimental.pallas import tpu as pltpu

LANE = 128
VMEM_LIMIT_BYTES = 32 * 1024 * 1024   # safe on v5e/v6e (128 MiB phys) and v7x (64 MiB phys)


def _round_up(x, m):
    return ((x + m - 1) // m) * m


def _pad_lane(n):
    return _round_up(n, LANE)


def _pick_tile(dim, cap):
    """Full-extent block if the dim is small (no padding copy), else pad to a cap multiple."""
    if dim <= cap:
        return dim, dim
    return cap, _round_up(dim, cap)


# --------------------------------------------------------------------------
# Fused matmul: act(a @ b + bias [+ residual]); ReLU optionally only on columns >= relu_start
# (used to fuse the no-ReLU projection and the ReLU'd c1 1x1-conv into one call).
# --------------------------------------------------------------------------

def _apply_relu(out, relu, relu_start, n_block):
    if not relu:
        return out
    if relu_start <= 0:
        return jnp.maximum(out, 0.0)
    # Column-masked ReLU: ReLU only on columns >= relu_start (static).
    col = (jax.lax.broadcasted_iota(jnp.int32, out.shape, out.ndim - 1)
           + pl.program_id(1) * n_block)
    return jnp.where(col >= relu_start, jnp.maximum(out, 0.0), out)


def _matmul_single_k_kernel(*refs, relu, relu_start, n_block, has_residual):
    # Fast path: whole K in one tile -> no scratch accumulator, no K loop machinery.
    if has_residual:
        a_ref, b_ref, bias_ref, res_ref, o_ref = refs
    else:
        a_ref, b_ref, bias_ref, o_ref = refs
        res_ref = None
    out = jnp.dot(a_ref[...], b_ref[...], preferred_element_type=jnp.float32)
    out = out + bias_ref[...].astype(jnp.float32)
    if res_ref is not None:
        out = out + res_ref[...].astype(jnp.float32)   # residual kept in f32 (no bf16 round-trip)
    out = _apply_relu(out, relu, relu_start, n_block)
    o_ref[...] = out.astype(o_ref.dtype)


def _matmul_kloop_kernel(*refs, relu, relu_start, n_block, has_residual):
    # General path: tiled K reduction with f32 VMEM scratch accumulator (P1 + P3).
    if has_residual:
        a_ref, b_ref, bias_ref, res_ref, o_ref, acc_ref = refs
    else:
        a_ref, b_ref, bias_ref, o_ref, acc_ref = refs
        res_ref = None

    k = pl.program_id(2)

    @pl.when(k == 0)
    def _():
        acc_ref[...] = jnp.zeros_like(acc_ref)

    acc_ref[...] += jnp.dot(a_ref[...], b_ref[...], preferred_element_type=jnp.float32)

    @pl.when(k == pl.num_programs(2) - 1)
    def _():
        out = acc_ref[...] + bias_ref[...].astype(jnp.float32)
        if res_ref is not None:
            out = out + res_ref[...].astype(jnp.float32)
        out = _apply_relu(out, relu, relu_start, n_block)
        o_ref[...] = out.astype(o_ref.dtype)


def fused_matmul(a, b, bias, residual=None, relu=False, relu_start=0,
                 out_dtype=jnp.bfloat16, tm_cap=256, tn_cap=256, tk_cap=512):
    """act(a @ b + bias [+ residual]) on the MXU.

    a: (M, K), b: (K, N) bf16 weights, bias: (1, N) f32, residual: (M, N) (kept in its own
    dtype, typically f32).  bf16 operands, f32 accumulation, fused f32 epilogue.  Zero
    padding of M/N/K is a numerical no-op (zero bias pad, monotone epilogue) and the padded
    columns/rows are sliced off before returning.
    """
    M, K = a.shape
    Kb, N = b.shape
    assert K == Kb
    tm, Mp = _pick_tile(M, tm_cap)
    tn, Np = _pick_tile(N, tn_cap)
    tk, Kp = _pick_tile(K, tk_cap)

    a = a.astype(jnp.bfloat16)
    b = b.astype(jnp.bfloat16)
    if (Mp, Kp) != (M, K):
        a = jnp.pad(a, ((0, Mp - M), (0, Kp - K)))
    if (Kp, Np) != (K, N):
        b = jnp.pad(b, ((0, Kp - K), (0, Np - N)))
    bias = bias.astype(jnp.float32)
    if Np != N:
        bias = jnp.pad(bias, ((0, 0), (0, Np - N)))

    has_residual = residual is not None
    if has_residual:
        r = residual
        if r.shape != (Mp, Np):
            r = jnp.pad(r, ((0, Mp - r.shape[0]), (0, Np - r.shape[1])))

    single_k = (Kp // tk) == 1

    if single_k:
        in_specs = [
            pl.BlockSpec((tm, Kp), lambda i, j: (i, 0)),
            pl.BlockSpec((Kp, tn), lambda i, j: (0, j)),
            pl.BlockSpec((1, tn), lambda i, j: (0, j)),
        ]
        args = [a, b, bias]
        if has_residual:
            in_specs.append(pl.BlockSpec((tm, tn), lambda i, j: (i, j)))
            args.append(r)
        out = pl.pallas_call(
            functools.partial(_matmul_single_k_kernel, relu=relu, relu_start=relu_start,
                              n_block=tn, has_residual=has_residual),
            out_shape=jax.ShapeDtypeStruct((Mp, Np), out_dtype),
            grid=(Mp // tm, Np // tn),
            in_specs=in_specs,
            out_specs=pl.BlockSpec((tm, tn), lambda i, j: (i, j)),
            compiler_params=pltpu.CompilerParams(
                dimension_semantics=("parallel", "parallel"),
                vmem_limit_bytes=VMEM_LIMIT_BYTES,
            ),
        )(*args)
    else:
        in_specs = [
            pl.BlockSpec((tm, tk), lambda i, j, k: (i, k)),
            pl.BlockSpec((tk, tn), lambda i, j, k: (k, j)),
            pl.BlockSpec((1, tn), lambda i, j, k: (0, j)),
        ]
        args = [a, b, bias]
        if has_residual:
            in_specs.append(pl.BlockSpec((tm, tn), lambda i, j, k: (i, j)))
            args.append(r)
        out = pl.pallas_call(
            functools.partial(_matmul_kloop_kernel, relu=relu, relu_start=relu_start,
                              n_block=tn, has_residual=has_residual),
            out_shape=jax.ShapeDtypeStruct((Mp, Np), out_dtype),
            grid=(Mp // tm, Np // tn, Kp // tk),          # reduction (K) axis last
            in_specs=in_specs,
            out_specs=pl.BlockSpec((tm, tn), lambda i, j, k: (i, j)),
            scratch_shapes=[pltpu.VMEM((tm, tn), jnp.float32)],
            compiler_params=pltpu.CompilerParams(
                dimension_semantics=("parallel", "parallel", "arbitrary"),
                vmem_limit_bytes=VMEM_LIMIT_BYTES,
            ),
        )(*args)

    if (Mp, Np) != (M, N):
        out = out[:M, :N]
    return out


# --------------------------------------------------------------------------
# Fused 3x3 conv: batch folded into MXU M, taps reduced inside the kernel (no HBM im2col),
# bias + ReLU fused, f32 VMEM scratch accumulator.
# --------------------------------------------------------------------------

def _conv_kernel(x_ref, w_ref, bias_ref, o_ref, acc_ref, *, Ho, Wo, stride, relu):
    # x_ref: (B, stride*stride, Hs, Ws, Cin) phase-decomposed padded slab (bf16)
    # w_ref: (kh, kw, Cin, Cout) bf16; acc_ref: (B*Ho*Wo, Cout) f32 scratch.
    kh, kw, cin, cout = w_ref.shape
    B = x_ref.shape[0]
    M = B * Ho * Wo
    acc_ref[...] = jnp.zeros_like(acc_ref)
    for di in range(kh):
        for dj in range(kw):
            phase = (di % stride) * stride + (dj % stride)
            patch = x_ref[:, phase,
                          pl.ds(di // stride, Ho),
                          pl.ds(dj // stride, Wo), :]          # (B, Ho, Wo, Cin), contiguous
            acc_ref[...] += jnp.dot(patch.reshape(M, cin), w_ref[di, dj],
                                    preferred_element_type=jnp.float32)
    out = acc_ref[...] + bias_ref[...].astype(jnp.float32)
    if relu:
        out = jnp.maximum(out, 0.0)
    o_ref[...] = out.reshape(B, Ho, Wo, cout).astype(o_ref.dtype)


def conv2d_3x3(x, w, bias, *, stride=1, relu=True):
    """'same'-padded (pad = kh//2) NHWC conv with fused bias + optional ReLU.

    The padded input is phase-decomposed by `stride` outside the kernel (single XLA
    reshuffle, exact no-op for stride 1); the kernel accumulates the kh*kw taps with
    contiguous VMEM slices only and folds the batch dim into the MXU M (B*Ho*Wo rows).
    """
    B, H, W, Cin = x.shape
    kh, kw, Cin_w, Cout = w.shape
    assert Cin == Cin_w
    pad = kh // 2
    Ho = (H + 2 * pad - kh) // stride + 1
    Wo = (W + 2 * pad - kw) // stride + 1
    Hp = _round_up(H + 2 * pad, stride)
    Wp = _round_up(W + 2 * pad, stride)
    xp = jnp.pad(x.astype(jnp.bfloat16),
                 ((0, 0), (pad, Hp - H - pad), (pad, Wp - W - pad), (0, 0)))
    Hs, Ws = Hp // stride, Wp // stride
    # (B, Hp, Wp, C) -> (B, stride*stride, Hs, Ws, C), phase-major.
    xp = (xp.reshape(B, Hs, stride, Ws, stride, Cin)
            .transpose(0, 2, 4, 1, 3, 5)
            .reshape(B, stride * stride, Hs, Ws, Cin))

    return pl.pallas_call(
        functools.partial(_conv_kernel, Ho=Ho, Wo=Wo, stride=stride, relu=relu),
        out_shape=jax.ShapeDtypeStruct((B, Ho, Wo, Cout), jnp.bfloat16),
        grid=(1,),
        in_specs=[
            pl.BlockSpec((B, stride * stride, Hs, Ws, Cin), lambda g: (0, 0, 0, 0, 0)),
            pl.BlockSpec((kh, kw, Cin, Cout), lambda g: (0, 0, 0, 0)),
            pl.BlockSpec((1, Cout), lambda g: (0, 0)),
        ],
        out_specs=pl.BlockSpec((B, Ho, Wo, Cout), lambda g: (0, 0, 0, 0)),
        scratch_shapes=[pltpu.VMEM((B * Ho * Wo, Cout), jnp.float32)],
        compiler_params=pltpu.CompilerParams(
            dimension_semantics=("arbitrary",),
            vmem_limit_bytes=VMEM_LIMIT_BYTES,
        ),
    )(xp, w.astype(jnp.bfloat16), bias.astype(jnp.float32))


# --------------------------------------------------------------------------
# Fused global-average-pool + FC: pool to a lane-dense (B, C) register value, then one
# small MXU matmul against fc_w -- no standalone M=2 matmul launch, no feat HBM round-trip.
# --------------------------------------------------------------------------

def _gap_fc_kernel(x_ref, w_ref, b_ref, o_ref, *, inv_hw):
    b, h, w, c = x_ref.shape
    x = x_ref[...].astype(jnp.float32).reshape(b, h * w, c)
    feat = (jnp.sum(x, axis=1) * inv_hw).astype(jnp.bfloat16)          # (B, C), lane-dense
    out = jnp.dot(feat, w_ref[...], preferred_element_type=jnp.float32)
    o_ref[...] = out + b_ref[...].astype(jnp.float32)


def gap_fc(x, fc_w, fc_b):
    """(B, H, W, C) NHWC -> mean over spatial dims -> @ fc_w + fc_b, (B, N) f32 output."""
    B, H, W, C = x.shape
    N = fc_w.shape[1]
    return pl.pallas_call(
        functools.partial(_gap_fc_kernel, inv_hw=1.0 / float(H * W)),
        out_shape=jax.ShapeDtypeStruct((B, N), jnp.float32),
        grid=(1,),
        in_specs=[
            pl.BlockSpec((B, H, W, C), lambda g: (0, 0, 0, 0)),
            pl.BlockSpec((C, N), lambda g: (0, 0)),
            pl.BlockSpec((1, N), lambda g: (0, 0)),
        ],
        out_specs=pl.BlockSpec((B, N), lambda g: (0, 0)),
        compiler_params=pltpu.CompilerParams(vmem_limit_bytes=VMEM_LIMIT_BYTES),
    )(x, fc_w.astype(jnp.bfloat16), fc_b.astype(jnp.float32))


# --------------------------------------------------------------------------
# Network glue (NHWC end to end, jit-ed).  5 pallas_calls per branch.
# --------------------------------------------------------------------------

def resnet_branch(x_nhwc, p, stride):
    """Representative ResNet50 branch: stem -> bottleneck (+proj residual) -> GAP+FC."""
    B = x_nhwc.shape[0]
    bc_pad = p['c3_w'].shape[0]     # padded bottleneck width (stem/c1/c2 output channels)
    exp_pad = p['c3_w'].shape[1]    # padded expansion width (proj/c3 output channels)

    h = conv2d_3x3(x_nhwc, p['stem_w'], p['stem_b'], stride=stride, relu=True)
    _, Ho, Wo, _ = h.shape
    h2 = h.reshape(B * Ho * Wo, bc_pad)                                # NHWC flatten, no transpose

    # Fused proj (identity, no ReLU) + c1 (ReLU) matmul: ReLU only on columns >= exp_pad.
    comb = fused_matmul(h2, p['projc1_w'], p['projc1_b'],
                        relu=True, relu_start=exp_pad, out_dtype=jnp.float32)
    identity = comb[:, :exp_pad]                                       # f32 residual
    y = comb[:, exp_pad:exp_pad + bc_pad]

    y = conv2d_3x3(y.reshape(B, Ho, Wo, bc_pad), p['c2_w'], p['c2_b'], stride=1, relu=True)
    z = fused_matmul(y.reshape(B * Ho * Wo, bc_pad), p['c3_w'], p['c3_b'],
                     residual=identity, relu=True)                     # 1x1 + fused add + ReLU
    return gap_fc(z.reshape(B, Ho, Wo, exp_pad), p['fc_w'], p['fc_b']) # (B, Ncls_pad) f32


def ts_net_forward(params, x_instrument, x_pupil, x_entire, *, stride=2, num_classes=9):
    def to_nhwc(x, cin_padded):
        x = jnp.transpose(x, (0, 2, 3, 1)).astype(jnp.bfloat16)        # one boundary transpose
        c = x.shape[-1]
        if c != cin_padded:
            x = jnp.pad(x, ((0, 0), (0, 0), (0, 0), (0, cin_padded - c)))
        return x

    outs = []
    for name, x in (("instrument", x_instrument), ("pupil", x_pupil), ("entire", x_entire)):
        p = params[name]
        xi = to_nhwc(x, p['stem_w'].shape[2])
        outs.append(resnet_branch(xi, p, stride)[:, :num_classes])
    return jnp.concatenate(outs, axis=1)                               # torch.cat(..., dim=1)


# --------------------------------------------------------------------------
# Parameters: generated in PyTorch layout, converted + channel-padded ONCE.
# --------------------------------------------------------------------------

def init_branch_params(key, in_channels, bc, num_classes):
    ks = jax.random.split(key, 6)
    exp = bc * 4

    def w(k, shape):
        return jax.random.normal(k, shape, jnp.float32) * 0.05

    z = lambda n: jnp.zeros((n,), jnp.float32)
    return {  # PyTorch layouts: conv (Cout, Cin, kh, kw), fc (Cin, num_classes)
        'stem_w': w(ks[0], (bc, in_channels, 3, 3)), 'stem_b': z(bc),
        'c1_w': w(ks[1], (bc, bc, 1, 1)),            'c1_b': z(bc),
        'c2_w': w(ks[2], (bc, bc, 3, 3)),            'c2_b': z(bc),
        'c3_w': w(ks[3], (exp, bc, 1, 1)),           'c3_b': z(exp),
        'proj_w': w(ks[4], (exp, bc, 1, 1)),         'proj_b': z(exp),
        'fc_w': w(ks[5], (exp, num_classes)),        'fc_b': z(num_classes),
    }


def prepare_branch_params(p):
    """One-time conversion to kernel layouts: 3x3 conv weights (kh,kw,Cin,Cout), 1x1 convs as
    (Cin,Cout) matrices, all channel dims zero-padded to multiples of 128, weights in bf16,
    biases as (1, Cout) f32.  proj and c1 are concatenated along N so one matmul serves both
    (ReLU applied only to the c1 columns inside the kernel).  Zero padding (zero weights and
    zero bias, monotone epilogue) leaves the real output columns numerically unchanged."""
    def conv_w(w):
        cout, cin, kh, kw = w.shape
        w = jnp.transpose(w, (2, 3, 1, 0))
        w = jnp.pad(w, ((0, 0), (0, 0),
                        (0, _pad_lane(cin) - cin), (0, _pad_lane(cout) - cout)))
        return w.astype(jnp.bfloat16)

    def mat_w(w):
        cout, cin = w.shape[:2]
        w = w.reshape(cout, cin).T
        w = jnp.pad(w, ((0, _pad_lane(cin) - cin), (0, _pad_lane(cout) - cout)))
        return w.astype(jnp.bfloat16)

    def fc_w(w):
        cin, n = w.shape
        w = jnp.pad(w, ((0, _pad_lane(cin) - cin), (0, _pad_lane(n) - n)))
        return w.astype(jnp.bfloat16)

    def bias(b):
        n = b.shape[0]
        return jnp.pad(b, (0, _pad_lane(n) - n)).reshape(1, -1).astype(jnp.float32)

    proj_w_m, c1_w_m = mat_w(p['proj_w']), mat_w(p['c1_w'])
    proj_b_m, c1_b_m = bias(p['proj_b']), bias(p['c1_b'])
    return {
        'stem_w': conv_w(p['stem_w']), 'stem_b': bias(p['stem_b']),
        'projc1_w': jnp.concatenate([proj_w_m, c1_w_m], axis=1),   # (bc_pad, exp_pad + bc_pad)
        'projc1_b': jnp.concatenate([proj_b_m, c1_b_m], axis=1),
        'c2_w': conv_w(p['c2_w']),     'c2_b': bias(p['c2_b']),
        'c3_w': mat_w(p['c3_w']),      'c3_b': bias(p['c3_b']),
        'fc_w': fc_w(p['fc_w']),       'fc_b': bias(p['fc_b']),
    }


if __name__ == "__main__":
    num_classes = 9
    stride = 2
    basic_channels = 8   # PyTorch default is 32; reduced for a small self-test

    # Channel counts exactly as derived in TS_Net.__init__
    c_inst = basic_channels * 16
    c_pupil = (basic_channels * 16 + basic_channels * 8) // 2
    c_entire = ((basic_channels * 16 + basic_channels * 8) // 4 + basic_channels * 8) // 2

    B, H, W = 2, 16, 16
    key = jax.random.PRNGKey(0)
    kx, kp = jax.random.split(key)
    kx1, kx2, kx3 = jax.random.split(kx, 3)
    kp1, kp2, kp3 = jax.random.split(kp, 3)

    x_instrument = jax.random.normal(kx1, (B, c_inst, H, W), jnp.float32)
    x_pupil = jax.random.normal(kx2, (B, c_pupil, H, W), jnp.float32)
    x_entire = jax.random.normal(kx3, (B, c_entire, H, W), jnp.float32)

    raw_params = {
        'instrument': init_branch_params(kp1, c_inst, basic_channels * 4, num_classes),
        'pupil':      init_branch_params(kp2, c_pupil, basic_channels * 4, num_classes),
        'entire':     init_branch_params(kp3, c_entire, basic_channels * 2, num_classes),
    }
    params = {k: prepare_branch_params(v) for k, v in raw_params.items()}

    fwd = jax.jit(functools.partial(ts_net_forward, stride=stride, num_classes=num_classes))
    out = fwd(params, x_instrument, x_pupil, x_entire)
    out = jax.block_until_ready(out)
    assert out.shape == (B, num_classes * 3), out.shape
    assert out.dtype == jnp.float32
    print("KERNEL_OK")
</pallas_src>

<mosaic_0001>
module attributes {stable_mosaic.version = 11 : i64} {
  func.func @_conv_kernel(%arg0: i32, %arg1: memref<2x4x9x9x128xbf16, #tpu.memory_space<vmem>>, %arg2: memref<3x3x128x128xbf16, #tpu.memory_space<vmem>>, %arg3: memref<1x128xf32, #tpu.memory_space<vmem>>, %arg4: memref<2x8x8x128xbf16, #tpu.memory_space<vmem>>, %arg5: memref<128x128xf32, #tpu.memory_space<vmem>>) attributes {dimension_semantics = [#tpu.dimension_semantics<arbitrary>], iteration_bounds = array<i64: 1>, scalar_prefetch = 0 : i64, scratch_operands = 1 : i64, tpu.core_type = #tpu.core_type<tc>, window_params = [{pipeline_mode = #tpu.pipeline_mode<synchronous>, transform_indices = @transform_0, window_bounds = array<i64: 2, 4, 9, 9, 128>}, {pipeline_mode = #tpu.pipeline_mode<synchronous>, transform_indices = @transform_1, window_bounds = array<i64: 3, 3, 128, 128>}, {pipeline_mode = #tpu.pipeline_mode<synchronous>, transform_indices = @transform_2, window_bounds = array<i64: 1, 128>}, {pipeline_mode = #tpu.pipeline_mode<synchronous>, transform_indices = @transform_3, window_bounds = array<i64: 2, 8, 8, 128>}]} {
    %cst = arith.constant 0.000000e+00 : f32
    %0 = vector.broadcast %cst : f32 to vector<128x128xf32>
    %c0 = arith.constant 0 : index
    %c0_0 = arith.constant 0 : index
    %1 = vector.load %arg5[%c0, %c0_0] : memref<128x128xf32, #tpu.memory_space<vmem>>, vector<128x128xf32>
    tpu.vector_store %arg5[%c0, %c0_0], %0 {strides = array<i32>} : memref<128x128xf32, #tpu.memory_space<vmem>>, vector<128x128xf32>,
    %c0_1 = arith.constant 0 : index
    %c0_2 = arith.constant 0 : index
    %c0_3 = arith.constant 0 : index
    %c0_4 = arith.constant 0 : index
    %c0_5 = arith.constant 0 : index
    %2 = vector.load %arg1[%c0_1, %c0_2, %c0_3, %c0_4, %c0_5] : memref<2x4x9x9x128xbf16, #tpu.memory_space<vmem>>, vector<2x1x8x8x128xbf16>
    %3 = vector.shape_cast %2 : vector<2x1x8x8x128xbf16> to vector<2x8x8x128xbf16>
    %c0_6 = arith.constant 0 : index
    %c0_7 = arith.constant 0 : index
    %4 = vector.load %arg5[%c0_6, %c0_7] : memref<128x128xf32, #tpu.memory_space<vmem>>, vector<128x128xf32>
    %5 = vector.shape_cast %3 : vector<2x8x8x128xbf16> to vector<128x128xbf16>
    %c0_8 = arith.constant 0 : index
    %c0_9 = arith.constant 0 : index
    %c0_10 = arith.constant 0 : index
    %c0_11 = arith.constant 0 : index
    %6 = vector.load %arg2[%c0_8, %c0_9, %c0_10, %c0_11] : memref<3x3x128x128xbf16, #tpu.memory_space<vmem>>, vector<1x1x128x128xbf16>
    %7 = vector.shape_cast %6 : vector<1x1x128x128xbf16> to vector<128x128xbf16>
    %cst_12 = arith.constant dense<0.000000e+00> : vector<128x128xf32>
    %8 = tpu.matmul %5, %7, %cst_12 {dimension_numbers = #tpu.dot_dimension_numbers<[1], [0], [0], [1], [0, 0, 1, 1], [], []>} : vector<128x128xbf16>, vector<128x128xbf16>, vector<128x128xf32> -> vector<128x128xf32>
    %9 = arith.addf %4, %8 : vector<128x128xf32>
    %c0_13 = arith.constant 0 : index
    %c0_14 = arith.constant 0 : index
    %10 = vector.load %arg5[%c0_13, %c0_14] : memref<128x128xf32, #tpu.memory_space<vmem>>, vector<128x128xf32>
    tpu.vector_store %arg5[%c0_13, %c0_14], %9 {strides = array<i32>} : memref<128x128xf32, #tpu.memory_space<vmem>>, vector<128x128xf32>,
    %c0_15 = arith.constant 0 : index
    %c1 = arith.constant 1 : index
    %c0_16 = arith.constant 0 : index
    %c0_17 = arith.constant 0 : index
    %c0_18 = arith.constant 0 : index
    %11 = vector.load %arg1[%c0_15, %c1, %c0_16, %c0_17, %c0_18] : memref<2x4x9x9x128xbf16, #tpu.memory_space<vmem>>, vector<2x1x8x8x128xbf16>
    %12 = vector.shape_cast %11 : vector<2x1x8x8x128xbf16> to vector<2x8x8x128xbf16>
    %c0_19 = arith.constant 0 : index
    %c0_20 = arith.constant 0 : index
    %13 = vector.load %arg5[%c0_19, %c0_20] : memref<128x128xf32, #tpu.memory_space<vmem>>, vector<128x128xf32>
    %14 = vector.shape_cast %12 : vector<2x8x8x128xbf16> to vector<128x128xbf16>
    %c0_21 = arith.constant 0 : index
    %c1_22 = arith.constant 1 : index
    %c0_23 = arith.constant 0 : index
    %c0_24 = arith.constant 0 : index
    %15 = vector.load %arg2[%c0_21, %c1_22, %c0_23, %c0_24] : memref<3x3x128x128xbf16, #tpu.memory_space<vmem>>, vector<1x1x128x128xbf16>
    %16 = vector.shape_cast %15 : vector<1x1x128x128xbf16> to vector<128x128xbf16>
    %cst_25 = arith.constant dense<0.000000e+00> : vector<128x128xf32>
    %17 = tpu.matmul %14, %16, %cst_25 {dimension_numbers = #tpu.dot_dimension_numbers<[1], [0], [0], [1], [0, 0, 1, 1], [], []>} : vector<128x128xbf16>, vector<128x128xbf16>, vector<128x128xf32> -> vector<128x128xf32>
    %18 = arith.addf %13, %17 : vector<128x128xf32>
    %c0_26 = arith.constant 0 : index
    %c0_27 = arith.constant 0 : index
    %19 = vector.load %arg5[%c0_26, %c0_27] : memref<128x128xf32, #tpu.memory_space<vmem>>, vector<128x128xf32>
    tpu.vector_store %arg5[%c0_26, %c0_27], %18 {strides = array<i32>} : memref<128x128xf32, #tpu.memory_space<vmem>>, vector<128x128xf32>,
    %c0_28 = arith.constant 0 : index
    %c0_29 = arith.constant 0 : index
    %c0_30 = arith.constant 0 : index
    %c1_31 = arith.constant 1 : index
    %c0_32 = arith.constant 0 : index
    %20 = vector.load %arg1[%c0_28, %c0_29, %c0_30, %c1_31, %c0_32] : memref<2x4x9x9x128xbf16, #tpu.memory_space<vmem>>, vector<2x1x8x8x128xbf16>
    %21 = vector.shape_cast %20 : vector<2x1x8x8x128xbf16> to vector<2x8x8x128xbf16>
    %c0_33 = arith.constant 0 : index
    %c0_34 = arith.constant 0 : index
    %22 = vector.load %arg5[%c0_33, %c0_34] : memref<128x128xf32, #tpu.memory_space<vmem>>, vector<128x128xf32>
    %23 = vector.shape_cast %21 : vector<2x8x8x128xbf16> to vector<128x128xbf16>
    %c0_35 = arith.constant 0 : index
    %c2 = arith.constant 2 : index
    %c0_36 = arith.constant 0 : index
    %c0_37 = arith.constant 0 : index
    %24 = vector.load %arg2[%c0_35, %c2, %c0_36, %c0_37] : memref<3x3x128x128xbf16, #tpu.memory_space<vmem>>, vector<1x1x128x128xbf16>
    %25 = vector.shape_cast %24 : vector<1x1x128x128xbf16> to vector<128x128xbf16>
    %cst_38 = arith.constant dense<0.000000e+00> : vector<128x128xf32>
    %26 = tpu.matmul %23, %25, %cst_38 {dimension_numbers = #tpu.dot_dimension_numbers<[1], [0], [0], [1], [0, 0, 1, 1], [], []>} : vector<128x128xbf16>, vector<128x128xbf16>, vector<128x128xf32> -> vector<128x128xf32>
    %27 = arith.addf %22, %26 : vector<128x128xf32>
    %c0_39 = arith.constant 0 : index
    %c0_40 = arith.constant 0 : index
    %28 = vector.load %arg5[%c0_39, %c0_40] : memref<128x128xf32, #tpu.memory_space<vmem>>, vector<128x128xf32>
    tpu.vector_store %arg5[%c0_39, %c0_40], %27 {strides = array<i32>} : memref<128x128xf32, #tpu.memory_space<vmem>>, vector<128x128xf32>,
    %c0_41 = arith.constant 0 : index
    %c2_42 = arith.constant 2 : index
    %c0_43 = arith.constant 0 : index
    %c0_44 = arith.constant 0 : index
    %c0_45 = arith.constant 0 : index
    %29 = vector.load %arg1[%c0_41, %c2_42, %c0_43, %c0_44, %c0_45] : memref<2x4x9x9x128xbf16, #tpu.memory_space<vmem>>, vector<2x1x8x8x128xbf16>
    %30 = vector.shape_cast %29 : vector<2x1x8x8x128xbf16> to vector<2x8x8x128xbf16>
    %c0_46 = arith.constant 0 : index
    %c0_47 = arith.constant 0 : index
    %31 = vector.load %arg5[%c0_46, %c0_47] : memref<128x128xf32, #tpu.memory_space<vmem>>, vector<128x128xf32>
    %32 = vector.shape_cast %30 : vector<2x8x8x128xbf16> to vector<128x128xbf16>
    %c1_48 = arith.constant 1 : index
    %c0_49 = arith.constant 0 : index
    %c0_50 = arith.constant 0 : index
    %c0_51 = arith.constant 0 : index
    %33 = vector.load %arg2[%c1_48, %c0_49, %c0_50, %c0_51] : memref<3x3x128x128xbf16, #tpu.memory_space<vmem>>, vector<1x1x128x128xbf16>
    %34 = vector.shape_cast %33 : vector<1x1x128x128xbf16> to vector<128x128xbf16>
    %cst_52 = arith.constant dense<0.000000e+00> : vector<128x128xf32>
    %35 = tpu.matmul %32, %34, %cst_52 {dimension_numbers = #tpu.dot_dimension_numbers<[1], [0], [0], [1], [0, 0, 1, 1], [], []>} : vector<128x128xbf16>, vector<128x128xbf16>, vector<128x128xf32> -> vector<128x128xf32>
    %36 = arith.addf %31, %35 : vector<128x128xf32>
    %c0_53 = arith.constant 0 : index
    %c0_54 = arith.constant 0 : index
    %37 = vector.load %arg5[%c0_53, %c0_54] : memref<128x128xf32, #tpu.memory_space<vmem>>, vector<128x128xf32>
    tpu.vector_store %arg5[%c0_53, %c0_54], %36 {strides = array<i32>} : memref<128x128xf32, #tpu.memory_space<vmem>>, vector<128x128xf32>,
    %c0_55 = arith.constant 0 : index
    %c3 = arith.constant 3 : index
    %c0_56 = arith.constant 0 : index
    %c0_57 = arith.constant 0 : index
    %c0_58 = arith.constant 0 : index
    %38 = vector.load %arg1[%c0_55, %c3, %c0_56, %c0_57, %c0_58] : memref<2x4x9x9x128xbf16, #tpu.memory_space<vmem>>, vector<2x1x8x8x128xbf16>
    %39 = vector.shape_cast %38 : vector<2x1x8x8x128xbf16> to vector<2x8x8x128xbf16>
    %c0_59 = arith.constant 0 : index
    %c0_60 = arith.constant 0 : index
    %40 = vector.load %arg5[%c0_59, %c0_60] : memref<128x128xf32, #tpu.memory_space<vmem>>, vector<128x128xf32>
    %41 = vector.shape_cast %39 : vector<2x8x8x128xbf16> to vector<128x128xbf16>
    %c1_61 = arith.constant 1 : index
    %c1_62 = arith.constant 1 : index
    %c0_63 = arith.constant 0 : index
    %c0_64 = arith.constant 0 : index
    %42 = vector.load %arg2[%c1_61, %c1_62, %c0_63, %c0_64] : memref<3x3x128x128xbf16, #tpu.memory_space<vmem>>, vector<1x1x128x128xbf16>
    %43 = vector.shape_cast %42 : vector<1x1x128x128xbf16> to vector<128x128xbf16>
    %cst_65 = arith.constant dense<0.000000e+00> : vector<128x128xf32>
    %44 = tpu.matmul %41, %43, %cst_65 {dimension_numbers = #tpu.dot_dimension_numbers<[1], [0], [0], [1], [0, 0, 1, 1], [], []>} : vector<128x128xbf16>, vector<128x128xbf16>, vector<128x128xf32> -> vector<128x128xf32>
    %45 = arith.addf %40, %44 : vector<128x128xf32>
    %c0_66 = arith.constant 0 : index
    %c0_67 = arith.constant 0 : index
    %46 = vector.load %arg5[%c0_66, %c0_67] : memref<128x128xf32, #tpu.memory_space<vmem>>, vector<128x128xf32>
    tpu.vector_store %arg5[%c0_66, %c0_67], %45 {strides = array<i32>} : memref<128x128xf32, #tpu.memory_space<vmem>>, vector<128x128xf32>,
    %c0_68 = arith.constant 0 : index
    %c2_69 = arith.constant 2 : index
    %c0_70 = arith.constant 0 : index
    %c1_71 = arith.constant 1 : index
    %c0_72 = arith.constant 0 : index
    %47 = vector.load %arg1[%c0_68, %c2_69, %c0_70, %c1_71, %c0_72] : memref<2x4x9x9x128xbf16, #tpu.memory_space<vmem>>, vector<2x1x8x8x128xbf16>
    %48 = vector.shape_cast %47 : vector<2x1x8x8x128xbf16> to vector<2x8x8x128xbf16>
    %c0_73 = arith.constant 0 : index
    %c0_74 = arith.constant 0 : index
    %49 = vector.load %arg5[%c0_73, %c0_74] : memref<128x128xf32, #tpu.memory_space<vmem>>, vector<128x128xf32>
    %50 = vector.shape_cast %48 : vector<2x8x8x128xbf16> to vector<128x128xbf16>
    %c1_75 = arith.constant 1 : index
    %c2_76 = arith.constant 2 : index
    %c0_77 = arith.constant 0 : index
    %c0_78 = arith.constant 0 : index
    %51 = vector.load %arg2[%c1_75, %c2_76, %c0_77, %c0_78] : memref<3x3x128x128xbf16, #tpu.memory_space<vmem>>, vector<1x1x128x128xbf16>
    %52 = vector.shape_cast %51 : vector<1x1x128x128xbf16> to vector<128x128xbf16>
    %cst_79 = arith.constant dense<0.000000e+00> : vector<128x128xf32>
    %53 = tpu.matmul %50, %52, %cst_79 {dimension_numbers = #tpu.dot_dimension_numbers<[1], [0], [0], [1], [0, 0, 1, 1], [], []>} : vector<128x128xbf16>, vector<128x128xbf16>, vector<128x128xf32> -> vector<128x128xf32>
    %54 = arith.addf %49, %53 : vector<128x128xf32>
    %c0_80 = arith.constant 0 : index
    %c0_81 = arith.constant 0 : index
    %55 = vector.load %arg5[%c0_80, %c0_81] : memref<128x128xf32, #tpu.memory_space<vmem>>, vector<128x128xf32>
    tpu.vector_store %arg5[%c0_80, %c0_81], %54 {strides = array<i32>} : memref<128x128xf32, #tpu.memory_space<vmem>>, vector<128x128xf32>,
    %c0_82 = arith.constant 0 : index
    %c0_83 = arith.constant 0 : index
    %c1_84 = arith.constant 1 : index
    %c0_85 = arith.constant 0 : index
    %c0_86 = arith.constant 0 : index
    %56 = vector.load %arg1[%c0_82, %c0_83, %c1_84, %c0_85, %c0_86] : memref<2x4x9x9x128xbf16, #tpu.memory_space<vmem>>, vector<2x1x8x8x128xbf16>
    %57 = vector.shape_cast %56 : vector<2x1x8x8x128xbf16> to vector<2x8x8x128xbf16>
    %c0_87 = arith.constant 0 : index
    %c0_88 = arith.constant 0 : index
    %58 = vector.load %arg5[%c0_87, %c0_88] : memref<128x128xf32, #tpu.memory_space<vmem>>, vector<128x128xf32>
    %59 = vector.shape_cast %57 : vector<2x8x8x128xbf16> to vector<128x128xbf16>
    %c2_89 = arith.constant 2 : index
    %c0_90 = arith.constant 0 : index
    %c0_91 = arith.constant 0 : index
    %c0_92 = arith.constant 0 : index
    %60 = vector.load %arg2[%c2_89, %c0_90, %c0_91, %c0_92] : memref<3x3x128x128xbf16, #tpu.memory_space<vmem>>, vector<1x1x128x128xbf16>
    %61 = vector.shape_cast %60 : vector<1x1x128x128xbf16> to vector<128x128xbf16>
    %cst_93 = arith.constant dense<0.000000e+00> : vector<128x128xf32>
    %62 = tpu.matmul %59, %61, %cst_93 {dimension_numbers = #tpu.dot_dimension_numbers<[1], [0], [0], [1], [0, 0, 1, 1], [], []>} : vector<128x128xbf16>, vector<128x128xbf16>, vector<128x128xf32> -> vector<128x128xf32>
    %63 = arith.addf %58, %62 : vector<128x128xf32>
    %c0_94 = arith.constant 0 : index
    %c0_95 = arith.constant 0 : index
    %64 = vector.load %arg5[%c0_94, %c0_95] : memref<128x128xf32, #tpu.memory_space<vmem>>, vector<128x128xf32>
    tpu.vector_store %arg5[%c0_94, %c0_95], %63 {strides = array<i32>} : memref<128x128xf32, #tpu.memory_space<vmem>>, vector<128x128xf32>,
    %c0_96 = arith.constant 0 : index
    %c1_97 = arith.constant 1 : index
    %c1_98 = arith.constant 1 : index
    %c0_99 = arith.constant 0 : index
    %c0_100 = arith.constant 0 : index
    %65 = vector.load %arg1[%c0_96, %c1_97, %c1_98, %c0_99, %c0_100] : memref<2x4x9x9x128xbf16, #tpu.memory_space<vmem>>, vector<2x1x8x8x128xbf16>
    %66 = vector.shape_cast %65 : vector<2x1x8x8x128xbf16> to vector<2x8x8x128xbf16>
    %c0_101 = arith.constant 0 : index
    %c0_102 = arith.constant 0 : index
    %67 = vector.load %arg5[%c0_101, %c0_102] : memref<128x128xf32, #tpu.memory_space<vmem>>, vector<128x128xf32>
    %68 = vector.shape_cast %66 : vector<2x8x8x128xbf16> to vector<128x128xbf16>
    %c2_103 = arith.constant 2 : index
    %c1_104 = arith.constant 1 : index
    %c0_105 = arith.constant 0 : index
    %c0_106 = arith.constant 0 : index
    %69 = vector.load %arg2[%c2_103, %c1_104, %c0_105, %c0_106] : memref<3x3x128x128xbf16, #tpu.memory_space<vmem>>, vector<1x1x128x128xbf16>
    %70 = vector.shape_cast %69 : vector<1x1x128x128xbf16> to vector<128x128xbf16>
    %cst_107 = arith.constant dense<0.000000e+00> : vector<128x128xf32>
    %71 = tpu.matmul %68, %70, %cst_107 {dimension_numbers = #tpu.dot_dimension_numbers<[1], [0], [0], [1], [0, 0, 1, 1], [], []>} : vector<128x128xbf16>, vector<128x128xbf16>, vector<128x128xf32> -> vector<128x128xf32>
    %72 = arith.addf %67, %71 : vector<128x128xf32>
    %c0_108 = arith.constant 0 : index
    %c0_109 = arith.constant 0 : index
    %73 = vector.load %arg5[%c0_108, %c0_109] : memref<128x128xf32, #tpu.memory_space<vmem>>, vector<128x128xf32>
    tpu.vector_store %arg5[%c0_108, %c0_109], %72 {strides = array<i32>} : memref<128x128xf32, #tpu.memory_space<vmem>>, vector<128x128xf32>,
    %c0_110 = arith.constant 0 : index
    %c0_111 = arith.constant 0 : index
    %c1_112 = arith.constant 1 : index
    %c1_113 = arith.constant 1 : index
    %c0_114 = arith.constant 0 : index
    %74 = vector.load %arg1[%c0_110, %c0_111, %c1_112, %c1_113, %c0_114] : memref<2x4x9x9x128xbf16, #tpu.memory_space<vmem>>, vector<2x1x8x8x128xbf16>
    %75 = vector.shape_cast %74 : vector<2x1x8x8x128xbf16> to vector<2x8x8x128xbf16>
    %c0_115 = arith.constant 0 : index
    %c0_116 = arith.constant 0 : index
    %76 = vector.load %arg5[%c0_115, %c0_116] : memref<128x128xf32, #tpu.memory_space<vmem>>, vector<128x128xf32>
    %77 = vector.shape_cast %75 : vector<2x8x8x128xbf16> to vector<128x128xbf16>
    %c2_117 = arith.constant 2 : index
    %c2_118 = arith.constant 2 : index
    %c0_119 = arith.constant 0 : index
    %c0_120 = arith.constant 0 : index
    %78 = vector.load %arg2[%c2_117, %c2_118, %c0_119, %c0_120] : memref<3x3x128x128xbf16, #tpu.memory_space<vmem>>, vector<1x1x128x128xbf16>
    %79 = vector.shape_cast %78 : vector<1x1x128x128xbf16> to vector<128x128xbf16>
    %cst_121 = arith.constant dense<0.000000e+00> : vector<128x128xf32>
    %80 = tpu.matmul %77, %79, %cst_121 {dimension_numbers = #tpu.dot_dimension_numbers<[1], [0], [0], [1], [0, 0, 1, 1], [], []>} : vector<128x128xbf16>, vector<128x128xbf16>, vector<128x128xf32> -> vector<128x128xf32>
    %81 = arith.addf %76, %80 : vector<128x128xf32>
    %c0_122 = arith.constant 0 : index
    %c0_123 = arith.constant 0 : index
    %82 = vector.load %arg5[%c0_122, %c0_123] : memref<128x128xf32, #tpu.memory_space<vmem>>, vector<128x128xf32>
    tpu.vector_store %arg5[%c0_122, %c0_123], %81 {strides = array<i32>} : memref<128x128xf32, #tpu.memory_space<vmem>>, vector<128x128xf32>,
    %c0_124 = arith.constant 0 : index
    %c0_125 = arith.constant 0 : index
    %83 = vector.load %arg5[%c0_124, %c0_125] : memref<128x128xf32, #tpu.memory_space<vmem>>, vector<128x128xf32>
    %c0_126 = arith.constant 0 : index
    %c0_127 = arith.constant 0 : index
    %84 = vector.load %arg3[%c0_126, %c0_127] : memref<1x128xf32, #tpu.memory_space<vmem>>, vector<1x128xf32>
    %85 = vector.broadcast %84 : vector<1x128xf32> to vector<128x128xf32>
    %86 = arith.addf %83, %85 : vector<128x128xf32>
    %cst_128 = arith.constant 0.000000e+00 : f32
    %87 = vector.broadcast %cst_128 : f32 to vector<128x128xf32>
    %88 = arith.maximumf %86, %87 : vector<128x128xf32>
    %89 = vector.shape_cast %88 : vector<128x128xf32> to vector<2x8x8x128xf32>
    %90 = arith.truncf %89 : vector<2x8x8x128xf32> to vector<2x8x8x128xbf16>
    %c0_129 = arith.constant 0 : index
    %c0_130 = arith.constant 0 : index
    %c0_131 = arith.constant 0 : index
    %c0_132 = arith.constant 0 : index
    %91 = vector.load %arg4[%c0_129, %c0_130, %c0_131, %c0_132] : memref<2x8x8x128xbf16, #tpu.memory_space<vmem>>, vector<2x8x8x128xbf16>
    tpu.vector_store %arg4[%c0_129, %c0_130, %c0_131, %c0_132], %90 {strides = array<i32>} : memref<2x8x8x128xbf16, #tpu.memory_space<vmem>>, vector<2x8x8x128xbf16>,
    return
  }
  func.func @transform_0(%arg0: i32) -> (i32, i32, i32, i32, i32) {
    %c0_i32 = arith.constant 0 : i32
    %c0_i32_0 = arith.constant 0 : i32
    %c0_i32_1 = arith.constant 0 : i32
    %c0_i32_2 = arith.constant 0 : i32
    %c0_i32_3 = arith.constant 0 : i32
    %c0_i32_4 = arith.constant 0 : i32
    return %c0_i32, %c0_i32_0, %c0_i32_1, %c0_i32_2, %c0_i32_3 : i32, i32, i32, i32, i32
  }
  func.func @transform_1(%arg0: i32) -> (i32, i32, i32, i32) {
    %c0_i32 = arith.constant 0 : i32
    %c0_i32_0 = arith.constant 0 : i32
    %c0_i32_1 = arith.constant 0 : i32
    %c0_i32_2 = arith.constant 0 : i32
    %c0_i32_3 = arith.constant 0 : i32
    return %c0_i32, %c0_i32_0, %c0_i32_1, %c0_i32_2 : i32, i32, i32, i32
  }
  func.func @transform_2(%arg0: i32) -> (i32, i32) {
    %c0_i32 = arith.constant 0 : i32
    %c0_i32_0 = arith.constant 0 : i32
    %c0_i32_1 = arith.constant 0 : i32
    return %c0_i32, %c0_i32_0 : i32, i32
  }
  func.func @transform_3(%arg0: i32) -> (i32, i32, i32, i32) {
    %c0_i32 = arith.constant 0 : i32
    %c0_i32_0 = arith.constant 0 : i32
    %c0_i32_1 = arith.constant 0 : i32
    %c0_i32_2 = arith.constant 0 : i32
    %c0_i32_3 = arith.constant 0 : i32
    return %c0_i32, %c0_i32_0, %c0_i32_1, %c0_i32_2 : i32, i32, i32, i32
  }
}

module attributes {stable_mosaic.version = 11 : i64} {
  func.func @_matmul_single_k_kernel(%arg0: i32, %arg1: i32, %arg2: memref<128x128xbf16, #tpu.memory_space<vmem>>, %arg3: memref<128x256xbf16, #tpu.memory_space<vmem>>, %arg4: memref<1x256xf32, #tpu.memory_space<vmem>>, %arg5: memref<128x256xf32, #tpu.memory_space<vmem>>) attributes {dimension_semantics = [#tpu.dimension_semantics<parallel>, #tpu.dimension_semantics<parallel>], iteration_bounds = array<i64: 1, 1>, scalar_prefetch = 0 : i64, scratch_operands = 0 : i64, tpu.core_type = #tpu.core_type<tc>, window_params = [{transform_indices = @transform_0, window_bounds = array<i64: 128, 128>}, {transform_indices = @transform_1, window_bounds = array<i64: 128, 256>}, {transform_indices = @transform_2, window_bounds = array<i64: 1, 256>}, {transform_indices = @transform_3, window_bounds = array<i64: 128, 256>}]} {
    %c0 = arith.constant 0 : index
    %c0_0 = arith.constant 0 : index
    %0 = vector.load %arg2[%c0, %c0_0] : memref<128x128xbf16, #tpu.memory_space<vmem>>, vector<128x128xbf16>
    %c0_1 = arith.constant 0 : index
    %c0_2 = arith.constant 0 : index
    %1 = vector.load %arg3[%c0_1, %c0_2] : memref<128x256xbf16, #tpu.memory_space<vmem>>, vector<128x256xbf16>
    %cst = arith.constant dense<0.000000e+00> : vector<128x256xf32>
    %2 = tpu.matmul %0, %1, %cst {dimension_numbers = #tpu.dot_dimension_numbers<[1], [0], [0], [1], [0, 0, 1, 1], [], []>} : vector<128x128xbf16>, vector<128x256xbf16>, vector<128x256xf32> -> vector<128x256xf32>
    %c0_3 = arith.constant 0 : index
    %c0_4 = arith.constant 0 : index
    %3 = vector.load %arg4[%c0_3, %c0_4] : memref<1x256xf32, #tpu.memory_space<vmem>>, vector<1x256xf32>
    %4 = vector.broadcast %3 : vector<1x256xf32> to vector<128x256xf32>
    %5 = arith.addf %2, %4 : vector<128x256xf32>
    %6 = tpu.iota {dimensions = array<i32: 1>} : vector<128x256xi32>
    %c256_i32 = arith.constant 256 : i32
    %7 = arith.muli %arg1, %c256_i32 : i32
    %8 = vector.broadcast %7 : i32 to vector<128x256xi32>
    %9 = arith.addi %6, %8 : vector<128x256xi32>
    %c128_i32 = arith.constant 128 : i32
    %10 = vector.broadcast %c128_i32 : i32 to vector<128x256xi32>
    %11 = arith.cmpi sge, %9, %10 : vector<128x256xi32>
    %cst_5 = arith.constant 0.000000e+00 : f32
    %12 = vector.broadcast %cst_5 : f32 to vector<128x256xf32>
    %13 = arith.maximumf %5, %12 : vector<128x256xf32>
    %14 = arith.select %11, %13, %5 : vector<128x256xi1>, vector<128x256xf32>
    %c0_6 = arith.constant 0 : index
    %c0_7 = arith.constant 0 : index
    %15 = vector.load %arg5[%c0_6, %c0_7] : memref<128x256xf32, #tpu.memory_space<vmem>>, vector<128x256xf32>
    tpu.vector_store %arg5[%c0_6, %c0_7], %14 {strides = array<i32>} : memref<128x256xf32, #tpu.memory_space<vmem>>, vector<128x256xf32>,
    return
  }
  func.func @transform_0(%arg0: i32, %arg1: i32) -> (i32, i32) {
    %c0_i32 = arith.constant 0 : i32
    %c0_i32_0 = arith.constant 0 : i32
    return %arg0, %c0_i32 : i32, i32
  }
  func.func @transform_1(%arg0: i32, %arg1: i32) -> (i32, i32) {
    %c0_i32 = arith.constant 0 : i32
    %c0_i32_0 = arith.constant 0 : i32
    return %c0_i32, %arg1 : i32, i32
  }
  func.func @transform_2(%arg0: i32, %arg1: i32) -> (i32, i32) {
    %c0_i32 = arith.constant 0 : i32
    %c0_i32_0 = arith.constant 0 : i32
    return %c0_i32, %arg1 : i32, i32
  }
  func.func @transform_3(%arg0: i32, %arg1: i32) -> (i32, i32) {
    %c0_i32 = arith.constant 0 : i32
    return %arg0, %arg1 : i32, i32
  }
}

module attributes {stable_mosaic.version = 11 : i64} {
  func.func @_matmul_single_k_kernel(%arg0: i32, %arg1: i32, %arg2: memref<128x128xbf16, #tpu.memory_space<vmem>>, %arg3: memref<128x128xbf16, #tpu.memory_space<vmem>>, %arg4: memref<1x128xf32, #tpu.memory_space<vmem>>, %arg5: memref<128x128xf32, #tpu.memory_space<vmem>>, %arg6: memref<128x128xbf16, #tpu.memory_space<vmem>>) attributes {dimension_semantics = [#tpu.dimension_semantics<parallel>, #tpu.dimension_semantics<parallel>], iteration_bounds = array<i64: 1, 1>, scalar_prefetch = 0 : i64, scratch_operands = 0 : i64, tpu.core_type = #tpu.core_type<tc>, window_params = [{transform_indices = @transform_0, window_bounds = array<i64: 128, 128>}, {transform_indices = @transform_1, window_bounds = array<i64: 128, 128>}, {transform_indices = @transform_2, window_bounds = array<i64: 1, 128>}, {transform_indices = @transform_3, window_bounds = array<i64: 128, 128>}, {transform_indices = @transform_4, window_bounds = array<i64: 128, 128>}]} {
    %c0 = arith.constant 0 : index
    %c0_0 = arith.constant 0 : index
    %0 = vector.load %arg2[%c0, %c0_0] : memref<128x128xbf16, #tpu.memory_space<vmem>>, vector<128x128xbf16>
    %c0_1 = arith.constant 0 : index
    %c0_2 = arith.constant 0 : index
    %1 = vector.load %arg3[%c0_1, %c0_2] : memref<128x128xbf16, #tpu.memory_space<vmem>>, vector<128x128xbf16>
    %cst = arith.constant dense<0.000000e+00> : vector<128x128xf32>
    %2 = tpu.matmul %0, %1, %cst {dimension_numbers = #tpu.dot_dimension_numbers<[1], [0], [0], [1], [0, 0, 1, 1], [], []>} : vector<128x128xbf16>, vector<128x128xbf16>, vector<128x128xf32> -> vector<128x128xf32>
    %c0_3 = arith.constant 0 : index
    %c0_4 = arith.constant 0 : index
    %3 = vector.load %arg4[%c0_3, %c0_4] : memref<1x128xf32, #tpu.memory_space<vmem>>, vector<1x128xf32>
    %4 = vector.broadcast %3 : vector<1x128xf32> to vector<128x128xf32>
    %5 = arith.addf %2, %4 : vector<128x128xf32>
    %c0_5 = arith.constant 0 : index
    %c0_6 = arith.constant 0 : index
    %6 = vector.load %arg5[%c0_5, %c0_6] : memref<128x128xf32, #tpu.memory_space<vmem>>, vector<128x128xf32>
    %7 = arith.addf %5, %6 : vector<128x128xf32>
    %cst_7 = arith.constant 0.000000e+00 : f32
    %8 = vector.broadcast %cst_7 : f32 to vector<128x128xf32>
    %9 = arith.maximumf %7, %8 : vector<128x128xf32>
    %10 = arith.truncf %9 : vector<128x128xf32> to vector<128x128xbf16>
    %c0_8 = arith.constant 0 : index
    %c0_9 = arith.constant 0 : index
    %11 = vector.load %arg6[%c0_8, %c0_9] : memref<128x128xbf16, #tpu.memory_space<vmem>>, vector<128x128xbf16>
    tpu.vector_store %arg6[%c0_8, %c0_9], %10 {strides = array<i32>} : memref<128x128xbf16, #tpu.memory_space<vmem>>, vector<128x128xbf16>,
    return
  }
  func.func @transform_0(%arg0: i32, %arg1: i32) -> (i32, i32) {
    %c0_i32 = arith.constant 0 : i32
    %c0_i32_0 = arith.constant 0 : i32
    return %arg0, %c0_i32 : i32, i32
  }
  func.func @transform_1(%arg0: i32, %arg1: i32) -> (i32, i32) {
    %c0_i32 = arith.constant 0 : i32
    %c0_i32_0 = arith.constant 0 : i32
    return %c0_i32, %arg1 : i32, i32
  }
  func.func @transform_2(%arg0: i32, %arg1: i32) -> (i32, i32) {
    %c0_i32 = arith.constant 0 : i32
    %c0_i32_0 = arith.constant 0 : i32
    return %c0_i32, %arg1 : i32, i32
  }
  func.func @transform_3(%arg0: i32, %arg1: i32) -> (i32, i32) {
    %c0_i32 = arith.constant 0 : i32
    return %arg0, %arg1 : i32, i32
  }
  func.func @transform_4(%arg0: i32, %arg1: i32) -> (i32, i32) {
    %c0_i32 = arith.constant 0 : i32
    return %arg0, %arg1 : i32, i32
  }
}

module attributes {stable_mosaic.version = 11 : i64} {
  func.func @_conv_kernel(%arg0: i32, %arg1: memref<2x1x10x10x128xbf16, #tpu.memory_space<vmem>>, %arg2: memref<3x3x128x128xbf16, #tpu.memory_space<vmem>>, %arg3: memref<1x128xf32, #tpu.memory_space<vmem>>, %arg4: memref<2x8x8x128xbf16, #tpu.memory_space<vmem>>, %arg5: memref<128x128xf32, #tpu.memory_space<vmem>>) attributes {dimension_semantics = [#tpu.dimension_semantics<arbitrary>], iteration_bounds = array<i64: 1>, scalar_prefetch = 0 : i64, scratch_operands = 1 : i64, tpu.core_type = #tpu.core_type<tc>, window_params = [{pipeline_mode = #tpu.pipeline_mode<synchronous>, transform_indices = @transform_0, window_bounds = array<i64: 2, 1, 10, 10, 128>}, {pipeline_mode = #tpu.pipeline_mode<synchronous>, transform_indices = @transform_1, window_bounds = array<i64: 3, 3, 128, 128>}, {pipeline_mode = #tpu.pipeline_mode<synchronous>, transform_indices = @transform_2, window_bounds = array<i64: 1, 128>}, {pipeline_mode = #tpu.pipeline_mode<synchronous>, transform_indices = @transform_3, window_bounds = array<i64: 2, 8, 8, 128>}]} {
    %cst = arith.constant 0.000000e+00 : f32
    %0 = vector.broadcast %cst : f32 to vector<128x128xf32>
    %c0 = arith.constant 0 : index
    %c0_0 = arith.constant 0 : index
    %1 = vector.load %arg5[%c0, %c0_0] : memref<128x128xf32, #tpu.memory_space<vmem>>, vector<128x128xf32>
    tpu.vector_store %arg5[%c0, %c0_0], %0 {strides = array<i32>} : memref<128x128xf32, #tpu.memory_space<vmem>>, vector<128x128xf32>,
    %c0_1 = arith.constant 0 : index
    %c0_2 = arith.constant 0 : index
    %c0_3 = arith.constant 0 : index
    %c0_4 = arith.constant 0 : index
    %c0_5 = arith.constant 0 : index
    %2 = vector.load %arg1[%c0_1, %c0_2, %c0_3, %c0_4, %c0_5] : memref<2x1x10x10x128xbf16, #tpu.memory_space<vmem>>, vector<2x1x8x8x128xbf16>
    %3 = vector.shape_cast %2 : vector<2x1x8x8x128xbf16> to vector<2x8x8x128xbf16>
    %c0_6 = arith.constant 0 : index
    %c0_7 = arith.constant 0 : index
    %4 = vector.load %arg5[%c0_6, %c0_7] : memref<128x128xf32, #tpu.memory_space<vmem>>, vector<128x128xf32>
    %5 = vector.shape_cast %3 : vector<2x8x8x128xbf16> to vector<128x128xbf16>
    %c0_8 = arith.constant 0 : index
    %c0_9 = arith.constant 0 : index
    %c0_10 = arith.constant 0 : index
    %c0_11 = arith.constant 0 : index
    %6 = vector.load %arg2[%c0_8, %c0_9, %c0_10, %c0_11] : memref<3x3x128x128xbf16, #tpu.memory_space<vmem>>, vector<1x1x128x128xbf16>
    %7 = vector.shape_cast %6 : vector<1x1x128x128xbf16> to vector<128x128xbf16>
    %cst_12 = arith.constant dense<0.000000e+00> : vector<128x128xf32>
    %8 = tpu.matmul %5, %7, %cst_12 {dimension_numbers = #tpu.dot_dimension_numbers<[1], [0], [0], [1], [0, 0, 1, 1], [], []>} : vector<128x128xbf16>, vector<128x128xbf16>, vector<128x128xf32> -> vector<128x128xf32>
    %9 = arith.addf %4, %8 : vector<128x128xf32>
    %c0_13 = arith.constant 0 : index
    %c0_14 = arith.constant 0 : index
    %10 = vector.load %arg5[%c0_13, %c0_14] : memref<128x128xf32, #tpu.memory_space<vmem>>, vector<128x128xf32>
    tpu.vector_store %arg5[%c0_13, %c0_14], %9 {strides = array<i32>} : memref<128x128xf32, #tpu.memory_space<vmem>>, vector<128x128xf32>,
    %c0_15 = arith.constant 0 : index
    %c0_16 = arith.constant 0 : index
    %c0_17 = arith.constant 0 : index
    %c1 = arith.constant 1 : index
    %c0_18 = arith.constant 0 : index
    %11 = vector.load %arg1[%c0_15, %c0_16, %c0_17, %c1, %c0_18] : memref<2x1x10x10x128xbf16, #tpu.memory_space<vmem>>, vector<2x1x8x8x128xbf16>
    %12 = vector.shape_cast %11 : vector<2x1x8x8x128xbf16> to vector<2x8x8x128xbf16>
    %c0_19 = arith.constant 0 : index
    %c0_20 = arith.constant 0 : index
    %13 = vector.load %arg5[%c0_19, %c0_20] : memref<128x128xf32, #tpu.memory_space<vmem>>, vector<128x128xf32>
    %14 = vector.shape_cast %12 : vector<2x8x8x128xbf16> to vector<128x128xbf16>
    %c0_21 = arith.constant 0 : index
    %c1_22 = arith.constant 1 : index
    %c0_23 = arith.constant 0 : index
    %c0_24 = arith.constant 0 : index
    %15 = vector.load %arg2[%c0_21, %c1_22, %c0_23, %c0_24] : memref<3x3x128x128xbf16, #tpu.memory_space<vmem>>, vector<1x1x128x128xbf16>
    %16 = vector.shape_cast %15 : vector<1x1x128x128xbf16> to vector<128x128xbf16>
    %cst_25 = arith.constant dense<0.000000e+00> : vector<128x128xf32>
    %17 = tpu.matmul %14, %16, %cst_25 {dimension_numbers = #tpu.dot_dimension_numbers<[1], [0], [0], [1], [0, 0, 1, 1], [], []>} : vector<128x128xbf16>, vector<128x128xbf16>, vector<128x128xf32> -> vector<128x128xf32>
    %18 = arith.addf %13, %17 : vector<128x128xf32>
    %c0_26 = arith.constant 0 : index
    %c0_27 = arith.constant 0 : index
    %19 = vector.load %arg5[%c0_26, %c0_27] : memref<128x128xf32, #tpu.memory_space<vmem>>, vector<128x128xf32>
    tpu.vector_store %arg5[%c0_26, %c0_27], %18 {strides = array<i32>} : memref<128x128xf32, #tpu.memory_space<vmem>>, vector<128x128xf32>,
    %c0_28 = arith.constant 0 : index
    %c0_29 = arith.constant 0 : index
    %c0_30 = arith.constant 0 : index
    %c2 = arith.constant 2 : index
    %c0_31 = arith.constant 0 : index
    %20 = vector.load %arg1[%c0_28, %c0_29, %c0_30, %c2, %c0_31] : memref<2x1x10x10x128xbf16, #tpu.memory_space<vmem>>, vector<2x1x8x8x128xbf16>
    %21 = vector.shape_cast %20 : vector<2x1x8x8x128xbf16> to vector<2x8x8x128xbf16>
    %c0_32 = arith.constant 0 : index
    %c0_33 = arith.constant 0 : index
    %22 = vector.load %arg5[%c0_32, %c0_33] : memref<128x128xf32, #tpu.memory_space<vmem>>, vector<128x128xf32>
    %23 = vector.shape_cast %21 : vector<2x8x8x128xbf16> to vector<128x128xbf16>
    %c0_34 = arith.constant 0 : index
    %c2_35 = arith.constant 2 : index
    %c0_36 = arith.constant 0 : index
    %c0_37 = arith.constant 0 : index
    %24 = vector.load %arg2[%c0_34, %c2_35, %c0_36, %c0_37] : memref<3x3x128x128xbf16, #tpu.memory_space<vmem>>, vector<1x1x128x128xbf16>
    %25 = vector.shape_cast %24 : vector<1x1x128x128xbf16> to vector<128x128xbf16>
    %cst_38 = arith.constant dense<0.000000e+00> : vector<128x128xf32>
    %26 = tpu.matmul %23, %25, %cst_38 {dimension_numbers = #tpu.dot_dimension_numbers<[1], [0], [0], [1], [0, 0, 1, 1], [], []>} : vector<128x128xbf16>, vector<128x128xbf16>, vector<128x128xf32> -> vector<128x128xf32>
    %27 = arith.addf %22, %26 : vector<128x128xf32>
    %c0_39 = arith.constant 0 : index
    %c0_40 = arith.constant 0 : index
    %28 = vector.load %arg5[%c0_39, %c0_40] : memref<128x128xf32, #tpu.memory_space<vmem>>, vector<128x128xf32>
    tpu.vector_store %arg5[%c0_39, %c0_40], %27 {strides = array<i32>} : memref<128x128xf32, #tpu.memory_space<vmem>>, vector<128x128xf32>,
    %c0_41 = arith.constant 0 : index
    %c0_42 = arith.constant 0 : index
    %c1_43 = arith.constant 1 : index
    %c0_44 = arith.constant 0 : index
    %c0_45 = arith.constant 0 : index
    %29 = vector.load %arg1[%c0_41, %c0_42, %c1_43, %c0_44, %c0_45] : memref<2x1x10x10x128xbf16, #tpu.memory_space<vmem>>, vector<2x1x8x8x128xbf16>
    %30 = vector.shape_cast %29 : vector<2x1x8x8x128xbf16> to vector<2x8x8x128xbf16>
    %c0_46 = arith.constant 0 : index
    %c0_47 = arith.constant 0 : index
    %31 = vector.load %arg5[%c0_46, %c0_47] : memref<128x128xf32, #tpu.memory_space<vmem>>, vector<128x128xf32>
    %32 = vector.shape_cast %30 : vector<2x8x8x128xbf16> to vector<128x128xbf16>
    %c1_48 = arith.constant 1 : index
    %c0_49 = arith.constant 0 : index
    %c0_50 = arith.constant 0 : index
    %c0_51 = arith.constant 0 : index
    %33 = vector.load %arg2[%c1_48, %c0_49, %c0_50, %c0_51] : memref<3x3x128x128xbf16, #tpu.memory_space<vmem>>, vector<1x1x128x128xbf16>
    %34 = vector.shape_cast %33 : vector<1x1x128x128xbf16> to vector<128x128xbf16>
    %cst_52 = arith.constant dense<0.000000e+00> : vector<128x128xf32>
    %35 = tpu.matmul %32, %34, %cst_52 {dimension_numbers = #tpu.dot_dimension_numbers<[1], [0], [0], [1], [0, 0, 1, 1], [], []>} : vector<128x128xbf16>, vector<128x128xbf16>, vector<128x128xf32> -> vector<128x128xf32>
    %36 = arith.addf %31, %35 : vector<128x128xf32>
    %c0_53 = arith.constant 0 : index
    %c0_54 = arith.constant 0 : index
    %37 = vector.load %arg5[%c0_53, %c0_54] : memref<128x128xf32, #tpu.memory_space<vmem>>, vector<128x128xf32>
    tpu.vector_store %arg5[%c0_53, %c0_54], %36 {strides = array<i32>} : memref<128x128xf32, #tpu.memory_space<vmem>>, vector<128x128xf32>,
    %c0_55 = arith.constant 0 : index
    %c0_56 = arith.constant 0 : index
    %c1_57 = arith.constant 1 : index
    %c1_58 = arith.constant 1 : index
    %c0_59 = arith.constant 0 : index
    %38 = vector.load %arg1[%c0_55, %c0_56, %c1_57, %c1_58, %c0_59] : memref<2x1x10x10x128xbf16, #tpu.memory_space<vmem>>, vector<2x1x8x8x128xbf16>
    %39 = vector.shape_cast %38 : vector<2x1x8x8x128xbf16> to vector<2x8x8x128xbf16>
    %c0_60 = arith.constant 0 : index
    %c0_61 = arith.constant 0 : index
    %40 = vector.load %arg5[%c0_60, %c0_61] : memref<128x128xf32, #tpu.memory_space<vmem>>, vector<128x128xf32>
    %41 = vector.shape_cast %39 : vector<2x8x8x128xbf16> to vector<128x128xbf16>
    %c1_62 = arith.constant 1 : index
    %c1_63 = arith.constant 1 : index
    %c0_64 = arith.constant 0 : index
    %c0_65 = arith.constant 0 : index
    %42 = vector.load %arg2[%c1_62, %c1_63, %c0_64, %c0_65] : memref<3x3x128x128xbf16, #tpu.memory_space<vmem>>, vector<1x1x128x128xbf16>
    %43 = vector.shape_cast %42 : vector<1x1x128x128xbf16> to vector<128x128xbf16>
    %cst_66 = arith.constant dense<0.000000e+00> : vector<128x128xf32>
    %44 = tpu.matmul %41, %43, %cst_66 {dimension_numbers = #tpu.dot_dimension_numbers<[1], [0], [0], [1], [0, 0, 1, 1], [], []>} : vector<128x128xbf16>, vector<128x128xbf16>, vector<128x128xf32> -> vector<128x128xf32>
    %45 = arith.addf %40, %44 : vector<128x128xf32>
    %c0_67 = arith.constant 0 : index
    %c0_68 = arith.constant 0 : index
    %46 = vector.load %arg5[%c0_67, %c0_68] : memref<128x128xf32, #tpu.memory_space<vmem>>, vector<128x128xf32>
    tpu.vector_store %arg5[%c0_67, %c0_68], %45 {strides = array<i32>} : memref<128x128xf32, #tpu.memory_space<vmem>>, vector<128x128xf32>,
    %c0_69 = arith.constant 0 : index
    %c0_70 = arith.constant 0 : index
    %c1_71 = arith.constant 1 : index
    %c2_72 = arith.constant 2 : index
    %c0_73 = arith.constant 0 : index
    %47 = vector.load %arg1[%c0_69, %c0_70, %c1_71, %c2_72, %c0_73] : memref<2x1x10x10x128xbf16, #tpu.memory_space<vmem>>, vector<2x1x8x8x128xbf16>
    %48 = vector.shape_cast %47 : vector<2x1x8x8x128xbf16> to vector<2x8x8x128xbf16>
    %c0_74 = arith.constant 0 : index
    %c0_75 = arith.constant 0 : index
    %49 = vector.load %arg5[%c0_74, %c0_75] : memref<128x128xf32, #tpu.memory_space<vmem>>, vector<128x128xf32>
    %50 = vector.shape_cast %48 : vector<2x8x8x128xbf16> to vector<128x128xbf16>
    %c1_76 = arith.constant 1 : index
    %c2_77 = arith.constant 2 : index
    %c0_78 = arith.constant 0 : index
    %c0_79 = arith.constant 0 : index
    %51 = vector.load %arg2[%c1_76, %c2_77, %c0_78, %c0_79] : memref<3x3x128x128xbf16, #tpu.memory_space<vmem>>, vector<1x1x128x128xbf16>
    %52 = vector.shape_cast %51 : vector<1x1x128x128xbf16> to vector<128x128xbf16>
    %cst_80 = arith.constant dense<0.000000e+00> : vector<128x128xf32>
    %53 = tpu.matmul %50, %52, %cst_80 {dimension_numbers = #tpu.dot_dimension_numbers<[1], [0], [0], [1], [0, 0, 1, 1], [], []>} : vector<128x128xbf16>, vector<128x128xbf16>, vector<128x128xf32> -> vector<128x128xf32>
    %54 = arith.addf %49, %53 : vector<128x128xf32>
    %c0_81 = arith.constant 0 : index
    %c0_82 = arith.constant 0 : index
    %55 = vector.load %arg5[%c0_81, %c0_82] : memref<128x128xf32, #tpu.memory_space<vmem>>, vector<128x128xf32>
    tpu.vector_store %arg5[%c0_81, %c0_82], %54 {strides = array<i32>} : memref<128x128xf32, #tpu.memory_space<vmem>>, vector<128x128xf32>,
    %c0_83 = arith.constant 0 : index
    %c0_84 = arith.constant 0 : index
    %c2_85 = arith.constant 2 : index
    %c0_86 = arith.constant 0 : index
    %c0_87 = arith.constant 0 : index
    %56 = vector.load %arg1[%c0_83, %c0_84, %c2_85, %c0_86, %c0_87] : memref<2x1x10x10x128xbf16, #tpu.memory_space<vmem>>, vector<2x1x8x8x128xbf16>
    %57 = vector.shape_cast %56 : vector<2x1x8x8x128xbf16> to vector<2x8x8x128xbf16>
    %c0_88 = arith.constant 0 : index
    %c0_89 = arith.constant 0 : index
    %58 = vector.load %arg5[%c0_88, %c0_89] : memref<128x128xf32, #tpu.memory_space<vmem>>, vector<128x128xf32>
    %59 = vector.shape_cast %57 : vector<2x8x8x128xbf16> to vector<128x128xbf16>
    %c2_90 = arith.constant 2 : index
    %c0_91 = arith.constant 0 : index
    %c0_92 = arith.constant 0 : index
    %c0_93 = arith.constant 0 : index
    %60 = vector.load %arg2[%c2_90, %c0_91, %c0_92, %c0_93] : memref<3x3x128x128xbf16, #tpu.memory_space<vmem>>, vector<1x1x128x128xbf16>
    %61 = vector.shape_cast %60 : vector<1x1x128x128xbf16> to vector<128x128xbf16>
    %cst_94 = arith.constant dense<0.000000e+00> : vector<128x128xf32>
    %62 = tpu.matmul %59, %61, %cst_94 {dimension_numbers = #tpu.dot_dimension_numbers<[1], [0], [0], [1], [0, 0, 1, 1], [], []>} : vector<128x128xbf16>, vector<128x128xbf16>, vector<128x128xf32> -> vector<128x128xf32>
    %63 = arith.addf %58, %62 : vector<128x128xf32>
    %c0_95 = arith.constant 0 : index
    %c0_96 = arith.constant 0 : index
    %64 = vector.load %arg5[%c0_95, %c0_96] : memref<128x128xf32, #tpu.memory_space<vmem>>, vector<128x128xf32>
    tpu.vector_store %arg5[%c0_95, %c0_96], %63 {strides = array<i32>} : memref<128x128xf32, #tpu.memory_space<vmem>>, vector<128x128xf32>,
    %c0_97 = arith.constant 0 : index
    %c0_98 = arith.constant 0 : index
    %c2_99 = arith.constant 2 : index
    %c1_100 = arith.constant 1 : index
    %c0_101 = arith.constant 0 : index
    %65 = vector.load %arg1[%c0_97, %c0_98, %c2_99, %c1_100, %c0_101] : memref<2x1x10x10x128xbf16, #tpu.memory_space<vmem>>, vector<2x1x8x8x128xbf16>
    %66 = vector.shape_cast %65 : vector<2x1x8x8x128xbf16> to vector<2x8x8x128xbf16>
    %c0_102 = arith.constant 0 : index
    %c0_103 = arith.constant 0 : index
    %67 = vector.load %arg5[%c0_102, %c0_103] : memref<128x128xf32, #tpu.memory_space<vmem>>, vector<128x128xf32>
    %68 = vector.shape_cast %66 : vector<2x8x8x128xbf16> to vector<128x128xbf16>
    %c2_104 = arith.constant 2 : index
    %c1_105 = arith.constant 1 : index
    %c0_106 = arith.constant 0 : index
    %c0_107 = arith.constant 0 : index
    %69 = vector.load %arg2[%c2_104, %c1_105, %c0_106, %c0_107] : memref<3x3x128x128xbf16, #tpu.memory_space<vmem>>, vector<1x1x128x128xbf16>
    %70 = vector.shape_cast %69 : vector<1x1x128x128xbf16> to vector<128x128xbf16>
    %cst_108 = arith.constant dense<0.000000e+00> : vector<128x128xf32>
    %71 = tpu.matmul %68, %70, %cst_108 {dimension_numbers = #tpu.dot_dimension_numbers<[1], [0], [0], [1], [0, 0, 1, 1], [], []>} : vector<128x128xbf16>, vector<128x128xbf16>, vector<128x128xf32> -> vector<128x128xf32>
    %72 = arith.addf %67, %71 : vector<128x128xf32>
    %c0_109 = arith.constant 0 : index
    %c0_110 = arith.constant 0 : index
    %73 = vector.load %arg5[%c0_109, %c0_110] : memref<128x128xf32, #tpu.memory_space<vmem>>, vector<128x128xf32>
    tpu.vector_store %arg5[%c0_109, %c0_110], %72 {strides = array<i32>} : memref<128x128xf32, #tpu.memory_space<vmem>>, vector<128x128xf32>,
    %c0_111 = arith.constant 0 : index
    %c0_112 = arith.constant 0 : index
    %c2_113 = arith.constant 2 : index
    %c2_114 = arith.constant 2 : index
    %c0_115 = arith.constant 0 : index
    %74 = vector.load %arg1[%c0_111, %c0_112, %c2_113, %c2_114, %c0_115] : memref<2x1x10x10x128xbf16, #tpu.memory_space<vmem>>, vector<2x1x8x8x128xbf16>
    %75 = vector.shape_cast %74 : vector<2x1x8x8x128xbf16> to vector<2x8x8x128xbf16>
    %c0_116 = arith.constant 0 : index
    %c0_117 = arith.constant 0 : index
    %76 = vector.load %arg5[%c0_116, %c0_117] : memref<128x128xf32, #tpu.memory_space<vmem>>, vector<128x128xf32>
    %77 = vector.shape_cast %75 : vector<2x8x8x128xbf16> to vector<128x128xbf16>
    %c2_118 = arith.constant 2 : index
    %c2_119 = arith.constant 2 : index
    %c0_120 = arith.constant 0 : index
    %c0_121 = arith.constant 0 : index
    %78 = vector.load %arg2[%c2_118, %c2_119, %c0_120, %c0_121] : memref<3x3x128x128xbf16, #tpu.memory_space<vmem>>, vector<1x1x128x128xbf16>
    %79 = vector.shape_cast %78 : vector<1x1x128x128xbf16> to vector<128x128xbf16>
    %cst_122 = arith.constant dense<0.000000e+00> : vector<128x128xf32>
    %80 = tpu.matmul %77, %79, %cst_122 {dimension_numbers = #tpu.dot_dimension_numbers<[1], [0], [0], [1], [0, 0, 1, 1], [], []>} : vector<128x128xbf16>, vector<128x128xbf16>, vector<128x128xf32> -> vector<128x128xf32>
    %81 = arith.addf %76, %80 : vector<128x128xf32>
    %c0_123 = arith.constant 0 : index
    %c0_124 = arith.constant 0 : index
    %82 = vector.load %arg5[%c0_123, %c0_124] : memref<128x128xf32, #tpu.memory_space<vmem>>, vector<128x128xf32>
    tpu.vector_store %arg5[%c0_123, %c0_124], %81 {strides = array<i32>} : memref<128x128xf32, #tpu.memory_space<vmem>>, vector<128x128xf32>,
    %c0_125 = arith.constant 0 : index
    %c0_126 = arith.constant 0 : index
    %83 = vector.load %arg5[%c0_125, %c0_126] : memref<128x128xf32, #tpu.memory_space<vmem>>, vector<128x128xf32>
    %c0_127 = arith.constant 0 : index
    %c0_128 = arith.constant 0 : index
    %84 = vector.load %arg3[%c0_127, %c0_128] : memref<1x128xf32, #tpu.memory_space<vmem>>, vector<1x128xf32>
    %85 = vector.broadcast %84 : vector<1x128xf32> to vector<128x128xf32>
    %86 = arith.addf %83, %85 : vector<128x128xf32>
    %cst_129 = arith.constant 0.000000e+00 : f32
    %87 = vector.broadcast %cst_129 : f32 to vector<128x128xf32>
    %88 = arith.maximumf %86, %87 : vector<128x128xf32>
    %89 = vector.shape_cast %88 : vector<128x128xf32> to vector<2x8x8x128xf32>
    %90 = arith.truncf %89 : vector<2x8x8x128xf32> to vector<2x8x8x128xbf16>
    %c0_130 = arith.constant 0 : index
    %c0_131 = arith.constant 0 : index
    %c0_132 = arith.constant 0 : index
    %c0_133 = arith.constant 0 : index
    %91 = vector.load %arg4[%c0_130, %c0_131, %c0_132, %c0_133] : memref<2x8x8x128xbf16, #tpu.memory_space<vmem>>, vector<2x8x8x128xbf16>
    tpu.vector_store %arg4[%c0_130, %c0_131, %c0_132, %c0_133], %90 {strides = array<i32>} : memref<2x8x8x128xbf16, #tpu.memory_space<vmem>>, vector<2x8x8x128xbf16>,
    return
  }
  func.func @transform_0(%arg0: i32) -> (i32, i32, i32, i32, i32) {
    %c0_i32 = arith.constant 0 : i32
    %c0_i32_0 = arith.constant 0 : i32
    %c0_i32_1 = arith.constant 0 : i32
    %c0_i32_2 = arith.constant 0 : i32
    %c0_i32_3 = arith.constant 0 : i32
    %c0_i32_4 = arith.constant 0 : i32
    return %c0_i32, %c0_i32_0, %c0_i32_1, %c0_i32_2, %c0_i32_3 : i32, i32, i32, i32, i32
  }
  func.func @transform_1(%arg0: i32) -> (i32, i32, i32, i32) {
    %c0_i32 = arith.constant 0 : i32
    %c0_i32_0 = arith.constant 0 : i32
    %c0_i32_1 = arith.constant 0 : i32
    %c0_i32_2 = arith.constant 0 : i32
    %c0_i32_3 = arith.constant 0 : i32
    return %c0_i32, %c0_i32_0, %c0_i32_1, %c0_i32_2 : i32, i32, i32, i32
  }
  func.func @transform_2(%arg0: i32) -> (i32, i32) {
    %c0_i32 = arith.constant 0 : i32
    %c0_i32_0 = arith.constant 0 : i32
    %c0_i32_1 = arith.constant 0 : i32
    return %c0_i32, %c0_i32_0 : i32, i32
  }
  func.func @transform_3(%arg0: i32) -> (i32, i32, i32, i32) {
    %c0_i32 = arith.constant 0 : i32
    %c0_i32_0 = arith.constant 0 : i32
    %c0_i32_1 = arith.constant 0 : i32
    %c0_i32_2 = arith.constant 0 : i32
    %c0_i32_3 = arith.constant 0 : i32
    return %c0_i32, %c0_i32_0, %c0_i32_1, %c0_i32_2 : i32, i32, i32, i32
  }
}

module attributes {stable_mosaic.version = 11 : i64} {
  func.func @_gap_fc_kernel(%arg0: i32, %arg1: memref<2x8x8x128xbf16, #tpu.memory_space<vmem>>, %arg2: memref<128x128xbf16, #tpu.memory_space<vmem>>, %arg3: memref<1x128xf32, #tpu.memory_space<vmem>>, %arg4: memref<2x128xf32, #tpu.memory_space<vmem>>) attributes {dimension_semantics = [#tpu.dimension_semantics<arbitrary>], iteration_bounds = array<i64: 1>, scalar_prefetch = 0 : i64, scratch_operands = 0 : i64, tpu.core_type = #tpu.core_type<tc>, window_params = [{pipeline_mode = #tpu.pipeline_mode<synchronous>, transform_indices = @transform_0, window_bounds = array<i64: 2, 8, 8, 128>}, {pipeline_mode = #tpu.pipeline_mode<synchronous>, transform_indices = @transform_1, window_bounds = array<i64: 128, 128>}, {pipeline_mode = #tpu.pipeline_mode<synchronous>, transform_indices = @transform_2, window_bounds = array<i64: 1, 128>}, {pipeline_mode = #tpu.pipeline_mode<synchronous>, transform_indices = @transform_3, window_bounds = array<i64: 2, 128>}]} {
    %c0 = arith.constant 0 : index
    %c0_0 = arith.constant 0 : index
    %c0_1 = arith.constant 0 : index
    %c0_2 = arith.constant 0 : index
    %0 = vector.load %arg1[%c0, %c0_0, %c0_1, %c0_2] : memref<2x8x8x128xbf16, #tpu.memory_space<vmem>>, vector<2x8x8x128xbf16>
    %1 = arith.extf %0 : vector<2x8x8x128xbf16> to vector<2x8x8x128xf32>
    %2 = vector.shape_cast %1 : vector<2x8x8x128xf32> to vector<2x64x128xf32>
    %cst = arith.constant dense<0.000000e+00> : vector<2x128xf32>
    %3 = vector.multi_reduction <add>, %2, %cst [1] : vector<2x64x128xf32> to vector<2x128xf32>
    %cst_3 = arith.constant 1.562500e-02 : f32
    %4 = vector.broadcast %cst_3 : f32 to vector<2x128xf32>
    %5 = arith.mulf %3, %4 : vector<2x128xf32>
    %6 = arith.truncf %5 : vector<2x128xf32> to vector<2x128xbf16>
    %c0_4 = arith.constant 0 : index
    %c0_5 = arith.constant 0 : index
    %7 = vector.load %arg2[%c0_4, %c0_5] : memref<128x128xbf16, #tpu.memory_space<vmem>>, vector<128x128xbf16>
    %cst_6 = arith.constant dense<0.000000e+00> : vector<2x128xf32>
    %8 = tpu.matmul %6, %7, %cst_6 {dimension_numbers = #tpu.dot_dimension_numbers<[1], [0], [0], [1], [0, 0, 1, 1], [], []>} : vector<2x128xbf16>, vector<128x128xbf16>, vector<2x128xf32> -> vector<2x128xf32>
    %c0_7 = arith.constant 0 : index
    %c0_8 = arith.constant 0 : index
    %9 = vector.load %arg3[%c0_7, %c0_8] : memref<1x128xf32, #tpu.memory_space<vmem>>, vector<1x128xf32>
    %10 = vector.broadcast %9 : vector<1x128xf32> to vector<2x128xf32>
    %11 = arith.addf %8, %10 : vector<2x128xf32>
    %c0_9 = arith.constant 0 : index
    %c0_10 = arith.constant 0 : index
    %12 = vector.load %arg4[%c0_9, %c0_10] : memref<2x128xf32, #tpu.memory_space<vmem>>, vector<2x128xf32>
    tpu.vector_store %arg4[%c0_9, %c0_10], %11 {strides = array<i32>} : memref<2x128xf32, #tpu.memory_space<vmem>>, vector<2x128xf32>,
    return
  }
  func.func @transform_0(%arg0: i32) -> (i32, i32, i32, i32) {
    %c0_i32 = arith.constant 0 : i32
    %c0_i32_0 = arith.constant 0 : i32
    %c0_i32_1 = arith.constant 0 : i32
    %c0_i32_2 = arith.constant 0 : i32
    %c0_i32_3 = arith.constant 0 : i32
    return %c0_i32, %c0_i32_0, %c0_i32_1, %c0_i32_2 : i32, i32, i32, i32
  }
  func.func @transform_1(%arg0: i32) -> (i32, i32) {
    %c0_i32 = arith.constant 0 : i32
    %c0_i32_0 = arith.constant 0 : i32
    %c0_i32_1 = arith.constant 0 : i32
    return %c0_i32, %c0_i32_0 : i32, i32
  }
  func.func @transform_2(%arg0: i32) -> (i32, i32) {
    %c0_i32 = arith.constant 0 : i32
    %c0_i32_0 = arith.constant 0 : i32
    %c0_i32_1 = arith.constant 0 : i32
    return %c0_i32, %c0_i32_0 : i32, i32
  }
  func.func @transform_3(%arg0: i32) -> (i32, i32) {
    %c0_i32 = arith.constant 0 : i32
    %c0_i32_0 = arith.constant 0 : i32
    %c0_i32_1 = arith.constant 0 : i32
    return %c0_i32, %c0_i32_0 : i32, i32
  }
}

</mosaic_0001>

<llo_original>
// kernel: ts_net_forward.16
$region0: #{ts_net_forward.16}
  #allocation0 [shape = 'u32[]', space=smem, size = 0x4, offset = 0x4, fixed_abs, tag = 'smem constant byte address 0x4 - core index']
  #allocation1 [shape = 'u32[144,128]{1,0:T(1,128)}', space=vmem, size = 0x12000, scoped, tag = 'internal scratch']
  %s0 = inlined_call_operand.vmem [shape: bf16[128,128], index: 0, kind: input, shape index: {}]
  %s1 = inlined_call_operand.vmem [shape: bf16[128,256], index: 1, kind: input, shape index: {}]
  %s2 = inlined_call_operand.vmem [shape: f32[1,256], index: 2, kind: input, shape index: {}]
  %s3 = inlined_call_operand.vmem [shape: f32[128,256], index: 3, kind: output, shape index: {}]
  %s4 = sld [smem:[#allocation0]]
  $region22: #{ts_net_forward.16} parent=0
    _
  %s6 = ssub.s32 1, %s4
  %s7 = scalar_select 0, %s6, %s4
  // Predicated region
  $region2: #{ts_net_forward.16} parent=0 // pred_check
    _
  $region3: #{ts_net_forward.16} parent=0 // pred_check_branch
    %9 = sbr.rel (0) target = $region5
  $region4: #{ts_net_forward.16} parent=0 // pred_region
    _
  $region5: #{ts_net_forward.16} parent=0 // pred_fallthru
    _
  // Predicated region
  $region6: #{ts_net_forward.16} parent=0 // pred_check
    _
  $region7: #{ts_net_forward.16} parent=0 // pred_check_branch
    %11 = sbr.rel (0) target = $region9
  $region8: #{ts_net_forward.16} parent=0 // pred_region
    _
  $region9: #{ts_net_forward.16} parent=0 // pred_fallthru
    _
  // Predicated region
  $region10: #{ts_net_forward.16} parent=0 // pred_check
    _
  $region11: #{ts_net_forward.16} parent=0 // pred_check_branch
    %13 = sbr.rel (0) target = $region13
  $region12: #{ts_net_forward.16} parent=0 // pred_region
    _
  $region13: #{ts_net_forward.16} parent=0 // pred_fallthru
    _
  %v15 = vld [vmem:[%s0] sm:$0xf]
  %v16 = vld [vmem:[%s0 + $0x4] sm:$0xf]
  %v17 = vld [vmem:[%s0 + $0x8] sm:$0xf]
  %v18 = vld [vmem:[%s0 + $0xc] sm:$0xf]
  %v19 = vld [vmem:[%s0 + $0x10] sm:$0xf]
  %v20 = vld [vmem:[%s0 + $0x14] sm:$0xf]
  %v21 = vld [vmem:[%s0 + $0x18] sm:$0xf]
  %v22 = vld [vmem:[%s0 + $0x1c] sm:$0xf]
  %v23 = vld [vmem:[%s0 + $0x20] sm:$0xf]
  %v24 = vld [vmem:[%s0 + $0x24] sm:$0xf]
  %v25 = vld [vmem:[%s0 + $0x28] sm:$0xf]
  %v26 = vld [vmem:[%s0 + $0x2c] sm:$0xf]
  %v27 = vld [vmem:[%s0 + $0x30] sm:$0xf]
  %v28 = vld [vmem:[%s0 + $0x34] sm:$0xf]
  %v29 = vld [vmem:[%s0 + $0x38] sm:$0xf]
  %v30 = vld [vmem:[%s0 + $0x3c] sm:$0xf]
  %v31 = vld [vmem:[%s1] sm:$0xff]
  %v32 = vld [vmem:[%s1 + $0x8] sm:$0xff]
  %v33 = vld [vmem:[%s1 + $0x10] sm:$0xff]
  %v34 = vld [vmem:[%s1 + $0x18] sm:$0xff]
  %v35 = vld [vmem:[%s1 + $0x20] sm:$0xff]
  %v36 = vld [vmem:[%s1 + $0x28] sm:$0xff]
  %v37 = vld [vmem:[%s1 + $0x30] sm:$0xff]
  %v38 = vld [vmem:[%s1 + $0x38] sm:$0xff]
  %v39 = vld [vmem:[%s1 + $0x40] sm:$0xff]
  %v40 = vld [vmem:[%s1 + $0x48] sm:$0xff]
  %v41 = vld [vmem:[%s1 + $0x50] sm:$0xff]
  %v42 = vld [vmem:[%s1 + $0x58] sm:$0xff]
  %v43 = vld [vmem:[%s1 + $0x60] sm:$0xff]
  %v44 = vld [vmem:[%s1 + $0x68] sm:$0xff]
  %v45 = vld [vmem:[%s1 + $0x70] sm:$0xff]
  %v46 = vld [vmem:[%s1 + $0x78] sm:$0xff]
  %v47 = vld [vmem:[%s2] sm:$0x3]
  %v49 = vlaneseq
  %v50 = vshrl.u32 %v49, 7
  %v51 = vsub.s32 0, %v50
  %v52 = vrot.slane %v47, %v51
  %v53 = vlaneseq
  %v54 = vshrl.u32 %v53, 7
  %v55 = vsub.s32 1, %v54
  %v56 = vrot.slane %v47, %v55
  %v75 = vunpack.c.l.b16 %v15
  %v76 = vunpack.c.l.b16 %v16
  %v77 = vunpack.c.l.b16 %v17
  %v78 = vunpack.c.l.b16 %v18
  %v79 = vunpack.c.l.b16 %v19
  %v80 = vunpack.c.l.b16 %v20
  %v81 = vunpack.c.l.b16 %v21
  %v82 = vunpack.c.l.b16 %v22
  %v83 = vunpack.c.l.b16 %v23
  %v84 = vunpack.c.l.b16 %v24
  %v85 = vunpack.c.l.b16 %v25
  %v86 = vunpack.c.l.b16 %v26
  %v87 = vunpack.c.l.b16 %v27
  %v88 = vunpack.c.l.b16 %v28
  %v89 = vunpack.c.l.b16 %v29
  %v90 = vunpack.c.l.b16 %v30
  %v91 = vpack.c.b16 %v76, %v75
  %v92 = vpack.c.b16 %v78, %v77
  %v93 = vpack.c.b16 %v80, %v79
  %v94 = vpack.c.b16 %v82, %v81
  %v95 = vpack.c.b16 %v84, %v83
  %v96 = vpack.c.b16 %v86, %v85
  %v97 = vpack.c.b16 %v88, %v87
  %v98 = vpack.c.b16 %v90, %v89
  %v123 = vunpack.c.l.b16 %v31
  %v124 = vunpack.c.h.b16 %v31
  %v125 = vunpack.c.l.b16 %v32
  %v126 = vunpack.c.h.b16 %v32
  %v127 = vunpack.c.l.b16 %v33
  %v128 = vunpack.c.h.b16 %v33
  %v129 = vunpack.c.l.b16 %v34
  %v130 = vunpack.c.h.b16 %v34
  %v131 = vunpack.c.l.b16 %v35
  %v132 = vunpack.c.h.b16 %v35
  %v133 = vunpack.c.l.b16 %v36
  %v134 = vunpack.c.h.b16 %v36
  %v135 = vunpack.c.l.b16 %v37
  %v136 = vunpack.c.h.b16 %v37
  %v137 = vunpack.c.l.b16 %v38
  %v138 = vunpack.c.h.b16 %v38
  %v139 = vunpack.c.l.b16 %v39
  %v140 = vunpack.c.h.b16 %v39
  %v141 = vunpack.c.l.b16 %v40
  %v142 = vunpack.c.h.b16 %v40
  %v143 = vunpack.c.l.b16 %v41
  %v144 = vunpack.c.h.b16 %v41
  %v145 = vunpack.c.l.b16 %v42
  %v146 = vunpack.c.h.b16 %v42
  %v147 = vunpack.c.l.b16 %v43
  %v148 = vunpack.c.h.b16 %v43
  %v149 = vunpack.c.l.b16 %v44
  %v150 = vunpack.c.h.b16 %v44
  %v151 = vunpack.c.l.b16 %v45
  %v152 = vunpack.c.h.b16 %v45
  %v153 = vunpack.c.l.b16 %v46
  %v154 = vunpack.c.h.b16 %v46
  %v155 = vpack.c.b16 %v125, %v123
  %v156 = vpack.c.b16 %v126, %v124
  %v157 = vpack.c.b16 %v129, %v127
  %v158 = vpack.c.b16 %v130, %v128
  %v159 = vpack.c.b16 %v133, %v131
  %v160 = vpack.c.b16 %v134, %v132
  %v161 = vpack.c.b16 %v137, %v135
  %v162 = vpack.c.b16 %v138, %v136
  %v163 = vpack.c.b16 %v141, %v139
  %v164 = vpack.c.b16 %v142, %v140
  %v165 = vpack.c.b16 %v145, %v143
  %v166 = vpack.c.b16 %v146, %v144
  %v167 = vpack.c.b16 %v149, %v147
  %v168 = vpack.c.b16 %v150, %v148
  %v169 = vpack.c.b16 %v153, %v151
  %v170 = vpack.c.b16 %v154, %v152
  %187 = vmatprep.subr.bf16.mxu0 %v170
  %188 = vmatpush1.bf16.msra.mxu0 %v169
  %189 = vmatprep.subr.bf16.mxu0 %v168
  %190 = vmatpush1.bf16.msra.mxu0 %v167
  %191 = vmatprep.subr.bf16.mxu0 %v166
  %192 = vmatpush1.bf16.msra.mxu0 %v165
  %193 = vmatprep.subr.bf16.mxu0 %v164
  %194 = vmatpush1.bf16.msra.mxu0 %v163
  %195 = vmatprep.subr.bf16.mxu0 %v162
  %196 = vmatpush1.bf16.msra.mxu0 %v161
  %197 = vmatprep.subr.bf16.mxu0 %v160
  %198 = vmatpush1.bf16.msra.mxu0 %v159
  %199 = vmatprep.subr.bf16.mxu0 %v158
  %200 = vmatpush1.bf16.msra.mxu0 %v157
  %201 = vmatprep.subr.bf16.mxu0 %v156
  %202 = vmatpush1.bf16.msra.mxu0 %v155
  %203 = vmatprep.subr.bf16.mxu0 0
  %204 = vmatpush2.bf16.msra.mxu0 0
  %205 = vmatprep.subr.bf16.mxu0 0
  %206 = vmatpush2.bf16.msra.mxu0 0
  %207 = vmatprep.subr.bf16.mxu0 0
  %208 = vmatpush2.bf16.msra.mxu0 0
  %209 = vmatprep.subr.bf16.mxu0 0
  %210 = vmatpush2.bf16.msra.mxu0 0
  %211 = vmatprep.subr.bf16.mxu0 0
  %212 = vmatpush2.bf16.msra.mxu0 0
  %213 = vmatprep.subr.bf16.mxu0 0
  %214 = vmatpush2.bf16.msra.mxu0 0
  %215 = vmatprep.subr.bf16.mxu0 0
  %216 = vmatpush2.bf16.msra.mxu0 0
  %217 = vmatprep.subr.bf16.mxu0 0
  %218 = vmatpush2.bf16.msra.mxu0 0
  %219 = vmatprep.mubr.bf16.mxu0 0
  %220 = vmatmul.mubr.bf16.gmra.mxu0 %v91
  %v221 = vpop.f32.mrf.mxu0
  %v222 = vadd.f32 %v52, %v221
  %v223 = vpop.f32.mrf.mxu0
  %v224 = vadd.f32 %v56, %v223
  %v225 = vpop.f32.mrf.mxu0
  %v226 = vadd.f32 %v52, %v225
  %v227 = vpop.f32.mrf.mxu0
  %v228 = vadd.f32 %v56, %v227
  %229 = vmatprep.mubr.bf16.mxu0 0
  %230 = vmatmul.mubr.bf16.gmra.mxu0 %v92
  %v231 = vpop.f32.mrf.mxu0
  %v232 = vadd.f32 %v52, %v231
  %v233 = vpop.f32.mrf.mxu0
  %v234 = vadd.f32 %v56, %v233
  %v235 = vpop.f32.mrf.mxu0
  %v236 = vadd.f32 %v52, %v235
  %v237 = vpop.f32.mrf.mxu0
  %v238 = vadd.f32 %v56, %v237
  %239 = vmatprep.mubr.bf16.mxu0 0
  %240 = vmatmul.mubr.bf16.gmra.mxu0 %v93
  %v241 = vpop.f32.mrf.mxu0
  %v242 = vadd.f32 %v52, %v241
  %v243 = vpop.f32.mrf.mxu0
  %v244 = vadd.f32 %v56, %v243
  %v245 = vpop.f32.mrf.mxu0
  %v246 = vadd.f32 %v52, %v245
  %v247 = vpop.f32.mrf.mxu0
  %v248 = vadd.f32 %v56, %v247
  %249 = vmatprep.mubr.bf16.mxu0 0
  %250 = vmatmul.mubr.bf16.gmra.mxu0 %v94
  %v251 = vpop.f32.mrf.mxu0
  %v252 = vadd.f32 %v52, %v251
  %v253 = vpop.f32.mrf.mxu0
  %v254 = vadd.f32 %v56, %v253
  %v255 = vpop.f32.mrf.mxu0
  %v256 = vadd.f32 %v52, %v255
  %v257 = vpop.f32.mrf.mxu0
  %v258 = vadd.f32 %v56, %v257
  %259 = vmatprep.mubr.bf16.mxu0 0
  %260 = vmatmul.mubr.bf16.gmra.mxu0 %v95
  %v261 = vpop.f32.mrf.mxu0
  %v262 = vadd.f32 %v52, %v261
  %v263 = vpop.f32.mrf.mxu0
  %v264 = vadd.f32 %v56, %v263
  %v265 = vpop.f32.mrf.mxu0
  %v266 = vadd.f32 %v52, %v265
  %v267 = vpop.f32.mrf.mxu0
  %v268 = vadd.f32 %v56, %v267
  %269 = vmatprep.mubr.bf16.mxu0 0
  %270 = vmatmul.mubr.bf16.gmra.mxu0 %v96
  %v271 = vpop.f32.mrf.mxu0
  %v272 = vadd.f32 %v52, %v271
  %v273 = vpop.f32.mrf.mxu0
  %v274 = vadd.f32 %v56, %v273
  %v275 = vpop.f32.mrf.mxu0
  %v276 = vadd.f32 %v52, %v275
  %v277 = vpop.f32.mrf.mxu0
  %v278 = vadd.f32 %v56, %v277
  %279 = vmatprep.mubr.bf16.mxu0 0
  %280 = vmatmul.mubr.bf16.gmra.mxu0 %v97
  %v281 = vpop.f32.mrf.mxu0
  %v282 = vadd.f32 %v52, %v281
  %v283 = vpop.f32.mrf.mxu0
  %v284 = vadd.f32 %v56, %v283
  %v285 = vpop.f32.mrf.mxu0
  %v286 = vadd.f32 %v52, %v285
  %v287 = vpop.f32.mrf.mxu0
  %v288 = vadd.f32 %v56, %v287
  %289 = vmatprep.mubr.bf16.mxu0 0
  %290 = vmatmul.mubr.bf16.gmra.mxu0 %v98
  %v291 = vpop.f32.mrf.mxu0
  %v292 = vadd.f32 %v52, %v291
  %v293 = vpop.f32.mrf.mxu0
  %v294 = vadd.f32 %v56, %v293
  %v295 = vpop.f32.mrf.mxu0
  %v296 = vadd.f32 %v52, %v295
  %v297 = vpop.f32.mrf.mxu0
  %v298 = vadd.f32 %v56, %v297
  %299 = vdwg.mxu0
  %v300 = vlaneseq
  %v301 = vand.u32 %v300, 127
  %v302 = vadd.s32 %v301, 128
  %s303 = smul.u32 0, 256
  %v304 = vstv %s303
  %v305 = vadd.s32 %v301, %v304
  %v306 = vadd.s32 %v302, %v304
  %vm307 = vcmp.ge.s32.totalorder %v305, 128
  %vm308 = vcmp.ge.s32.totalorder %v306, 128
  %v309 = vmax.f32 %v222, 0.0
  %v310 = vmax.f32 %v224, 0.0
  %v311 = vmax.f32 %v226, 0.0
  %v312 = vmax.f32 %v228, 0.0
  %v313 = vmax.f32 %v232, 0.0
  %v314 = vmax.f32 %v234, 0.0
  %v315 = vmax.f32 %v236, 0.0
  %v316 = vmax.f32 %v238, 0.0
  %v317 = vmax.f32 %v242, 0.0
  %v318 = vmax.f32 %v244, 0.0
  %v319 = vmax.f32 %v246, 0.0
  %v320 = vmax.f32 %v248, 0.0
  %v321 = vmax.f32 %v252, 0.0
  %v322 = vmax.f32 %v254, 0.0
  %v323 = vmax.f32 %v256, 0.0
  %v324 = vmax.f32 %v258, 0.0
  %v325 = vmax.f32 %v262, 0.0
  %v326 = vmax.f32 %v264, 0.0
  %v327 = vmax.f32 %v266, 0.0
  %v328 = vmax.f32 %v268, 0.0
  %v329 = vmax.f32 %v272, 0.0
  %v330 = vmax.f32 %v274, 0.0
  %v331 = vmax.f32 %v276, 0.0
  %v332 = vmax.f32 %v278, 0.0
  %v333 = vmax.f32 %v282, 0.0
  %v334 = vmax.f32 %v284, 0.0
  %v335 = vmax.f32 %v286, 0.0
  %v336 = vmax.f32 %v288, 0.0
  %v337 = vmax.f32 %v292, 0.0
  %v338 = vmax.f32 %v294, 0.0
  %v339 = vmax.f32 %v296, 0.0
  %v340 = vmax.f32 %v298, 0.0
  %v341 = vsel %vm307, %v309, %v222
  %v342 = vsel %vm308, %v310, %v224
  %v343 = vsel %vm307, %v311, %v226
  %v344 = vsel %vm308, %v312, %v228
  %v345 = vsel %vm307, %v313, %v232
  %v346 = vsel %vm308, %v314, %v234
  %v347 = vsel %vm307, %v315, %v236
  %v348 = vsel %vm308, %v316, %v238
  %v349 = vsel %vm307, %v317, %v242
  %v350 = vsel %vm308, %v318, %v244
  %v351 = vsel %vm307, %v319, %v246
  %v352 = vsel %vm308, %v320, %v248
  %v353 = vsel %vm307, %v321, %v252
  %v354 = vsel %vm308, %v322, %v254
  %v355 = vsel %vm307, %v323, %v256
  %v356 = vsel %vm308, %v324, %v258
  %v357 = vsel %vm307, %v325, %v262
  %v358 = vsel %vm308, %v326, %v264
  %v359 = vsel %vm307, %v327, %v266
  %v360 = vsel %vm308, %v328, %v268
  %v361 = vsel %vm307, %v329, %v272
  %v362 = vsel %vm308, %v330, %v274
  %v363 = vsel %vm307, %v331, %v276
  %v364 = vsel %vm308, %v332, %v278
  %v365 = vsel %vm307, %v333, %v282
  %v366 = vsel %vm308, %v334, %v284
  %v367 = vsel %vm307, %v335, %v286
  %v368 = vsel %vm308, %v336, %v288
  %v369 = vsel %vm307, %v337, %v292
  %v370 = vsel %vm308, %v338, %v294
  %v371 = vsel %vm307, %v339, %v296
  %v372 = vsel %vm308, %v340, %v298
  %373 = vst [vmem:[%s3] sm:$0xff] %v341
  %374 = vst [vmem:[%s3 + $0x8] sm:$0xff] %v342
  %375 = vst [vmem:[%s3 + $0x10] sm:$0xff] %v343
  %376 = vst [vmem:[%s3 + $0x18] sm:$0xff] %v344
  %377 = vst [vmem:[%s3 + $0x20] sm:$0xff] %v345
  %378 = vst [vmem:[%s3 + $0x28] sm:$0xff] %v346
  %379 = vst [vmem:[%s3 + $0x30] sm:$0xff] %v347
  %380 = vst [vmem:[%s3 + $0x38] sm:$0xff] %v348
  %381 = vst [vmem:[%s3 + $0x40] sm:$0xff] %v349
  %382 = vst [vmem:[%s3 + $0x48] sm:$0xff] %v350
  %383 = vst [vmem:[%s3 + $0x50] sm:$0xff] %v351
  %384 = vst [vmem:[%s3 + $0x58] sm:$0xff] %v352
  %385 = vst [vmem:[%s3 + $0x60] sm:$0xff] %v353
  %386 = vst [vmem:[%s3 + $0x68] sm:$0xff] %v354
  %387 = vst [vmem:[%s3 + $0x70] sm:$0xff] %v355
  %388 = vst [vmem:[%s3 + $0x78] sm:$0xff] %v356
  %389 = vst [vmem:[%s3 + $0x80] sm:$0xff] %v357
  %390 = vst [vmem:[%s3 + $0x88] sm:$0xff] %v358
  %391 = vst [vmem:[%s3 + $0x90] sm:$0xff] %v359
  %392 = vst [vmem:[%s3 + $0x98] sm:$0xff] %v360
  %393 = vst [vmem:[%s3 + $0xa0] sm:$0xff] %v361
  %394 = vst [vmem:[%s3 + $0xa8] sm:$0xff] %v362
  %395 = vst [vmem:[%s3 + $0xb0] sm:$0xff] %v363
  %396 = vst [vmem:[%s3 + $0xb8] sm:$0xff] %v364
  %397 = vst [vmem:[%s3 + $0xc0] sm:$0xff] %v365
  %398 = vst [vmem:[%s3 + $0xc8] sm:$0xff] %v366
  %399 = vst [vmem:[%s3 + $0xd0] sm:$0xff] %v367
  %400 = vst [vmem:[%s3 + $0xd8] sm:$0xff] %v368
  %401 = vst [vmem:[%s3 + $0xe0] sm:$0xff] %v369
  %402 = vst [vmem:[%s3 + $0xe8] sm:$0xff] %v370
  %403 = vst [vmem:[%s3 + $0xf0] sm:$0xff] %v371
  %404 = vst [vmem:[%s3 + $0xf8] sm:$0xff] %v372
  // Predicated region
  $region14: #{ts_net_forward.16} parent=0 // pred_check
    _
  $region15: #{ts_net_forward.16} parent=0 // pred_check_branch
    %406 = sbr.rel (0) target = $region17
  $region16: #{ts_net_forward.16} parent=0 // pred_region
    _
  $region17: #{ts_net_forward.16} parent=0 // pred_fallthru
    _
  // Predicated region
  $region18: #{ts_net_forward.16} parent=0 // pred_check
    _
  $region19: #{ts_net_forward.16} parent=0 // pred_check_branch
    %408 = sbr.rel (0) target = $region21
  $region20: #{ts_net_forward.16} parent=0 // pred_region
    _
  $region21: #{ts_net_forward.16} parent=0 // pred_fallthru
    _

// kernel: ts_net_forward.18
$region0: #{ts_net_forward.18}
  #allocation0 [shape = 'u32[]', space=smem, size = 0x4, offset = 0x4, fixed_abs, tag = 'smem constant byte address 0x4 - core index']
  #allocation1 [shape = 'u32[144,128]{1,0:T(1,128)}', space=vmem, size = 0x12000, scoped, tag = 'internal scratch']
  %s0 = inlined_call_operand.vmem [shape: bf16[128,128], index: 0, kind: input, shape index: {}]
  %s1 = inlined_call_operand.vmem [shape: bf16[128,128], index: 1, kind: input, shape index: {}]
  %s2 = inlined_call_operand.vmem [shape: f32[1,128], index: 2, kind: input, shape index: {}]
  %s3 = inlined_call_operand.vmem [shape: f32[128,128], index: 3, kind: input, shape index: {}]
  %s4 = inlined_call_operand.vmem [shape: bf16[128,128], index: 4, kind: output, shape index: {}]
  %s5 = sld [smem:[#allocation0]]
  $region26: #{ts_net_forward.18} parent=0
    _
  %s7 = ssub.s32 1, %s5
  %s8 = scalar_select 0, %s7, %s5
  // Predicated region
  $region2: #{ts_net_forward.18} parent=0 // pred_check
    _
  $region3: #{ts_net_forward.18} parent=0 // pred_check_branch
    %10 = sbr.rel (0) target = $region5
  $region4: #{ts_net_forward.18} parent=0 // pred_region
    _
  $region5: #{ts_net_forward.18} parent=0 // pred_fallthru
    _
  // Predicated region
  $region6: #{ts_net_forward.18} parent=0 // pred_check
    _
  $region7: #{ts_net_forward.18} parent=0 // pred_check_branch
    %12 = sbr.rel (0) target = $region9
  $region8: #{ts_net_forward.18} parent=0 // pred_region
    _
  $region9: #{ts_net_forward.18} parent=0 // pred_fallthru
    _
  // Predicated region
  $region10: #{ts_net_forward.18} parent=0 // pred_check
    _
  $region11: #{ts_net_forward.18} parent=0 // pred_check_branch
    %14 = sbr.rel (0) target = $region13
  $region12: #{ts_net_forward.18} parent=0 // pred_region
    _
  $region13: #{ts_net_forward.18} parent=0 // pred_fallthru
    _
  // Predicated region
  $region14: #{ts_net_forward.18} parent=0 // pred_check
    _
  $region15: #{ts_net_forward.18} parent=0 // pred_check_branch
    %16 = sbr.rel (0) target = $region17
  $region16: #{ts_net_forward.18} parent=0 // pred_region
    _
  $region17: #{ts_net_forward.18} parent=0 // pred_fallthru
    _
  %v18 = vld [vmem:[%s0] sm:$0xf]
  %v19 = vld [vmem:[%s0 + $0x4] sm:$0xf]
  %v20 = vld [vmem:[%s0 + $0x8] sm:$0xf]
  %v21 = vld [vmem:[%s0 + $0xc] sm:$0xf]
  %v22 = vld [vmem:[%s0 + $0x10] sm:$0xf]
  %v23 = vld [vmem:[%s0 + $0x14] sm:$0xf]
  %v24 = vld [vmem:[%s0 + $0x18] sm:$0xf]
  %v25 = vld [vmem:[%s0 + $0x1c] sm:$0xf]
  %v26 = vld [vmem:[%s0 + $0x20] sm:$0xf]
  %v27 = vld [vmem:[%s0 + $0x24] sm:$0xf]
  %v28 = vld [vmem:[%s0 + $0x28] sm:$0xf]
  %v29 = vld [vmem:[%s0 + $0x2c] sm:$0xf]
  %v30 = vld [vmem:[%s0 + $0x30] sm:$0xf]
  %v31 = vld [vmem:[%s0 + $0x34] sm:$0xf]
  %v32 = vld [vmem:[%s0 + $0x38] sm:$0xf]
  %v33 = vld [vmem:[%s0 + $0x3c] sm:$0xf]
  %v34 = vld [vmem:[%s1] sm:$0xf]
  %v35 = vld [vmem:[%s1 + $0x4] sm:$0xf]
  %v36 = vld [vmem:[%s1 + $0x8] sm:$0xf]
  %v37 = vld [vmem:[%s1 + $0xc] sm:$0xf]
  %v38 = vld [vmem:[%s1 + $0x10] sm:$0xf]
  %v39 = vld [vmem:[%s1 + $0x14] sm:$0xf]
  %v40 = vld [vmem:[%s1 + $0x18] sm:$0xf]
  %v41 = vld [vmem:[%s1 + $0x1c] sm:$0xf]
  %v42 = vld [vmem:[%s1 + $0x20] sm:$0xf]
  %v43 = vld [vmem:[%s1 + $0x24] sm:$0xf]
  %v44 = vld [vmem:[%s1 + $0x28] sm:$0xf]
  %v45 = vld [vmem:[%s1 + $0x2c] sm:$0xf]
  %v46 = vld [vmem:[%s1 + $0x30] sm:$0xf]
  %v47 = vld [vmem:[%s1 + $0x34] sm:$0xf]
  %v48 = vld [vmem:[%s1 + $0x38] sm:$0xf]
  %v49 = vld [vmem:[%s1 + $0x3c] sm:$0xf]
  %v50 = vld [vmem:[%s2] sm:$0x1]
  %v52 = vlaneseq
  %v53 = vshrl.u32 %v52, 7
  %v54 = vsub.s32 0, %v53
  %v55 = vrot.slane %v50, %v54
  %v73 = vunpack.c.l.b16 %v18
  %v74 = vunpack.c.l.b16 %v19
  %v75 = vunpack.c.l.b16 %v20
  %v76 = vunpack.c.l.b16 %v21
  %v77 = vunpack.c.l.b16 %v22
  %v78 = vunpack.c.l.b16 %v23
  %v79 = vunpack.c.l.b16 %v24
  %v80 = vunpack.c.l.b16 %v25
  %v81 = vunpack.c.l.b16 %v26
  %v82 = vunpack.c.l.b16 %v27
  %v83 = vunpack.c.l.b16 %v28
  %v84 = vunpack.c.l.b16 %v29
  %v85 = vunpack.c.l.b16 %v30
  %v86 = vunpack.c.l.b16 %v31
  %v87 = vunpack.c.l.b16 %v32
  %v88 = vunpack.c.l.b16 %v33
  %v89 = vpack.c.b16 %v74, %v73
  %v90 = vpack.c.b16 %v76, %v75
  %v91 = vpack.c.b16 %v78, %v77
  %v92 = vpack.c.b16 %v80, %v79
  %v93 = vpack.c.b16 %v82, %v81
  %v94 = vpack.c.b16 %v84, %v83
  %v95 = vpack.c.b16 %v86, %v85
  %v96 = vpack.c.b16 %v88, %v87
  %v121 = vunpack.c.l.b16 %v34
  %v122 = vunpack.c.l.b16 %v35
  %v123 = vunpack.c.l.b16 %v36
  %v124 = vunpack.c.l.b16 %v37
  %v125 = vunpack.c.l.b16 %v38
  %v126 = vunpack.c.l.b16 %v39
  %v127 = vunpack.c.l.b16 %v40
  %v128 = vunpack.c.l.b16 %v41
  %v129 = vunpack.c.l.b16 %v42
  %v130 = vunpack.c.l.b16 %v43
  %v131 = vunpack.c.l.b16 %v44
  %v132 = vunpack.c.l.b16 %v45
  %v133 = vunpack.c.l.b16 %v46
  %v134 = vunpack.c.l.b16 %v47
  %v135 = vunpack.c.l.b16 %v48
  %v136 = vunpack.c.l.b16 %v49
  %v137 = vpack.c.b16 %v122, %v121
  %v138 = vpack.c.b16 %v124, %v123
  %v139 = vpack.c.b16 %v126, %v125
  %v140 = vpack.c.b16 %v128, %v127
  %v141 = vpack.c.b16 %v130, %v129
  %v142 = vpack.c.b16 %v132, %v131
  %v143 = vpack.c.b16 %v134, %v133
  %v144 = vpack.c.b16 %v136, %v135
  %153 = vmatprep.subr.bf16.mxu0 0
  %154 = vmatpush1.bf16.msra.mxu0 %v144
  %155 = vmatprep.subr.bf16.mxu0 0
  %156 = vmatpush1.bf16.msra.mxu0 %v143
  %157 = vmatprep.subr.bf16.mxu0 0
  %158 = vmatpush1.bf16.msra.mxu0 %v142
  %159 = vmatprep.subr.bf16.mxu0 0
  %160 = vmatpush1.bf16.msra.mxu0 %v141
  %161 = vmatprep.subr.bf16.mxu0 0
  %162 = vmatpush1.bf16.msra.mxu0 %v140
  %163 = vmatprep.subr.bf16.mxu0 0
  %164 = vmatpush1.bf16.msra.mxu0 %v139
  %165 = vmatprep.subr.bf16.mxu0 0
  %166 = vmatpush1.bf16.msra.mxu0 %v138
  %167 = vmatprep.subr.bf16.mxu0 0
  %168 = vmatpush1.bf16.msra.mxu0 %v137
  %169 = vmatprep.subr.bf16.mxu0 0
  %170 = vmatpush2.bf16.msra.mxu0 0
  %171 = vmatprep.subr.bf16.mxu0 0
  %172 = vmatpush2.bf16.msra.mxu0 0
  %173 = vmatprep.subr.bf16.mxu0 0
  %174 = vmatpush2.bf16.msra.mxu0 0
  %175 = vmatprep.subr.bf16.mxu0 0
  %176 = vmatpush2.bf16.msra.mxu0 0
  %177 = vmatprep.subr.bf16.mxu0 0
  %178 = vmatpush2.bf16.msra.mxu0 0
  %179 = vmatprep.subr.bf16.mxu0 0
  %180 = vmatpush2.bf16.msra.mxu0 0
  %181 = vmatprep.subr.bf16.mxu0 0
  %182 = vmatpush2.bf16.msra.mxu0 0
  %183 = vmatprep.subr.bf16.mxu0 0
  %184 = vmatpush2.bf16.msra.mxu0 0
  %185 = vmatprep.mubr.bf16.mxu0 0
  %186 = vmatmul.mubr.bf16.gmra.mxu0 %v89
  %v187 = vpop.f32.mrf.mxu0
  %v188 = vadd.f32 %v55, %v187
  %v189 = vpop.f32.mrf.mxu0
  %v190 = vpop.f32.mrf.mxu0
  %v191 = vadd.f32 %v55, %v190
  %v192 = vpop.f32.mrf.mxu0
  %193 = vmatprep.mubr.bf16.mxu0 0
  %194 = vmatmul.mubr.bf16.gmra.mxu0 %v90
  %v195 = vpop.f32.mrf.mxu0
  %v196 = vadd.f32 %v55, %v195
  %v197 = vpop.f32.mrf.mxu0
  %v198 = vpop.f32.mrf.mxu0
  %v199 = vadd.f32 %v55, %v198
  %v200 = vpop.f32.mrf.mxu0
  %201 = vmatprep.mubr.bf16.mxu0 0
  %202 = vmatmul.mubr.bf16.gmra.mxu0 %v91
  %v203 = vpop.f32.mrf.mxu0
  %v204 = vadd.f32 %v55, %v203
  %v205 = vpop.f32.mrf.mxu0
  %v206 = vpop.f32.mrf.mxu0
  %v207 = vadd.f32 %v55, %v206
  %v208 = vpop.f32.mrf.mxu0
  %209 = vmatprep.mubr.bf16.mxu0 0
  %210 = vmatmul.mubr.bf16.gmra.mxu0 %v92
  %v211 = vpop.f32.mrf.mxu0
  %v212 = vadd.f32 %v55, %v211
  %v213 = vpop.f32.mrf.mxu0
  %v214 = vpop.f32.mrf.mxu0
  %v215 = vadd.f32 %v55, %v214
  %v216 = vpop.f32.mrf.mxu0
  %217 = vmatprep.mubr.bf16.mxu0 0
  %218 = vmatmul.mubr.bf16.gmra.mxu0 %v93
  %v219 = vpop.f32.mrf.mxu0
  %v220 = vadd.f32 %v55, %v219
  %v221 = vpop.f32.mrf.mxu0
  %v222 = vpop.f32.mrf.mxu0
  %v223 = vadd.f32 %v55, %v222
  %v224 = vpop.f32.mrf.mxu0
  %225 = vmatprep.mubr.bf16.mxu0 0
  %226 = vmatmul.mubr.bf16.gmra.mxu0 %v94
  %v227 = vpop.f32.mrf.mxu0
  %v228 = vadd.f32 %v55, %v227
  %v229 = vpop.f32.mrf.mxu0
  %v230 = vpop.f32.mrf.mxu0
  %v231 = vadd.f32 %v55, %v230
  %v232 = vpop.f32.mrf.mxu0
  %233 = vmatprep.mubr.bf16.mxu0 0
  %234 = vmatmul.mubr.bf16.gmra.mxu0 %v95
  %v235 = vpop.f32.mrf.mxu0
  %v236 = vadd.f32 %v55, %v235
  %v237 = vpop.f32.mrf.mxu0
  %v238 = vpop.f32.mrf.mxu0
  %v239 = vadd.f32 %v55, %v238
  %v240 = vpop.f32.mrf.mxu0
  %241 = vmatprep.mubr.bf16.mxu0 0
  %242 = vmatmul.mubr.bf16.gmra.mxu0 %v96
  %v243 = vpop.f32.mrf.mxu0
  %v244 = vadd.f32 %v55, %v243
  %v245 = vpop.f32.mrf.mxu0
  %v246 = vpop.f32.mrf.mxu0
  %v247 = vadd.f32 %v55, %v246
  %v248 = vpop.f32.mrf.mxu0
  %249 = vdwg.mxu0
  %v250 = vld [vmem:[%s3] sm:$0xff]
  %v251 = vld [vmem:[%s3 + $0x8] sm:$0xff]
  %v252 = vld [vmem:[%s3 + $0x10] sm:$0xff]
  %v253 = vld [vmem:[%s3 + $0x18] sm:$0xff]
  %v254 = vld [vmem:[%s3 + $0x20] sm:$0xff]
  %v255 = vld [vmem:[%s3 + $0x28] sm:$0xff]
  %v256 = vld [vmem:[%s3 + $0x30] sm:$0xff]
  %v257 = vld [vmem:[%s3 + $0x38] sm:$0xff]
  %v258 = vld [vmem:[%s3 + $0x40] sm:$0xff]
  %v259 = vld [vmem:[%s3 + $0x48] sm:$0xff]
  %v260 = vld [vmem:[%s3 + $0x50] sm:$0xff]
  %v261 = vld [vmem:[%s3 + $0x58] sm:$0xff]
  %v262 = vld [vmem:[%s3 + $0x60] sm:$0xff]
  %v263 = vld [vmem:[%s3 + $0x68] sm:$0xff]
  %v264 = vld [vmem:[%s3 + $0x70] sm:$0xff]
  %v265 = vld [vmem:[%s3 + $0x78] sm:$0xff]
  %v266 = vadd.f32 %v188, %v250
  %v267 = vadd.f32 %v191, %v251
  %v268 = vadd.f32 %v196, %v252
  %v269 = vadd.f32 %v199, %v253
  %v270 = vadd.f32 %v204, %v254
  %v271 = vadd.f32 %v207, %v255
  %v272 = vadd.f32 %v212, %v256
  %v273 = vadd.f32 %v215, %v257
  %v274 = vadd.f32 %v220, %v258
  %v275 = vadd.f32 %v223, %v259
  %v276 = vadd.f32 %v228, %v260
  %v277 = vadd.f32 %v231, %v261
  %v278 = vadd.f32 %v236, %v262
  %v279 = vadd.f32 %v239, %v263
  %v280 = vadd.f32 %v244, %v264
  %v281 = vadd.f32 %v247, %v265
  %v282 = vmax.f32 %v266, 0.0
  %v283 = vmax.f32 %v267, 0.0
  %v284 = vmax.f32 %v268, 0.0
  %v285 = vmax.f32 %v269, 0.0
  %v286 = vmax.f32 %v270, 0.0
  %v287 = vmax.f32 %v271, 0.0
  %v288 = vmax.f32 %v272, 0.0
  %v289 = vmax.f32 %v273, 0.0
  %v290 = vmax.f32 %v274, 0.0
  %v291 = vmax.f32 %v275, 0.0
  %v292 = vmax.f32 %v276, 0.0
  %v293 = vmax.f32 %v277, 0.0
  %v294 = vmax.f32 %v278, 0.0
  %v295 = vmax.f32 %v279, 0.0
  %v296 = vmax.f32 %v280, 0.0
  %v297 = vmax.f32 %v281, 0.0
  %v298 = vpack.c.bf16 %v283, %v282
  %v299 = vpack.c.bf16 %v285, %v284
  %v300 = vpack.c.bf16 %v287, %v286
  %v301 = vpack.c.bf16 %v289, %v288
  %v302 = vpack.c.bf16 %v291, %v290
  %v303 = vpack.c.bf16 %v293, %v292
  %v304 = vpack.c.bf16 %v295, %v294
  %v305 = vpack.c.bf16 %v297, %v296
  %v314 = vunpack.c.l.b16 %v298
  %v315 = vunpack.c.h.b16 %v298
  %v316 = vunpack.c.l.b16 %v299
  %v317 = vunpack.c.h.b16 %v299
  %v318 = vunpack.c.l.b16 %v300
  %v319 = vunpack.c.h.b16 %v300
  %v320 = vunpack.c.l.b16 %v301
  %v321 = vunpack.c.h.b16 %v301
  %v322 = vunpack.c.l.b16 %v302
  %v323 = vunpack.c.h.b16 %v302
  %v324 = vunpack.c.l.b16 %v303
  %v325 = vunpack.c.h.b16 %v303
  %v326 = vunpack.c.l.b16 %v304
  %v327 = vunpack.c.h.b16 %v304
  %v328 = vunpack.c.l.b16 %v305
  %v329 = vunpack.c.h.b16 %v305
  %v330 = vpack.c.b16 %v314, %v314
  %v331 = vpack.c.b16 %v315, %v315
  %v332 = vpack.c.b16 %v316, %v316
  %v333 = vpack.c.b16 %v317, %v317
  %v334 = vpack.c.b16 %v318, %v318
  %v335 = vpack.c.b16 %v319, %v319
  %v336 = vpack.c.b16 %v320, %v320
  %v337 = vpack.c.b16 %v321, %v321
  %v338 = vpack.c.b16 %v322, %v322
  %v339 = vpack.c.b16 %v323, %v323
  %v340 = vpack.c.b16 %v324, %v324
  %v341 = vpack.c.b16 %v325, %v325
  %v342 = vpack.c.b16 %v326, %v326
  %v343 = vpack.c.b16 %v327, %v327
  %v344 = vpack.c.b16 %v328, %v328
  %v345 = vpack.c.b16 %v329, %v329
  %362 = vst [vmem:[%s4] sm:$0xf] %v330
  %363 = vst [vmem:[%s4 + $0x4] sm:$0xf] %v331
  %364 = vst [vmem:[%s4 + $0x8] sm:$0xf] %v332
  %365 = vst [vmem:[%s4 + $0xc] sm:$0xf] %v333
  %366 = vst [vmem:[%s4 + $0x10] sm:$0xf] %v334
  %367 = vst [vmem:[%s4 + $0x14] sm:$0xf] %v335
  %368 = vst [vmem:[%s4 + $0x18] sm:$0xf] %v336
  %369 = vst [vmem:[%s4 + $0x1c] sm:$0xf] %v337
  %370 = vst [vmem:[%s4 + $0x20] sm:$0xf] %v338
  %371 = vst [vmem:[%s4 + $0x24] sm:$0xf] %v339
  %372 = vst [vmem:[%s4 + $0x28] sm:$0xf] %v340
  %373 = vst [vmem:[%s4 + $0x2c] sm:$0xf] %v341
  %374 = vst [vmem:[%s4 + $0x30] sm:$0xf] %v342
  %375 = vst [vmem:[%s4 + $0x34] sm:$0xf] %v343
  %376 = vst [vmem:[%s4 + $0x38] sm:$0xf] %v344
  %377 = vst [vmem:[%s4 + $0x3c] sm:$0xf] %v345
  // Predicated region
  $region18: #{ts_net_forward.18} parent=0 // pred_check
    _
  $region19: #{ts_net_forward.18} parent=0 // pred_check_branch
    %379 = sbr.rel (0) target = $region21
  $region20: #{ts_net_forward.18} parent=0 // pred_region
    _
  $region21: #{ts_net_forward.18} parent=0 // pred_fallthru
    _
  // Predicated region
  $region22: #{ts_net_forward.18} parent=0 // pred_check
    _
  $region23: #{ts_net_forward.18} parent=0 // pred_check_branch
    %381 = sbr.rel (0) target = $region25
  $region24: #{ts_net_forward.18} parent=0 // pred_region
    _
  $region25: #{ts_net_forward.18} parent=0 // pred_fallthru
    _

// kernel: ts_net_forward.19
$region0: #{ts_net_forward.19}
  #allocation0 [shape = 'u32[]', space=smem, size = 0x4, offset = 0x4, fixed_abs, tag = 'smem constant byte address 0x4 - core index']
  #allocation1 [shape = 'u32[144,128]{1,0:T(1,128)}', space=vmem, size = 0x12000, scoped, tag = 'internal scratch']
  %s0 = inlined_call_operand.vmem [shape: bf16[2,8,8,128], index: 0, kind: input, shape index: {}]
  %s1 = inlined_call_operand.vmem [shape: bf16[128,128], index: 1, kind: input, shape index: {}]
  %s2 = inlined_call_operand.vmem [shape: f32[1,128], index: 2, kind: input, shape index: {}]
  %s3 = inlined_call_operand.vmem [shape: f32[2,128], index: 3, kind: output, shape index: {}]
  %s4 = sld [smem:[#allocation0]]
  $region22: #{ts_net_forward.19} parent=0
    _
  %s6 = ssub.s32 1, %s4
  %s7 = scalar_select 0, %s6, %s4
  // Predicated region
  $region2: #{ts_net_forward.19} parent=0 // pred_check
    _
  $region3: #{ts_net_forward.19} parent=0 // pred_check_branch
    %9 = sbr.rel (0) target = $region5
  $region4: #{ts_net_forward.19} parent=0 // pred_region
    _
  $region5: #{ts_net_forward.19} parent=0 // pred_fallthru
    _
  // Predicated region
  $region6: #{ts_net_forward.19} parent=0 // pred_check
    _
  $region7: #{ts_net_forward.19} parent=0 // pred_check_branch
    %11 = sbr.rel (0) target = $region9
  $region8: #{ts_net_forward.19} parent=0 // pred_region
    _
  $region9: #{ts_net_forward.19} parent=0 // pred_fallthru
    _
  // Predicated region
  $region10: #{ts_net_forward.19} parent=0 // pred_check
    _
  $region11: #{ts_net_forward.19} parent=0 // pred_check_branch
    %13 = sbr.rel (0) target = $region13
  $region12: #{ts_net_forward.19} parent=0 // pred_region
    _
  $region13: #{ts_net_forward.19} parent=0 // pred_fallthru
    _
  %v15 = vld [vmem:[%s0] sm:$0xf]
  %v16 = vld [vmem:[%s0 + $0x4] sm:$0xf]
  %v17 = vld [vmem:[%s0 + $0x8] sm:$0xf]
  %v18 = vld [vmem:[%s0 + $0xc] sm:$0xf]
  %v19 = vld [vmem:[%s0 + $0x10] sm:$0xf]
  %v20 = vld [vmem:[%s0 + $0x14] sm:$0xf]
  %v21 = vld [vmem:[%s0 + $0x18] sm:$0xf]
  %v22 = vld [vmem:[%s0 + $0x1c] sm:$0xf]
  %v23 = vld [vmem:[%s0 + $0x20] sm:$0xf]
  %v24 = vld [vmem:[%s0 + $0x24] sm:$0xf]
  %v25 = vld [vmem:[%s0 + $0x28] sm:$0xf]
  %v26 = vld [vmem:[%s0 + $0x2c] sm:$0xf]
  %v27 = vld [vmem:[%s0 + $0x30] sm:$0xf]
  %v28 = vld [vmem:[%s0 + $0x34] sm:$0xf]
  %v29 = vld [vmem:[%s0 + $0x38] sm:$0xf]
  %v30 = vld [vmem:[%s0 + $0x3c] sm:$0xf]
  %v31 = vunpack.c.l.bf16 %v15
  %v32 = vunpack.c.l.bf16 %v16
  %v33 = vunpack.c.l.bf16 %v17
  %v34 = vunpack.c.l.bf16 %v18
  %v35 = vunpack.c.l.bf16 %v19
  %v36 = vunpack.c.l.bf16 %v20
  %v37 = vunpack.c.l.bf16 %v21
  %v38 = vunpack.c.l.bf16 %v22
  %v39 = vunpack.c.l.bf16 %v23
  %v40 = vunpack.c.l.bf16 %v24
  %v41 = vunpack.c.l.bf16 %v25
  %v42 = vunpack.c.l.bf16 %v26
  %v43 = vunpack.c.l.bf16 %v27
  %v44 = vunpack.c.l.bf16 %v28
  %v45 = vunpack.c.l.bf16 %v29
  %v46 = vunpack.c.l.bf16 %v30
  %v47 = vadd.f32 %v31, %v32
  %v48 = vadd.f32 %v47, %v33
  %v49 = vadd.f32 %v48, %v34
  %v50 = vadd.f32 %v49, %v35
  %v51 = vadd.f32 %v50, %v36
  %v52 = vadd.f32 %v51, %v37
  %v53 = vadd.f32 %v52, %v38
  %v54 = vrot.slane %v53, 4
  %v55 = vadd.f32 %v53, %v54
  %v56 = vrot.slane %v55, 2
  %v57 = vadd.f32 %v55, %v56
  %v58 = vrot.slane %v57, 1
  %v59 = vadd.f32 %v57, %v58
  %v60 = vadd.f32 %v39, %v40
  %v61 = vadd.f32 %v60, %v41
  %v62 = vadd.f32 %v61, %v42
  %v63 = vadd.f32 %v62, %v43
  %v64 = vadd.f32 %v63, %v44
  %v65 = vadd.f32 %v64, %v45
  %v66 = vadd.f32 %v65, %v46
  %v67 = vrot.slane %v66, 4
  %v68 = vadd.f32 %v66, %v67
  %v69 = vrot.slane %v68, 2
  %v70 = vadd.f32 %v68, %v69
  %v71 = vrot.slane %v70, 1
  %v72 = vadd.f32 %v70, %v71
  %v73 = vmul.f32 %v59, 0.015625
  %v74 = vmul.f32 %v72, 0.015625
  %v75 = vpack.c.bf16 %v73, %v73
  %v76 = vpack.c.bf16 %v74, %v74
  %v77 = vld [vmem:[%s1] sm:$0xf]
  %v78 = vld [vmem:[%s1 + $0x4] sm:$0xf]
  %v79 = vld [vmem:[%s1 + $0x8] sm:$0xf]
  %v80 = vld [vmem:[%s1 + $0xc] sm:$0xf]
  %v81 = vld [vmem:[%s1 + $0x10] sm:$0xf]
  %v82 = vld [vmem:[%s1 + $0x14] sm:$0xf]
  %v83 = vld [vmem:[%s1 + $0x18] sm:$0xf]
  %v84 = vld [vmem:[%s1 + $0x1c] sm:$0xf]
  %v85 = vld [vmem:[%s1 + $0x20] sm:$0xf]
  %v86 = vld [vmem:[%s1 + $0x24] sm:$0xf]
  %v87 = vld [vmem:[%s1 + $0x28] sm:$0xf]
  %v88 = vld [vmem:[%s1 + $0x2c] sm:$0xf]
  %v89 = vld [vmem:[%s1 + $0x30] sm:$0xf]
  %v90 = vld [vmem:[%s1 + $0x34] sm:$0xf]
  %v91 = vld [vmem:[%s1 + $0x38] sm:$0xf]
  %v92 = vld [vmem:[%s1 + $0x3c] sm:$0xf]
  %v93 = vld [vmem:[%s2] sm:$0x1]
  %v95 = vlaneseq
  %v96 = vshrl.u32 %v95, 7
  %v97 = vsub.s32 0, %v96
  %v98 = vrot.slane %v93, %v97
  %v102 = vunpack.c.l.b16 %v75
  %v103 = vunpack.c.l.b16 %v76
  %vm104 = vcmask 1041409
  %v105 = vsel %vm104, %v103, %v102
  %v106 = vpack.c.b16 %v105, %v105
  %v124 = vunpack.c.l.b16 %v77
  %v125 = vunpack.c.l.b16 %v78
  %v126 = vunpack.c.l.b16 %v79
  %v127 = vunpack.c.l.b16 %v80
  %v128 = vunpack.c.l.b16 %v81
  %v129 = vunpack.c.l.b16 %v82
  %v130 = vunpack.c.l.b16 %v83
  %v131 = vunpack.c.l.b16 %v84
  %v132 = vunpack.c.l.b16 %v85
  %v133 = vunpack.c.l.b16 %v86
  %v134 = vunpack.c.l.b16 %v87
  %v135 = vunpack.c.l.b16 %v88
  %v136 = vunpack.c.l.b16 %v89
  %v137 = vunpack.c.l.b16 %v90
  %v138 = vunpack.c.l.b16 %v91
  %v139 = vunpack.c.l.b16 %v92
  %v140 = vpack.c.b16 %v125, %v124
  %v141 = vpack.c.b16 %v127, %v126
  %v142 = vpack.c.b16 %v129, %v128
  %v143 = vpack.c.b16 %v131, %v130
  %v144 = vpack.c.b16 %v133, %v132
  %v145 = vpack.c.b16 %v135, %v134
  %v146 = vpack.c.b16 %v137, %v136
  %v147 = vpack.c.b16 %v139, %v138
  %156 = vmatprep.subr.bf16.mxu0 0
  %157 = vmatpush1.bf16.msra.mxu0 %v147
  %158 = vmatprep.subr.bf16.mxu0 0
  %159 = vmatpush1.bf16.msra.mxu0 %v146
  %160 = vmatprep.subr.bf16.mxu0 0
  %161 = vmatpush1.bf16.msra.mxu0 %v145
  %162 = vmatprep.subr.bf16.mxu0 0
  %163 = vmatpush1.bf16.msra.mxu0 %v144
  %164 = vmatprep.subr.bf16.mxu0 0
  %165 = vmatpush1.bf16.msra.mxu0 %v143
  %166 = vmatprep.subr.bf16.mxu0 0
  %167 = vmatpush1.bf16.msra.mxu0 %v142
  %168 = vmatprep.subr.bf16.mxu0 0
  %169 = vmatpush1.bf16.msra.mxu0 %v141
  %170 = vmatprep.subr.bf16.mxu0 0
  %171 = vmatpush1.bf16.msra.mxu0 %v140
  %172 = vmatprep.subr.bf16.mxu0 0
  %173 = vmatpush2.bf16.msra.mxu0 0
  %174 = vmatprep.subr.bf16.mxu0 0
  %175 = vmatpush2.bf16.msra.mxu0 0
  %176 = vmatprep.subr.bf16.mxu0 0
  %177 = vmatpush2.bf16.msra.mxu0 0
  %178 = vmatprep.subr.bf16.mxu0 0
  %179 = vmatpush2.bf16.msra.mxu0 0
  %180 = vmatprep.subr.bf16.mxu0 0
  %181 = vmatpush2.bf16.msra.mxu0 0
  %182 = vmatprep.subr.bf16.mxu0 0
  %183 = vmatpush2.bf16.msra.mxu0 0
  %184 = vmatprep.subr.bf16.mxu0 0
  %185 = vmatpush2.bf16.msra.mxu0 0
  %186 = vmatprep.subr.bf16.mxu0 0
  %187 = vmatpush2.bf16.msra.mxu0 0
  %188 = vmatprep.mubr.bf16.mxu0 0
  %189 = vmatmul.mubr.bf16.gmra.mxu0 %v106
  %v190 = vpop.f32.mrf.mxu0
  %v191 = vadd.f32 %v98, %v190
  %v192 = vpop.f32.mrf.mxu0
  %v193 = vpop.f32.mrf.mxu0
  %v194 = vpop.f32.mrf.mxu0
  %195 = vdwg.mxu0
  %196 = vst [vmem:[%s3] sm:$0x3] %v191
  // Predicated region
  $region14: #{ts_net_forward.19} parent=0 // pred_check
    _
  $region15: #{ts_net_forward.19} parent=0 // pred_check_branch
    %198 = sbr.rel (0) target = $region17
  $region16: #{ts_net_forward.19} parent=0 // pred_region
    _
  $region17: #{ts_net_forward.19} parent=0 // pred_fallthru
    _
  // Predicated region
  $region18: #{ts_net_forward.19} parent=0 // pred_check
    _
  $region19: #{ts_net_forward.19} parent=0 // pred_check_branch
    %200 = sbr.rel (0) target = $region21
  $region20: #{ts_net_forward.19} parent=0 // pred_region
    _
  $region21: #{ts_net_forward.19} parent=0 // pred_fallthru
    _

// kernel: ts_net_forward.15
$region0: #{ts_net_forward.15}
  #allocation0 [shape = 'u32[]', space=smem, size = 0x4, offset = 0x4, fixed_abs, tag = 'smem constant byte address 0x4 - core index']
  #allocation1 [shape = 'u32[144,128]{1,0:T(1,128)}', space=vmem, size = 0x12000, scoped, tag = 'internal scratch']
  #allocation2 [shape = 'f32[128,128]{1,0:T(8,128)}', space=vmem, size = 0x10000, scoped, tag = 'scratch operand']
  %s0 = inlined_call_operand.vmem [shape: bf16[2,4,9,9,128], index: 0, kind: input, shape index: {}]
  %s1 = inlined_call_operand.vmem [shape: bf16[3,3,128,128], index: 1, kind: input, shape index: {}]
  %s2 = inlined_call_operand.vmem [shape: f32[1,128], index: 2, kind: input, shape index: {}]
  %s3 = inlined_call_operand.vmem [shape: bf16[2,8,8,128], index: 3, kind: output, shape index: {}]
  %s4 = sld [smem:[#allocation0]]
  $region22: #{ts_net_forward.15} parent=0
    _
  %s6 = ssub.s32 1, %s4
  %s7 = scalar_select 0, %s6, %s4
  // Predicated region
  $region2: #{ts_net_forward.15} parent=0 // pred_check
    _
  $region3: #{ts_net_forward.15} parent=0 // pred_check_branch
    %9 = sbr.rel (0) target = $region5
  $region4: #{ts_net_forward.15} parent=0 // pred_region
    _
  $region5: #{ts_net_forward.15} parent=0 // pred_fallthru
    _
  // Predicated region
  $region6: #{ts_net_forward.15} parent=0 // pred_check
    _
  $region7: #{ts_net_forward.15} parent=0 // pred_check_branch
    %11 = sbr.rel (0) target = $region9
  $region8: #{ts_net_forward.15} parent=0 // pred_region
    _
  $region9: #{ts_net_forward.15} parent=0 // pred_fallthru
    _
  // Predicated region
  $region10: #{ts_net_forward.15} parent=0 // pred_check
    _
  $region11: #{ts_net_forward.15} parent=0 // pred_check_branch
    %13 = sbr.rel (0) target = $region13
  $region12: #{ts_net_forward.15} parent=0 // pred_region
    _
  $region13: #{ts_net_forward.15} parent=0 // pred_fallthru
    _
  %15 = vst [vmem:[#allocation2] sm:$0xff] 0.0
  %16 = vst [vmem:[#allocation2 + $0x8] sm:$0xff] 0.0
  %17 = vst [vmem:[#allocation2 + $0x10] sm:$0xff] 0.0
  %18 = vst [vmem:[#allocation2 + $0x18] sm:$0xff] 0.0
  %19 = vst [vmem:[#allocation2 + $0x20] sm:$0xff] 0.0
  %20 = vst [vmem:[#allocation2 + $0x28] sm:$0xff] 0.0
  %21 = vst [vmem:[#allocation2 + $0x30] sm:$0xff] 0.0
  %22 = vst [vmem:[#allocation2 + $0x38] sm:$0xff] 0.0
  %23 = vst [vmem:[#allocation2 + $0x40] sm:$0xff] 0.0
  %24 = vst [vmem:[#allocation2 + $0x48] sm:$0xff] 0.0
  %25 = vst [vmem:[#allocation2 + $0x50] sm:$0xff] 0.0
  %26 = vst [vmem:[#allocation2 + $0x58] sm:$0xff] 0.0
  %27 = vst [vmem:[#allocation2 + $0x60] sm:$0xff] 0.0
  %28 = vst [vmem:[#allocation2 + $0x68] sm:$0xff] 0.0
  %29 = vst [vmem:[#allocation2 + $0x70] sm:$0xff] 0.0
  %30 = vst [vmem:[#allocation2 + $0x78] sm:$0xff] 0.0
  %v31 = vld [vmem:[%s0] sm:$0xf]
  %v32 = vld [vmem:[%s0 + $0x8] sm:$0xf]
  %v33 = vld [vmem:[%s0 + $0x10] sm:$0xf]
  %v34 = vld [vmem:[%s0 + $0x18] sm:$0xf]
  %v35 = vld [vmem:[%s0 + $0x20] sm:$0xf]
  %v36 = vld [vmem:[%s0 + $0x28] sm:$0xf]
  %v37 = vld [vmem:[%s0 + $0x30] sm:$0xf]
  %v38 = vld [vmem:[%s0 + $0x38] sm:$0xf]
  %v39 = vld [vmem:[%s0 + $0x120] sm:$0xf]
  %v40 = vld [vmem:[%s0 + $0x128] sm:$0xf]
  %v41 = vld [vmem:[%s0 + $0x130] sm:$0xf]
  %v42 = vld [vmem:[%s0 + $0x138] sm:$0xf]
  %v43 = vld [vmem:[%s0 + $0x140] sm:$0xf]
  %v44 = vld [vmem:[%s0 + $0x148] sm:$0xf]
  %v45 = vld [vmem:[%s0 + $0x150] sm:$0xf]
  %v46 = vld [vmem:[%s0 + $0x158] sm:$0xf]
  %v47 = vld [vmem:[#allocation2] sm:$0xff]
  %v48 = vld [vmem:[#allocation2 + $0x8] sm:$0xff]
  %v49 = vld [vmem:[#allocation2 + $0x10] sm:$0xff]
  %v50 = vld [vmem:[#allocation2 + $0x18] sm:$0xff]
  %v51 = vld [vmem:[#allocation2 + $0x20] sm:$0xff]
  %v52 = vld [vmem:[#allocation2 + $0x28] sm:$0xff]
  %v53 = vld [vmem:[#allocation2 + $0x30] sm:$0xff]
  %v54 = vld [vmem:[#allocation2 + $0x38] sm:$0xff]
  %v55 = vld [vmem:[#allocation2 + $0x40] sm:$0xff]
  %v56 = vld [vmem:[#allocation2 + $0x48] sm:$0xff]
  %v57 = vld [vmem:[#allocation2 + $0x50] sm:$0xff]
  %v58 = vld [vmem:[#allocation2 + $0x58] sm:$0xff]
  %v59 = vld [vmem:[#allocation2 + $0x60] sm:$0xff]
  %v60 = vld [vmem:[#allocation2 + $0x68] sm:$0xff]
  %v61 = vld [vmem:[#allocation2 + $0x70] sm:$0xff]
  %v62 = vld [vmem:[#allocation2 + $0x78] sm:$0xff]
  %v63 = vld [vmem:[%s1] sm:$0xf]
  %v64 = vld [vmem:[%s1 + $0x4] sm:$0xf]
  %v65 = vld [vmem:[%s1 + $0x8] sm:$0xf]
  %v66 = vld [vmem:[%s1 + $0xc] sm:$0xf]
  %v67 = vld [vmem:[%s1 + $0x10] sm:$0xf]
  %v68 = vld [vmem:[%s1 + $0x14] sm:$0xf]
  %v69 = vld [vmem:[%s1 + $0x18] sm:$0xf]
  %v70 = vld [vmem:[%s1 + $0x1c] sm:$0xf]
  %v71 = vld [vmem:[%s1 + $0x20] sm:$0xf]
  %v72 = vld [vmem:[%s1 + $0x24] sm:$0xf]
  %v73 = vld [vmem:[%s1 + $0x28] sm:$0xf]
  %v74 = vld [vmem:[%s1 + $0x2c] sm:$0xf]
  %v75 = vld [vmem:[%s1 + $0x30] sm:$0xf]
  %v76 = vld [vmem:[%s1 + $0x34] sm:$0xf]
  %v77 = vld [vmem:[%s1 + $0x38] sm:$0xf]
  %v78 = vld [vmem:[%s1 + $0x3c] sm:$0xf]
  %v95 = vunpack.c.l.b16 %v31
  %v96 = vunpack.c.l.b16 %v32
  %v97 = vunpack.c.l.b16 %v33
  %v98 = vunpack.c.l.b16 %v34
  %v99 = vunpack.c.l.b16 %v35
  %v100 = vunpack.c.l.b16 %v36
  %v101 = vunpack.c.l.b16 %v37
  %v102 = vunpack.c.l.b16 %v38
  %v103 = vunpack.c.l.b16 %v39
  %v104 = vunpack.c.l.b16 %v40
  %v105 = vunpack.c.l.b16 %v41
  %v106 = vunpack.c.l.b16 %v42
  %v107 = vunpack.c.l.b16 %v43
  %v108 = vunpack.c.l.b16 %v44
  %v109 = vunpack.c.l.b16 %v45
  %v110 = vunpack.c.l.b16 %v46
  %v111 = vpack.c.b16 %v96, %v95
  %v112 = vpack.c.b16 %v98, %v97
  %v113 = vpack.c.b16 %v100, %v99
  %v114 = vpack.c.b16 %v102, %v101
  %v115 = vpack.c.b16 %v104, %v103
  %v116 = vpack.c.b16 %v106, %v105
  %v117 = vpack.c.b16 %v108, %v107
  %v118 = vpack.c.b16 %v110, %v109
  %v143 = vunpack.c.l.b16 %v63
  %v144 = vunpack.c.l.b16 %v64
  %v145 = vunpack.c.l.b16 %v65
  %v146 = vunpack.c.l.b16 %v66
  %v147 = vunpack.c.l.b16 %v67
  %v148 = vunpack.c.l.b16 %v68
  %v149 = vunpack.c.l.b16 %v69
  %v150 = vunpack.c.l.b16 %v70
  %v151 = vunpack.c.l.b16 %v71
  %v152 = vunpack.c.l.b16 %v72
  %v153 = vunpack.c.l.b16 %v73
  %v154 = vunpack.c.l.b16 %v74
  %v155 = vunpack.c.l.b16 %v75
  %v156 = vunpack.c.l.b16 %v76
  %v157 = vunpack.c.l.b16 %v77
  %v158 = vunpack.c.l.b16 %v78
  %v159 = vpack.c.b16 %v144, %v143
  %v160 = vpack.c.b16 %v146, %v145
  %v161 = vpack.c.b16 %v148, %v147
  %v162 = vpack.c.b16 %v150, %v149
  %v163 = vpack.c.b16 %v152, %v151
  %v164 = vpack.c.b16 %v154, %v153
  %v165 = vpack.c.b16 %v156, %v155
  %v166 = vpack.c.b16 %v158, %v157
  %175 = vmatprep.subr.bf16.mxu0 0
  %176 = vmatpush1.bf16.msra.mxu0 %v166
  %177 = vmatprep.subr.bf16.mxu0 0
  %178 = vmatpush1.bf16.msra.mxu0 %v165
  %179 = vmatprep.subr.bf16.mxu0 0
  %180 = vmatpush1.bf16.msra.mxu0 %v164
  %181 = vmatprep.subr.bf16.mxu0 0
  %182 = vmatpush1.bf16.msra.mxu0 %v163
  %183 = vmatprep.subr.bf16.mxu0 0
  %184 = vmatpush1.bf16.msra.mxu0 %v162
  %185 = vmatprep.subr.bf16.mxu0 0
  %186 = vmatpush1.bf16.msra.mxu0 %v161
  %187 = vmatprep.subr.bf16.mxu0 0
  %188 = vmatpush1.bf16.msra.mxu0 %v160
  %189 = vmatprep.subr.bf16.mxu0 0
  %190 = vmatpush1.bf16.msra.mxu0 %v159
  %191 = vmatprep.subr.bf16.mxu0 0
  %192 = vmatpush2.bf16.msra.mxu0 0
  %193 = vmatprep.subr.bf16.mxu0 0
  %194 = vmatpush2.bf16.msra.mxu0 0
  %195 = vmatprep.subr.bf16.mxu0 0
  %196 = vmatpush2.bf16.msra.mxu0 0
  %197 = vmatprep.subr.bf16.mxu0 0
  %198 = vmatpush2.bf16.msra.mxu0 0
  %199 = vmatprep.subr.bf16.mxu0 0
  %200 = vmatpush2.bf16.msra.mxu0 0
  %201 = vmatprep.subr.bf16.mxu0 0
  %202 = vmatpush2.bf16.msra.mxu0 0
  %203 = vmatprep.subr.bf16.mxu0 0
  %204 = vmatpush2.bf16.msra.mxu0 0
  %205 = vmatprep.subr.bf16.mxu0 0
  %206 = vmatpush2.bf16.msra.mxu0 0
  %207 = vmatprep.mubr.bf16.mxu0 0
  %208 = vmatmul.mubr.bf16.gmra.mxu0 %v111
  %v209 = vpop.f32.mrf.mxu0
  %v210 = vadd.f32 0.0, %v209
  %v211 = vpop.f32.mrf.mxu0
  %v212 = vpop.f32.mrf.mxu0
  %v213 = vadd.f32 0.0, %v212
  %v214 = vpop.f32.mrf.mxu0
  %215 = vmatprep.mubr.bf16.mxu0 0
  %216 = vmatmul.mubr.bf16.gmra.mxu0 %v112
  %v217 = vpop.f32.mrf.mxu0
  %v218 = vadd.f32 0.0, %v217
  %v219 = vpop.f32.mrf.mxu0
  %v220 = vpop.f32.mrf.mxu0
  %v221 = vadd.f32 0.0, %v220
  %v222 = vpop.f32.mrf.mxu0
  %223 = vmatprep.mubr.bf16.mxu0 0
  %224 = vmatmul.mubr.bf16.gmra.mxu0 %v113
  %v225 = vpop.f32.mrf.mxu0
  %v226 = vadd.f32 0.0, %v225
  %v227 = vpop.f32.mrf.mxu0
  %v228 = vpop.f32.mrf.mxu0
  %v229 = vadd.f32 0.0, %v228
  %v230 = vpop.f32.mrf.mxu0
  %231 = vmatprep.mubr.bf16.mxu0 0
  %232 = vmatmul.mubr.bf16.gmra.mxu0 %v114
  %v233 = vpop.f32.mrf.mxu0
  %v234 = vadd.f32 0.0, %v233
  %v235 = vpop.f32.mrf.mxu0
  %v236 = vpop.f32.mrf.mxu0
  %v237 = vadd.f32 0.0, %v236
  %v238 = vpop.f32.mrf.mxu0
  %239 = vmatprep.mubr.bf16.mxu0 0
  %240 = vmatmul.mubr.bf16.gmra.mxu0 %v115
  %v241 = vpop.f32.mrf.mxu0
  %v242 = vadd.f32 0.0, %v241
  %v243 = vpop.f32.mrf.mxu0
  %v244 = vpop.f32.mrf.mxu0
  %v245 = vadd.f32 0.0, %v244
  %v246 = vpop.f32.mrf.mxu0
  %247 = vmatprep.mubr.bf16.mxu0 0
  %248 = vmatmul.mubr.bf16.gmra.mxu0 %v116
  %v249 = vpop.f32.mrf.mxu0
  %v250 = vadd.f32 0.0, %v249
  %v251 = vpop.f32.mrf.mxu0
  %v252 = vpop.f32.mrf.mxu0
  %v253 = vadd.f32 0.0, %v252
  %v254 = vpop.f32.mrf.mxu0
  %255 = vmatprep.mubr.bf16.mxu0 0
  %256 = vmatmul.mubr.bf16.gmra.mxu0 %v117
  %v257 = vpop.f32.mrf.mxu0
  %v258 = vadd.f32 0.0, %v257
  %v259 = vpop.f32.mrf.mxu0
  %v260 = vpop.f32.mrf.mxu0
  %v261 = vadd.f32 0.0, %v260
  %v262 = vpop.f32.mrf.mxu0
  %263 = vmatprep.mubr.bf16.mxu0 0
  %264 = vmatmul.mubr.bf16.gmra.mxu0 %v118
  %v265 = vpop.f32.mrf.mxu0
  %v266 = vadd.f32 0.0, %v265
  %v267 = vpop.f32.mrf.mxu0
  %v268 = vpop.f32.mrf.mxu0
  %v269 = vadd.f32 0.0, %v268
  %v270 = vpop.f32.mrf.mxu0
  %271 = vdwg.mxu0
  %v272 = vadd.f32 %v47, %v210
  %v273 = vadd.f32 %v48, %v213
  %v274 = vadd.f32 %v49, %v218
  %v275 = vadd.f32 %v50, %v221
  %v276 = vadd.f32 %v51, %v226
  %v277 = vadd.f32 %v52, %v229
  %v278 = vadd.f32 %v53, %v234
  %v279 = vadd.f32 %v54, %v237
  %v280 = vadd.f32 %v55, %v242
  %v281 = vadd.f32 %v56, %v245
  %v282 = vadd.f32 %v57, %v250
  %v283 = vadd.f32 %v58, %v253
  %v284 = vadd.f32 %v59, %v258
  %v285 = vadd.f32 %v60, %v261
  %v286 = vadd.f32 %v61, %v266
  %v287 = vadd.f32 %v62, %v269
  %288 = vst [vmem:[#allocation2] sm:$0xff] %v272
  %289 = vst [vmem:[#allocation2 + $0x8] sm:$0xff] %v273
  %290 = vst [vmem:[#allocation2 + $0x10] sm:$0xff] %v274
  %291 = vst [vmem:[#allocation2 + $0x18] sm:$0xff] %v275
  %292 = vst [vmem:[#allocation2 + $0x20] sm:$0xff] %v276
  %293 = vst [vmem:[#allocation2 + $0x28] sm:$0xff] %v277
  %294 = vst [vmem:[#allocation2 + $0x30] sm:$0xff] %v278
  %295 = vst [vmem:[#allocation2 + $0x38] sm:$0xff] %v279
  %296 = vst [vmem:[#allocation2 + $0x40] sm:$0xff] %v280
  %297 = vst [vmem:[#allocation2 + $0x48] sm:$0xff] %v281
  %298 = vst [vmem:[#allocation2 + $0x50] sm:$0xff] %v282
  %299 = vst [vmem:[#allocation2 + $0x58] sm:$0xff] %v283
  %300 = vst [vmem:[#allocation2 + $0x60] sm:$0xff] %v284
  %301 = vst [vmem:[#allocation2 + $0x68] sm:$0xff] %v285
  %302 = vst [vmem:[#allocation2 + $0x70] sm:$0xff] %v286
  %303 = vst [vmem:[#allocation2 + $0x78] sm:$0xff] %v287
  %s304 = scalar_lea.vmem %s0, 72
  %v305 = vld [vmem:[%s304] sm:$0xf]
  %v306 = vld [vmem:[%s304 + $0x8] sm:$0xf]
  %v307 = vld [vmem:[%s304 + $0x10] sm:$0xf]
  %v308 = vld [vmem:[%s304 + $0x18] sm:$0xf]
  %v309 = vld [vmem:[%s304 + $0x20] sm:$0xf]
  %v310 = vld [vmem:[%s304 + $0x28] sm:$0xf]
  %v311 = vld [vmem:[%s304 + $0x30] sm:$0xf]
  %v312 = vld [vmem:[%s304 + $0x38] sm:$0xf]
  %v313 = vld [vmem:[%s304 + $0x120] sm:$0xf]
  %v314 = vld [vmem:[%s304 + $0x128] sm:$0xf]
  %v315 = vld [vmem:[%s304 + $0x130] sm:$0xf]
  %v316 = vld [vmem:[%s304 + $0x138] sm:$0xf]
  %v317 = vld [vmem:[%s304 + $0x140] sm:$0xf]
  %v318 = vld [vmem:[%s304 + $0x148] sm:$0xf]
  %v319 = vld [vmem:[%s304 + $0x150] sm:$0xf]
  %v320 = vld [vmem:[%s304 + $0x158] sm:$0xf]
  %v321 = vld [vmem:[#allocation2] sm:$0xff]
  %v322 = vld [vmem:[#allocation2 + $0x8] sm:$0xff]
  %v323 = vld [vmem:[#allocation2 + $0x10] sm:$0xff]
  %v324 = vld [vmem:[#allocation2 + $0x18] sm:$0xff]
  %v325 = vld [vmem:[#allocation2 + $0x20] sm:$0xff]
  %v326 = vld [vmem:[#allocation2 + $0x28] sm:$0xff]
  %v327 = vld [vmem:[#allocation2 + $0x30] sm:$0xff]
  %v328 = vld [vmem:[#allocation2 + $0x38] sm:$0xff]
  %v329 = vld [vmem:[#allocation2 + $0x40] sm:$0xff]
  %v330 = vld [vmem:[#allocation2 + $0x48] sm:$0xff]
  %v331 = vld [vmem:[#allocation2 + $0x50] sm:$0xff]
  %v332 = vld [vmem:[#allocation2 + $0x58] sm:$0xff]
  %v333 = vld [vmem:[#allocation2 + $0x60] sm:$0xff]
  %v334 = vld [vmem:[#allocation2 + $0x68] sm:$0xff]
  %v335 = vld [vmem:[#allocation2 + $0x70] sm:$0xff]
  %v336 = vld [vmem:[#allocation2 + $0x78] sm:$0xff]
  %s337 = scalar_lea.vmem %s1, 64
  %v338 = vld [vmem:[%s337] sm:$0xf]
  %v339 = vld [vmem:[%s337 + $0x4] sm:$0xf]
  %v340 = vld [vmem:[%s337 + $0x8] sm:$0xf]
  %v341 = vld [vmem:[%s337 + $0xc] sm:$0xf]
  %v342 = vld [vmem:[%s337 + $0x10] sm:$0xf]
  %v343 = vld [vmem:[%s337 + $0x14] sm:$0xf]
  %v344 = vld [vmem:[%s337 + $0x18] sm:$0xf]
  %v345 = vld [vmem:[%s337 + $0x1c] sm:$0xf]
  %v346 = vld [vmem:[%s337 + $0x20] sm:$0xf]
  %v347 = vld [vmem:[%s337 + $0x24] sm:$0xf]
  %v348 = vld [vmem:[%s337 + $0x28] sm:$0xf]
  %v349 = vld [vmem:[%s337 + $0x2c] sm:$0xf]
  %v350 = vld [vmem:[%s337 + $0x30] sm:$0xf]
  %v351 = vld [vmem:[%s337 + $0x34] sm:$0xf]
  %v352 = vld [vmem:[%s337 + $0x38] sm:$0xf]
  %v353 = vld [vmem:[%s337 + $0x3c] sm:$0xf]
  %v370 = vunpack.c.l.b16 %v305
  %v371 = vunpack.c.l.b16 %v306
  %v372 = vunpack.c.l.b16 %v307
  %v373 = vunpack.c.l.b16 %v308
  %v374 = vunpack.c.l.b16 %v309
  %v375 = vunpack.c.l.b16 %v310
  %v376 = vunpack.c.l.b16 %v311
  %v377 = vunpack.c.l.b16 %v312
  %v378 = vunpack.c.l.b16 %v313
  %v379 = vunpack.c.l.b16 %v314
  %v380 = vunpack.c.l.b16 %v315
  %v381 = vunpack.c.l.b16 %v316
  %v382 = vunpack.c.l.b16 %v317
  %v383 = vunpack.c.l.b16 %v318
  %v384 = vunpack.c.l.b16 %v319
  %v385 = vunpack.c.l.b16 %v320
  %v386 = vpack.c.b16 %v371, %v370
  %v387 = vpack.c.b16 %v373, %v372
  %v388 = vpack.c.b16 %v375, %v374
  %v389 = vpack.c.b16 %v377, %v376
  %v390 = vpack.c.b16 %v379, %v378
  %v391 = vpack.c.b16 %v381, %v380
  %v392 = vpack.c.b16 %v383, %v382
  %v393 = vpack.c.b16 %v385, %v384
  %v418 = vunpack.c.l.b16 %v338
  %v419 = vunpack.c.l.b16 %v339
  %v420 = vunpack.c.l.b16 %v340
  %v421 = vunpack.c.l.b16 %v341
  %v422 = vunpack.c.l.b16 %v342
  %v423 = vunpack.c.l.b16 %v343
  %v424 = vunpack.c.l.b16 %v344
  %v425 = vunpack.c.l.b16 %v345
  %v426 = vunpack.c.l.b16 %v346
  %v427 = vunpack.c.l.b16 %v347
  %v428 = vunpack.c.l.b16 %v348
  %v429 = vunpack.c.l.b16 %v349
  %v430 = vunpack.c.l.b16 %v350
  %v431 = vunpack.c.l.b16 %v351
  %v432 = vunpack.c.l.b16 %v352
  %v433 = vunpack.c.l.b16 %v353
  %v434 = vpack.c.b16 %v419, %v418
  %v435 = vpack.c.b16 %v421, %v420
  %v436 = vpack.c.b16 %v423, %v422
  %v437 = vpack.c.b16 %v425, %v424
  %v438 = vpack.c.b16 %v427, %v426
  %v439 = vpack.c.b16 %v429, %v428
  %v440 = vpack.c.b16 %v431, %v430
  %v441 = vpack.c.b16 %v433, %v432
  %450 = vmatprep.subr.bf16.mxu0 0
  %451 = vmatpush1.bf16.msra.mxu0 %v441
  %452 = vmatprep.subr.bf16.mxu0 0
  %453 = vmatpush1.bf16.msra.mxu0 %v440
  %454 = vmatprep.subr.bf16.mxu0 0
  %455 = vmatpush1.bf16.msra.mxu0 %v439
  %456 = vmatprep.subr.bf16.mxu0 0
  %457 = vmatpush1.bf16.msra.mxu0 %v438
  %458 = vmatprep.subr.bf16.mxu0 0
  %459 = vmatpush1.bf16.msra.mxu0 %v437
  %460 = vmatprep.subr.bf16.mxu0 0
  %461 = vmatpush1.bf16.msra.mxu0 %v436
  %462 = vmatprep.subr.bf16.mxu0 0
  %463 = vmatpush1.bf16.msra.mxu0 %v435
  %464 = vmatprep.subr.bf16.mxu0 0
  %465 = vmatpush1.bf16.msra.mxu0 %v434
  %466 = vmatprep.subr.bf16.mxu0 0
  %467 = vmatpush2.bf16.msra.mxu0 0
  %468 = vmatprep.subr.bf16.mxu0 0
  %469 = vmatpush2.bf16.msra.mxu0 0
  %470 = vmatprep.subr.bf16.mxu0 0
  %471 = vmatpush2.bf16.msra.mxu0 0
  %472 = vmatprep.subr.bf16.mxu0 0
  %473 = vmatpush2.bf16.msra.mxu0 0
  %474 = vmatprep.subr.bf16.mxu0 0
  %475 = vmatpush2.bf16.msra.mxu0 0
  %476 = vmatprep.subr.bf16.mxu0 0
  %477 = vmatpush2.bf16.msra.mxu0 0
  %478 = vmatprep.subr.bf16.mxu0 0
  %479 = vmatpush2.bf16.msra.mxu0 0
  %480 = vmatprep.subr.bf16.mxu0 0
  %481 = vmatpush2.bf16.msra.mxu0 0
  %482 = vmatprep.mubr.bf16.mxu0 0
  %483 = vmatmul.mubr.bf16.gmra.mxu0 %v386
  %v484 = vpop.f32.mrf.mxu0
  %v485 = vadd.f32 0.0, %v484
  %v486 = vpop.f32.mrf.mxu0
  %v487 = vpop.f32.mrf.mxu0
  %v488 = vadd.f32 0.0, %v487
  %v489 = vpop.f32.mrf.mxu0
  %490 = vmatprep.mubr.bf16.mxu0 0
  %491 = vmatmul.mubr.bf16.gmra.mxu0 %v387
  %v492 = vpop.f32.mrf.mxu0
  %v493 = vadd.f32 0.0, %v492
  %v494 = vpop.f32.mrf.mxu0
  %v495 = vpop.f32.mrf.mxu0
  %v496 = vadd.f32 0.0, %v495
  %v497 = vpop.f32.mrf.mxu0
  %498 = vmatprep.mubr.bf16.mxu0 0
  %499 = vmatmul.mubr.bf16.gmra.mxu0 %v388
  %v500 = vpop.f32.mrf.mxu0
  %v501 = vadd.f32 0.0, %v500
  %v502 = vpop.f32.mrf.mxu0
  %v503 = vpop.f32.mrf.mxu0
  %v504 = vadd.f32 0.0, %v503
  %v505 = vpop.f32.mrf.mxu0
  %506 = vmatprep.mubr.bf16.mxu0 0
  %507 = vmatmul.mubr.bf16.gmra.mxu0 %v389
  %v508 = vpop.f32.mrf.mxu0
  %v509 = vadd.f32 0.0, %v508
  %v510 = vpop.f32.mrf.mxu0
  %v511 = vpop.f32.mrf.mxu0
  %v512 = vadd.f32 0.0, %v511
  %v513 = vpop.f32.mrf.mxu0
  %514 = vmatprep.mubr.bf16.mxu0 0
  %515 = vmatmul.mubr.bf16.gmra.mxu0 %v390
  %v516 = vpop.f32.mrf.mxu0
  %v517 = vadd.f32 0.0, %v516
  %v518 = vpop.f32.mrf.mxu0
  %v519 = vpop.f32.mrf.mxu0
  %v520 = vadd.f32 0.0, %v519
  %v521 = vpop.f32.mrf.mxu0
  %522 = vmatprep.mubr.bf16.mxu0 0
  %523 = vmatmul.mubr.bf16.gmra.mxu0 %v391
  %v524 = vpop.f32.mrf.mxu0
  %v525 = vadd.f32 0.0, %v524
  %v526 = vpop.f32.mrf.mxu0
  %v527 = vpop.f32.mrf.mxu0
  %v528 = vadd.f32 0.0, %v527
  %v529 = vpop.f32.mrf.mxu0
  %530 = vmatprep.mubr.bf16.mxu0 0
  %531 = vmatmul.mubr.bf16.gmra.mxu0 %v392
  %v532 = vpop.f32.mrf.mxu0
  %v533 = vadd.f32 0.0, %v532
  %v534 = vpop.f32.mrf.mxu0
  %v535 = vpop.f32.mrf.mxu0
  %v536 = vadd.f32 0.0, %v535
  %v537 = vpop.f32.mrf.mxu0
  %538 = vmatprep.mubr.bf16.mxu0 0
  %539 = vmatmul.mubr.bf16.gmra.mxu0 %v393
  %v540 = vpop.f32.mrf.mxu0
  %v541 = vadd.f32 0.0, %v540
  %v542 = vpop.f32.mrf.mxu0
  %v543 = vpop.f32.mrf.mxu0
  %v544 = vadd.f32 0.0, %v543
  %v545 = vpop.f32.mrf.mxu0
  %546 = vdwg.mxu0
  %v547 = vadd.f32 %v321, %v485
  %v548 = vadd.f32 %v322, %v488
  %v549 = vadd.f32 %v323, %v493
  %v550 = vadd.f32 %v324, %v496
  %v551 = vadd.f32 %v325, %v501
  %v552 = vadd.f32 %v326, %v504
  %v553 = vadd.f32 %v327, %v509
  %v554 = vadd.f32 %v328, %v512
  %v555 = vadd.f32 %v329, %v517
  %v556 = vadd.f32 %v330, %v520
  %v557 = vadd.f32 %v331, %v525
  %v558 = vadd.f32 %v332, %v528
  %v559 = vadd.f32 %v333, %v533
  %v560 = vadd.f32 %v334, %v536
  %v561 = vadd.f32 %v335, %v541
  %v562 = vadd.f32 %v336, %v544
  %563 = vst [vmem:[#allocation2] sm:$0xff] %v547
  %564 = vst [vmem:[#allocation2 + $0x8] sm:$0xff] %v548
  %565 = vst [vmem:[#allocation2 + $0x10] sm:$0xff] %v549
  %566 = vst [vmem:[#allocation2 + $0x18] sm:$0xff] %v550
  %567 = vst [vmem:[#allocation2 + $0x20] sm:$0xff] %v551
  %568 = vst [vmem:[#allocation2 + $0x28] sm:$0xff] %v552
  %569 = vst [vmem:[#allocation2 + $0x30] sm:$0xff] %v553
  %570 = vst [vmem:[#allocation2 + $0x38] sm:$0xff] %v554
  %571 = vst [vmem:[#allocation2 + $0x40] sm:$0xff] %v555
  %572 = vst [vmem:[#allocation2 + $0x48] sm:$0xff] %v556
  %573 = vst [vmem:[#allocation2 + $0x50] sm:$0xff] %v557
  %574 = vst [vmem:[#allocation2 + $0x58] sm:$0xff] %v558
  %575 = vst [vmem:[#allocation2 + $0x60] sm:$0xff] %v559
  %576 = vst [vmem:[#allocation2 + $0x68] sm:$0xff] %v560
  %577 = vst [vmem:[#allocation2 + $0x70] sm:$0xff] %v561
  %578 = vst [vmem:[#allocation2 + $0x78] sm:$0xff] %v562
  %v579 = vld [vmem:[%s0] sm:$0xf]
  %v580 = vld [vmem:[%s0 + $0x4] sm:$0x1]
  %v581 = vld [vmem:[%s0 + $0x8] sm:$0xf]
  %v582 = vld [vmem:[%s0 + $0xc] sm:$0x1]
  %v583 = vld [vmem:[%s0 + $0x10] sm:$0xf]
  %v584 = vld [vmem:[%s0 + $0x14] sm:$0x1]
  %v585 = vld [vmem:[%s0 + $0x18] sm:$0xf]
  %v586 = vld [vmem:[%s0 + $0x1c] sm:$0x1]
  %v587 = vld [vmem:[%s0 + $0x20] sm:$0xf]
  %v588 = vld [vmem:[%s0 + $0x24] sm:$0x1]
  %v589 = vld [vmem:[%s0 + $0x28] sm:$0xf]
  %v590 = vld [vmem:[%s0 + $0x2c] sm:$0x1]
  %v591 = vld [vmem:[%s0 + $0x30] sm:$0xf]
  %v592 = vld [vmem:[%s0 + $0x34] sm:$0x1]
  %v593 = vld [vmem:[%s0 + $0x38] sm:$0xf]
  %v594 = vld [vmem:[%s0 + $0x3c] sm:$0x1]
  %v595 = vld [vmem:[%s0 + $0x120] sm:$0xf]
  %v596 = vld [vmem:[%s0 + $0x124] sm:$0x1]
  %v597 = vld [vmem:[%s0 + $0x128] sm:$0xf]
  %v598 = vld [vmem:[%s0 + $0x12c] sm:$0x1]
  %v599 = vld [vmem:[%s0 + $0x130] sm:$0xf]
  %v600 = vld [vmem:[%s0 + $0x134] sm:$0x1]
  %v601 = vld [vmem:[%s0 + $0x138] sm:$0xf]
  %v602 = vld [vmem:[%s0 + $0x13c] sm:$0x1]
  %v603 = vld [vmem:[%s0 + $0x140] sm:$0xf]
  %v604 = vld [vmem:[%s0 + $0x144] sm:$0x1]
  %v605 = vld [vmem:[%s0 + $0x148] sm:$0xf]
  %v606 = vld [vmem:[%s0 + $0x14c] sm:$0x1]
  %v607 = vld [vmem:[%s0 + $0x150] sm:$0xf]
  %v608 = vld [vmem:[%s0 + $0x154] sm:$0x1]
  %v609 = vld [vmem:[%s0 + $0x158] sm:$0xf]
  %v610 = vld [vmem:[%s0 + $0x15c] sm:$0x1]
  %v611 = vld [vmem:[#allocation2] sm:$0xff]
  %v612 = vld [vmem:[#allocation2 + $0x8] sm:$0xff]
  %v613 = vld [vmem:[#allocation2 + $0x10] sm:$0xff]
  %v614 = vld [vmem:[#allocation2 + $0x18] sm:$0xff]
  %v615 = vld [vmem:[#allocation2 + $0x20] sm:$0xff]
  %v616 = vld [vmem:[#allocation2 + $0x28] sm:$0xff]
  %v617 = vld [vmem:[#allocation2 + $0x30] sm:$0xff]
  %v618 = vld [vmem:[#allocation2 + $0x38] sm:$0xff]
  %v619 = vld [vmem:[#allocation2 + $0x40] sm:$0xff]
  %v620 = vld [vmem:[#allocation2 + $0x48] sm:$0xff]
  %v621 = vld [vmem:[#allocation2 + $0x50] sm:$0xff]
  %v622 = vld [vmem:[#allocation2 + $0x58] sm:$0xff]
  %v623 = vld [vmem:[#allocation2 + $0x60] sm:$0xff]
  %v624 = vld [vmem:[#allocation2 + $0x68] sm:$0xff]
  %v625 = vld [vmem:[#allocation2 + $0x70] sm:$0xff]
  %v626 = vld [vmem:[#allocation2 + $0x78] sm:$0xff]
  %vm627 = vsmask.f32 3328
  %vm628 = vsmask.f32 7440
  %vm629 = vmor %vm627, %vm628
  %v631 = vshrl.u32 %v579, 16
  %v633 = vrot.slane %v631, 4
  %v634 = vshll.u32 %v579, 16
  %v636 = vrot.slane %v634, 5
  %v637 = vor.u32 %v633, %v636
  %v638 = vrot.slane %v637, 4
  %v640 = vshll.u32 %v580, 16
  %v642 = vrot.slane %v640, 5
  %v643 = vsel %vm629, %v638, %v642
  %v645 = vshrl.u32 %v581, 16
  %v647 = vrot.slane %v645, 4
  %v648 = vshll.u32 %v581, 16
  %v650 = vrot.slane %v648, 5
  %v651 = vor.u32 %v647, %v650
  %v652 = vrot.slane %v651, 4
  %v654 = vshll.u32 %v582, 16
  %v656 = vrot.slane %v654, 5
  %v657 = vsel %vm629, %v652, %v656
  %v659 = vshrl.u32 %v583, 16
  %v661 = vrot.slane %v659, 4
  %v662 = vshll.u32 %v583, 16
  %v664 = vrot.slane %v662, 5
  %v665 = vor.u32 %v661, %v664
  %v666 = vrot.slane %v665, 4
  %v668 = vshll.u32 %v584, 16
  %v670 = vrot.slane %v668, 5
  %v671 = vsel %vm629, %v666, %v670
  %v673 = vshrl.u32 %v585, 16
  %v675 = vrot.slane %v673, 4
  %v676 = vshll.u32 %v585, 16
  %v678 = vrot.slane %v676, 5
  %v679 = vor.u32 %v675, %v678
  %v680 = vrot.slane %v679, 4
  %v682 = vshll.u32 %v586, 16
  %v684 = vrot.slane %v682, 5
  %v685 = vsel %vm629, %v680, %v684
  %v687 = vshrl.u32 %v587, 16
  %v689 = vrot.slane %v687, 4
  %v690 = vshll.u32 %v587, 16
  %v692 = vrot.slane %v690, 5
  %v693 = vor.u32 %v689, %v692
  %v694 = vrot.slane %v693, 4
  %v696 = vshll.u32 %v588, 16
  %v698 = vrot.slane %v696, 5
  %v699 = vsel %vm629, %v694, %v698
  %v701 = vshrl.u32 %v589, 16
  %v703 = vrot.slane %v701, 4
  %v704 = vshll.u32 %v589, 16
  %v706 = vrot.slane %v704, 5
  %v707 = vor.u32 %v703, %v706
  %v708 = vrot.slane %v707, 4
  %v710 = vshll.u32 %v590, 16
  %v712 = vrot.slane %v710, 5
  %v713 = vsel %vm629, %v708, %v712
  %v715 = vshrl.u32 %v591, 16
  %v717 = vrot.slane %v715, 4
  %v718 = vshll.u32 %v591, 16
  %v720 = vrot.slane %v718, 5
  %v721 = vor.u32 %v717, %v720
  %v722 = vrot.slane %v721, 4
  %v724 = vshll.u32 %v592, 16
  %v726 = vrot.slane %v724, 5
  %v727 = vsel %vm629, %v722, %v726
  %v729 = vshrl.u32 %v593, 16
  %v731 = vrot.slane %v729, 4
  %v732 = vshll.u32 %v593, 16
  %v734 = vrot.slane %v732, 5
  %v735 = vor.u32 %v731, %v734
  %v736 = vrot.slane %v735, 4
  %v738 = vshll.u32 %v594, 16
  %v740 = vrot.slane %v738, 5
  %v741 = vsel %vm629, %v736, %v740
  %v743 = vshrl.u32 %v595, 16
  %v745 = vrot.slane %v743, 4
  %v746 = vshll.u32 %v595, 16
  %v748 = vrot.slane %v746, 5
  %v749 = vor.u32 %v745, %v748
  %v750 = vrot.slane %v749, 4
  %v752 = vshll.u32 %v596, 16
  %v754 = vrot.slane %v752, 5
  %v755 = vsel %vm629, %v750, %v754
  %v757 = vshrl.u32 %v597, 16
  %v759 = vrot.slane %v757, 4
  %v760 = vshll.u32 %v597, 16
  %v762 = vrot.slane %v760, 5
  %v763 = vor.u32 %v759, %v762
  %v764 = vrot.slane %v763, 4
  %v766 = vshll.u32 %v598, 16
  %v768 = vrot.slane %v766, 5
  %v769 = vsel %vm629, %v764, %v768
  %v771 = vshrl.u32 %v599, 16
  %v773 = vrot.slane %v771, 4
  %v774 = vshll.u32 %v599, 16
  %v776 = vrot.slane %v774, 5
  %v777 = vor.u32 %v773, %v776
  %v778 = vrot.slane %v777, 4
  %v780 = vshll.u32 %v600, 16
  %v782 = vrot.slane %v780, 5
  %v783 = vsel %vm629, %v778, %v782
  %v785 = vshrl.u32 %v601, 16
  %v787 = vrot.slane %v785, 4
  %v788 = vshll.u32 %v601, 16
  %v790 = vrot.slane %v788, 5
  %v791 = vor.u32 %v787, %v790
  %v792 = vrot.slane %v791, 4
  %v794 = vshll.u32 %v602, 16
  %v796 = vrot.slane %v794, 5
  %v797 = vsel %vm629, %v792, %v796
  %v799 = vshrl.u32 %v603, 16
  %v801 = vrot.slane %v799, 4
  %v802 = vshll.u32 %v603, 16
  %v804 = vrot.slane %v802, 5
  %v805 = vor.u32 %v801, %v804
  %v806 = vrot.slane %v805, 4
  %v808 = vshll.u32 %v604, 16
  %v810 = vrot.slane %v808, 5
  %v811 = vsel %vm629, %v806, %v810
  %v813 = vshrl.u32 %v605, 16
  %v815 = vrot.slane %v813, 4
  %v816 = vshll.u32 %v605, 16
  %v818 = vrot.slane %v816, 5
  %v819 = vor.u32 %v815, %v818
  %v820 = vrot.slane %v819, 4
  %v822 = vshll.u32 %v606, 16
  %v824 = vrot.slane %v822, 5
  %v825 = vsel %vm629, %v820, %v824
  %v827 = vshrl.u32 %v607, 16
  %v829 = vrot.slane %v827, 4
  %v830 = vshll.u32 %v607, 16
  %v832 = vrot.slane %v830, 5
  %v833 = vor.u32 %v829, %v832
  %v834 = vrot.slane %v833, 4
  %v836 = vshll.u32 %v608, 16
  %v838 = vrot.slane %v836, 5
  %v839 = vsel %vm629, %v834, %v838
  %v841 = vshrl.u32 %v609, 16
  %v843 = vrot.slane %v841, 4
  %v844 = vshll.u32 %v609, 16
  %v846 = vrot.slane %v844, 5
  %v847 = vor.u32 %v843, %v846
  %v848 = vrot.slane %v847, 4
  %v850 = vshll.u32 %v610, 16
  %v852 = vrot.slane %v850, 5
  %v853 = vsel %vm629, %v848, %v852
  %s854 = scalar_lea.vmem %s1, 128
  %v855 = vld [vmem:[%s854] sm:$0xf]
  %v856 = vld [vmem:[%s854 + $0x4] sm:$0xf]
  %v857 = vld [vmem:[%s854 + $0x8] sm:$0xf]
  %v858 = vld [vmem:[%s854 + $0xc] sm:$0xf]
  %v859 = vld [vmem:[%s854 + $0x10] sm:$0xf]
  %v860 = vld [vmem:[%s854 + $0x14] sm:$0xf]
  %v861 = vld [vmem:[%s854 + $0x18] sm:$0xf]
  %v862 = vld [vmem:[%s854 + $0x1c] sm:$0xf]
  %v863 = vld [vmem:[%s854 + $0x20] sm:$0xf]
  %v864 = vld [vmem:[%s854 + $0x24] sm:$0xf]
  %v865 = vld [vmem:[%s854 + $0x28] sm:$0xf]
  %v866 = vld [vmem:[%s854 + $0x2c] sm:$0xf]
  %v867 = vld [vmem:[%s854 + $0x30] sm:$0xf]
  %v868 = vld [vmem:[%s854 + $0x34] sm:$0xf]
  %v869 = vld [vmem:[%s854 + $0x38] sm:$0xf]
  %v870 = vld [vmem:[%s854 + $0x3c] sm:$0xf]
  %v871 = vunpack.c.l.b16 %v643
  %v872 = vunpack.c.l.b16 %v657
  %v873 = vunpack.c.l.b16 %v671
  %v874 = vunpack.c.l.b16 %v685
  %v875 = vunpack.c.l.b16 %v699
  %v876 = vunpack.c.l.b16 %v713
  %v877 = vunpack.c.l.b16 %v727
  %v878 = vunpack.c.l.b16 %v741
  %v879 = vunpack.c.l.b16 %v755
  %v880 = vunpack.c.l.b16 %v769
  %v881 = vunpack.c.l.b16 %v783
  %v882 = vunpack.c.l.b16 %v797
  %v883 = vunpack.c.l.b16 %v811
  %v884 = vunpack.c.l.b16 %v825
  %v885 = vunpack.c.l.b16 %v839
  %v886 = vunpack.c.l.b16 %v853
  %v887 = vpack.c.b16 %v872, %v871
  %v888 = vpack.c.b16 %v874, %v873
  %v889 = vpack.c.b16 %v876, %v875
  %v890 = vpack.c.b16 %v878, %v877
  %v891 = vpack.c.b16 %v880, %v879
  %v892 = vpack.c.b16 %v882, %v881
  %v893 = vpack.c.b16 %v884, %v883
  %v894 = vpack.c.b16 %v886, %v885
  %v919 = vunpack.c.l.b16 %v855
  %v920 = vunpack.c.l.b16 %v856
  %v921 = vunpack.c.l.b16 %v857
  %v922 = vunpack.c.l.b16 %v858
  %v923 = vunpack.c.l.b16 %v859
  %v924 = vunpack.c.l.b16 %v860
  %v925 = vunpack.c.l.b16 %v861
  %v926 = vunpack.c.l.b16 %v862
  %v927 = vunpack.c.l.b16 %v863
  %v928 = vunpack.c.l.b16 %v864
  %v929 = vunpack.c.l.b16 %v865
  %v930 = vunpack.c.l.b16 %v866
  %v931 = vunpack.c.l.b16 %v867
  %v932 = vunpack.c.l.b16 %v868
  %v933 = vunpack.c.l.b16 %v869
  %v934 = vunpack.c.l.b16 %v870
  %v935 = vpack.c.b16 %v920, %v919
  %v936 = vpack.c.b16 %v922, %v921
  %v937 = vpack.c.b16 %v924, %v923
  %v938 = vpack.c.b16 %v926, %v925
  %v939 = vpack.c.b16 %v928, %v927
  %v940 = vpack.c.b16 %v930, %v929
  %v941 = vpack.c.b16 %v932, %v931
  %v942 = vpack.c.b16 %v934, %v933
  %951 = vmatprep.subr.bf16.mxu0 0
  %952 = vmatpush1.bf16.msra.mxu0 %v942
  %953 = vmatprep.subr.bf16.mxu0 0
  %954 = vmatpush1.bf16.msra.mxu0 %v941
  %955 = vmatprep.subr.bf16.mxu0 0
  %956 = vmatpush1.bf16.msra.mxu0 %v940
  %957 = vmatprep.subr.bf16.mxu0 0
  %958 = vmatpush1.bf16.msra.mxu0 %v939
  %959 = vmatprep.subr.bf16.mxu0 0
  %960 = vmatpush1.bf16.msra.mxu0 %v938
  %961 = vmatprep.subr.bf16.mxu0 0
  %962 = vmatpush1.bf16.msra.mxu0 %v937
  %963 = vmatprep.subr.bf16.mxu0 0
  %964 = vmatpush1.bf16.msra.mxu0 %v936
  %965 = vmatprep.subr.bf16.mxu0 0
  %966 = vmatpush1.bf16.msra.mxu0 %v935
  %967 = vmatprep.subr.bf16.mxu0 0
  %968 = vmatpush2.bf16.msra.mxu0 0
  %969 = vmatprep.subr.bf16.mxu0 0
  %970 = vmatpush2.bf16.msra.mxu0 0
  %971 = vmatprep.subr.bf16.mxu0 0
  %972 = vmatpush2.bf16.msra.mxu0 0
  %973 = vmatprep.subr.bf16.mxu0 0
  %974 = vmatpush2.bf16.msra.mxu0 0
  %975 = vmatprep.subr.bf16.mxu0 0
  %976 = vmatpush2.bf16.msra.mxu0 0
  %977 = vmatprep.subr.bf16.mxu0 0
  %978 = vmatpush2.bf16.msra.mxu0 0
  %979 = vmatprep.subr.bf16.mxu0 0
  %980 = vmatpush2.bf16.msra.mxu0 0
  %981 = vmatprep.subr.bf16.mxu0 0
  %982 = vmatpush2.bf16.msra.mxu0 0
  %983 = vmatprep.mubr.bf16.mxu0 0
  %984 = vmatmul.mubr.bf16.gmra.mxu0 %v887
  %v985 = vpop.f32.mrf.mxu0
  %v986 = vadd.f32 0.0, %v985
  %v987 = vpop.f32.mrf.mxu0
  %v988 = vpop.f32.mrf.mxu0
  %v989 = vadd.f32 0.0, %v988
  %v990 = vpop.f32.mrf.mxu0
  %991 = vmatprep.mubr.bf16.mxu0 0
  %992 = vmatmul.mubr.bf16.gmra.mxu0 %v888
  %v993 = vpop.f32.mrf.mxu0
  %v994 = vadd.f32 0.0, %v993
  %v995 = vpop.f32.mrf.mxu0
  %v996 = vpop.f32.mrf.mxu0
  %v997 = vadd.f32 0.0, %v996
  %v998 = vpop.f32.mrf.mxu0
  %999 = vmatprep.mubr.bf16.mxu0 0
  %1000 = vmatmul.mubr.bf16.gmra.mxu0 %v889
  %v1001 = vpop.f32.mrf.mxu0
  %v1002 = vadd.f32 0.0, %v1001
  %v1003 = vpop.f32.mrf.mxu0
  %v1004 = vpop.f32.mrf.mxu0
  %v1005 = vadd.f32 0.0, %v1004
  %v1006 = vpop.f32.mrf.mxu0
  %1007 = vmatprep.mubr.bf16.mxu0 0
  %1008 = vmatmul.mubr.bf16.gmra.mxu0 %v890
  %v1009 = vpop.f32.mrf.mxu0
  %v1010 = vadd.f32 0.0, %v1009
  %v1011 = vpop.f32.mrf.mxu0
  %v1012 = vpop.f32.mrf.mxu0
  %v1013 = vadd.f32 0.0, %v1012
  %v1014 = vpop.f32.mrf.mxu0
  %1015 = vmatprep.mubr.bf16.mxu0 0
  %1016 = vmatmul.mubr.bf16.gmra.mxu0 %v891
  %v1017 = vpop.f32.mrf.mxu0
  %v1018 = vadd.f32 0.0, %v1017
  %v1019 = vpop.f32.mrf.mxu0
  %v1020 = vpop.f32.mrf.mxu0
  %v1021 = vadd.f32 0.0, %v1020
  %v1022 = vpop.f32.mrf.mxu0
  %1023 = vmatprep.mubr.bf16.mxu0 0
  %1024 = vmatmul.mubr.bf16.gmra.mxu0 %v892
  %v1025 = vpop.f32.mrf.mxu0
  %v1026 = vadd.f32 0.0, %v1025
  %v1027 = vpop.f32.mrf.mxu0
  %v1028 = vpop.f32.mrf.mxu0
  %v1029 = vadd.f32 0.0, %v1028
  %v1030 = vpop.f32.mrf.mxu0
  %1031 = vmatprep.mubr.bf16.mxu0 0
  %1032 = vmatmul.mubr.bf16.gmra.mxu0 %v893
  %v1033 = vpop.f32.mrf.mxu0
  %v1034 = vadd.f32 0.0, %v1033
  %v1035 = vpop.f32.mrf.mxu0
  %v1036 = vpop.f32.mrf.mxu0
  %v1037 = vadd.f32 0.0, %v1036
  %v1038 = vpop.f32.mrf.mxu0
  %1039 = vmatprep.mubr.bf16.mxu0 0
  %1040 = vmatmul.mubr.bf16.gmra.mxu0 %v894
  %v1041 = vpop.f32.mrf.mxu0
  %v1042 = vadd.f32 0.0, %v1041
  %v1043 = vpop.f32.mrf.mxu0
  %v1044 = vpop.f32.mrf.mxu0
  %v1045 = vadd.f32 0.0, %v1044
  %v1046 = vpop.f32.mrf.mxu0
  %1047 = vdwg.mxu0
  %v1048 = vadd.f32 %v611, %v986
  %v1049 = vadd.f32 %v612, %v989
  %v1050 = vadd.f32 %v613, %v994
  %v1051 = vadd.f32 %v614, %v997
  %v1052 = vadd.f32 %v615, %v1002
  %v1053 = vadd.f32 %v616, %v1005
  %v1054 = vadd.f32 %v617, %v1010
  %v1055 = vadd.f32 %v618, %v1013
  %v1056 = vadd.f32 %v619, %v1018
  %v1057 = vadd.f32 %v620, %v1021
  %v1058 = vadd.f32 %v621, %v1026
  %v1059 = vadd.f32 %v622, %v1029
  %v1060 = vadd.f32 %v623, %v1034
  %v1061 = vadd.f32 %v624, %v1037
  %v1062 = vadd.f32 %v625, %v1042
  %v1063 = vadd.f32 %v626, %v1045
  %1064 = vst [vmem:[#allocation2] sm:$0xff] %v1048
  %1065 = vst [vmem:[#allocation2 + $0x8] sm:$0xff] %v1049
  %1066 = vst [vmem:[#allocation2 + $0x10] sm:$0xff] %v1050
  %1067 = vst [vmem:[#allocation2 + $0x18] sm:$0xff] %v1051
  %1068 = vst [vmem:[#allocation2 + $0x20] sm:$0xff] %v1052
  %1069 = vst [vmem:[#allocation2 + $0x28] sm:$0xff] %v1053
  %1070 = vst [vmem:[#allocation2 + $0x30] sm:$0xff] %v1054
  %1071 = vst [vmem:[#allocation2 + $0x38] sm:$0xff] %v1055
  %1072 = vst [vmem:[#allocation2 + $0x40] sm:$0xff] %v1056
  %1073 = vst [vmem:[#allocation2 + $0x48] sm:$0xff] %v1057
  %1074 = vst [vmem:[#allocation2 + $0x50] sm:$0xff] %v1058
  %1075 = vst [vmem:[#allocation2 + $0x58] sm:$0xff] %v1059
  %1076 = vst [vmem:[#allocation2 + $0x60] sm:$0xff] %v1060
  %1077 = vst [vmem:[#allocation2 + $0x68] sm:$0xff] %v1061
  %1078 = vst [vmem:[#allocation2 + $0x70] sm:$0xff] %v1062
  %1079 = vst [vmem:[#allocation2 + $0x78] sm:$0xff] %v1063
  %s1080 = scalar_lea.vmem %s0, 144
  %v1081 = vld [vmem:[%s1080] sm:$0xf]
  %v1082 = vld [vmem:[%s1080 + $0x8] sm:$0xf]
  %v1083 = vld [vmem:[%s1080 + $0x10] sm:$0xf]
  %v1084 = vld [vmem:[%s1080 + $0x18] sm:$0xf]
  %v1085 = vld [vmem:[%s1080 + $0x20] sm:$0xf]
  %v1086 = vld [vmem:[%s1080 + $0x28] sm:$0xf]
  %v1087 = vld [vmem:[%s1080 + $0x30] sm:$0xf]
  %v1088 = vld [vmem:[%s1080 + $0x38] sm:$0xf]
  %v1089 = vld [vmem:[%s1080 + $0x120] sm:$0xf]
  %v1090 = vld [vmem:[%s1080 + $0x128] sm:$0xf]
  %v1091 = vld [vmem:[%s1080 + $0x130] sm:$0xf]
  %v1092 = vld [vmem:[%s1080 + $0x138] sm:$0xf]
  %v1093 = vld [vmem:[%s1080 + $0x140] sm:$0xf]
  %v1094 = vld [vmem:[%s1080 + $0x148] sm:$0xf]
  %v1095 = vld [vmem:[%s1080 + $0x150] sm:$0xf]
  %v1096 = vld [vmem:[%s1080 + $0x158] sm:$0xf]
  %v1097 = vld [vmem:[#allocation2] sm:$0xff]
  %v1098 = vld [vmem:[#allocation2 + $0x8] sm:$0xff]
  %v1099 = vld [vmem:[#allocation2 + $0x10] sm:$0xff]
  %v1100 = vld [vmem:[#allocation2 + $0x18] sm:$0xff]
  %v1101 = vld [vmem:[#allocation2 + $0x20] sm:$0xff]
  %v1102 = vld [vmem:[#allocation2 + $0x28] sm:$0xff]
  %v1103 = vld [vmem:[#allocation2 + $0x30] sm:$0xff]
  %v1104 = vld [vmem:[#allocation2 + $0x38] sm:$0xff]
  %v1105 = vld [vmem:[#allocation2 + $0x40] sm:$0xff]
  %v1106 = vld [vmem:[#allocation2 + $0x48] sm:$0xff]
  %v1107 = vld [vmem:[#allocation2 + $0x50] sm:$0xff]
  %v1108 = vld [vmem:[#allocation2 + $0x58] sm:$0xff]
  %v1109 = vld [vmem:[#allocation2 + $0x60] sm:$0xff]
  %v1110 = vld [vmem:[#allocation2 + $0x68] sm:$0xff]
  %v1111 = vld [vmem:[#allocation2 + $0x70] sm:$0xff]
  %v1112 = vld [vmem:[#allocation2 + $0x78] sm:$0xff]
  %s1113 = scalar_lea.vmem %s1, 192
  %v1114 = vld [vmem:[%s1113] sm:$0xf]
  %v1115 = vld [vmem:[%s1113 + $0x4] sm:$0xf]
  %v1116 = vld [vmem:[%s1113 + $0x8] sm:$0xf]
  %v1117 = vld [vmem:[%s1113 + $0xc] sm:$0xf]
  %v1118 = vld [vmem:[%s1113 + $0x10] sm:$0xf]
  %v1119 = vld [vmem:[%s1113 + $0x14] sm:$0xf]
  %v1120 = vld [vmem:[%s1113 + $0x18] sm:$0xf]
  %v1121 = vld [vmem:[%s1113 + $0x1c] sm:$0xf]
  %v1122 = vld [vmem:[%s1113 + $0x20] sm:$0xf]
  %v1123 = vld [vmem:[%s1113 + $0x24] sm:$0xf]
  %v1124 = vld [vmem:[%s1113 + $0x28] sm:$0xf]
  %v1125 = vld [vmem:[%s1113 + $0x2c] sm:$0xf]
  %v1126 = vld [vmem:[%s1113 + $0x30] sm:$0xf]
  %v1127 = vld [vmem:[%s1113 + $0x34] sm:$0xf]
  %v1128 = vld [vmem:[%s1113 + $0x38] sm:$0xf]
  %v1129 = vld [vmem:[%s1113 + $0x3c] sm:$0xf]
  %v1146 = vunpack.c.l.b16 %v1081
  %v1147 = vunpack.c.l.b16 %v1082
  %v1148 = vunpack.c.l.b16 %v1083
  %v1149 = vunpack.c.l.b16 %v1084
  %v1150 = vunpack.c.l.b16 %v1085
  %v1151 = vunpack.c.l.b16 %v1086
  %v1152 = vunpack.c.l.b16 %v1087
  %v1153 = vunpack.c.l.b16 %v1088
  %v1154 = vunpack.c.l.b16 %v1089
  %v1155 = vunpack.c.l.b16 %v1090
  %v1156 = vunpack.c.l.b16 %v1091
  %v1157 = vunpack.c.l.b16 %v1092
  %v1158 = vunpack.c.l.b16 %v1093
  %v1159 = vunpack.c.l.b16 %v1094
  %v1160 = vunpack.c.l.b16 %v1095
  %v1161 = vunpack.c.l.b16 %v1096
  %v1162 = vpack.c.b16 %v1147, %v1146
  %v1163 = vpack.c.b16 %v1149, %v1148
  %v1164 = vpack.c.b16 %v1151, %v1150
  %v1165 = vpack.c.b16 %v1153, %v1152
  %v1166 = vpack.c.b16 %v1155, %v1154
  %v1167 = vpack.c.b16 %v1157, %v1156
  %v1168 = vpack.c.b16 %v1159, %v1158
  %v1169 = vpack.c.b16 %v1161, %v1160
  %v1194 = vunpack.c.l.b16 %v1114
  %v1195 = vunpack.c.l.b16 %v1115
  %v1196 = vunpack.c.l.b16 %v1116
  %v1197 = vunpack.c.l.b16 %v1117
  %v1198 = vunpack.c.l.b16 %v1118
  %v1199 = vunpack.c.l.b16 %v1119
  %v1200 = vunpack.c.l.b16 %v1120
  %v1201 = vunpack.c.l.b16 %v1121
  %v1202 = vunpack.c.l.b16 %v1122
  %v1203 = vunpack.c.l.b16 %v1123
  %v1204 = vunpack.c.l.b16 %v1124
  %v1205 = vunpack.c.l.b16 %v1125
  %v1206 = vunpack.c.l.b16 %v1126
  %v1207 = vunpack.c.l.b16 %v1127
  %v1208 = vunpack.c.l.b16 %v1128
  %v1209 = vunpack.c.l.b16 %v1129
  %v1210 = vpack.c.b16 %v1195, %v1194
  %v1211 = vpack.c.b16 %v1197, %v1196
  %v1212 = vpack.c.b16 %v1199, %v1198
  %v1213 = vpack.c.b16 %v1201, %v1200
  %v1214 = vpack.c.b16 %v1203, %v1202
  %v1215 = vpack.c.b16 %v1205, %v1204
  %v1216 = vpack.c.b16 %v1207, %v1206
  %v1217 = vpack.c.b16 %v1209, %v1208
  %1226 = vmatprep.subr.bf16.mxu0 0
  %1227 = vmatpush1.bf16.msra.mxu0 %v1217
  %1228 = vmatprep.subr.bf16.mxu0 0
  %1229 = vmatpush1.bf16.msra.mxu0 %v1216
  %1230 = vmatprep.subr.bf16.mxu0 0
  %1231 = vmatpush1.bf16.msra.mxu0 %v1215
  %1232 = vmatprep.subr.bf16.mxu0 0
  %1233 = vmatpush1.bf16.msra.mxu0 %v1214
  %1234 = vmatprep.subr.bf16.mxu0 0
  %1235 = vmatpush1.bf16.msra.mxu0 %v1213
  %1236 = vmatprep.subr.bf16.mxu0 0
  %1237 = vmatpush1.bf16.msra.mxu0 %v1212
  %1238 = vmatprep.subr.bf16.mxu0 0
  %1239 = vmatpush1.bf16.msra.mxu0 %v1211
  %1240 = vmatprep.subr.bf16.mxu0 0
  %1241 = vmatpush1.bf16.msra.mxu0 %v1210
  %1242 = vmatprep.subr.bf16.mxu0 0
  %1243 = vmatpush2.bf16.msra.mxu0 0
  %1244 = vmatprep.subr.bf16.mxu0 0
  %1245 = vmatpush2.bf16.msra.mxu0 0
  %1246 = vmatprep.subr.bf16.mxu0 0
  %1247 = vmatpush2.bf16.msra.mxu0 0
  %1248 = vmatprep.subr.bf16.mxu0 0
  %1249 = vmatpush2.bf16.msra.mxu0 0
  %1250 = vmatprep.subr.bf16.mxu0 0
  %1251 = vmatpush2.bf16.msra.mxu0 0
  %1252 = vmatprep.subr.bf16.mxu0 0
  %1253 = vmatpush2.bf16.msra.mxu0 0
  %1254 = vmatprep.subr.bf16.mxu0 0
  %1255 = vmatpush2.bf16.msra.mxu0 0
  %1256 = vmatprep.subr.bf16.mxu0 0
  %1257 = vmatpush2.bf16.msra.mxu0 0
  %1258 = vmatprep.mubr.bf16.mxu0 0
  %1259 = vmatmul.mubr.bf16.gmra.mxu0 %v1162
  %v1260 = vpop.f32.mrf.mxu0
  %v1261 = vadd.f32 0.0, %v1260
  %v1262 = vpop.f32.mrf.mxu0
  %v1263 = vpop.f32.mrf.mxu0
  %v1264 = vadd.f32 0.0, %v1263
  %v1265 = vpop.f32.mrf.mxu0
  %1266 = vmatprep.mubr.bf16.mxu0 0
  %1267 = vmatmul.mubr.bf16.gmra.mxu0 %v1163
  %v1268 = vpop.f32.mrf.mxu0
  %v1269 = vadd.f32 0.0, %v1268
  %v1270 = vpop.f32.mrf.mxu0
  %v1271 = vpop.f32.mrf.mxu0
  %v1272 = vadd.f32 0.0, %v1271
  %v1273 = vpop.f32.mrf.mxu0
  %1274 = vmatprep.mubr.bf16.mxu0 0
  %1275 = vmatmul.mubr.bf16.gmra.mxu0 %v1164
  %v1276 = vpop.f32.mrf.mxu0
  %v1277 = vadd.f32 0.0, %v1276
  %v1278 = vpop.f32.mrf.mxu0
  %v1279 = vpop.f32.mrf.mxu0
  %v1280 = vadd.f32 0.0, %v1279
  %v1281 = vpop.f32.mrf.mxu0
  %1282 = vmatprep.mubr.bf16.mxu0 0
  %1283 = vmatmul.mubr.bf16.gmra.mxu0 %v1165
  %v1284 = vpop.f32.mrf.mxu0
  %v1285 = vadd.f32 0.0, %v1284
  %v1286 = vpop.f32.mrf.mxu0
  %v1287 = vpop.f32.mrf.mxu0
  %v1288 = vadd.f32 0.0, %v1287
  %v1289 = vpop.f32.mrf.mxu0
  %1290 = vmatprep.mubr.bf16.mxu0 0
  %1291 = vmatmul.mubr.bf16.gmra.mxu0 %v1166
  %v1292 = vpop.f32.mrf.mxu0
  %v1293 = vadd.f32 0.0, %v1292
  %v1294 = vpop.f32.mrf.mxu0
  %v1295 = vpop.f32.mrf.mxu0
  %v1296 = vadd.f32 0.0, %v1295
  %v1297 = vpop.f32.mrf.mxu0
  %1298 = vmatprep.mubr.bf16.mxu0 0
  %1299 = vmatmul.mubr.bf16.gmra.mxu0 %v1167
  %v1300 = vpop.f32.mrf.mxu0
  %v1301 = vadd.f32 0.0, %v1300
  %v1302 = vpop.f32.mrf.mxu0
  %v1303 = vpop.f32.mrf.mxu0
  %v1304 = vadd.f32 0.0, %v1303
  %v1305 = vpop.f32.mrf.mxu0
  %1306 = vmatprep.mubr.bf16.mxu0 0
  %1307 = vmatmul.mubr.bf16.gmra.mxu0 %v1168
  %v1308 = vpop.f32.mrf.mxu0
  %v1309 = vadd.f32 0.0, %v1308
  %v1310 = vpop.f32.mrf.mxu0
  %v1311 = vpop.f32.mrf.mxu0
  %v1312 = vadd.f32 0.0, %v1311
  %v1313 = vpop.f32.mrf.mxu0
  %1314 = vmatprep.mubr.bf16.mxu0 0
  %1315 = vmatmul.mubr.bf16.gmra.mxu0 %v1169
  %v1316 = vpop.f32.mrf.mxu0
  %v1317 = vadd.f32 0.0, %v1316
  %v1318 = vpop.f32.mrf.mxu0
  %v1319 = vpop.f32.mrf.mxu0
  %v1320 = vadd.f32 0.0, %v1319
  %v1321 = vpop.f32.mrf.mxu0
  %1322 = vdwg.mxu0
  %v1323 = vadd.f32 %v1097, %v1261
  %v1324 = vadd.f32 %v1098, %v1264
  %v1325 = vadd.f32 %v1099, %v1269
  %v1326 = vadd.f32 %v1100, %v1272
  %v1327 = vadd.f32 %v1101, %v1277
  %v1328 = vadd.f32 %v1102, %v1280
  %v1329 = vadd.f32 %v1103, %v1285
  %v1330 = vadd.f32 %v1104, %v1288
  %v1331 = vadd.f32 %v1105, %v1293
  %v1332 = vadd.f32 %v1106, %v1296
  %v1333 = vadd.f32 %v1107, %v1301
  %v1334 = vadd.f32 %v1108, %v1304
  %v1335 = vadd.f32 %v1109, %v1309
  %v1336 = vadd.f32 %v1110, %v1312
  %v1337 = vadd.f32 %v1111, %v1317
  %v1338 = vadd.f32 %v1112, %v1320
  %1339 = vst [vmem:[#allocation2] sm:$0xff] %v1323
  %1340 = vst [vmem:[#allocation2 + $0x8] sm:$0xff] %v1324
  %1341 = vst [vmem:[#allocation2 + $0x10] sm:$0xff] %v1325
  %1342 = vst [vmem:[#allocation2 + $0x18] sm:$0xff] %v1326
  %1343 = vst [vmem:[#allocation2 + $0x20] sm:$0xff] %v1327
  %1344 = vst [vmem:[#allocation2 + $0x28] sm:$0xff] %v1328
  %1345 = vst [vmem:[#allocation2 + $0x30] sm:$0xff] %v1329
  %1346 = vst [vmem:[#allocation2 + $0x38] sm:$0xff] %v1330
  %1347 = vst [vmem:[#allocation2 + $0x40] sm:$0xff] %v1331
  %1348 = vst [vmem:[#allocation2 + $0x48] sm:$0xff] %v1332
  %1349 = vst [vmem:[#allocation2 + $0x50] sm:$0xff] %v1333
  %1350 = vst [vmem:[#allocation2 + $0x58] sm:$0xff] %v1334
  %1351 = vst [vmem:[#allocation2 + $0x60] sm:$0xff] %v1335
  %1352 = vst [vmem:[#allocation2 + $0x68] sm:$0xff] %v1336
  %1353 = vst [vmem:[#allocation2 + $0x70] sm:$0xff] %v1337
  %1354 = vst [vmem:[#allocation2 + $0x78] sm:$0xff] %v1338
  %s1355 = scalar_lea.vmem %s0, 216
  %v1356 = vld [vmem:[%s1355] sm:$0xf]
  %v1357 = vld [vmem:[%s1355 + $0x8] sm:$0xf]
  %v1358 = vld [vmem:[%s1355 + $0x10] sm:$0xf]
  %v1359 = vld [vmem:[%s1355 + $0x18] sm:$0xf]
  %v1360 = vld [vmem:[%s1355 + $0x20] sm:$0xf]
  %v1361 = vld [vmem:[%s1355 + $0x28] sm:$0xf]
  %v1362 = vld [vmem:[%s1355 + $0x30] sm:$0xf]
  %v1363 = vld [vmem:[%s1355 + $0x38] sm:$0xf]
  %v1364 = vld [vmem:[%s1355 + $0x120] sm:$0xf]
  %v1365 = vld [vmem:[%s1355 + $0x128] sm:$0xf]
  %v1366 = vld [vmem:[%s1355 + $0x130] sm:$0xf]
  %v1367 = vld [vmem:[%s1355 + $0x138] sm:$0xf]
  %v1368 = vld [vmem:[%s1355 + $0x140] sm:$0xf]
  %v1369 = vld [vmem:[%s1355 + $0x148] sm:$0xf]
  %v1370 = vld [vmem:[%s1355 + $0x150] sm:$0xf]
  %v1371 = vld [vmem:[%s1355 + $0x158] sm:$0xf]
  %v1372 = vld [vmem:[#allocation2] sm:$0xff]
  %v1373 = vld [vmem:[#allocation2 + $0x8] sm:$0xff]
  %v1374 = vld [vmem:[#allocation2 + $0x10] sm:$0xff]
  %v1375 = vld [vmem:[#allocation2 + $0x18] sm:$0xff]
  %v1376 = vld [vmem:[#allocation2 + $0x20] sm:$0xff]
  %v1377 = vld [vmem:[#allocation2 + $0x28] sm:$0xff]
  %v1378 = vld [vmem:[#allocation2 + $0x30] sm:$0xff]
  %v1379 = vld [vmem:[#allocation2 + $0x38] sm:$0xff]
  %v1380 = vld [vmem:[#allocation2 + $0x40] sm:$0xff]
  %v1381 = vld [vmem:[#allocation2 + $0x48] sm:$0xff]
  %v1382 = vld [vmem:[#allocation2 + $0x50] sm:$0xff]
  %v1383 = vld [vmem:[#allocation2 + $0x58] sm:$0xff]
  %v1384 = vld [vmem:[#allocation2 + $0x60] sm:$0xff]
  %v1385 = vld [vmem:[#allocation2 + $0x68] sm:$0xff]
  %v1386 = vld [vmem:[#allocation2 + $0x70] sm:$0xff]
  %v1387 = vld [vmem:[#allocation2 + $0x78] sm:$0xff]
  %s1388 = scalar_lea.vmem %s1, 256
  %v1389 = vld [vmem:[%s1388] sm:$0xf]
  %v1390 = vld [vmem:[%s1388 + $0x4] sm:$0xf]
  %v1391 = vld [vmem:[%s1388 + $0x8] sm:$0xf]
  %v1392 = vld [vmem:[%s1388 + $0xc] sm:$0xf]
  %v1393 = vld [vmem:[%s1388 + $0x10] sm:$0xf]
  %v1394 = vld [vmem:[%s1388 + $0x14] sm:$0xf]
  %v1395 = vld [vmem:[%s1388 + $0x18] sm:$0xf]
  %v1396 = vld [vmem:[%s1388 + $0x1c] sm:$0xf]
  %v1397 = vld [vmem:[%s1388 + $0x20] sm:$0xf]
  %v1398 = vld [vmem:[%s1388 + $0x24] sm:$0xf]
  %v1399 = vld [vmem:[%s1388 + $0x28] sm:$0xf]
  %v1400 = vld [vmem:[%s1388 + $0x2c] sm:$0xf]
  %v1401 = vld [vmem:[%s1388 + $0x30] sm:$0xf]
  %v1402 = vld [vmem:[%s1388 + $0x34] sm:$0xf]
  %v1403 = vld [vmem:[%s1388 + $0x38] sm:$0xf]
  %v1404 = vld [vmem:[%s1388 + $0x3c] sm:$0xf]
  %v1421 = vunpack.c.l.b16 %v1356
  %v1422 = vunpack.c.l.b16 %v1357
  %v1423 = vunpack.c.l.b16 %v1358
  %v1424 = vunpack.c.l.b16 %v1359
  %v1425 = vunpack.c.l.b16 %v1360
  %v1426 = vunpack.c.l.b16 %v1361
  %v1427 = vunpack.c.l.b16 %v1362
  %v1428 = vunpack.c.l.b16 %v1363
  %v1429 = vunpack.c.l.b16 %v1364
  %v1430 = vunpack.c.l.b16 %v1365
  %v1431 = vunpack.c.l.b16 %v1366
  %v1432 = vunpack.c.l.b16 %v1367
  %v1433 = vunpack.c.l.b16 %v1368
  %v1434 = vunpack.c.l.b16 %v1369
  %v1435 = vunpack.c.l.b16 %v1370
  %v1436 = vunpack.c.l.b16 %v1371
  %v1437 = vpack.c.b16 %v1422, %v1421
  %v1438 = vpack.c.b16 %v1424, %v1423
  %v1439 = vpack.c.b16 %v1426, %v1425
  %v1440 = vpack.c.b16 %v1428, %v1427
  %v1441 = vpack.c.b16 %v1430, %v1429
  %v1442 = vpack.c.b16 %v1432, %v1431
  %v1443 = vpack.c.b16 %v1434, %v1433
  %v1444 = vpack.c.b16 %v1436, %v1435
  %v1469 = vunpack.c.l.b16 %v1389
  %v1470 = vunpack.c.l.b16 %v1390
  %v1471 = vunpack.c.l.b16 %v1391
  %v1472 = vunpack.c.l.b16 %v1392
  %v1473 = vunpack.c.l.b16 %v1393
  %v1474 = vunpack.c.l.b16 %v1394
  %v1475 = vunpack.c.l.b16 %v1395
  %v1476 = vunpack.c.l.b16 %v1396
  %v1477 = vunpack.c.l.b16 %v1397
  %v1478 = vunpack.c.l.b16 %v1398
  %v1479 = vunpack.c.l.b16 %v1399
  %v1480 = vunpack.c.l.b16 %v1400
  %v1481 = vunpack.c.l.b16 %v1401
  %v1482 = vunpack.c.l.b16 %v1402
  %v1483 = vunpack.c.l.b16 %v1403
  %v1484 = vunpack.c.l.b16 %v1404
  %v1485 = vpack.c.b16 %v1470, %v1469
  %v1486 = vpack.c.b16 %v1472, %v1471
  %v1487 = vpack.c.b16 %v1474, %v1473
  %v1488 = vpack.c.b16 %v1476, %v1475
  %v1489 = vpack.c.b16 %v1478, %v1477
  %v1490 = vpack.c.b16 %v1480, %v1479
  %v1491 = vpack.c.b16 %v1482, %v1481
  %v1492 = vpack.c.b16 %v1484, %v1483
  %1501 = vmatprep.subr.bf16.mxu0 0
  %1502 = vmatpush1.bf16.msra.mxu0 %v1492
  %1503 = vmatprep.subr.bf16.mxu0 0
  %1504 = vmatpush1.bf16.msra.mxu0 %v1491
  %1505 = vmatprep.subr.bf16.mxu0 0
  %1506 = vmatpush1.bf16.msra.mxu0 %v1490
  %1507 = vmatprep.subr.bf16.mxu0 0
  %1508 = vmatpush1.bf16.msra.mxu0 %v1489
  %1509 = vmatprep.subr.bf16.mxu0 0
  %1510 = vmatpush1.bf16.msra.mxu0 %v1488
  %1511 = vmatprep.subr.bf16.mxu0 0
  %1512 = vmatpush1.bf16.msra.mxu0 %v1487
  %1513 = vmatprep.subr.bf16.mxu0 0
  %1514 = vmatpush1.bf16.msra.mxu0 %v1486
  %1515 = vmatprep.subr.bf16.mxu0 0
  %1516 = vmatpush1.bf16.msra.mxu0 %v1485
  %1517 = vmatprep.subr.bf16.mxu0 0
  %1518 = vmatpush2.bf16.msra.mxu0 0
  %1519 = vmatprep.subr.bf16.mxu0 0
  %1520 = vmatpush2.bf16.msra.mxu0 0
  %1521 = vmatprep.subr.bf16.mxu0 0
  %1522 = vmatpush2.bf16.msra.mxu0 0
  %1523 = vmatprep.subr.bf16.mxu0 0
  %1524 = vmatpush2.bf16.msra.mxu0 0
  %1525 = vmatprep.subr.bf16.mxu0 0
  %1526 = vmatpush2.bf16.msra.mxu0 0
  %1527 = vmatprep.subr.bf16.mxu0 0
  %1528 = vmatpush2.bf16.msra.mxu0 0
  %1529 = vmatprep.subr.bf16.mxu0 0
  %1530 = vmatpush2.bf16.msra.mxu0 0
  %1531 = vmatprep.subr.bf16.mxu0 0
  %1532 = vmatpush2.bf16.msra.mxu0 0
  %1533 = vmatprep.mubr.bf16.mxu0 0
  %1534 = vmatmul.mubr.bf16.gmra.mxu0 %v1437
  %v1535 = vpop.f32.mrf.mxu0
  %v1536 = vadd.f32 0.0, %v1535
  %v1537 = vpop.f32.mrf.mxu0
  %v1538 = vpop.f32.mrf.mxu0
  %v1539 = vadd.f32 0.0, %v1538
  %v1540 = vpop.f32.mrf.mxu0
  %1541 = vmatprep.mubr.bf16.mxu0 0
  %1542 = vmatmul.mubr.bf16.gmra.mxu0 %v1438
  %v1543 = vpop.f32.mrf.mxu0
  %v1544 = vadd.f32 0.0, %v1543
  %v1545 = vpop.f32.mrf.mxu0
  %v1546 = vpop.f32.mrf.mxu0
  %v1547 = vadd.f32 0.0, %v1546
  %v1548 = vpop.f32.mrf.mxu0
  %1549 = vmatprep.mubr.bf16.mxu0 0
  %1550 = vmatmul.mubr.bf16.gmra.mxu0 %v1439
  %v1551 = vpop.f32.mrf.mxu0
  %v1552 = vadd.f32 0.0, %v1551
  %v1553 = vpop.f32.mrf.mxu0
  %v1554 = vpop.f32.mrf.mxu0
  %v1555 = vadd.f32 0.0, %v1554
  %v1556 = vpop.f32.mrf.mxu0
  %1557 = vmatprep.mubr.bf16.mxu0 0
  %1558 = vmatmul.mubr.bf16.gmra.mxu0 %v1440
  %v1559 = vpop.f32.mrf.mxu0
  %v1560 = vadd.f32 0.0, %v1559
  %v1561 = vpop.f32.mrf.mxu0
  %v1562 = vpop.f32.mrf.mxu0
  %v1563 = vadd.f32 0.0, %v1562
  %v1564 = vpop.f32.mrf.mxu0
  %1565 = vmatprep.mubr.bf16.mxu0 0
  %1566 = vmatmul.mubr.bf16.gmra.mxu0 %v1441
  %v1567 = vpop.f32.mrf.mxu0
  %v1568 = vadd.f32 0.0, %v1567
  %v1569 = vpop.f32.mrf.mxu0
  %v1570 = vpop.f32.mrf.mxu0
  %v1571 = vadd.f32 0.0, %v1570
  %v1572 = vpop.f32.mrf.mxu0
  %1573 = vmatprep.mubr.bf16.mxu0 0
  %1574 = vmatmul.mubr.bf16.gmra.mxu0 %v1442
  %v1575 = vpop.f32.mrf.mxu0
  %v1576 = vadd.f32 0.0, %v1575
  %v1577 = vpop.f32.mrf.mxu0
  %v1578 = vpop.f32.mrf.mxu0
  %v1579 = vadd.f32 0.0, %v1578
  %v1580 = vpop.f32.mrf.mxu0
  %1581 = vmatprep.mubr.bf16.mxu0 0
  %1582 = vmatmul.mubr.bf16.gmra.mxu0 %v1443
  %v1583 = vpop.f32.mrf.mxu0
  %v1584 = vadd.f32 0.0, %v1583
  %v1585 = vpop.f32.mrf.mxu0
  %v1586 = vpop.f32.mrf.mxu0
  %v1587 = vadd.f32 0.0, %v1586
  %v1588 = vpop.f32.mrf.mxu0
  %1589 = vmatprep.mubr.bf16.mxu0 0
  %1590 = vmatmul.mubr.bf16.gmra.mxu0 %v1444
  %v1591 = vpop.f32.mrf.mxu0
  %v1592 = vadd.f32 0.0, %v1591
  %v1593 = vpop.f32.mrf.mxu0
  %v1594 = vpop.f32.mrf.mxu0
  %v1595 = vadd.f32 0.0, %v1594
  %v1596 = vpop.f32.mrf.mxu0
  %1597 = vdwg.mxu0
  %v1598 = vadd.f32 %v1372, %v1536
  %v1599 = vadd.f32 %v1373, %v1539
  %v1600 = vadd.f32 %v1374, %v1544
  %v1601 = vadd.f32 %v1375, %v1547
  %v1602 = vadd.f32 %v1376, %v1552
  %v1603 = vadd.f32 %v1377, %v1555
  %v1604 = vadd.f32 %v1378, %v1560
  %v1605 = vadd.f32 %v1379, %v1563
  %v1606 = vadd.f32 %v1380, %v1568
  %v1607 = vadd.f32 %v1381, %v1571
  %v1608 = vadd.f32 %v1382, %v1576
  %v1609 = vadd.f32 %v1383, %v1579
  %v1610 = vadd.f32 %v1384, %v1584
  %v1611 = vadd.f32 %v1385, %v1587
  %v1612 = vadd.f32 %v1386, %v1592
  %v1613 = vadd.f32 %v1387, %v1595
  %1614 = vst [vmem:[#allocation2] sm:$0xff] %v1598
  %1615 = vst [vmem:[#allocation2 + $0x8] sm:$0xff] %v1599
  %1616 = vst [vmem:[#allocation2 + $0x10] sm:$0xff] %v1600
  %1617 = vst [vmem:[#allocation2 + $0x18] sm:$0xff] %v1601
  %1618 = vst [vmem:[#allocation2 + $0x20] sm:$0xff] %v1602
  %1619 = vst [vmem:[#allocation2 + $0x28] sm:$0xff] %v1603
  %1620 = vst [vmem:[#allocation2 + $0x30] sm:$0xff] %v1604
  %1621 = vst [vmem:[#allocation2 + $0x38] sm:$0xff] %v1605
  %1622 = vst [vmem:[#allocation2 + $0x40] sm:$0xff] %v1606
  %1623 = vst [vmem:[#allocation2 + $0x48] sm:$0xff] %v1607
  %1624 = vst [vmem:[#allocation2 + $0x50] sm:$0xff] %v1608
  %1625 = vst [vmem:[#allocation2 + $0x58] sm:$0xff] %v1609
  %1626 = vst [vmem:[#allocation2 + $0x60] sm:$0xff] %v1610
  %1627 = vst [vmem:[#allocation2 + $0x68] sm:$0xff] %v1611
  %1628 = vst [vmem:[#allocation2 + $0x70] sm:$0xff] %v1612
  %1629 = vst [vmem:[#allocation2 + $0x78] sm:$0xff] %v1613
  %v1630 = vld [vmem:[%s1080] sm:$0xf]
  %v1631 = vld [vmem:[%s1080 + $0x4] sm:$0x1]
  %v1632 = vld [vmem:[%s1080 + $0x8] sm:$0xf]
  %v1633 = vld [vmem:[%s1080 + $0xc] sm:$0x1]
  %v1634 = vld [vmem:[%s1080 + $0x10] sm:$0xf]
  %v1635 = vld [vmem:[%s1080 + $0x14] sm:$0x1]
  %v1636 = vld [vmem:[%s1080 + $0x18] sm:$0xf]
  %v1637 = vld [vmem:[%s1080 + $0x1c] sm:$0x1]
  %v1638 = vld [vmem:[%s1080 + $0x20] sm:$0xf]
  %v1639 = vld [vmem:[%s1080 + $0x24] sm:$0x1]
  %v1640 = vld [vmem:[%s1080 + $0x28] sm:$0xf]
  %v1641 = vld [vmem:[%s1080 + $0x2c] sm:$0x1]
  %v1642 = vld [vmem:[%s1080 + $0x30] sm:$0xf]
  %v1643 = vld [vmem:[%s1080 + $0x34] sm:$0x1]
  %v1644 = vld [vmem:[%s1080 + $0x38] sm:$0xf]
  %v1645 = vld [vmem:[%s1080 + $0x3c] sm:$0x1]
  %v1646 = vld [vmem:[%s1080 + $0x120] sm:$0xf]
  %v1647 = vld [vmem:[%s1080 + $0x124] sm:$0x1]
  %v1648 = vld [vmem:[%s1080 + $0x128] sm:$0xf]
  %v1649 = vld [vmem:[%s1080 + $0x12c] sm:$0x1]
  %v1650 = vld [vmem:[%s1080 + $0x130] sm:$0xf]
  %v1651 = vld [vmem:[%s1080 + $0x134] sm:$0x1]
  %v1652 = vld [vmem:[%s1080 + $0x138] sm:$0xf]
  %v1653 = vld [vmem:[%s1080 + $0x13c] sm:$0x1]
  %v1654 = vld [vmem:[%s1080 + $0x140] sm:$0xf]
  %v1655 = vld [vmem:[%s1080 + $0x144] sm:$0x1]
  %v1656 = vld [vmem:[%s1080 + $0x148] sm:$0xf]
  %v1657 = vld [vmem:[%s1080 + $0x14c] sm:$0x1]
  %v1658 = vld [vmem:[%s1080 + $0x150] sm:$0xf]
  %v1659 = vld [vmem:[%s1080 + $0x154] sm:$0x1]
  %v1660 = vld [vmem:[%s1080 + $0x158] sm:$0xf]
  %v1661 = vld [vmem:[%s1080 + $0x15c] sm:$0x1]
  %v1662 = vld [vmem:[#allocation2] sm:$0xff]
  %v1663 = vld [vmem:[#allocation2 + $0x8] sm:$0xff]
  %v1664 = vld [vmem:[#allocation2 + $0x10] sm:$0xff]
  %v1665 = vld [vmem:[#allocation2 + $0x18] sm:$0xff]
  %v1666 = vld [vmem:[#allocation2 + $0x20] sm:$0xff]
  %v1667 = vld [vmem:[#allocation2 + $0x28] sm:$0xff]
  %v1668 = vld [vmem:[#allocation2 + $0x30] sm:$0xff]
  %v1669 = vld [vmem:[#allocation2 + $0x38] sm:$0xff]
  %v1670 = vld [vmem:[#allocation2 + $0x40] sm:$0xff]
  %v1671 = vld [vmem:[#allocation2 + $0x48] sm:$0xff]
  %v1672 = vld [vmem:[#allocation2 + $0x50] sm:$0xff]
  %v1673 = vld [vmem:[#allocation2 + $0x58] sm:$0xff]
  %v1674 = vld [vmem:[#allocation2 + $0x60] sm:$0xff]
  %v1675 = vld [vmem:[#allocation2 + $0x68] sm:$0xff]
  %v1676 = vld [vmem:[#allocation2 + $0x70] sm:$0xff]
  %v1677 = vld [vmem:[#allocation2 + $0x78] sm:$0xff]
  %v1679 = vshrl.u32 %v1630, 16
  %v1681 = vrot.slane %v1679, 4
  %v1682 = vshll.u32 %v1630, 16
  %v1684 = vrot.slane %v1682, 5
  %v1685 = vor.u32 %v1681, %v1684
  %v1686 = vrot.slane %v1685, 4
  %v1688 = vshll.u32 %v1631, 16
  %v1690 = vrot.slane %v1688, 5
  %v1691 = vsel %vm629, %v1686, %v1690
  %v1693 = vshrl.u32 %v1632, 16
  %v1695 = vrot.slane %v1693, 4
  %v1696 = vshll.u32 %v1632, 16
  %v1698 = vrot.slane %v1696, 5
  %v1699 = vor.u32 %v1695, %v1698
  %v1700 = vrot.slane %v1699, 4
  %v1702 = vshll.u32 %v1633, 16
  %v1704 = vrot.slane %v1702, 5
  %v1705 = vsel %vm629, %v1700, %v1704
  %v1707 = vshrl.u32 %v1634, 16
  %v1709 = vrot.slane %v1707, 4
  %v1710 = vshll.u32 %v1634, 16
  %v1712 = vrot.slane %v1710, 5
  %v1713 = vor.u32 %v1709, %v1712
  %v1714 = vrot.slane %v1713, 4
  %v1716 = vshll.u32 %v1635, 16
  %v1718 = vrot.slane %v1716, 5
  %v1719 = vsel %vm629, %v1714, %v1718
  %v1721 = vshrl.u32 %v1636, 16
  %v1723 = vrot.slane %v1721, 4
  %v1724 = vshll.u32 %v1636, 16
  %v1726 = vrot.slane %v1724, 5
  %v1727 = vor.u32 %v1723, %v1726
  %v1728 = vrot.slane %v1727, 4
  %v1730 = vshll.u32 %v1637, 16
  %v1732 = vrot.slane %v1730, 5
  %v1733 = vsel %vm629, %v1728, %v1732
  %v1735 = vshrl.u32 %v1638, 16
  %v1737 = vrot.slane %v1735, 4
  %v1738 = vshll.u32 %v1638, 16
  %v1740 = vrot.slane %v1738, 5
  %v1741 = vor.u32 %v1737, %v1740
  %v1742 = vrot.slane %v1741, 4
  %v1744 = vshll.u32 %v1639, 16
  %v1746 = vrot.slane %v1744, 5
  %v1747 = vsel %vm629, %v1742, %v1746
  %v1749 = vshrl.u32 %v1640, 16
  %v1751 = vrot.slane %v1749, 4
  %v1752 = vshll.u32 %v1640, 16
  %v1754 = vrot.slane %v1752, 5
  %v1755 = vor.u32 %v1751, %v1754
  %v1756 = vrot.slane %v1755, 4
  %v1758 = vshll.u32 %v1641, 16
  %v1760 = vrot.slane %v1758, 5
  %v1761 = vsel %vm629, %v1756, %v1760
  %v1763 = vshrl.u32 %v1642, 16
  %v1765 = vrot.slane %v1763, 4
  %v1766 = vshll.u32 %v1642, 16
  %v1768 = vrot.slane %v1766, 5
  %v1769 = vor.u32 %v1765, %v1768
  %v1770 = vrot.slane %v1769, 4
  %v1772 = vshll.u32 %v1643, 16
  %v1774 = vrot.slane %v1772, 5
  %v1775 = vsel %vm629, %v1770, %v1774
  %v1777 = vshrl.u32 %v1644, 16
  %v1779 = vrot.slane %v1777, 4
  %v1780 = vshll.u32 %v1644, 16
  %v1782 = vrot.slane %v1780, 5
  %v1783 = vor.u32 %v1779, %v1782
  %v1784 = vrot.slane %v1783, 4
  %v1786 = vshll.u32 %v1645, 16
  %v1788 = vrot.slane %v1786, 5
  %v1789 = vsel %vm629, %v1784, %v1788
  %v1791 = vshrl.u32 %v1646, 16
  %v1793 = vrot.slane %v1791, 4
  %v1794 = vshll.u32 %v1646, 16
  %v1796 = vrot.slane %v1794, 5
  %v1797 = vor.u32 %v1793, %v1796
  %v1798 = vrot.slane %v1797, 4
  %v1800 = vshll.u32 %v1647, 16
  %v1802 = vrot.slane %v1800, 5
  %v1803 = vsel %vm629, %v1798, %v1802
  %v1805 = vshrl.u32 %v1648, 16
  %v1807 = vrot.slane %v1805, 4
  %v1808 = vshll.u32 %v1648, 16
  %v1810 = vrot.slane %v1808, 5
  %v1811 = vor.u32 %v1807, %v1810
  %v1812 = vrot.slane %v1811, 4
  %v1814 = vshll.u32 %v1649, 16
  %v1816 = vrot.slane %v1814, 5
  %v1817 = vsel %vm629, %v1812, %v1816
  %v1819 = vshrl.u32 %v1650, 16
  %v1821 = vrot.slane %v1819, 4
  %v1822 = vshll.u32 %v1650, 16
  %v1824 = vrot.slane %v1822, 5
  %v1825 = vor.u32 %v1821, %v1824
  %v1826 = vrot.slane %v1825, 4
  %v1828 = vshll.u32 %v1651, 16
  %v1830 = vrot.slane %v1828, 5
  %v1831 = vsel %vm629, %v1826, %v1830
  %v1833 = vshrl.u32 %v1652, 16
  %v1835 = vrot.slane %v1833, 4
  %v1836 = vshll.u32 %v1652, 16
  %v1838 = vrot.slane %v1836, 5
  %v1839 = vor.u32 %v1835, %v1838
  %v1840 = vrot.slane %v1839, 4
  %v1842 = vshll.u32 %v1653, 16
  %v1844 = vrot.slane %v1842, 5
  %v1845 = vsel %vm629, %v1840, %v1844
  %v1847 = vshrl.u32 %v1654, 16
  %v1849 = vrot.slane %v1847, 4
  %v1850 = vshll.u32 %v1654, 16
  %v1852 = vrot.slane %v1850, 5
  %v1853 = vor.u32 %v1849, %v1852
  %v1854 = vrot.slane %v1853, 4
  %v1856 = vshll.u32 %v1655, 16
  %v1858 = vrot.slane %v1856, 5
  %v1859 = vsel %vm629, %v1854, %v1858
  %v1861 = vshrl.u32 %v1656, 16
  %v1863 = vrot.slane %v1861, 4
  %v1864 = vshll.u32 %v1656, 16
  %v1866 = vrot.slane %v1864, 5
  %v1867 = vor.u32 %v1863, %v1866
  %v1868 = vrot.slane %v1867, 4
  %v1870 = vshll.u32 %v1657, 16
  %v1872 = vrot.slane %v1870, 5
  %v1873 = vsel %vm629, %v1868, %v1872
  %v1875 = vshrl.u32 %v1658, 16
  %v1877 = vrot.slane %v1875, 4
  %v1878 = vshll.u32 %v1658, 16
  %v1880 = vrot.slane %v1878, 5
  %v1881 = vor.u32 %v1877, %v1880
  %v1882 = vrot.slane %v1881, 4
  %v1884 = vshll.u32 %v1659, 16
  %v1886 = vrot.slane %v1884, 5
  %v1887 = vsel %vm629, %v1882, %v1886
  %v1889 = vshrl.u32 %v1660, 16
  %v1891 = vrot.slane %v1889, 4
  %v1892 = vshll.u32 %v1660, 16
  %v1894 = vrot.slane %v1892, 5
  %v1895 = vor.u32 %v1891, %v1894
  %v1896 = vrot.slane %v1895, 4
  %v1898 = vshll.u32 %v1661, 16
  %v1900 = vrot.slane %v1898, 5
  %v1901 = vsel %vm629, %v1896, %v1900
  %s1902 = scalar_lea.vmem %s1, 320
  %v1903 = vld [vmem:[%s1902] sm:$0xf]
  %v1904 = vld [vmem:[%s1902 + $0x4] sm:$0xf]
  %v1905 = vld [vmem:[%s1902 + $0x8] sm:$0xf]
  %v1906 = vld [vmem:[%s1902 + $0xc] sm:$0xf]
  %v1907 = vld [vmem:[%s1902 + $0x10] sm:$0xf]
  %v1908 = vld [vmem:[%s1902 + $0x14] sm:$0xf]
  %v1909 = vld [vmem:[%s1902 + $0x18] sm:$0xf]
  %v1910 = vld [vmem:[%s1902 + $0x1c] sm:$0xf]
  %v1911 = vld [vmem:[%s1902 + $0x20] sm:$0xf]
  %v1912 = vld [vmem:[%s1902 + $0x24] sm:$0xf]
  %v1913 = vld [vmem:[%s1902 + $0x28] sm:$0xf]
  %v1914 = vld [vmem:[%s1902 + $0x2c] sm:$0xf]
  %v1915 = vld [vmem:[%s1902 + $0x30] sm:$0xf]
  %v1916 = vld [vmem:[%s1902 + $0x34] sm:$0xf]
  %v1917 = vld [vmem:[%s1902 + $0x38] sm:$0xf]
  %v1918 = vld [vmem:[%s1902 + $0x3c] sm:$0xf]
  %v1919 = vunpack.c.l.b16 %v1691
  %v1920 = vunpack.c.l.b16 %v1705
  %v1921 = vunpack.c.l.b16 %v1719
  %v1922 = vunpack.c.l.b16 %v1733
  %v1923 = vunpack.c.l.b16 %v1747
  %v1924 = vunpack.c.l.b16 %v1761
  %v1925 = vunpack.c.l.b16 %v1775
  %v1926 = vunpack.c.l.b16 %v1789
  %v1927 = vunpack.c.l.b16 %v1803
  %v1928 = vunpack.c.l.b16 %v1817
  %v1929 = vunpack.c.l.b16 %v1831
  %v1930 = vunpack.c.l.b16 %v1845
  %v1931 = vunpack.c.l.b16 %v1859
  %v1932 = vunpack.c.l.b16 %v1873
  %v1933 = vunpack.c.l.b16 %v1887
  %v1934 = vunpack.c.l.b16 %v1901
  %v1935 = vpack.c.b16 %v1920, %v1919
  %v1936 = vpack.c.b16 %v1922, %v1921
  %v1937 = vpack.c.b16 %v1924, %v1923
  %v1938 = vpack.c.b16 %v1926, %v1925
  %v1939 = vpack.c.b16 %v1928, %v1927
  %v1940 = vpack.c.b16 %v1930, %v1929
  %v1941 = vpack.c.b16 %v1932, %v1931
  %v1942 = vpack.c.b16 %v1934, %v1933
  %v1967 = vunpack.c.l.b16 %v1903
  %v1968 = vunpack.c.l.b16 %v1904
  %v1969 = vunpack.c.l.b16 %v1905
  %v1970 = vunpack.c.l.b16 %v1906
  %v1971 = vunpack.c.l.b16 %v1907
  %v1972 = vunpack.c.l.b16 %v1908
  %v1973 = vunpack.c.l.b16 %v1909
  %v1974 = vunpack.c.l.b16 %v1910
  %v1975 = vunpack.c.l.b16 %v1911
  %v1976 = vunpack.c.l.b16 %v1912
  %v1977 = vunpack.c.l.b16 %v1913
  %v1978 = vunpack.c.l.b16 %v1914
  %v1979 = vunpack.c.l.b16 %v1915
  %v1980 = vunpack.c.l.b16 %v1916
  %v1981 = vunpack.c.l.b16 %v1917
  %v1982 = vunpack.c.l.b16 %v1918
  %v1983 = vpack.c.b16 %v1968, %v1967
  %v1984 = vpack.c.b16 %v1970, %v1969
  %v1985 = vpack.c.b16 %v1972, %v1971
  %v1986 = vpack.c.b16 %v1974, %v1973
  %v1987 = vpack.c.b16 %v1976, %v1975
  %v1988 = vpack.c.b16 %v1978, %v1977
  %v1989 = vpack.c.b16 %v1980, %v1979
  %v1990 = vpack.c.b16 %v1982, %v1981
  %1999 = vmatprep.subr.bf16.mxu0 0
  %2000 = vmatpush1.bf16.msra.mxu0 %v1990
  %2001 = vmatprep.subr.bf16.mxu0 0
  %2002 = vmatpush1.bf16.msra.mxu0 %v1989
  %2003 = vmatprep.subr.bf16.mxu0 0
  %2004 = vmatpush1.bf16.msra.mxu0 %v1988
  %2005 = vmatprep.subr.bf16.mxu0 0
  %2006 = vmatpush1.bf16.msra.mxu0 %v1987
  %2007 = vmatprep.subr.bf16.mxu0 0
  %2008 = vmatpush1.bf16.msra.mxu0 %v1986
  %2009 = vmatprep.subr.bf16.mxu0 0
  %2010 = vmatpush1.bf16.msra.mxu0 %v1985
  %2011 = vmatprep.subr.bf16.mxu0 0
  %2012 = vmatpush1.bf16.msra.mxu0 %v1984
  %2013 = vmatprep.subr.bf16.mxu0 0
  %2014 = vmatpush1.bf16.msra.mxu0 %v1983
  %2015 = vmatprep.subr.bf16.mxu0 0
  %2016 = vmatpush2.bf16.msra.mxu0 0
  %2017 = vmatprep.subr.bf16.mxu0 0
  %2018 = vmatpush2.bf16.msra.mxu0 0
  %2019 = vmatprep.subr.bf16.mxu0 0
  %2020 = vmatpush2.bf16.msra.mxu0 0
  %2021 = vmatprep.subr.bf16.mxu0 0
  %2022 = vmatpush2.bf16.msra.mxu0 0
  %2023 = vmatprep.subr.bf16.mxu0 0
  %2024 = vmatpush2.bf16.msra.mxu0 0
  %2025 = vmatprep.subr.bf16.mxu0 0
  %2026 = vmatpush2.bf16.msra.mxu0 0
  %2027 = vmatprep.subr.bf16.mxu0 0
  %2028 = vmatpush2.bf16.msra.mxu0 0
  %2029 = vmatprep.subr.bf16.mxu0 0
  %2030 = vmatpush2.bf16.msra.mxu0 0
  %2031 = vmatprep.mubr.bf16.mxu0 0
  %2032 = vmatmul.mubr.bf16.gmra.mxu0 %v1935
  %v2033 = vpop.f32.mrf.mxu0
  %v2034 = vadd.f32 0.0, %v2033
  %v2035 = vpop.f32.mrf.mxu0
  %v2036 = vpop.f32.mrf.mxu0
  %v2037 = vadd.f32 0.0, %v2036
  %v2038 = vpop.f32.mrf.mxu0
  %2039 = vmatprep.mubr.bf16.mxu0 0
  %2040 = vmatmul.mubr.bf16.gmra.mxu0 %v1936
  %v2041 = vpop.f32.mrf.mxu0
  %v2042 = vadd.f32 0.0, %v2041
  %v2043 = vpop.f32.mrf.mxu0
  %v2044 = vpop.f32.mrf.mxu0
  %v2045 = vadd.f32 0.0, %v2044
  %v2046 = vpop.f32.mrf.mxu0
  %2047 = vmatprep.mubr.bf16.mxu0 0
  %2048 = vmatmul.mubr.bf16.gmra.mxu0 %v1937
  %v2049 = vpop.f32.mrf.mxu0
  %v2050 = vadd.f32 0.0, %v2049
  %v2051 = vpop.f32.mrf.mxu0
  %v2052 = vpop.f32.mrf.mxu0
  %v2053 = vadd.f32 0.0, %v2052
  %v2054 = vpop.f32.mrf.mxu0
  %2055 = vmatprep.mubr.bf16.mxu0 0
  %2056 = vmatmul.mubr.bf16.gmra.mxu0 %v1938
  %v2057 = vpop.f32.mrf.mxu0
  %v2058 = vadd.f32 0.0, %v2057
  %v2059 = vpop.f32.mrf.mxu0
  %v2060 = vpop.f32.mrf.mxu0
  %v2061 = vadd.f32 0.0, %v2060
  %v2062 = vpop.f32.mrf.mxu0
  %2063 = vmatprep.mubr.bf16.mxu0 0
  %2064 = vmatmul.mubr.bf16.gmra.mxu0 %v1939
  %v2065 = vpop.f32.mrf.mxu0
  %v2066 = vadd.f32 0.0, %v2065
  %v2067 = vpop.f32.mrf.mxu0
  %v2068 = vpop.f32.mrf.mxu0
  %v2069 = vadd.f32 0.0, %v2068
  %v2070 = vpop.f32.mrf.mxu0
  %2071 = vmatprep.mubr.bf16.mxu0 0
  %2072 = vmatmul.mubr.bf16.gmra.mxu0 %v1940
  %v2073 = vpop.f32.mrf.mxu0
  %v2074 = vadd.f32 0.0, %v2073
  %v2075 = vpop.f32.mrf.mxu0
  %v2076 = vpop.f32.mrf.mxu0
  %v2077 = vadd.f32 0.0, %v2076
  %v2078 = vpop.f32.mrf.mxu0
  %2079 = vmatprep.mubr.bf16.mxu0 0
  %2080 = vmatmul.mubr.bf16.gmra.mxu0 %v1941
  %v2081 = vpop.f32.mrf.mxu0
  %v2082 = vadd.f32 0.0, %v2081
  %v2083 = vpop.f32.mrf.mxu0
  %v2084 = vpop.f32.mrf.mxu0
  %v2085 = vadd.f32 0.0, %v2084
  %v2086 = vpop.f32.mrf.mxu0
  %2087 = vmatprep.mubr.bf16.mxu0 0
  %2088 = vmatmul.mubr.bf16.gmra.mxu0 %v1942
  %v2089 = vpop.f32.mrf.mxu0
  %v2090 = vadd.f32 0.0, %v2089
  %v2091 = vpop.f32.mrf.mxu0
  %v2092 = vpop.f32.mrf.mxu0
  %v2093 = vadd.f32 0.0, %v2092
  %v2094 = vpop.f32.mrf.mxu0
  %2095 = vdwg.mxu0
  %v2096 = vadd.f32 %v1662, %v2034
  %v2097 = vadd.f32 %v1663, %v2037
  %v2098 = vadd.f32 %v1664, %v2042
  %v2099 = vadd.f32 %v1665, %v2045
  %v2100 = vadd.f32 %v1666, %v2050
  %v2101 = vadd.f32 %v1667, %v2053
  %v2102 = vadd.f32 %v1668, %v2058
  %v2103 = vadd.f32 %v1669, %v2061
  %v2104 = vadd.f32 %v1670, %v2066
  %v2105 = vadd.f32 %v1671, %v2069
  %v2106 = vadd.f32 %v1672, %v2074
  %v2107 = vadd.f32 %v1673, %v2077
  %v2108 = vadd.f32 %v1674, %v2082
  %v2109 = vadd.f32 %v1675, %v2085
  %v2110 = vadd.f32 %v1676, %v2090
  %v2111 = vadd.f32 %v1677, %v2093
  %2112 = vst [vmem:[#allocation2] sm:$0xff] %v2096
  %2113 = vst [vmem:[#allocation2 + $0x8] sm:$0xff] %v2097
  %2114 = vst [vmem:[#allocation2 + $0x10] sm:$0xff] %v2098
  %2115 = vst [vmem:[#allocation2 + $0x18] sm:$0xff] %v2099
  %2116 = vst [vmem:[#allocation2 + $0x20] sm:$0xff] %v2100
  %2117 = vst [vmem:[#allocation2 + $0x28] sm:$0xff] %v2101
  %2118 = vst [vmem:[#allocation2 + $0x30] sm:$0xff] %v2102
  %2119 = vst [vmem:[#allocation2 + $0x38] sm:$0xff] %v2103
  %2120 = vst [vmem:[#allocation2 + $0x40] sm:$0xff] %v2104
  %2121 = vst [vmem:[#allocation2 + $0x48] sm:$0xff] %v2105
  %2122 = vst [vmem:[#allocation2 + $0x50] sm:$0xff] %v2106
  %2123 = vst [vmem:[#allocation2 + $0x58] sm:$0xff] %v2107
  %2124 = vst [vmem:[#allocation2 + $0x60] sm:$0xff] %v2108
  %2125 = vst [vmem:[#allocation2 + $0x68] sm:$0xff] %v2109
  %2126 = vst [vmem:[#allocation2 + $0x70] sm:$0xff] %v2110
  %2127 = vst [vmem:[#allocation2 + $0x78] sm:$0xff] %v2111
  %s2128 = scalar_lea.vmem %s0, 8
  %v2129 = vld [vmem:[%s2128] sm:$0xf]
  %v2130 = vld [vmem:[%s2128 + $0x8] sm:$0xf]
  %v2131 = vld [vmem:[%s2128 + $0x10] sm:$0xf]
  %v2132 = vld [vmem:[%s2128 + $0x18] sm:$0xf]
  %v2133 = vld [vmem:[%s2128 + $0x20] sm:$0xf]
  %v2134 = vld [vmem:[%s2128 + $0x28] sm:$0xf]
  %v2135 = vld [vmem:[%s2128 + $0x30] sm:$0xf]
  %v2136 = vld [vmem:[%s2128 + $0x38] sm:$0xf]
  %v2137 = vld [vmem:[%s2128 + $0x120] sm:$0xf]
  %v2138 = vld [vmem:[%s2128 + $0x128] sm:$0xf]
  %v2139 = vld [vmem:[%s2128 + $0x130] sm:$0xf]
  %v2140 = vld [vmem:[%s2128 + $0x138] sm:$0xf]
  %v2141 = vld [vmem:[%s2128 + $0x140] sm:$0xf]
  %v2142 = vld [vmem:[%s2128 + $0x148] sm:$0xf]
  %v2143 = vld [vmem:[%s2128 + $0x150] sm:$0xf]
  %v2144 = vld [vmem:[%s2128 + $0x158] sm:$0xf]
  %v2145 = vld [vmem:[#allocation2] sm:$0xff]
  %v2146 = vld [vmem:[#allocation2 + $0x8] sm:$0xff]
  %v2147 = vld [vmem:[#allocation2 + $0x10] sm:$0xff]
  %v2148 = vld [vmem:[#allocation2 + $0x18] sm:$0xff]
  %v2149 = vld [vmem:[#allocation2 + $0x20] sm:$0xff]
  %v2150 = vld [vmem:[#allocation2 + $0x28] sm:$0xff]
  %v2151 = vld [vmem:[#allocation2 + $0x30] sm:$0xff]
  %v2152 = vld [vmem:[#allocation2 + $0x38] sm:$0xff]
  %v2153 = vld [vmem:[#allocation2 + $0x40] sm:$0xff]
  %v2154 = vld [vmem:[#allocation2 + $0x48] sm:$0xff]
  %v2155 = vld [vmem:[#allocation2 + $0x50] sm:$0xff]
  %v2156 = vld [vmem:[#allocation2 + $0x58] sm:$0xff]
  %v2157 = vld [vmem:[#allocation2 + $0x60] sm:$0xff]
  %v2158 = vld [vmem:[#allocation2 + $0x68] sm:$0xff]
  %v2159 = vld [vmem:[#allocation2 + $0x70] sm:$0xff]
  %v2160 = vld [vmem:[#allocation2 + $0x78] sm:$0xff]
  %s2161 = scalar_lea.vmem %s1, 384
  %v2162 = vld [vmem:[%s2161] sm:$0xf]
  %v2163 = vld [vmem:[%s2161 + $0x4] sm:$0xf]
  %v2164 = vld [vmem:[%s2161 + $0x8] sm:$0xf]
  %v2165 = vld [vmem:[%s2161 + $0xc] sm:$0xf]
  %v2166 = vld [vmem:[%s2161 + $0x10] sm:$0xf]
  %v2167 = vld [vmem:[%s2161 + $0x14] sm:$0xf]
  %v2168 = vld [vmem:[%s2161 + $0x18] sm:$0xf]
  %v2169 = vld [vmem:[%s2161 + $0x1c] sm:$0xf]
  %v2170 = vld [vmem:[%s2161 + $0x20] sm:$0xf]
  %v2171 = vld [vmem:[%s2161 + $0x24] sm:$0xf]
  %v2172 = vld [vmem:[%s2161 + $0x28] sm:$0xf]
  %v2173 = vld [vmem:[%s2161 + $0x2c] sm:$0xf]
  %v2174 = vld [vmem:[%s2161 + $0x30] sm:$0xf]
  %v2175 = vld [vmem:[%s2161 + $0x34] sm:$0xf]
  %v2176 = vld [vmem:[%s2161 + $0x38] sm:$0xf]
  %v2177 = vld [vmem:[%s2161 + $0x3c] sm:$0xf]
  %v2194 = vunpack.c.l.b16 %v2129
  %v2195 = vunpack.c.l.b16 %v2130
  %v2196 = vunpack.c.l.b16 %v2131
  %v2197 = vunpack.c.l.b16 %v2132
  %v2198 = vunpack.c.l.b16 %v2133
  %v2199 = vunpack.c.l.b16 %v2134
  %v2200 = vunpack.c.l.b16 %v2135
  %v2201 = vunpack.c.l.b16 %v2136
  %v2202 = vunpack.c.l.b16 %v2137
  %v2203 = vunpack.c.l.b16 %v2138
  %v2204 = vunpack.c.l.b16 %v2139
  %v2205 = vunpack.c.l.b16 %v2140
  %v2206 = vunpack.c.l.b16 %v2141
  %v2207 = vunpack.c.l.b16 %v2142
  %v2208 = vunpack.c.l.b16 %v2143
  %v2209 = vunpack.c.l.b16 %v2144
  %v2210 = vpack.c.b16 %v2195, %v2194
  %v2211 = vpack.c.b16 %v2197, %v2196
  %v2212 = vpack.c.b16 %v2199, %v2198
  %v2213 = vpack.c.b16 %v2201, %v2200
  %v2214 = vpack.c.b16 %v2203, %v2202
  %v2215 = vpack.c.b16 %v2205, %v2204
  %v2216 = vpack.c.b16 %v2207, %v2206
  %v2217 = vpack.c.b16 %v2209, %v2208
  %v2242 = vunpack.c.l.b16 %v2162
  %v2243 = vunpack.c.l.b16 %v2163
  %v2244 = vunpack.c.l.b16 %v2164
  %v2245 = vunpack.c.l.b16 %v2165
  %v2246 = vunpack.c.l.b16 %v2166
  %v2247 = vunpack.c.l.b16 %v2167
  %v2248 = vunpack.c.l.b16 %v2168
  %v2249 = vunpack.c.l.b16 %v2169
  %v2250 = vunpack.c.l.b16 %v2170
  %v2251 = vunpack.c.l.b16 %v2171
  %v2252 = vunpack.c.l.b16 %v2172
  %v2253 = vunpack.c.l.b16 %v2173
  %v2254 = vunpack.c.l.b16 %v2174
  %v2255 = vunpack.c.l.b16 %v2175
  %v2256 = vunpack.c.l.b16 %v2176
  %v2257 = vunpack.c.l.b16 %v2177
  %v2258 = vpack.c.b16 %v2243, %v2242
  %v2259 = vpack.c.b16 %v2245, %v2244
  %v2260 = vpack.c.b16 %v2247, %v2246
  %v2261 = vpack.c.b16 %v2249, %v2248
  %v2262 = vpack.c.b16 %v2251, %v2250
  %v2263 = vpack.c.b16 %v2253, %v2252
  %v2264 = vpack.c.b16 %v2255, %v2254
  %v2265 = vpack.c.b16 %v2257, %v2256
  %2274 = vmatprep.subr.bf16.mxu0 0
  %2275 = vmatpush1.bf16.msra.mxu0 %v2265
  %2276 = vmatprep.subr.bf16.mxu0 0
  %2277 = vmatpush1.bf16.msra.mxu0 %v2264
  %2278 = vmatprep.subr.bf16.mxu0 0
  %2279 = vmatpush1.bf16.msra.mxu0 %v2263
  %2280 = vmatprep.subr.bf16.mxu0 0
  %2281 = vmatpush1.bf16.msra.mxu0 %v2262
  %2282 = vmatprep.subr.bf16.mxu0 0
  %2283 = vmatpush1.bf16.msra.mxu0 %v2261
  %2284 = vmatprep.subr.bf16.mxu0 0
  %2285 = vmatpush1.bf16.msra.mxu0 %v2260
  %2286 = vmatprep.subr.bf16.mxu0 0
  %2287 = vmatpush1.bf16.msra.mxu0 %v2259
  %2288 = vmatprep.subr.bf16.mxu0 0
  %2289 = vmatpush1.bf16.msra.mxu0 %v2258
  %2290 = vmatprep.subr.bf16.mxu0 0
  %2291 = vmatpush2.bf16.msra.mxu0 0
  %2292 = vmatprep.subr.bf16.mxu0 0
  %2293 = vmatpush2.bf16.msra.mxu0 0
  %2294 = vmatprep.subr.bf16.mxu0 0
  %2295 = vmatpush2.bf16.msra.mxu0 0
  %2296 = vmatprep.subr.bf16.mxu0 0
  %2297 = vmatpush2.bf16.msra.mxu0 0
  %2298 = vmatprep.subr.bf16.mxu0 0
  %2299 = vmatpush2.bf16.msra.mxu0 0
  %2300 = vmatprep.subr.bf16.mxu0 0
  %2301 = vmatpush2.bf16.msra.mxu0 0
  %2302 = vmatprep.subr.bf16.mxu0 0
  %2303 = vmatpush2.bf16.msra.mxu0 0
  %2304 = vmatprep.subr.bf16.mxu0 0
  %2305 = vmatpush2.bf16.msra.mxu0 0
  %2306 = vmatprep.mubr.bf16.mxu0 0
  %2307 = vmatmul.mubr.bf16.gmra.mxu0 %v2210
  %v2308 = vpop.f32.mrf.mxu0
  %v2309 = vadd.f32 0.0, %v2308
  %v2310 = vpop.f32.mrf.mxu0
  %v2311 = vpop.f32.mrf.mxu0
  %v2312 = vadd.f32 0.0, %v2311
  %v2313 = vpop.f32.mrf.mxu0
  %2314 = vmatprep.mubr.bf16.mxu0 0
  %2315 = vmatmul.mubr.bf16.gmra.mxu0 %v2211
  %v2316 = vpop.f32.mrf.mxu0
  %v2317 = vadd.f32 0.0, %v2316
  %v2318 = vpop.f32.mrf.mxu0
  %v2319 = vpop.f32.mrf.mxu0
  %v2320 = vadd.f32 0.0, %v2319
  %v2321 = vpop.f32.mrf.mxu0
  %2322 = vmatprep.mubr.bf16.mxu0 0
  %2323 = vmatmul.mubr.bf16.gmra.mxu0 %v2212
  %v2324 = vpop.f32.mrf.mxu0
  %v2325 = vadd.f32 0.0, %v2324
  %v2326 = vpop.f32.mrf.mxu0
  %v2327 = vpop.f32.mrf.mxu0
  %v2328 = vadd.f32 0.0, %v2327
  %v2329 = vpop.f32.mrf.mxu0
  %2330 = vmatprep.mubr.bf16.mxu0 0
  %2331 = vmatmul.mubr.bf16.gmra.mxu0 %v2213
  %v2332 = vpop.f32.mrf.mxu0
  %v2333 = vadd.f32 0.0, %v2332
  %v2334 = vpop.f32.mrf.mxu0
  %v2335 = vpop.f32.mrf.mxu0
  %v2336 = vadd.f32 0.0, %v2335
  %v2337 = vpop.f32.mrf.mxu0
  %2338 = vmatprep.mubr.bf16.mxu0 0
  %2339 = vmatmul.mubr.bf16.gmra.mxu0 %v2214
  %v2340 = vpop.f32.mrf.mxu0
  %v2341 = vadd.f32 0.0, %v2340
  %v2342 = vpop.f32.mrf.mxu0
  %v2343 = vpop.f32.mrf.mxu0
  %v2344 = vadd.f32 0.0, %v2343
  %v2345 = vpop.f32.mrf.mxu0
  %2346 = vmatprep.mubr.bf16.mxu0 0
  %2347 = vmatmul.mubr.bf16.gmra.mxu0 %v2215
  %v2348 = vpop.f32.mrf.mxu0
  %v2349 = vadd.f32 0.0, %v2348
  %v2350 = vpop.f32.mrf.mxu0
  %v2351 = vpop.f32.mrf.mxu0
  %v2352 = vadd.f32 0.0, %v2351
  %v2353 = vpop.f32.mrf.mxu0
  %2354 = vmatprep.mubr.bf16.mxu0 0
  %2355 = vmatmul.mubr.bf16.gmra.mxu0 %v2216
  %v2356 = vpop.f32.mrf.mxu0
  %v2357 = vadd.f32 0.0, %v2356
  %v2358 = vpop.f32.mrf.mxu0
  %v2359 = vpop.f32.mrf.mxu0
  %v2360 = vadd.f32 0.0, %v2359
  %v2361 = vpop.f32.mrf.mxu0
  %2362 = vmatprep.mubr.bf16.mxu0 0
  %2363 = vmatmul.mubr.bf16.gmra.mxu0 %v2217
  %v2364 = vpop.f32.mrf.mxu0
  %v2365 = vadd.f32 0.0, %v2364
  %v2366 = vpop.f32.mrf.mxu0
  %v2367 = vpop.f32.mrf.mxu0
  %v2368 = vadd.f32 0.0, %v2367
  %v2369 = vpop.f32.mrf.mxu0
  %2370 = vdwg.mxu0
  %v2371 = vadd.f32 %v2145, %v2309
  %v2372 = vadd.f32 %v2146, %v2312
  %v2373 = vadd.f32 %v2147, %v2317
  %v2374 = vadd.f32 %v2148, %v2320
  %v2375 = vadd.f32 %v2149, %v2325
  %v2376 = vadd.f32 %v2150, %v2328
  %v2377 = vadd.f32 %v2151, %v2333
  %v2378 = vadd.f32 %v2152, %v2336
  %v2379 = vadd.f32 %v2153, %v2341
  %v2380 = vadd.f32 %v2154, %v2344
  %v2381 = vadd.f32 %v2155, %v2349
  %v2382 = vadd.f32 %v2156, %v2352
  %v2383 = vadd.f32 %v2157, %v2357
  %v2384 = vadd.f32 %v2158, %v2360
  %v2385 = vadd.f32 %v2159, %v2365
  %v2386 = vadd.f32 %v2160, %v2368
  %2387 = vst [vmem:[#allocation2] sm:$0xff] %v2371
  %2388 = vst [vmem:[#allocation2 + $0x8] sm:$0xff] %v2372
  %2389 = vst [vmem:[#allocation2 + $0x10] sm:$0xff] %v2373
  %2390 = vst [vmem:[#allocation2 + $0x18] sm:$0xff] %v2374
  %2391 = vst [vmem:[#allocation2 + $0x20] sm:$0xff] %v2375
  %2392 = vst [vmem:[#allocation2 + $0x28] sm:$0xff] %v2376
  %2393 = vst [vmem:[#allocation2 + $0x30] sm:$0xff] %v2377
  %2394 = vst [vmem:[#allocation2 + $0x38] sm:$0xff] %v2378
  %2395 = vst [vmem:[#allocation2 + $0x40] sm:$0xff] %v2379
  %2396 = vst [vmem:[#allocation2 + $0x48] sm:$0xff] %v2380
  %2397 = vst [vmem:[#allocation2 + $0x50] sm:$0xff] %v2381
  %2398 = vst [vmem:[#allocation2 + $0x58] sm:$0xff] %v2382
  %2399 = vst [vmem:[#allocation2 + $0x60] sm:$0xff] %v2383
  %2400 = vst [vmem:[#allocation2 + $0x68] sm:$0xff] %v2384
  %2401 = vst [vmem:[#allocation2 + $0x70] sm:$0xff] %v2385
  %2402 = vst [vmem:[#allocation2 + $0x78] sm:$0xff] %v2386
  %s2403 = scalar_lea.vmem %s0, 80
  %v2404 = vld [vmem:[%s2403] sm:$0xf]
  %v2405 = vld [vmem:[%s2403 + $0x8] sm:$0xf]
  %v2406 = vld [vmem:[%s2403 + $0x10] sm:$0xf]
  %v2407 = vld [vmem:[%s2403 + $0x18] sm:$0xf]
  %v2408 = vld [vmem:[%s2403 + $0x20] sm:$0xf]
  %v2409 = vld [vmem:[%s2403 + $0x28] sm:$0xf]
  %v2410 = vld [vmem:[%s2403 + $0x30] sm:$0xf]
  %v2411 = vld [vmem:[%s2403 + $0x38] sm:$0xf]
  %v2412 = vld [vmem:[%s2403 + $0x120] sm:$0xf]
  %v2413 = vld [vmem:[%s2403 + $0x128] sm:$0xf]
  %v2414 = vld [vmem:[%s2403 + $0x130] sm:$0xf]
  %v2415 = vld [vmem:[%s2403 + $0x138] sm:$0xf]
  %v2416 = vld [vmem:[%s2403 + $0x140] sm:$0xf]
  %v2417 = vld [vmem:[%s2403 + $0x148] sm:$0xf]
  %v2418 = vld [vmem:[%s2403 + $0x150] sm:$0xf]
  %v2419 = vld [vmem:[%s2403 + $0x158] sm:$0xf]
  %v2420 = vld [vmem:[#allocation2] sm:$0xff]
  %v2421 = vld [vmem:[#allocation2 + $0x8] sm:$0xff]
  %v2422 = vld [vmem:[#allocation2 + $0x10] sm:$0xff]
  %v2423 = vld [vmem:[#allocation2 + $0x18] sm:$0xff]
  %v2424 = vld [vmem:[#allocation2 + $0x20] sm:$0xff]
  %v2425 = vld [vmem:[#allocation2 + $0x28] sm:$0xff]
  %v2426 = vld [vmem:[#allocation2 + $0x30] sm:$0xff]
  %v2427 = vld [vmem:[#allocation2 + $0x38] sm:$0xff]
  %v2428 = vld [vmem:[#allocation2 + $0x40] sm:$0xff]
  %v2429 = vld [vmem:[#allocation2 + $0x48] sm:$0xff]
  %v2430 = vld [vmem:[#allocation2 + $0x50] sm:$0xff]
  %v2431 = vld [vmem:[#allocation2 + $0x58] sm:$0xff]
  %v2432 = vld [vmem:[#allocation2 + $0x60] sm:$0xff]
  %v2433 = vld [vmem:[#allocation2 + $0x68] sm:$0xff]
  %v2434 = vld [vmem:[#allocation2 + $0x70] sm:$0xff]
  %v2435 = vld [vmem:[#allocation2 + $0x78] sm:$0xff]
  %s2436 = scalar_lea.vmem %s1, 448
  %v2437 = vld [vmem:[%s2436] sm:$0xf]
  %v2438 = vld [vmem:[%s2436 + $0x4] sm:$0xf]
  %v2439 = vld [vmem:[%s2436 + $0x8] sm:$0xf]
  %v2440 = vld [vmem:[%s2436 + $0xc] sm:$0xf]
  %v2441 = vld [vmem:[%s2436 + $0x10] sm:$0xf]
  %v2442 = vld [vmem:[%s2436 + $0x14] sm:$0xf]
  %v2443 = vld [vmem:[%s2436 + $0x18] sm:$0xf]
  %v2444 = vld [vmem:[%s2436 + $0x1c] sm:$0xf]
  %v2445 = vld [vmem:[%s2436 + $0x20] sm:$0xf]
  %v2446 = vld [vmem:[%s2436 + $0x24] sm:$0xf]
  %v2447 = vld [vmem:[%s2436 + $0x28] sm:$0xf]
  %v2448 = vld [vmem:[%s2436 + $0x2c] sm:$0xf]
  %v2449 = vld [vmem:[%s2436 + $0x30] sm:$0xf]
  %v2450 = vld [vmem:[%s2436 + $0x34] sm:$0xf]
  %v2451 = vld [vmem:[%s2436 + $0x38] sm:$0xf]
  %v2452 = vld [vmem:[%s2436 + $0x3c] sm:$0xf]
  %v2469 = vunpack.c.l.b16 %v2404
  %v2470 = vunpack.c.l.b16 %v2405
  %v2471 = vunpack.c.l.b16 %v2406
  %v2472 = vunpack.c.l.b16 %v2407
  %v2473 = vunpack.c.l.b16 %v2408
  %v2474 = vunpack.c.l.b16 %v2409
  %v2475 = vunpack.c.l.b16 %v2410
  %v2476 = vunpack.c.l.b16 %v2411
  %v2477 = vunpack.c.l.b16 %v2412
  %v2478 = vunpack.c.l.b16 %v2413
  %v2479 = vunpack.c.l.b16 %v2414
  %v2480 = vunpack.c.l.b16 %v2415
  %v2481 = vunpack.c.l.b16 %v2416
  %v2482 = vunpack.c.l.b16 %v2417
  %v2483 = vunpack.c.l.b16 %v2418
  %v2484 = vunpack.c.l.b16 %v2419
  %v2485 = vpack.c.b16 %v2470, %v2469
  %v2486 = vpack.c.b16 %v2472, %v2471
  %v2487 = vpack.c.b16 %v2474, %v2473
  %v2488 = vpack.c.b16 %v2476, %v2475
  %v2489 = vpack.c.b16 %v2478, %v2477
  %v2490 = vpack.c.b16 %v2480, %v2479
  %v2491 = vpack.c.b16 %v2482, %v2481
  %v2492 = vpack.c.b16 %v2484, %v2483
  %v2517 = vunpack.c.l.b16 %v2437
  %v2518 = vunpack.c.l.b16 %v2438
  %v2519 = vunpack.c.l.b16 %v2439
  %v2520 = vunpack.c.l.b16 %v2440
  %v2521 = vunpack.c.l.b16 %v2441
  %v2522 = vunpack.c.l.b16 %v2442
  %v2523 = vunpack.c.l.b16 %v2443
  %v2524 = vunpack.c.l.b16 %v2444
  %v2525 = vunpack.c.l.b16 %v2445
  %v2526 = vunpack.c.l.b16 %v2446
  %v2527 = vunpack.c.l.b16 %v2447
  %v2528 = vunpack.c.l.b16 %v2448
  %v2529 = vunpack.c.l.b16 %v2449
  %v2530 = vunpack.c.l.b16 %v2450
  %v2531 = vunpack.c.l.b16 %v2451
  %v2532 = vunpack.c.l.b16 %v2452
  %v2533 = vpack.c.b16 %v2518, %v2517
  %v2534 = vpack.c.b16 %v2520, %v2519
  %v2535 = vpack.c.b16 %v2522, %v2521
  %v2536 = vpack.c.b16 %v2524, %v2523
  %v2537 = vpack.c.b16 %v2526, %v2525
  %v2538 = vpack.c.b16 %v2528, %v2527
  %v2539 = vpack.c.b16 %v2530, %v2529
  %v2540 = vpack.c.b16 %v2532, %v2531
  %2549 = vmatprep.subr.bf16.mxu0 0
  %2550 = vmatpush1.bf16.msra.mxu0 %v2540
  %2551 = vmatprep.subr.bf16.mxu0 0
  %2552 = vmatpush1.bf16.msra.mxu0 %v2539
  %2553 = vmatprep.subr.bf16.mxu0 0
  %2554 = vmatpush1.bf16.msra.mxu0 %v2538
  %2555 = vmatprep.subr.bf16.mxu0 0
  %2556 = vmatpush1.bf16.msra.mxu0 %v2537
  %2557 = vmatprep.subr.bf16.mxu0 0
  %2558 = vmatpush1.bf16.msra.mxu0 %v2536
  %2559 = vmatprep.subr.bf16.mxu0 0
  %2560 = vmatpush1.bf16.msra.mxu0 %v2535
  %2561 = vmatprep.subr.bf16.mxu0 0
  %2562 = vmatpush1.bf16.msra.mxu0 %v2534
  %2563 = vmatprep.subr.bf16.mxu0 0
  %2564 = vmatpush1.bf16.msra.mxu0 %v2533
  %2565 = vmatprep.subr.bf16.mxu0 0
  %2566 = vmatpush2.bf16.msra.mxu0 0
  %2567 = vmatprep.subr.bf16.mxu0 0
  %2568 = vmatpush2.bf16.msra.mxu0 0
  %2569 = vmatprep.subr.bf16.mxu0 0
  %2570 = vmatpush2.bf16.msra.mxu0 0
  %2571 = vmatprep.subr.bf16.mxu0 0
  %2572 = vmatpush2.bf16.msra.mxu0 0
  %2573 = vmatprep.subr.bf16.mxu0 0
  %2574 = vmatpush2.bf16.msra.mxu0 0
  %2575 = vmatprep.subr.bf16.mxu0 0
  %2576 = vmatpush2.bf16.msra.mxu0 0
  %2577 = vmatprep.subr.bf16.mxu0 0
  %2578 = vmatpush2.bf16.msra.mxu0 0
  %2579 = vmatprep.subr.bf16.mxu0 0
  %2580 = vmatpush2.bf16.msra.mxu0 0
  %2581 = vmatprep.mubr.bf16.mxu0 0
  %2582 = vmatmul.mubr.bf16.gmra.mxu0 %v2485
  %v2583 = vpop.f32.mrf.mxu0
  %v2584 = vadd.f32 0.0, %v2583
  %v2585 = vpop.f32.mrf.mxu0
  %v2586 = vpop.f32.mrf.mxu0
  %v2587 = vadd.f32 0.0, %v2586
  %v2588 = vpop.f32.mrf.mxu0
  %2589 = vmatprep.mubr.bf16.mxu0 0
  %2590 = vmatmul.mubr.bf16.gmra.mxu0 %v2486
  %v2591 = vpop.f32.mrf.mxu0
  %v2592 = vadd.f32 0.0, %v2591
  %v2593 = vpop.f32.mrf.mxu0
  %v2594 = vpop.f32.mrf.mxu0
  %v2595 = vadd.f32 0.0, %v2594
  %v2596 = vpop.f32.mrf.mxu0
  %2597 = vmatprep.mubr.bf16.mxu0 0
  %2598 = vmatmul.mubr.bf16.gmra.mxu0 %v2487
  %v2599 = vpop.f32.mrf.mxu0
  %v2600 = vadd.f32 0.0, %v2599
  %v2601 = vpop.f32.mrf.mxu0
  %v2602 = vpop.f32.mrf.mxu0
  %v2603 = vadd.f32 0.0, %v2602
  %v2604 = vpop.f32.mrf.mxu0
  %2605 = vmatprep.mubr.bf16.mxu0 0
  %2606 = vmatmul.mubr.bf16.gmra.mxu0 %v2488
  %v2607 = vpop.f32.mrf.mxu0
  %v2608 = vadd.f32 0.0, %v2607
  %v2609 = vpop.f32.mrf.mxu0
  %v2610 = vpop.f32.mrf.mxu0
  %v2611 = vadd.f32 0.0, %v2610
  %v2612 = vpop.f32.mrf.mxu0
  %2613 = vmatprep.mubr.bf16.mxu0 0
  %2614 = vmatmul.mubr.bf16.gmra.mxu0 %v2489
  %v2615 = vpop.f32.mrf.mxu0
  %v2616 = vadd.f32 0.0, %v2615
  %v2617 = vpop.f32.mrf.mxu0
  %v2618 = vpop.f32.mrf.mxu0
  %v2619 = vadd.f32 0.0, %v2618
  %v2620 = vpop.f32.mrf.mxu0
  %2621 = vmatprep.mubr.bf16.mxu0 0
  %2622 = vmatmul.mubr.bf16.gmra.mxu0 %v2490
  %v2623 = vpop.f32.mrf.mxu0
  %v2624 = vadd.f32 0.0, %v2623
  %v2625 = vpop.f32.mrf.mxu0
  %v2626 = vpop.f32.mrf.mxu0
  %v2627 = vadd.f32 0.0, %v2626
  %v2628 = vpop.f32.mrf.mxu0
  %2629 = vmatprep.mubr.bf16.mxu0 0
  %2630 = vmatmul.mubr.bf16.gmra.mxu0 %v2491
  %v2631 = vpop.f32.mrf.mxu0
  %v2632 = vadd.f32 0.0, %v2631
  %v2633 = vpop.f32.mrf.mxu0
  %v2634 = vpop.f32.mrf.mxu0
  %v2635 = vadd.f32 0.0, %v2634
  %v2636 = vpop.f32.mrf.mxu0
  %2637 = vmatprep.mubr.bf16.mxu0 0
  %2638 = vmatmul.mubr.bf16.gmra.mxu0 %v2492
  %v2639 = vpop.f32.mrf.mxu0
  %v2640 = vadd.f32 0.0, %v2639
  %v2641 = vpop.f32.mrf.mxu0
  %v2642 = vpop.f32.mrf.mxu0
  %v2643 = vadd.f32 0.0, %v2642
  %v2644 = vpop.f32.mrf.mxu0
  %2645 = vdwg.mxu0
  %v2646 = vadd.f32 %v2420, %v2584
  %v2647 = vadd.f32 %v2421, %v2587
  %v2648 = vadd.f32 %v2422, %v2592
  %v2649 = vadd.f32 %v2423, %v2595
  %v2650 = vadd.f32 %v2424, %v2600
  %v2651 = vadd.f32 %v2425, %v2603
  %v2652 = vadd.f32 %v2426, %v2608
  %v2653 = vadd.f32 %v2427, %v2611
  %v2654 = vadd.f32 %v2428, %v2616
  %v2655 = vadd.f32 %v2429, %v2619
  %v2656 = vadd.f32 %v2430, %v2624
  %v2657 = vadd.f32 %v2431, %v2627
  %v2658 = vadd.f32 %v2432, %v2632
  %v2659 = vadd.f32 %v2433, %v2635
  %v2660 = vadd.f32 %v2434, %v2640
  %v2661 = vadd.f32 %v2435, %v2643
  %2662 = vst [vmem:[#allocation2] sm:$0xff] %v2646
  %2663 = vst [vmem:[#allocation2 + $0x8] sm:$0xff] %v2647
  %2664 = vst [vmem:[#allocation2 + $0x10] sm:$0xff] %v2648
  %2665 = vst [vmem:[#allocation2 + $0x18] sm:$0xff] %v2649
  %2666 = vst [vmem:[#allocation2 + $0x20] sm:$0xff] %v2650
  %2667 = vst [vmem:[#allocation2 + $0x28] sm:$0xff] %v2651
  %2668 = vst [vmem:[#allocation2 + $0x30] sm:$0xff] %v2652
  %2669 = vst [vmem:[#allocation2 + $0x38] sm:$0xff] %v2653
  %2670 = vst [vmem:[#allocation2 + $0x40] sm:$0xff] %v2654
  %2671 = vst [vmem:[#allocation2 + $0x48] sm:$0xff] %v2655
  %2672 = vst [vmem:[#allocation2 + $0x50] sm:$0xff] %v2656
  %2673 = vst [vmem:[#allocation2 + $0x58] sm:$0xff] %v2657
  %2674 = vst [vmem:[#allocation2 + $0x60] sm:$0xff] %v2658
  %2675 = vst [vmem:[#allocation2 + $0x68] sm:$0xff] %v2659
  %2676 = vst [vmem:[#allocation2 + $0x70] sm:$0xff] %v2660
  %2677 = vst [vmem:[#allocation2 + $0x78] sm:$0xff] %v2661
  %v2678 = vld [vmem:[%s2128] sm:$0xf]
  %v2679 = vld [vmem:[%s2128 + $0x4] sm:$0x1]
  %v2680 = vld [vmem:[%s2128 + $0x8] sm:$0xf]
  %v2681 = vld [vmem:[%s2128 + $0xc] sm:$0x1]
  %v2682 = vld [vmem:[%s2128 + $0x10] sm:$0xf]
  %v2683 = vld [vmem:[%s2128 + $0x14] sm:$0x1]
  %v2684 = vld [vmem:[%s2128 + $0x18] sm:$0xf]
  %v2685 = vld [vmem:[%s2128 + $0x1c] sm:$0x1]
  %v2686 = vld [vmem:[%s2128 + $0x20] sm:$0xf]
  %v2687 = vld [vmem:[%s2128 + $0x24] sm:$0x1]
  %v2688 = vld [vmem:[%s2128 + $0x28] sm:$0xf]
  %v2689 = vld [vmem:[%s2128 + $0x2c] sm:$0x1]
  %v2690 = vld [vmem:[%s2128 + $0x30] sm:$0xf]
  %v2691 = vld [vmem:[%s2128 + $0x34] sm:$0x1]
  %v2692 = vld [vmem:[%s2128 + $0x38] sm:$0xf]
  %v2693 = vld [vmem:[%s2128 + $0x3c] sm:$0x1]
  %v2694 = vld [vmem:[%s2128 + $0x120] sm:$0xf]
  %v2695 = vld [vmem:[%s2128 + $0x124] sm:$0x1]
  %v2696 = vld [vmem:[%s2128 + $0x128] sm:$0xf]
  %v2697 = vld [vmem:[%s2128 + $0x12c] sm:$0x1]
  %v2698 = vld [vmem:[%s2128 + $0x130] sm:$0xf]
  %v2699 = vld [vmem:[%s2128 + $0x134] sm:$0x1]
  %v2700 = vld [vmem:[%s2128 + $0x138] sm:$0xf]
  %v2701 = vld [vmem:[%s2128 + $0x13c] sm:$0x1]
  %v2702 = vld [vmem:[%s2128 + $0x140] sm:$0xf]
  %v2703 = vld [vmem:[%s2128 + $0x144] sm:$0x1]
  %v2704 = vld [vmem:[%s2128 + $0x148] sm:$0xf]
  %v2705 = vld [vmem:[%s2128 + $0x14c] sm:$0x1]
  %v2706 = vld [vmem:[%s2128 + $0x150] sm:$0xf]
  %v2707 = vld [vmem:[%s2128 + $0x154] sm:$0x1]
  %v2708 = vld [vmem:[%s2128 + $0x158] sm:$0xf]
  %v2709 = vld [vmem:[%s2128 + $0x15c] sm:$0x1]
  %v2710 = vld [vmem:[#allocation2] sm:$0xff]
  %v2711 = vld [vmem:[#allocation2 + $0x8] sm:$0xff]
  %v2712 = vld [vmem:[#allocation2 + $0x10] sm:$0xff]
  %v2713 = vld [vmem:[#allocation2 + $0x18] sm:$0xff]
  %v2714 = vld [vmem:[#allocation2 + $0x20] sm:$0xff]
  %v2715 = vld [vmem:[#allocation2 + $0x28] sm:$0xff]
  %v2716 = vld [vmem:[#allocation2 + $0x30] sm:$0xff]
  %v2717 = vld [vmem:[#allocation2 + $0x38] sm:$0xff]
  %v2718 = vld [vmem:[#allocation2 + $0x40] sm:$0xff]
  %v2719 = vld [vmem:[#allocation2 + $0x48] sm:$0xff]
  %v2720 = vld [vmem:[#allocation2 + $0x50] sm:$0xff]
  %v2721 = vld [vmem:[#allocation2 + $0x58] sm:$0xff]
  %v2722 = vld [vmem:[#allocation2 + $0x60] sm:$0xff]
  %v2723 = vld [vmem:[#allocation2 + $0x68] sm:$0xff]
  %v2724 = vld [vmem:[#allocation2 + $0x70] sm:$0xff]
  %v2725 = vld [vmem:[#allocation2 + $0x78] sm:$0xff]
  %v2727 = vshrl.u32 %v2678, 16
  %v2729 = vrot.slane %v2727, 4
  %v2730 = vshll.u32 %v2678, 16
  %v2732 = vrot.slane %v2730, 5
  %v2733 = vor.u32 %v2729, %v2732
  %v2734 = vrot.slane %v2733, 4
  %v2736 = vshll.u32 %v2679, 16
  %v2738 = vrot.slane %v2736, 5
  %v2739 = vsel %vm629, %v2734, %v2738
  %v2741 = vshrl.u32 %v2680, 16
  %v2743 = vrot.slane %v2741, 4
  %v2744 = vshll.u32 %v2680, 16
  %v2746 = vrot.slane %v2744, 5
  %v2747 = vor.u32 %v2743, %v2746
  %v2748 = vrot.slane %v2747, 4
  %v2750 = vshll.u32 %v2681, 16
  %v2752 = vrot.slane %v2750, 5
  %v2753 = vsel %vm629, %v2748, %v2752
  %v2755 = vshrl.u32 %v2682, 16
  %v2757 = vrot.slane %v2755, 4
  %v2758 = vshll.u32 %v2682, 16
  %v2760 = vrot.slane %v2758, 5
  %v2761 = vor.u32 %v2757, %v2760
  %v2762 = vrot.slane %v2761, 4
  %v2764 = vshll.u32 %v2683, 16
  %v2766 = vrot.slane %v2764, 5
  %v2767 = vsel %vm629, %v2762, %v2766
  %v2769 = vshrl.u32 %v2684, 16
  %v2771 = vrot.slane %v2769, 4
  %v2772 = vshll.u32 %v2684, 16
  %v2774 = vrot.slane %v2772, 5
  %v2775 = vor.u32 %v2771, %v2774
  %v2776 = vrot.slane %v2775, 4
  %v2778 = vshll.u32 %v2685, 16
  %v2780 = vrot.slane %v2778, 5
  %v2781 = vsel %vm629, %v2776, %v2780
  %v2783 = vshrl.u32 %v2686, 16
  %v2785 = vrot.slane %v2783, 4
  %v2786 = vshll.u32 %v2686, 16
  %v2788 = vrot.slane %v2786, 5
  %v2789 = vor.u32 %v2785, %v2788
  %v2790 = vrot.slane %v2789, 4
  %v2792 = vshll.u32 %v2687, 16
  %v2794 = vrot.slane %v2792, 5
  %v2795 = vsel %vm629, %v2790, %v2794
  %v2797 = vshrl.u32 %v2688, 16
  %v2799 = vrot.slane %v2797, 4
  %v2800 = vshll.u32 %v2688, 16
  %v2802 = vrot.slane %v2800, 5
  %v2803 = vor.u32 %v2799, %v2802
  %v2804 = vrot.slane %v2803, 4
  %v2806 = vshll.u32 %v2689, 16
  %v2808 = vrot.slane %v2806, 5
  %v2809 = vsel %vm629, %v2804, %v2808
  %v2811 = vshrl.u32 %v2690, 16
  %v2813 = vrot.slane %v2811, 4
  %v2814 = vshll.u32 %v2690, 16
  %v2816 = vrot.slane %v2814, 5
  %v2817 = vor.u32 %v2813, %v2816
  %v2818 = vrot.slane %v2817, 4
  %v2820 = vshll.u32 %v2691, 16
  %v2822 = vrot.slane %v2820, 5
  %v2823 = vsel %vm629, %v2818, %v2822
  %v2825 = vshrl.u32 %v2692, 16
  %v2827 = vrot.slane %v2825, 4
  %v2828 = vshll.u32 %v2692, 16
  %v2830 = vrot.slane %v2828, 5
  %v2831 = vor.u32 %v2827, %v2830
  %v2832 = vrot.slane %v2831, 4
  %v2834 = vshll.u32 %v2693, 16
  %v2836 = vrot.slane %v2834, 5
  %v2837 = vsel %vm629, %v2832, %v2836
  %v2839 = vshrl.u32 %v2694, 16
  %v2841 = vrot.slane %v2839, 4
  %v2842 = vshll.u32 %v2694, 16
  %v2844 = vrot.slane %v2842, 5
  %v2845 = vor.u32 %v2841, %v2844
  %v2846 = vrot.slane %v2845, 4
  %v2848 = vshll.u32 %v2695, 16
  %v2850 = vrot.slane %v2848, 5
  %v2851 = vsel %vm629, %v2846, %v2850
  %v2853 = vshrl.u32 %v2696, 16
  %v2855 = vrot.slane %v2853, 4
  %v2856 = vshll.u32 %v2696, 16
  %v2858 = vrot.slane %v2856, 5
  %v2859 = vor.u32 %v2855, %v2858
  %v2860 = vrot.slane %v2859, 4
  %v2862 = vshll.u32 %v2697, 16
  %v2864 = vrot.slane %v2862, 5
  %v2865 = vsel %vm629, %v2860, %v2864
  %v2867 = vshrl.u32 %v2698, 16
  %v2869 = vrot.slane %v2867, 4
  %v2870 = vshll.u32 %v2698, 16
  %v2872 = vrot.slane %v2870, 5
  %v2873 = vor.u32 %v2869, %v2872
  %v2874 = vrot.slane %v2873, 4
  %v2876 = vshll.u32 %v2699, 16
  %v2878 = vrot.slane %v2876, 5
  %v2879 = vsel %vm629, %v2874, %v2878
  %v2881 = vshrl.u32 %v2700, 16
  %v2883 = vrot.slane %v2881, 4
  %v2884 = vshll.u32 %v2700, 16
  %v2886 = vrot.slane %v2884, 5
  %v2887 = vor.u32 %v2883, %v2886
  %v2888 = vrot.slane %v2887, 4
  %v2890 = vshll.u32 %v2701, 16
  %v2892 = vrot.slane %v2890, 5
  %v2893 = vsel %vm629, %v2888, %v2892
  %v2895 = vshrl.u32 %v2702, 16
  %v2897 = vrot.slane %v2895, 4
  %v2898 = vshll.u32 %v2702, 16
  %v2900 = vrot.slane %v2898, 5
  %v2901 = vor.u32 %v2897, %v2900
  %v2902 = vrot.slane %v2901, 4
  %v2904 = vshll.u32 %v2703, 16
  %v2906 = vrot.slane %v2904, 5
  %v2907 = vsel %vm629, %v2902, %v2906
  %v2909 = vshrl.u32 %v2704, 16
  %v2911 = vrot.slane %v2909, 4
  %v2912 = vshll.u32 %v2704, 16
  %v2914 = vrot.slane %v2912, 5
  %v2915 = vor.u32 %v2911, %v2914
  %v2916 = vrot.slane %v2915, 4
  %v2918 = vshll.u32 %v2705, 16
  %v2920 = vrot.slane %v2918, 5
  %v2921 = vsel %vm629, %v2916, %v2920
  %v2923 = vshrl.u32 %v2706, 16
  %v2925 = vrot.slane %v2923, 4
  %v2926 = vshll.u32 %v2706, 16
  %v2928 = vrot.slane %v2926, 5
  %v2929 = vor.u32 %v2925, %v2928
  %v2930 = vrot.slane %v2929, 4
  %v2932 = vshll.u32 %v2707, 16
  %v2934 = vrot.slane %v2932, 5
  %v2935 = vsel %vm629, %v2930, %v2934
  %v2937 = vshrl.u32 %v2708, 16
  %v2939 = vrot.slane %v2937, 4
  %v2940 = vshll.u32 %v2708, 16
  %v2942 = vrot.slane %v2940, 5
  %v2943 = vor.u32 %v2939, %v2942
  %v2944 = vrot.slane %v2943, 4
  %v2946 = vshll.u32 %v2709, 16
  %v2948 = vrot.slane %v2946, 5
  %v2949 = vsel %vm629, %v2944, %v2948
  %s2950 = scalar_lea.vmem %s1, 512
  %v2951 = vld [vmem:[%s2950] sm:$0xf]
  %v2952 = vld [vmem:[%s2950 + $0x4] sm:$0xf]
  %v2953 = vld [vmem:[%s2950 + $0x8] sm:$0xf]
  %v2954 = vld [vmem:[%s2950 + $0xc] sm:$0xf]
  %v2955 = vld [vmem:[%s2950 + $0x10] sm:$0xf]
  %v2956 = vld [vmem:[%s2950 + $0x14] sm:$0xf]
  %v2957 = vld [vmem:[%s2950 + $0x18] sm:$0xf]
  %v2958 = vld [vmem:[%s2950 + $0x1c] sm:$0xf]
  %v2959 = vld [vmem:[%s2950 + $0x20] sm:$0xf]
  %v2960 = vld [vmem:[%s2950 + $0x24] sm:$0xf]
  %v2961 = vld [vmem:[%s2950 + $0x28] sm:$0xf]
  %v2962 = vld [vmem:[%s2950 + $0x2c] sm:$0xf]
  %v2963 = vld [vmem:[%s2950 + $0x30] sm:$0xf]
  %v2964 = vld [vmem:[%s2950 + $0x34] sm:$0xf]
  %v2965 = vld [vmem:[%s2950 + $0x38] sm:$0xf]
  %v2966 = vld [vmem:[%s2950 + $0x3c] sm:$0xf]
  %v2967 = vunpack.c.l.b16 %v2739
  %v2968 = vunpack.c.l.b16 %v2753
  %v2969 = vunpack.c.l.b16 %v2767
  %v2970 = vunpack.c.l.b16 %v2781
  %v2971 = vunpack.c.l.b16 %v2795
  %v2972 = vunpack.c.l.b16 %v2809
  %v2973 = vunpack.c.l.b16 %v2823
  %v2974 = vunpack.c.l.b16 %v2837
  %v2975 = vunpack.c.l.b16 %v2851
  %v2976 = vunpack.c.l.b16 %v2865
  %v2977 = vunpack.c.l.b16 %v2879
  %v2978 = vunpack.c.l.b16 %v2893
  %v2979 = vunpack.c.l.b16 %v2907
  %v2980 = vunpack.c.l.b16 %v2921
  %v2981 = vunpack.c.l.b16 %v2935
  %v2982 = vunpack.c.l.b16 %v2949
  %v2983 = vpack.c.b16 %v2968, %v2967
  %v2984 = vpack.c.b16 %v2970, %v2969
  %v2985 = vpack.c.b16 %v2972, %v2971
  %v2986 = vpack.c.b16 %v2974, %v2973
  %v2987 = vpack.c.b16 %v2976, %v2975
  %v2988 = vpack.c.b16 %v2978, %v2977
  %v2989 = vpack.c.b16 %v2980, %v2979
  %v2990 = vpack.c.b16 %v2982, %v2981
  %v3015 = vunpack.c.l.b16 %v2951
  %v3016 = vunpack.c.l.b16 %v2952
  %v3017 = vunpack.c.l.b16 %v2953
  %v3018 = vunpack.c.l.b16 %v2954
  %v3019 = vunpack.c.l.b16 %v2955
  %v3020 = vunpack.c.l.b16 %v2956
  %v3021 = vunpack.c.l.b16 %v2957
  %v3022 = vunpack.c.l.b16 %v2958
  %v3023 = vunpack.c.l.b16 %v2959
  %v3024 = vunpack.c.l.b16 %v2960
  %v3025 = vunpack.c.l.b16 %v2961
  %v3026 = vunpack.c.l.b16 %v2962
  %v3027 = vunpack.c.l.b16 %v2963
  %v3028 = vunpack.c.l.b16 %v2964
  %v3029 = vunpack.c.l.b16 %v2965
  %v3030 = vunpack.c.l.b16 %v2966
  %v3031 = vpack.c.b16 %v3016, %v3015
  %v3032 = vpack.c.b16 %v3018, %v3017
  %v3033 = vpack.c.b16 %v3020, %v3019
  %v3034 = vpack.c.b16 %v3022, %v3021
  %v3035 = vpack.c.b16 %v3024, %v3023
  %v3036 = vpack.c.b16 %v3026, %v3025
  %v3037 = vpack.c.b16 %v3028, %v3027
  %v3038 = vpack.c.b16 %v3030, %v3029
  %3047 = vmatprep.subr.bf16.mxu0 0
  %3048 = vmatpush1.bf16.msra.mxu0 %v3038
  %3049 = vmatprep.subr.bf16.mxu0 0
  %3050 = vmatpush1.bf16.msra.mxu0 %v3037
  %3051 = vmatprep.subr.bf16.mxu0 0
  %3052 = vmatpush1.bf16.msra.mxu0 %v3036
  %3053 = vmatprep.subr.bf16.mxu0 0
  %3054 = vmatpush1.bf16.msra.mxu0 %v3035
  %3055 = vmatprep.subr.bf16.mxu0 0
  %3056 = vmatpush1.bf16.msra.mxu0 %v3034
  %3057 = vmatprep.subr.bf16.mxu0 0
  %3058 = vmatpush1.bf16.msra.mxu0 %v3033
  %3059 = vmatprep.subr.bf16.mxu0 0
  %3060 = vmatpush1.bf16.msra.mxu0 %v3032
  %3061 = vmatprep.subr.bf16.mxu0 0
  %3062 = vmatpush1.bf16.msra.mxu0 %v3031
  %3063 = vmatprep.subr.bf16.mxu0 0
  %3064 = vmatpush2.bf16.msra.mxu0 0
  %3065 = vmatprep.subr.bf16.mxu0 0
  %3066 = vmatpush2.bf16.msra.mxu0 0
  %3067 = vmatprep.subr.bf16.mxu0 0
  %3068 = vmatpush2.bf16.msra.mxu0 0
  %3069 = vmatprep.subr.bf16.mxu0 0
  %3070 = vmatpush2.bf16.msra.mxu0 0
  %3071 = vmatprep.subr.bf16.mxu0 0
  %3072 = vmatpush2.bf16.msra.mxu0 0
  %3073 = vmatprep.subr.bf16.mxu0 0
  %3074 = vmatpush2.bf16.msra.mxu0 0
  %3075 = vmatprep.subr.bf16.mxu0 0
  %3076 = vmatpush2.bf16.msra.mxu0 0
  %3077 = vmatprep.subr.bf16.mxu0 0
  %3078 = vmatpush2.bf16.msra.mxu0 0
  %3079 = vmatprep.mubr.bf16.mxu0 0
  %3080 = vmatmul.mubr.bf16.gmra.mxu0 %v2983
  %v3081 = vpop.f32.mrf.mxu0
  %v3082 = vadd.f32 0.0, %v3081
  %v3083 = vpop.f32.mrf.mxu0
  %v3084 = vpop.f32.mrf.mxu0
  %v3085 = vadd.f32 0.0, %v3084
  %v3086 = vpop.f32.mrf.mxu0
  %3087 = vmatprep.mubr.bf16.mxu0 0
  %3088 = vmatmul.mubr.bf16.gmra.mxu0 %v2984
  %v3089 = vpop.f32.mrf.mxu0
  %v3090 = vadd.f32 0.0, %v3089
  %v3091 = vpop.f32.mrf.mxu0
  %v3092 = vpop.f32.mrf.mxu0
  %v3093 = vadd.f32 0.0, %v3092
  %v3094 = vpop.f32.mrf.mxu0
  %3095 = vmatprep.mubr.bf16.mxu0 0
  %3096 = vmatmul.mubr.bf16.gmra.mxu0 %v2985
  %v3097 = vpop.f32.mrf.mxu0
  %v3098 = vadd.f32 0.0, %v3097
  %v3099 = vpop.f32.mrf.mxu0
  %v3100 = vpop.f32.mrf.mxu0
  %v3101 = vadd.f32 0.0, %v3100
  %v3102 = vpop.f32.mrf.mxu0
  %3103 = vmatprep.mubr.bf16.mxu0 0
  %3104 = vmatmul.mubr.bf16.gmra.mxu0 %v2986
  %v3105 = vpop.f32.mrf.mxu0
  %v3106 = vadd.f32 0.0, %v3105
  %v3107 = vpop.f32.mrf.mxu0
  %v3108 = vpop.f32.mrf.mxu0
  %v3109 = vadd.f32 0.0, %v3108
  %v3110 = vpop.f32.mrf.mxu0
  %3111 = vmatprep.mubr.bf16.mxu0 0
  %3112 = vmatmul.mubr.bf16.gmra.mxu0 %v2987
  %v3113 = vpop.f32.mrf.mxu0
  %v3114 = vadd.f32 0.0, %v3113
  %v3115 = vpop.f32.mrf.mxu0
  %v3116 = vpop.f32.mrf.mxu0
  %v3117 = vadd.f32 0.0, %v3116
  %v3118 = vpop.f32.mrf.mxu0
  %3119 = vmatprep.mubr.bf16.mxu0 0
  %3120 = vmatmul.mubr.bf16.gmra.mxu0 %v2988
  %v3121 = vpop.f32.mrf.mxu0
  %v3122 = vadd.f32 0.0, %v3121
  %v3123 = vpop.f32.mrf.mxu0
  %v3124 = vpop.f32.mrf.mxu0
  %v3125 = vadd.f32 0.0, %v3124
  %v3126 = vpop.f32.mrf.mxu0
  %3127 = vmatprep.mubr.bf16.mxu0 0
  %3128 = vmatmul.mubr.bf16.gmra.mxu0 %v2989
  %v3129 = vpop.f32.mrf.mxu0
  %v3130 = vadd.f32 0.0, %v3129
  %v3131 = vpop.f32.mrf.mxu0
  %v3132 = vpop.f32.mrf.mxu0
  %v3133 = vadd.f32 0.0, %v3132
  %v3134 = vpop.f32.mrf.mxu0
  %3135 = vmatprep.mubr.bf16.mxu0 0
  %3136 = vmatmul.mubr.bf16.gmra.mxu0 %v2990
  %v3137 = vpop.f32.mrf.mxu0
  %v3138 = vadd.f32 0.0, %v3137
  %v3139 = vpop.f32.mrf.mxu0
  %v3140 = vpop.f32.mrf.mxu0
  %v3141 = vadd.f32 0.0, %v3140
  %v3142 = vpop.f32.mrf.mxu0
  %3143 = vdwg.mxu0
  %v3144 = vadd.f32 %v2710, %v3082
  %v3145 = vadd.f32 %v2711, %v3085
  %v3146 = vadd.f32 %v2712, %v3090
  %v3147 = vadd.f32 %v2713, %v3093
  %v3148 = vadd.f32 %v2714, %v3098
  %v3149 = vadd.f32 %v2715, %v3101
  %v3150 = vadd.f32 %v2716, %v3106
  %v3151 = vadd.f32 %v2717, %v3109
  %v3152 = vadd.f32 %v2718, %v3114
  %v3153 = vadd.f32 %v2719, %v3117
  %v3154 = vadd.f32 %v2720, %v3122
  %v3155 = vadd.f32 %v2721, %v3125
  %v3156 = vadd.f32 %v2722, %v3130
  %v3157 = vadd.f32 %v2723, %v3133
  %v3158 = vadd.f32 %v2724, %v3138
  %v3159 = vadd.f32 %v2725, %v3141
  %3160 = vst [vmem:[#allocation2] sm:$0xff] %v3144
  %3161 = vst [vmem:[#allocation2 + $0x8] sm:$0xff] %v3145
  %3162 = vst [vmem:[#allocation2 + $0x10] sm:$0xff] %v3146
  %3163 = vst [vmem:[#allocation2 + $0x18] sm:$0xff] %v3147
  %3164 = vst [vmem:[#allocation2 + $0x20] sm:$0xff] %v3148
  %3165 = vst [vmem:[#allocation2 + $0x28] sm:$0xff] %v3149
  %3166 = vst [vmem:[#allocation2 + $0x30] sm:$0xff] %v3150
  %3167 = vst [vmem:[#allocation2 + $0x38] sm:$0xff] %v3151
  %3168 = vst [vmem:[#allocation2 + $0x40] sm:$0xff] %v3152
  %3169 = vst [vmem:[#allocation2 + $0x48] sm:$0xff] %v3153
  %3170 = vst [vmem:[#allocation2 + $0x50] sm:$0xff] %v3154
  %3171 = vst [vmem:[#allocation2 + $0x58] sm:$0xff] %v3155
  %3172 = vst [vmem:[#allocation2 + $0x60] sm:$0xff] %v3156
  %3173 = vst [vmem:[#allocation2 + $0x68] sm:$0xff] %v3157
  %3174 = vst [vmem:[#allocation2 + $0x70] sm:$0xff] %v3158
  %3175 = vst [vmem:[#allocation2 + $0x78] sm:$0xff] %v3159
  %v3176 = vld [vmem:[#allocation2] sm:$0xff]
  %v3177 = vld [vmem:[#allocation2 + $0x8] sm:$0xff]
  %v3178 = vld [vmem:[#allocation2 + $0x10] sm:$0xff]
  %v3179 = vld [vmem:[#allocation2 + $0x18] sm:$0xff]
  %v3180 = vld [vmem:[#allocation2 + $0x20] sm:$0xff]
  %v3181 = vld [vmem:[#allocation2 + $0x28] sm:$0xff]
  %v3182 = vld [vmem:[#allocation2 + $0x30] sm:$0xff]
  %v3183 = vld [vmem:[#allocation2 + $0x38] sm:$0xff]
  %v3184 = vld [vmem:[#allocation2 + $0x40] sm:$0xff]
  %v3185 = vld [vmem:[#allocation2 + $0x48] sm:$0xff]
  %v3186 = vld [vmem:[#allocation2 + $0x50] sm:$0xff]
  %v3187 = vld [vmem:[#allocation2 + $0x58] sm:$0xff]
  %v3188 = vld [vmem:[#allocation2 + $0x60] sm:$0xff]
  %v3189 = vld [vmem:[#allocation2 + $0x68] sm:$0xff]
  %v3190 = vld [vmem:[#allocation2 + $0x70] sm:$0xff]
  %v3191 = vld [vmem:[#allocation2 + $0x78] sm:$0xff]
  %v3192 = vld [vmem:[%s2] sm:$0x1]
  %v3194 = vlaneseq
  %v3195 = vshrl.u32 %v3194, 7
  %v3196 = vsub.s32 0, %v3195
  %v3197 = vrot.slane %v3192, %v3196
  %v3199 = vadd.f32 %v3176, %v3197
  %v3200 = vadd.f32 %v3177, %v3197
  %v3201 = vadd.f32 %v3178, %v3197
  %v3202 = vadd.f32 %v3179, %v3197
  %v3203 = vadd.f32 %v3180, %v3197
  %v3204 = vadd.f32 %v3181, %v3197
  %v3205 = vadd.f32 %v3182, %v3197
  %v3206 = vadd.f32 %v3183, %v3197
  %v3207 = vadd.f32 %v3184, %v3197
  %v3208 = vadd.f32 %v3185, %v3197
  %v3209 = vadd.f32 %v3186, %v3197
  %v3210 = vadd.f32 %v3187, %v3197
  %v3211 = vadd.f32 %v3188, %v3197
  %v3212 = vadd.f32 %v3189, %v3197
  %v3213 = vadd.f32 %v3190, %v3197
  %v3214 = vadd.f32 %v3191, %v3197
  %v3215 = vmax.f32 %v3199, 0.0
  %v3216 = vmax.f32 %v3200, 0.0
  %v3217 = vmax.f32 %v3201, 0.0
  %v3218 = vmax.f32 %v3202, 0.0
  %v3219 = vmax.f32 %v3203, 0.0
  %v3220 = vmax.f32 %v3204, 0.0
  %v3221 = vmax.f32 %v3205, 0.0
  %v3222 = vmax.f32 %v3206, 0.0
  %v3223 = vmax.f32 %v3207, 0.0
  %v3224 = vmax.f32 %v3208, 0.0
  %v3225 = vmax.f32 %v3209, 0.0
  %v3226 = vmax.f32 %v3210, 0.0
  %v3227 = vmax.f32 %v3211, 0.0
  %v3228 = vmax.f32 %v3212, 0.0
  %v3229 = vmax.f32 %v3213, 0.0
  %v3230 = vmax.f32 %v3214, 0.0
  %v3231 = vpack.c.bf16 %v3215, %v3215
  %v3232 = vpack.c.bf16 %v3216, %v3216
  %v3233 = vpack.c.bf16 %v3217, %v3217
  %v3234 = vpack.c.bf16 %v3218, %v3218
  %v3235 = vpack.c.bf16 %v3219, %v3219
  %v3236 = vpack.c.bf16 %v3220, %v3220
  %v3237 = vpack.c.bf16 %v3221, %v3221
  %v3238 = vpack.c.bf16 %v3222, %v3222
  %v3239 = vpack.c.bf16 %v3223, %v3223
  %v3240 = vpack.c.bf16 %v3224, %v3224
  %v3241 = vpack.c.bf16 %v3225, %v3225
  %v3242 = vpack.c.bf16 %v3226, %v3226
  %v3243 = vpack.c.bf16 %v3227, %v3227
  %v3244 = vpack.c.bf16 %v3228, %v3228
  %v3245 = vpack.c.bf16 %v3229, %v3229
  %v3246 = vpack.c.bf16 %v3230, %v3230
  %3247 = vst [vmem:[%s3] sm:$0xf] %v3231
  %3248 = vst [vmem:[%s3 + $0x4] sm:$0xf] %v3232
  %3249 = vst [vmem:[%s3 + $0x8] sm:$0xf] %v3233
  %3250 = vst [vmem:[%s3 + $0xc] sm:$0xf] %v3234
  %3251 = vst [vmem:[%s3 + $0x10] sm:$0xf] %v3235
  %3252 = vst [vmem:[%s3 + $0x14] sm:$0xf] %v3236
  %3253 = vst [vmem:[%s3 + $0x18] sm:$0xf] %v3237
  %3254 = vst [vmem:[%s3 + $0x1c] sm:$0xf] %v3238
  %3255 = vst [vmem:[%s3 + $0x20] sm:$0xf] %v3239
  %3256 = vst [vmem:[%s3 + $0x24] sm:$0xf] %v3240
  %3257 = vst [vmem:[%s3 + $0x28] sm:$0xf] %v3241
  %3258 = vst [vmem:[%s3 + $0x2c] sm:$0xf] %v3242
  %3259 = vst [vmem:[%s3 + $0x30] sm:$0xf] %v3243
  %3260 = vst [vmem:[%s3 + $0x34] sm:$0xf] %v3244
  %3261 = vst [vmem:[%s3 + $0x38] sm:$0xf] %v3245
  %3262 = vst [vmem:[%s3 + $0x3c] sm:$0xf] %v3246
  // Predicated region
  $region14: #{ts_net_forward.15} parent=0 // pred_check
    _
  $region15: #{ts_net_forward.15} parent=0 // pred_check_branch
    %3264 = sbr.rel (0) target = $region17
  $region16: #{ts_net_forward.15} parent=0 // pred_region
    _
  $region17: #{ts_net_forward.15} parent=0 // pred_fallthru
    _
  // Predicated region
  $region18: #{ts_net_forward.15} parent=0 // pred_check
    _
  $region19: #{ts_net_forward.15} parent=0 // pred_check_branch
    %3266 = sbr.rel (0) target = $region21
  $region20: #{ts_net_forward.15} parent=0 // pred_region
    _
  $region21: #{ts_net_forward.15} parent=0 // pred_fallthru
    _

// kernel: ts_net_forward.17
$region0: #{ts_net_forward.17}
  #allocation0 [shape = 'u32[]', space=smem, size = 0x4, offset = 0x4, fixed_abs, tag = 'smem constant byte address 0x4 - core index']
  #allocation1 [shape = 'u32[144,128]{1,0:T(1,128)}', space=vmem, size = 0x12000, scoped, tag = 'internal scratch']
  #allocation2 [shape = 'f32[128,128]{1,0:T(8,128)}', space=vmem, size = 0x10000, scoped, tag = 'scratch operand']
  %s0 = inlined_call_operand.vmem [shape: bf16[2,1,10,10,128], index: 0, kind: input, shape index: {}]
  %s1 = inlined_call_operand.vmem [shape: bf16[3,3,128,128], index: 1, kind: input, shape index: {}]
  %s2 = inlined_call_operand.vmem [shape: f32[1,128], index: 2, kind: input, shape index: {}]
  %s3 = inlined_call_operand.vmem [shape: bf16[2,8,8,128], index: 3, kind: output, shape index: {}]
  %s4 = sld [smem:[#allocation0]]
  $region22: #{ts_net_forward.17} parent=0
    _
  %s6 = ssub.s32 1, %s4
  %s7 = scalar_select 0, %s6, %s4
  // Predicated region
  $region2: #{ts_net_forward.17} parent=0 // pred_check
    _
  $region3: #{ts_net_forward.17} parent=0 // pred_check_branch
    %9 = sbr.rel (0) target = $region5
  $region4: #{ts_net_forward.17} parent=0 // pred_region
    _
  $region5: #{ts_net_forward.17} parent=0 // pred_fallthru
    _
  // Predicated region
  $region6: #{ts_net_forward.17} parent=0 // pred_check
    _
  $region7: #{ts_net_forward.17} parent=0 // pred_check_branch
    %11 = sbr.rel (0) target = $region9
  $region8: #{ts_net_forward.17} parent=0 // pred_region
    _
  $region9: #{ts_net_forward.17} parent=0 // pred_fallthru
    _
  // Predicated region
  $region10: #{ts_net_forward.17} parent=0 // pred_check
    _
  $region11: #{ts_net_forward.17} parent=0 // pred_check_branch
    %13 = sbr.rel (0) target = $region13
  $region12: #{ts_net_forward.17} parent=0 // pred_region
    _
  $region13: #{ts_net_forward.17} parent=0 // pred_fallthru
    _
  %15 = vst [vmem:[#allocation2] sm:$0xff] 0.0
  %16 = vst [vmem:[#allocation2 + $0x8] sm:$0xff] 0.0
  %17 = vst [vmem:[#allocation2 + $0x10] sm:$0xff] 0.0
  %18 = vst [vmem:[#allocation2 + $0x18] sm:$0xff] 0.0
  %19 = vst [vmem:[#allocation2 + $0x20] sm:$0xff] 0.0
  %20 = vst [vmem:[#allocation2 + $0x28] sm:$0xff] 0.0
  %21 = vst [vmem:[#allocation2 + $0x30] sm:$0xff] 0.0
  %22 = vst [vmem:[#allocation2 + $0x38] sm:$0xff] 0.0
  %23 = vst [vmem:[#allocation2 + $0x40] sm:$0xff] 0.0
  %24 = vst [vmem:[#allocation2 + $0x48] sm:$0xff] 0.0
  %25 = vst [vmem:[#allocation2 + $0x50] sm:$0xff] 0.0
  %26 = vst [vmem:[#allocation2 + $0x58] sm:$0xff] 0.0
  %27 = vst [vmem:[#allocation2 + $0x60] sm:$0xff] 0.0
  %28 = vst [vmem:[#allocation2 + $0x68] sm:$0xff] 0.0
  %29 = vst [vmem:[#allocation2 + $0x70] sm:$0xff] 0.0
  %30 = vst [vmem:[#allocation2 + $0x78] sm:$0xff] 0.0
  %v31 = vld [vmem:[%s0] sm:$0xf]
  %v32 = vld [vmem:[%s0 + $0x8] sm:$0xf]
  %v33 = vld [vmem:[%s0 + $0x10] sm:$0xf]
  %v34 = vld [vmem:[%s0 + $0x18] sm:$0xf]
  %v35 = vld [vmem:[%s0 + $0x20] sm:$0xf]
  %v36 = vld [vmem:[%s0 + $0x28] sm:$0xf]
  %v37 = vld [vmem:[%s0 + $0x30] sm:$0xf]
  %v38 = vld [vmem:[%s0 + $0x38] sm:$0xf]
  %v39 = vld [vmem:[%s0 + $0x50] sm:$0xf]
  %v40 = vld [vmem:[%s0 + $0x58] sm:$0xf]
  %v41 = vld [vmem:[%s0 + $0x60] sm:$0xf]
  %v42 = vld [vmem:[%s0 + $0x68] sm:$0xf]
  %v43 = vld [vmem:[%s0 + $0x70] sm:$0xf]
  %v44 = vld [vmem:[%s0 + $0x78] sm:$0xf]
  %v45 = vld [vmem:[%s0 + $0x80] sm:$0xf]
  %v46 = vld [vmem:[%s0 + $0x88] sm:$0xf]
  %v47 = vld [vmem:[#allocation2] sm:$0xff]
  %v48 = vld [vmem:[#allocation2 + $0x8] sm:$0xff]
  %v49 = vld [vmem:[#allocation2 + $0x10] sm:$0xff]
  %v50 = vld [vmem:[#allocation2 + $0x18] sm:$0xff]
  %v51 = vld [vmem:[#allocation2 + $0x20] sm:$0xff]
  %v52 = vld [vmem:[#allocation2 + $0x28] sm:$0xff]
  %v53 = vld [vmem:[#allocation2 + $0x30] sm:$0xff]
  %v54 = vld [vmem:[#allocation2 + $0x38] sm:$0xff]
  %v55 = vld [vmem:[#allocation2 + $0x40] sm:$0xff]
  %v56 = vld [vmem:[#allocation2 + $0x48] sm:$0xff]
  %v57 = vld [vmem:[#allocation2 + $0x50] sm:$0xff]
  %v58 = vld [vmem:[#allocation2 + $0x58] sm:$0xff]
  %v59 = vld [vmem:[#allocation2 + $0x60] sm:$0xff]
  %v60 = vld [vmem:[#allocation2 + $0x68] sm:$0xff]
  %v61 = vld [vmem:[#allocation2 + $0x70] sm:$0xff]
  %v62 = vld [vmem:[#allocation2 + $0x78] sm:$0xff]
  %v63 = vld [vmem:[%s1] sm:$0xf]
  %v64 = vld [vmem:[%s1 + $0x4] sm:$0xf]
  %v65 = vld [vmem:[%s1 + $0x8] sm:$0xf]
  %v66 = vld [vmem:[%s1 + $0xc] sm:$0xf]
  %v67 = vld [vmem:[%s1 + $0x10] sm:$0xf]
  %v68 = vld [vmem:[%s1 + $0x14] sm:$0xf]
  %v69 = vld [vmem:[%s1 + $0x18] sm:$0xf]
  %v70 = vld [vmem:[%s1 + $0x1c] sm:$0xf]
  %v71 = vld [vmem:[%s1 + $0x20] sm:$0xf]
  %v72 = vld [vmem:[%s1 + $0x24] sm:$0xf]
  %v73 = vld [vmem:[%s1 + $0x28] sm:$0xf]
  %v74 = vld [vmem:[%s1 + $0x2c] sm:$0xf]
  %v75 = vld [vmem:[%s1 + $0x30] sm:$0xf]
  %v76 = vld [vmem:[%s1 + $0x34] sm:$0xf]
  %v77 = vld [vmem:[%s1 + $0x38] sm:$0xf]
  %v78 = vld [vmem:[%s1 + $0x3c] sm:$0xf]
  %v95 = vunpack.c.l.b16 %v31
  %v96 = vunpack.c.l.b16 %v32
  %v97 = vunpack.c.l.b16 %v33
  %v98 = vunpack.c.l.b16 %v34
  %v99 = vunpack.c.l.b16 %v35
  %v100 = vunpack.c.l.b16 %v36
  %v101 = vunpack.c.l.b16 %v37
  %v102 = vunpack.c.l.b16 %v38
  %v103 = vunpack.c.l.b16 %v39
  %v104 = vunpack.c.l.b16 %v40
  %v105 = vunpack.c.l.b16 %v41
  %v106 = vunpack.c.l.b16 %v42
  %v107 = vunpack.c.l.b16 %v43
  %v108 = vunpack.c.l.b16 %v44
  %v109 = vunpack.c.l.b16 %v45
  %v110 = vunpack.c.l.b16 %v46
  %v111 = vpack.c.b16 %v96, %v95
  %v112 = vpack.c.b16 %v98, %v97
  %v113 = vpack.c.b16 %v100, %v99
  %v114 = vpack.c.b16 %v102, %v101
  %v115 = vpack.c.b16 %v104, %v103
  %v116 = vpack.c.b16 %v106, %v105
  %v117 = vpack.c.b16 %v108, %v107
  %v118 = vpack.c.b16 %v110, %v109
  %v143 = vunpack.c.l.b16 %v63
  %v144 = vunpack.c.l.b16 %v64
  %v145 = vunpack.c.l.b16 %v65
  %v146 = vunpack.c.l.b16 %v66
  %v147 = vunpack.c.l.b16 %v67
  %v148 = vunpack.c.l.b16 %v68
  %v149 = vunpack.c.l.b16 %v69
  %v150 = vunpack.c.l.b16 %v70
  %v151 = vunpack.c.l.b16 %v71
  %v152 = vunpack.c.l.b16 %v72
  %v153 = vunpack.c.l.b16 %v73
  %v154 = vunpack.c.l.b16 %v74
  %v155 = vunpack.c.l.b16 %v75
  %v156 = vunpack.c.l.b16 %v76
  %v157 = vunpack.c.l.b16 %v77
  %v158 = vunpack.c.l.b16 %v78
  %v159 = vpack.c.b16 %v144, %v143
  %v160 = vpack.c.b16 %v146, %v145
  %v161 = vpack.c.b16 %v148, %v147
  %v162 = vpack.c.b16 %v150, %v149
  %v163 = vpack.c.b16 %v152, %v151
  %v164 = vpack.c.b16 %v154, %v153
  %v165 = vpack.c.b16 %v156, %v155
  %v166 = vpack.c.b16 %v158, %v157
  %175 = vmatprep.subr.bf16.mxu0 0
  %176 = vmatpush1.bf16.msra.mxu0 %v166
  %177 = vmatprep.subr.bf16.mxu0 0
  %178 = vmatpush1.bf16.msra.mxu0 %v165
  %179 = vmatprep.subr.bf16.mxu0 0
  %180 = vmatpush1.bf16.msra.mxu0 %v164
  %181 = vmatprep.subr.bf16.mxu0 0
  %182 = vmatpush1.bf16.msra.mxu0 %v163
  %183 = vmatprep.subr.bf16.mxu0 0
  %184 = vmatpush1.bf16.msra.mxu0 %v162
  %185 = vmatprep.subr.bf16.mxu0 0
  %186 = vmatpush1.bf16.msra.mxu0 %v161
  %187 = vmatprep.subr.bf16.mxu0 0
  %188 = vmatpush1.bf16.msra.mxu0 %v160
  %189 = vmatprep.subr.bf16.mxu0 0
  %190 = vmatpush1.bf16.msra.mxu0 %v159
  %191 = vmatprep.subr.bf16.mxu0 0
  %192 = vmatpush2.bf16.msra.mxu0 0
  %193 = vmatprep.subr.bf16.mxu0 0
  %194 = vmatpush2.bf16.msra.mxu0 0
  %195 = vmatprep.subr.bf16.mxu0 0
  %196 = vmatpush2.bf16.msra.mxu0 0
  %197 = vmatprep.subr.bf16.mxu0 0
  %198 = vmatpush2.bf16.msra.mxu0 0
  %199 = vmatprep.subr.bf16.mxu0 0
  %200 = vmatpush2.bf16.msra.mxu0 0
  %201 = vmatprep.subr.bf16.mxu0 0
  %202 = vmatpush2.bf16.msra.mxu0 0
  %203 = vmatprep.subr.bf16.mxu0 0
  %204 = vmatpush2.bf16.msra.mxu0 0
  %205 = vmatprep.subr.bf16.mxu0 0
  %206 = vmatpush2.bf16.msra.mxu0 0
  %207 = vmatprep.mubr.bf16.mxu0 0
  %208 = vmatmul.mubr.bf16.gmra.mxu0 %v111
  %v209 = vpop.f32.mrf.mxu0
  %v210 = vadd.f32 0.0, %v209
  %v211 = vpop.f32.mrf.mxu0
  %v212 = vpop.f32.mrf.mxu0
  %v213 = vadd.f32 0.0, %v212
  %v214 = vpop.f32.mrf.mxu0
  %215 = vmatprep.mubr.bf16.mxu0 0
  %216 = vmatmul.mubr.bf16.gmra.mxu0 %v112
  %v217 = vpop.f32.mrf.mxu0
  %v218 = vadd.f32 0.0, %v217
  %v219 = vpop.f32.mrf.mxu0
  %v220 = vpop.f32.mrf.mxu0
  %v221 = vadd.f32 0.0, %v220
  %v222 = vpop.f32.mrf.mxu0
  %223 = vmatprep.mubr.bf16.mxu0 0
  %224 = vmatmul.mubr.bf16.gmra.mxu0 %v113
  %v225 = vpop.f32.mrf.mxu0
  %v226 = vadd.f32 0.0, %v225
  %v227 = vpop.f32.mrf.mxu0
  %v228 = vpop.f32.mrf.mxu0
  %v229 = vadd.f32 0.0, %v228
  %v230 = vpop.f32.mrf.mxu0
  %231 = vmatprep.mubr.bf16.mxu0 0
  %232 = vmatmul.mubr.bf16.gmra.mxu0 %v114
  %v233 = vpop.f32.mrf.mxu0
  %v234 = vadd.f32 0.0, %v233
  %v235 = vpop.f32.mrf.mxu0
  %v236 = vpop.f32.mrf.mxu0
  %v237 = vadd.f32 0.0, %v236
  %v238 = vpop.f32.mrf.mxu0
  %239 = vmatprep.mubr.bf16.mxu0 0
  %240 = vmatmul.mubr.bf16.gmra.mxu0 %v115
  %v241 = vpop.f32.mrf.mxu0
  %v242 = vadd.f32 0.0, %v241
  %v243 = vpop.f32.mrf.mxu0
  %v244 = vpop.f32.mrf.mxu0
  %v245 = vadd.f32 0.0, %v244
  %v246 = vpop.f32.mrf.mxu0
  %247 = vmatprep.mubr.bf16.mxu0 0
  %248 = vmatmul.mubr.bf16.gmra.mxu0 %v116
  %v249 = vpop.f32.mrf.mxu0
  %v250 = vadd.f32 0.0, %v249
  %v251 = vpop.f32.mrf.mxu0
  %v252 = vpop.f32.mrf.mxu0
  %v253 = vadd.f32 0.0, %v252
  %v254 = vpop.f32.mrf.mxu0
  %255 = vmatprep.mubr.bf16.mxu0 0
  %256 = vmatmul.mubr.bf16.gmra.mxu0 %v117
  %v257 = vpop.f32.mrf.mxu0
  %v258 = vadd.f32 0.0, %v257
  %v259 = vpop.f32.mrf.mxu0
  %v260 = vpop.f32.mrf.mxu0
  %v261 = vadd.f32 0.0, %v260
  %v262 = vpop.f32.mrf.mxu0
  %263 = vmatprep.mubr.bf16.mxu0 0
  %264 = vmatmul.mubr.bf16.gmra.mxu0 %v118
  %v265 = vpop.f32.mrf.mxu0
  %v266 = vadd.f32 0.0, %v265
  %v267 = vpop.f32.mrf.mxu0
  %v268 = vpop.f32.mrf.mxu0
  %v269 = vadd.f32 0.0, %v268
  %v270 = vpop.f32.mrf.mxu0
  %271 = vdwg.mxu0
  %v272 = vadd.f32 %v47, %v210
  %v273 = vadd.f32 %v48, %v213
  %v274 = vadd.f32 %v49, %v218
  %v275 = vadd.f32 %v50, %v221
  %v276 = vadd.f32 %v51, %v226
  %v277 = vadd.f32 %v52, %v229
  %v278 = vadd.f32 %v53, %v234
  %v279 = vadd.f32 %v54, %v237
  %v280 = vadd.f32 %v55, %v242
  %v281 = vadd.f32 %v56, %v245
  %v282 = vadd.f32 %v57, %v250
  %v283 = vadd.f32 %v58, %v253
  %v284 = vadd.f32 %v59, %v258
  %v285 = vadd.f32 %v60, %v261
  %v286 = vadd.f32 %v61, %v266
  %v287 = vadd.f32 %v62, %v269
  %288 = vst [vmem:[#allocation2] sm:$0xff] %v272
  %289 = vst [vmem:[#allocation2 + $0x8] sm:$0xff] %v273
  %290 = vst [vmem:[#allocation2 + $0x10] sm:$0xff] %v274
  %291 = vst [vmem:[#allocation2 + $0x18] sm:$0xff] %v275
  %292 = vst [vmem:[#allocation2 + $0x20] sm:$0xff] %v276
  %293 = vst [vmem:[#allocation2 + $0x28] sm:$0xff] %v277
  %294 = vst [vmem:[#allocation2 + $0x30] sm:$0xff] %v278
  %295 = vst [vmem:[#allocation2 + $0x38] sm:$0xff] %v279
  %296 = vst [vmem:[#allocation2 + $0x40] sm:$0xff] %v280
  %297 = vst [vmem:[#allocation2 + $0x48] sm:$0xff] %v281
  %298 = vst [vmem:[#allocation2 + $0x50] sm:$0xff] %v282
  %299 = vst [vmem:[#allocation2 + $0x58] sm:$0xff] %v283
  %300 = vst [vmem:[#allocation2 + $0x60] sm:$0xff] %v284
  %301 = vst [vmem:[#allocation2 + $0x68] sm:$0xff] %v285
  %302 = vst [vmem:[#allocation2 + $0x70] sm:$0xff] %v286
  %303 = vst [vmem:[#allocation2 + $0x78] sm:$0xff] %v287
  %v304 = vld [vmem:[%s0] sm:$0xf]
  %v305 = vld [vmem:[%s0 + $0x4] sm:$0x1]
  %v306 = vld [vmem:[%s0 + $0x8] sm:$0xf]
  %v307 = vld [vmem:[%s0 + $0xc] sm:$0x1]
  %v308 = vld [vmem:[%s0 + $0x10] sm:$0xf]
  %v309 = vld [vmem:[%s0 + $0x14] sm:$0x1]
  %v310 = vld [vmem:[%s0 + $0x18] sm:$0xf]
  %v311 = vld [vmem:[%s0 + $0x1c] sm:$0x1]
  %v312 = vld [vmem:[%s0 + $0x20] sm:$0xf]
  %v313 = vld [vmem:[%s0 + $0x24] sm:$0x1]
  %v314 = vld [vmem:[%s0 + $0x28] sm:$0xf]
  %v315 = vld [vmem:[%s0 + $0x2c] sm:$0x1]
  %v316 = vld [vmem:[%s0 + $0x30] sm:$0xf]
  %v317 = vld [vmem:[%s0 + $0x34] sm:$0x1]
  %v318 = vld [vmem:[%s0 + $0x38] sm:$0xf]
  %v319 = vld [vmem:[%s0 + $0x3c] sm:$0x1]
  %v320 = vld [vmem:[%s0 + $0x50] sm:$0xf]
  %v321 = vld [vmem:[%s0 + $0x54] sm:$0x1]
  %v322 = vld [vmem:[%s0 + $0x58] sm:$0xf]
  %v323 = vld [vmem:[%s0 + $0x5c] sm:$0x1]
  %v324 = vld [vmem:[%s0 + $0x60] sm:$0xf]
  %v325 = vld [vmem:[%s0 + $0x64] sm:$0x1]
  %v326 = vld [vmem:[%s0 + $0x68] sm:$0xf]
  %v327 = vld [vmem:[%s0 + $0x6c] sm:$0x1]
  %v328 = vld [vmem:[%s0 + $0x70] sm:$0xf]
  %v329 = vld [vmem:[%s0 + $0x74] sm:$0x1]
  %v330 = vld [vmem:[%s0 + $0x78] sm:$0xf]
  %v331 = vld [vmem:[%s0 + $0x7c] sm:$0x1]
  %v332 = vld [vmem:[%s0 + $0x80] sm:$0xf]
  %v333 = vld [vmem:[%s0 + $0x84] sm:$0x1]
  %v334 = vld [vmem:[%s0 + $0x88] sm:$0xf]
  %v335 = vld [vmem:[%s0 + $0x8c] sm:$0x1]
  %v336 = vld [vmem:[#allocation2] sm:$0xff]
  %v337 = vld [vmem:[#allocation2 + $0x8] sm:$0xff]
  %v338 = vld [vmem:[#allocation2 + $0x10] sm:$0xff]
  %v339 = vld [vmem:[#allocation2 + $0x18] sm:$0xff]
  %v340 = vld [vmem:[#allocation2 + $0x20] sm:$0xff]
  %v341 = vld [vmem:[#allocation2 + $0x28] sm:$0xff]
  %v342 = vld [vmem:[#allocation2 + $0x30] sm:$0xff]
  %v343 = vld [vmem:[#allocation2 + $0x38] sm:$0xff]
  %v344 = vld [vmem:[#allocation2 + $0x40] sm:$0xff]
  %v345 = vld [vmem:[#allocation2 + $0x48] sm:$0xff]
  %v346 = vld [vmem:[#allocation2 + $0x50] sm:$0xff]
  %v347 = vld [vmem:[#allocation2 + $0x58] sm:$0xff]
  %v348 = vld [vmem:[#allocation2 + $0x60] sm:$0xff]
  %v349 = vld [vmem:[#allocation2 + $0x68] sm:$0xff]
  %v350 = vld [vmem:[#allocation2 + $0x70] sm:$0xff]
  %v351 = vld [vmem:[#allocation2 + $0x78] sm:$0xff]
  %vm352 = vsmask.f32 3328
  %vm353 = vsmask.f32 7440
  %vm354 = vmor %vm352, %vm353
  %v356 = vshrl.u32 %v304, 16
  %v358 = vrot.slane %v356, 4
  %v359 = vshll.u32 %v304, 16
  %v361 = vrot.slane %v359, 5
  %v362 = vor.u32 %v358, %v361
  %v363 = vrot.slane %v362, 4
  %v365 = vshll.u32 %v305, 16
  %v367 = vrot.slane %v365, 5
  %v368 = vsel %vm354, %v363, %v367
  %v370 = vshrl.u32 %v306, 16
  %v372 = vrot.slane %v370, 4
  %v373 = vshll.u32 %v306, 16
  %v375 = vrot.slane %v373, 5
  %v376 = vor.u32 %v372, %v375
  %v377 = vrot.slane %v376, 4
  %v379 = vshll.u32 %v307, 16
  %v381 = vrot.slane %v379, 5
  %v382 = vsel %vm354, %v377, %v381
  %v384 = vshrl.u32 %v308, 16
  %v386 = vrot.slane %v384, 4
  %v387 = vshll.u32 %v308, 16
  %v389 = vrot.slane %v387, 5
  %v390 = vor.u32 %v386, %v389
  %v391 = vrot.slane %v390, 4
  %v393 = vshll.u32 %v309, 16
  %v395 = vrot.slane %v393, 5
  %v396 = vsel %vm354, %v391, %v395
  %v398 = vshrl.u32 %v310, 16
  %v400 = vrot.slane %v398, 4
  %v401 = vshll.u32 %v310, 16
  %v403 = vrot.slane %v401, 5
  %v404 = vor.u32 %v400, %v403
  %v405 = vrot.slane %v404, 4
  %v407 = vshll.u32 %v311, 16
  %v409 = vrot.slane %v407, 5
  %v410 = vsel %vm354, %v405, %v409
  %v412 = vshrl.u32 %v312, 16
  %v414 = vrot.slane %v412, 4
  %v415 = vshll.u32 %v312, 16
  %v417 = vrot.slane %v415, 5
  %v418 = vor.u32 %v414, %v417
  %v419 = vrot.slane %v418, 4
  %v421 = vshll.u32 %v313, 16
  %v423 = vrot.slane %v421, 5
  %v424 = vsel %vm354, %v419, %v423
  %v426 = vshrl.u32 %v314, 16
  %v428 = vrot.slane %v426, 4
  %v429 = vshll.u32 %v314, 16
  %v431 = vrot.slane %v429, 5
  %v432 = vor.u32 %v428, %v431
  %v433 = vrot.slane %v432, 4
  %v435 = vshll.u32 %v315, 16
  %v437 = vrot.slane %v435, 5
  %v438 = vsel %vm354, %v433, %v437
  %v440 = vshrl.u32 %v316, 16
  %v442 = vrot.slane %v440, 4
  %v443 = vshll.u32 %v316, 16
  %v445 = vrot.slane %v443, 5
  %v446 = vor.u32 %v442, %v445
  %v447 = vrot.slane %v446, 4
  %v449 = vshll.u32 %v317, 16
  %v451 = vrot.slane %v449, 5
  %v452 = vsel %vm354, %v447, %v451
  %v454 = vshrl.u32 %v318, 16
  %v456 = vrot.slane %v454, 4
  %v457 = vshll.u32 %v318, 16
  %v459 = vrot.slane %v457, 5
  %v460 = vor.u32 %v456, %v459
  %v461 = vrot.slane %v460, 4
  %v463 = vshll.u32 %v319, 16
  %v465 = vrot.slane %v463, 5
  %v466 = vsel %vm354, %v461, %v465
  %v468 = vshrl.u32 %v320, 16
  %v470 = vrot.slane %v468, 4
  %v471 = vshll.u32 %v320, 16
  %v473 = vrot.slane %v471, 5
  %v474 = vor.u32 %v470, %v473
  %v475 = vrot.slane %v474, 4
  %v477 = vshll.u32 %v321, 16
  %v479 = vrot.slane %v477, 5
  %v480 = vsel %vm354, %v475, %v479
  %v482 = vshrl.u32 %v322, 16
  %v484 = vrot.slane %v482, 4
  %v485 = vshll.u32 %v322, 16
  %v487 = vrot.slane %v485, 5
  %v488 = vor.u32 %v484, %v487
  %v489 = vrot.slane %v488, 4
  %v491 = vshll.u32 %v323, 16
  %v493 = vrot.slane %v491, 5
  %v494 = vsel %vm354, %v489, %v493
  %v496 = vshrl.u32 %v324, 16
  %v498 = vrot.slane %v496, 4
  %v499 = vshll.u32 %v324, 16
  %v501 = vrot.slane %v499, 5
  %v502 = vor.u32 %v498, %v501
  %v503 = vrot.slane %v502, 4
  %v505 = vshll.u32 %v325, 16
  %v507 = vrot.slane %v505, 5
  %v508 = vsel %vm354, %v503, %v507
  %v510 = vshrl.u32 %v326, 16
  %v512 = vrot.slane %v510, 4
  %v513 = vshll.u32 %v326, 16
  %v515 = vrot.slane %v513, 5
  %v516 = vor.u32 %v512, %v515
  %v517 = vrot.slane %v516, 4
  %v519 = vshll.u32 %v327, 16
  %v521 = vrot.slane %v519, 5
  %v522 = vsel %vm354, %v517, %v521
  %v524 = vshrl.u32 %v328, 16
  %v526 = vrot.slane %v524, 4
  %v527 = vshll.u32 %v328, 16
  %v529 = vrot.slane %v527, 5
  %v530 = vor.u32 %v526, %v529
  %v531 = vrot.slane %v530, 4
  %v533 = vshll.u32 %v329, 16
  %v535 = vrot.slane %v533, 5
  %v536 = vsel %vm354, %v531, %v535
  %v538 = vshrl.u32 %v330, 16
  %v540 = vrot.slane %v538, 4
  %v541 = vshll.u32 %v330, 16
  %v543 = vrot.slane %v541, 5
  %v544 = vor.u32 %v540, %v543
  %v545 = vrot.slane %v544, 4
  %v547 = vshll.u32 %v331, 16
  %v549 = vrot.slane %v547, 5
  %v550 = vsel %vm354, %v545, %v549
  %v552 = vshrl.u32 %v332, 16
  %v554 = vrot.slane %v552, 4
  %v555 = vshll.u32 %v332, 16
  %v557 = vrot.slane %v555, 5
  %v558 = vor.u32 %v554, %v557
  %v559 = vrot.slane %v558, 4
  %v561 = vshll.u32 %v333, 16
  %v563 = vrot.slane %v561, 5
  %v564 = vsel %vm354, %v559, %v563
  %v566 = vshrl.u32 %v334, 16
  %v568 = vrot.slane %v566, 4
  %v569 = vshll.u32 %v334, 16
  %v571 = vrot.slane %v569, 5
  %v572 = vor.u32 %v568, %v571
  %v573 = vrot.slane %v572, 4
  %v575 = vshll.u32 %v335, 16
  %v577 = vrot.slane %v575, 5
  %v578 = vsel %vm354, %v573, %v577
  %s579 = scalar_lea.vmem %s1, 64
  %v580 = vld [vmem:[%s579] sm:$0xf]
  %v581 = vld [vmem:[%s579 + $0x4] sm:$0xf]
  %v582 = vld [vmem:[%s579 + $0x8] sm:$0xf]
  %v583 = vld [vmem:[%s579 + $0xc] sm:$0xf]
  %v584 = vld [vmem:[%s579 + $0x10] sm:$0xf]
  %v585 = vld [vmem:[%s579 + $0x14] sm:$0xf]
  %v586 = vld [vmem:[%s579 + $0x18] sm:$0xf]
  %v587 = vld [vmem:[%s579 + $0x1c] sm:$0xf]
  %v588 = vld [vmem:[%s579 + $0x20] sm:$0xf]
  %v589 = vld [vmem:[%s579 + $0x24] sm:$0xf]
  %v590 = vld [vmem:[%s579 + $0x28] sm:$0xf]
  %v591 = vld [vmem:[%s579 + $0x2c] sm:$0xf]
  %v592 = vld [vmem:[%s579 + $0x30] sm:$0xf]
  %v593 = vld [vmem:[%s579 + $0x34] sm:$0xf]
  %v594 = vld [vmem:[%s579 + $0x38] sm:$0xf]
  %v595 = vld [vmem:[%s579 + $0x3c] sm:$0xf]
  %v596 = vunpack.c.l.b16 %v368
  %v597 = vunpack.c.l.b16 %v382
  %v598 = vunpack.c.l.b16 %v396
  %v599 = vunpack.c.l.b16 %v410
  %v600 = vunpack.c.l.b16 %v424
  %v601 = vunpack.c.l.b16 %v438
  %v602 = vunpack.c.l.b16 %v452
  %v603 = vunpack.c.l.b16 %v466
  %v604 = vunpack.c.l.b16 %v480
  %v605 = vunpack.c.l.b16 %v494
  %v606 = vunpack.c.l.b16 %v508
  %v607 = vunpack.c.l.b16 %v522
  %v608 = vunpack.c.l.b16 %v536
  %v609 = vunpack.c.l.b16 %v550
  %v610 = vunpack.c.l.b16 %v564
  %v611 = vunpack.c.l.b16 %v578
  %v612 = vpack.c.b16 %v597, %v596
  %v613 = vpack.c.b16 %v599, %v598
  %v614 = vpack.c.b16 %v601, %v600
  %v615 = vpack.c.b16 %v603, %v602
  %v616 = vpack.c.b16 %v605, %v604
  %v617 = vpack.c.b16 %v607, %v606
  %v618 = vpack.c.b16 %v609, %v608
  %v619 = vpack.c.b16 %v611, %v610
  %v644 = vunpack.c.l.b16 %v580
  %v645 = vunpack.c.l.b16 %v581
  %v646 = vunpack.c.l.b16 %v582
  %v647 = vunpack.c.l.b16 %v583
  %v648 = vunpack.c.l.b16 %v584
  %v649 = vunpack.c.l.b16 %v585
  %v650 = vunpack.c.l.b16 %v586
  %v651 = vunpack.c.l.b16 %v587
  %v652 = vunpack.c.l.b16 %v588
  %v653 = vunpack.c.l.b16 %v589
  %v654 = vunpack.c.l.b16 %v590
  %v655 = vunpack.c.l.b16 %v591
  %v656 = vunpack.c.l.b16 %v592
  %v657 = vunpack.c.l.b16 %v593
  %v658 = vunpack.c.l.b16 %v594
  %v659 = vunpack.c.l.b16 %v595
  %v660 = vpack.c.b16 %v645, %v644
  %v661 = vpack.c.b16 %v647, %v646
  %v662 = vpack.c.b16 %v649, %v648
  %v663 = vpack.c.b16 %v651, %v650
  %v664 = vpack.c.b16 %v653, %v652
  %v665 = vpack.c.b16 %v655, %v654
  %v666 = vpack.c.b16 %v657, %v656
  %v667 = vpack.c.b16 %v659, %v658
  %676 = vmatprep.subr.bf16.mxu0 0
  %677 = vmatpush1.bf16.msra.mxu0 %v667
  %678 = vmatprep.subr.bf16.mxu0 0
  %679 = vmatpush1.bf16.msra.mxu0 %v666
  %680 = vmatprep.subr.bf16.mxu0 0
  %681 = vmatpush1.bf16.msra.mxu0 %v665
  %682 = vmatprep.subr.bf16.mxu0 0
  %683 = vmatpush1.bf16.msra.mxu0 %v664
  %684 = vmatprep.subr.bf16.mxu0 0
  %685 = vmatpush1.bf16.msra.mxu0 %v663
  %686 = vmatprep.subr.bf16.mxu0 0
  %687 = vmatpush1.bf16.msra.mxu0 %v662
  %688 = vmatprep.subr.bf16.mxu0 0
  %689 = vmatpush1.bf16.msra.mxu0 %v661
  %690 = vmatprep.subr.bf16.mxu0 0
  %691 = vmatpush1.bf16.msra.mxu0 %v660
  %692 = vmatprep.subr.bf16.mxu0 0
  %693 = vmatpush2.bf16.msra.mxu0 0
  %694 = vmatprep.subr.bf16.mxu0 0
  %695 = vmatpush2.bf16.msra.mxu0 0
  %696 = vmatprep.subr.bf16.mxu0 0
  %697 = vmatpush2.bf16.msra.mxu0 0
  %698 = vmatprep.subr.bf16.mxu0 0
  %699 = vmatpush2.bf16.msra.mxu0 0
  %700 = vmatprep.subr.bf16.mxu0 0
  %701 = vmatpush2.bf16.msra.mxu0 0
  %702 = vmatprep.subr.bf16.mxu0 0
  %703 = vmatpush2.bf16.msra.mxu0 0
  %704 = vmatprep.subr.bf16.mxu0 0
  %705 = vmatpush2.bf16.msra.mxu0 0
  %706 = vmatprep.subr.bf16.mxu0 0
  %707 = vmatpush2.bf16.msra.mxu0 0
  %708 = vmatprep.mubr.bf16.mxu0 0
  %709 = vmatmul.mubr.bf16.gmra.mxu0 %v612
  %v710 = vpop.f32.mrf.mxu0
  %v711 = vadd.f32 0.0, %v710
  %v712 = vpop.f32.mrf.mxu0
  %v713 = vpop.f32.mrf.mxu0
  %v714 = vadd.f32 0.0, %v713
  %v715 = vpop.f32.mrf.mxu0
  %716 = vmatprep.mubr.bf16.mxu0 0
  %717 = vmatmul.mubr.bf16.gmra.mxu0 %v613
  %v718 = vpop.f32.mrf.mxu0
  %v719 = vadd.f32 0.0, %v718
  %v720 = vpop.f32.mrf.mxu0
  %v721 = vpop.f32.mrf.mxu0
  %v722 = vadd.f32 0.0, %v721
  %v723 = vpop.f32.mrf.mxu0
  %724 = vmatprep.mubr.bf16.mxu0 0
  %725 = vmatmul.mubr.bf16.gmra.mxu0 %v614
  %v726 = vpop.f32.mrf.mxu0
  %v727 = vadd.f32 0.0, %v726
  %v728 = vpop.f32.mrf.mxu0
  %v729 = vpop.f32.mrf.mxu0
  %v730 = vadd.f32 0.0, %v729
  %v731 = vpop.f32.mrf.mxu0
  %732 = vmatprep.mubr.bf16.mxu0 0
  %733 = vmatmul.mubr.bf16.gmra.mxu0 %v615
  %v734 = vpop.f32.mrf.mxu0
  %v735 = vadd.f32 0.0, %v734
  %v736 = vpop.f32.mrf.mxu0
  %v737 = vpop.f32.mrf.mxu0
  %v738 = vadd.f32 0.0, %v737
  %v739 = vpop.f32.mrf.mxu0
  %740 = vmatprep.mubr.bf16.mxu0 0
  %741 = vmatmul.mubr.bf16.gmra.mxu0 %v616
  %v742 = vpop.f32.mrf.mxu0
  %v743 = vadd.f32 0.0, %v742
  %v744 = vpop.f32.mrf.mxu0
  %v745 = vpop.f32.mrf.mxu0
  %v746 = vadd.f32 0.0, %v745
  %v747 = vpop.f32.mrf.mxu0
  %748 = vmatprep.mubr.bf16.mxu0 0
  %749 = vmatmul.mubr.bf16.gmra.mxu0 %v617
  %v750 = vpop.f32.mrf.mxu0
  %v751 = vadd.f32 0.0, %v750
  %v752 = vpop.f32.mrf.mxu0
  %v753 = vpop.f32.mrf.mxu0
  %v754 = vadd.f32 0.0, %v753
  %v755 = vpop.f32.mrf.mxu0
  %756 = vmatprep.mubr.bf16.mxu0 0
  %757 = vmatmul.mubr.bf16.gmra.mxu0 %v618
  %v758 = vpop.f32.mrf.mxu0
  %v759 = vadd.f32 0.0, %v758
  %v760 = vpop.f32.mrf.mxu0
  %v761 = vpop.f32.mrf.mxu0
  %v762 = vadd.f32 0.0, %v761
  %v763 = vpop.f32.mrf.mxu0
  %764 = vmatprep.mubr.bf16.mxu0 0
  %765 = vmatmul.mubr.bf16.gmra.mxu0 %v619
  %v766 = vpop.f32.mrf.mxu0
  %v767 = vadd.f32 0.0, %v766
  %v768 = vpop.f32.mrf.mxu0
  %v769 = vpop.f32.mrf.mxu0
  %v770 = vadd.f32 0.0, %v769
  %v771 = vpop.f32.mrf.mxu0
  %772 = vdwg.mxu0
  %v773 = vadd.f32 %v336, %v711
  %v774 = vadd.f32 %v337, %v714
  %v775 = vadd.f32 %v338, %v719
  %v776 = vadd.f32 %v339, %v722
  %v777 = vadd.f32 %v340, %v727
  %v778 = vadd.f32 %v341, %v730
  %v779 = vadd.f32 %v342, %v735
  %v780 = vadd.f32 %v343, %v738
  %v781 = vadd.f32 %v344, %v743
  %v782 = vadd.f32 %v345, %v746
  %v783 = vadd.f32 %v346, %v751
  %v784 = vadd.f32 %v347, %v754
  %v785 = vadd.f32 %v348, %v759
  %v786 = vadd.f32 %v349, %v762
  %v787 = vadd.f32 %v350, %v767
  %v788 = vadd.f32 %v351, %v770
  %789 = vst [vmem:[#allocation2] sm:$0xff] %v773
  %790 = vst [vmem:[#allocation2 + $0x8] sm:$0xff] %v774
  %791 = vst [vmem:[#allocation2 + $0x10] sm:$0xff] %v775
  %792 = vst [vmem:[#allocation2 + $0x18] sm:$0xff] %v776
  %793 = vst [vmem:[#allocation2 + $0x20] sm:$0xff] %v777
  %794 = vst [vmem:[#allocation2 + $0x28] sm:$0xff] %v778
  %795 = vst [vmem:[#allocation2 + $0x30] sm:$0xff] %v779
  %796 = vst [vmem:[#allocation2 + $0x38] sm:$0xff] %v780
  %797 = vst [vmem:[#allocation2 + $0x40] sm:$0xff] %v781
  %798 = vst [vmem:[#allocation2 + $0x48] sm:$0xff] %v782
  %799 = vst [vmem:[#allocation2 + $0x50] sm:$0xff] %v783
  %800 = vst [vmem:[#allocation2 + $0x58] sm:$0xff] %v784
  %801 = vst [vmem:[#allocation2 + $0x60] sm:$0xff] %v785
  %802 = vst [vmem:[#allocation2 + $0x68] sm:$0xff] %v786
  %803 = vst [vmem:[#allocation2 + $0x70] sm:$0xff] %v787
  %804 = vst [vmem:[#allocation2 + $0x78] sm:$0xff] %v788
  %v805 = vld [vmem:[%s0] sm:$0xe]
  %v806 = vld [vmem:[%s0 + $0x4] sm:$0x1]
  %v807 = vld [vmem:[%s0 + $0x8] sm:$0xe]
  %v808 = vld [vmem:[%s0 + $0xc] sm:$0x1]
  %v809 = vld [vmem:[%s0 + $0x10] sm:$0xe]
  %v810 = vld [vmem:[%s0 + $0x14] sm:$0x1]
  %v811 = vld [vmem:[%s0 + $0x18] sm:$0xe]
  %v812 = vld [vmem:[%s0 + $0x1c] sm:$0x1]
  %v813 = vld [vmem:[%s0 + $0x20] sm:$0xe]
  %v814 = vld [vmem:[%s0 + $0x24] sm:$0x1]
  %v815 = vld [vmem:[%s0 + $0x28] sm:$0xe]
  %v816 = vld [vmem:[%s0 + $0x2c] sm:$0x1]
  %v817 = vld [vmem:[%s0 + $0x30] sm:$0xe]
  %v818 = vld [vmem:[%s0 + $0x34] sm:$0x1]
  %v819 = vld [vmem:[%s0 + $0x38] sm:$0xe]
  %v820 = vld [vmem:[%s0 + $0x3c] sm:$0x1]
  %v821 = vld [vmem:[%s0 + $0x50] sm:$0xe]
  %v822 = vld [vmem:[%s0 + $0x54] sm:$0x1]
  %v823 = vld [vmem:[%s0 + $0x58] sm:$0xe]
  %v824 = vld [vmem:[%s0 + $0x5c] sm:$0x1]
  %v825 = vld [vmem:[%s0 + $0x60] sm:$0xe]
  %v826 = vld [vmem:[%s0 + $0x64] sm:$0x1]
  %v827 = vld [vmem:[%s0 + $0x68] sm:$0xe]
  %v828 = vld [vmem:[%s0 + $0x6c] sm:$0x1]
  %v829 = vld [vmem:[%s0 + $0x70] sm:$0xe]
  %v830 = vld [vmem:[%s0 + $0x74] sm:$0x1]
  %v831 = vld [vmem:[%s0 + $0x78] sm:$0xe]
  %v832 = vld [vmem:[%s0 + $0x7c] sm:$0x1]
  %v833 = vld [vmem:[%s0 + $0x80] sm:$0xe]
  %v834 = vld [vmem:[%s0 + $0x84] sm:$0x1]
  %v835 = vld [vmem:[%s0 + $0x88] sm:$0xe]
  %v836 = vld [vmem:[%s0 + $0x8c] sm:$0x1]
  %v837 = vld [vmem:[#allocation2] sm:$0xff]
  %v838 = vld [vmem:[#allocation2 + $0x8] sm:$0xff]
  %v839 = vld [vmem:[#allocation2 + $0x10] sm:$0xff]
  %v840 = vld [vmem:[#allocation2 + $0x18] sm:$0xff]
  %v841 = vld [vmem:[#allocation2 + $0x20] sm:$0xff]
  %v842 = vld [vmem:[#allocation2 + $0x28] sm:$0xff]
  %v843 = vld [vmem:[#allocation2 + $0x30] sm:$0xff]
  %v844 = vld [vmem:[#allocation2 + $0x38] sm:$0xff]
  %v845 = vld [vmem:[#allocation2 + $0x40] sm:$0xff]
  %v846 = vld [vmem:[#allocation2 + $0x48] sm:$0xff]
  %v847 = vld [vmem:[#allocation2 + $0x50] sm:$0xff]
  %v848 = vld [vmem:[#allocation2 + $0x58] sm:$0xff]
  %v849 = vld [vmem:[#allocation2 + $0x60] sm:$0xff]
  %v850 = vld [vmem:[#allocation2 + $0x68] sm:$0xff]
  %v851 = vld [vmem:[#allocation2 + $0x70] sm:$0xff]
  %v852 = vld [vmem:[#allocation2 + $0x78] sm:$0xff]
  %vm885 = vcmask 1042432
  %vm886 = vcmask 1046532
  %vm887 = vmor %vm885, %vm886
  %v888 = vrot.slane %v805, 5
  %v889 = vrot.slane %v888, 4
  %v890 = vrot.slane %v806, 5
  %v891 = vsel %vm887, %v889, %v890
  %v892 = vrot.slane %v807, 5
  %v893 = vrot.slane %v892, 4
  %v894 = vrot.slane %v808, 5
  %v895 = vsel %vm887, %v893, %v894
  %v896 = vrot.slane %v809, 5
  %v897 = vrot.slane %v896, 4
  %v898 = vrot.slane %v810, 5
  %v899 = vsel %vm887, %v897, %v898
  %v900 = vrot.slane %v811, 5
  %v901 = vrot.slane %v900, 4
  %v902 = vrot.slane %v812, 5
  %v903 = vsel %vm887, %v901, %v902
  %v904 = vrot.slane %v813, 5
  %v905 = vrot.slane %v904, 4
  %v906 = vrot.slane %v814, 5
  %v907 = vsel %vm887, %v905, %v906
  %v908 = vrot.slane %v815, 5
  %v909 = vrot.slane %v908, 4
  %v910 = vrot.slane %v816, 5
  %v911 = vsel %vm887, %v909, %v910
  %v912 = vrot.slane %v817, 5
  %v913 = vrot.slane %v912, 4
  %v914 = vrot.slane %v818, 5
  %v915 = vsel %vm887, %v913, %v914
  %v916 = vrot.slane %v819, 5
  %v917 = vrot.slane %v916, 4
  %v918 = vrot.slane %v820, 5
  %v919 = vsel %vm887, %v917, %v918
  %v920 = vrot.slane %v821, 5
  %v921 = vrot.slane %v920, 4
  %v922 = vrot.slane %v822, 5
  %v923 = vsel %vm887, %v921, %v922
  %v924 = vrot.slane %v823, 5
  %v925 = vrot.slane %v924, 4
  %v926 = vrot.slane %v824, 5
  %v927 = vsel %vm887, %v925, %v926
  %v928 = vrot.slane %v825, 5
  %v929 = vrot.slane %v928, 4
  %v930 = vrot.slane %v826, 5
  %v931 = vsel %vm887, %v929, %v930
  %v932 = vrot.slane %v827, 5
  %v933 = vrot.slane %v932, 4
  %v934 = vrot.slane %v828, 5
  %v935 = vsel %vm887, %v933, %v934
  %v936 = vrot.slane %v829, 5
  %v937 = vrot.slane %v936, 4
  %v938 = vrot.slane %v830, 5
  %v939 = vsel %vm887, %v937, %v938
  %v940 = vrot.slane %v831, 5
  %v941 = vrot.slane %v940, 4
  %v942 = vrot.slane %v832, 5
  %v943 = vsel %vm887, %v941, %v942
  %v944 = vrot.slane %v833, 5
  %v945 = vrot.slane %v944, 4
  %v946 = vrot.slane %v834, 5
  %v947 = vsel %vm887, %v945, %v946
  %v948 = vrot.slane %v835, 5
  %v949 = vrot.slane %v948, 4
  %v950 = vrot.slane %v836, 5
  %v951 = vsel %vm887, %v949, %v950
  %s952 = scalar_lea.vmem %s1, 128
  %v953 = vld [vmem:[%s952] sm:$0xf]
  %v954 = vld [vmem:[%s952 + $0x4] sm:$0xf]
  %v955 = vld [vmem:[%s952 + $0x8] sm:$0xf]
  %v956 = vld [vmem:[%s952 + $0xc] sm:$0xf]
  %v957 = vld [vmem:[%s952 + $0x10] sm:$0xf]
  %v958 = vld [vmem:[%s952 + $0x14] sm:$0xf]
  %v959 = vld [vmem:[%s952 + $0x18] sm:$0xf]
  %v960 = vld [vmem:[%s952 + $0x1c] sm:$0xf]
  %v961 = vld [vmem:[%s952 + $0x20] sm:$0xf]
  %v962 = vld [vmem:[%s952 + $0x24] sm:$0xf]
  %v963 = vld [vmem:[%s952 + $0x28] sm:$0xf]
  %v964 = vld [vmem:[%s952 + $0x2c] sm:$0xf]
  %v965 = vld [vmem:[%s952 + $0x30] sm:$0xf]
  %v966 = vld [vmem:[%s952 + $0x34] sm:$0xf]
  %v967 = vld [vmem:[%s952 + $0x38] sm:$0xf]
  %v968 = vld [vmem:[%s952 + $0x3c] sm:$0xf]
  %v969 = vunpack.c.l.b16 %v891
  %v970 = vunpack.c.l.b16 %v895
  %v971 = vunpack.c.l.b16 %v899
  %v972 = vunpack.c.l.b16 %v903
  %v973 = vunpack.c.l.b16 %v907
  %v974 = vunpack.c.l.b16 %v911
  %v975 = vunpack.c.l.b16 %v915
  %v976 = vunpack.c.l.b16 %v919
  %v977 = vunpack.c.l.b16 %v923
  %v978 = vunpack.c.l.b16 %v927
  %v979 = vunpack.c.l.b16 %v931
  %v980 = vunpack.c.l.b16 %v935
  %v981 = vunpack.c.l.b16 %v939
  %v982 = vunpack.c.l.b16 %v943
  %v983 = vunpack.c.l.b16 %v947
  %v984 = vunpack.c.l.b16 %v951
  %v985 = vpack.c.b16 %v970, %v969
  %v986 = vpack.c.b16 %v972, %v971
  %v987 = vpack.c.b16 %v974, %v973
  %v988 = vpack.c.b16 %v976, %v975
  %v989 = vpack.c.b16 %v978, %v977
  %v990 = vpack.c.b16 %v980, %v979
  %v991 = vpack.c.b16 %v982, %v981
  %v992 = vpack.c.b16 %v984, %v983
  %v1017 = vunpack.c.l.b16 %v953
  %v1018 = vunpack.c.l.b16 %v954
  %v1019 = vunpack.c.l.b16 %v955
  %v1020 = vunpack.c.l.b16 %v956
  %v1021 = vunpack.c.l.b16 %v957
  %v1022 = vunpack.c.l.b16 %v958
  %v1023 = vunpack.c.l.b16 %v959
  %v1024 = vunpack.c.l.b16 %v960
  %v1025 = vunpack.c.l.b16 %v961
  %v1026 = vunpack.c.l.b16 %v962
  %v1027 = vunpack.c.l.b16 %v963
  %v1028 = vunpack.c.l.b16 %v964
  %v1029 = vunpack.c.l.b16 %v965
  %v1030 = vunpack.c.l.b16 %v966
  %v1031 = vunpack.c.l.b16 %v967
  %v1032 = vunpack.c.l.b16 %v968
  %v1033 = vpack.c.b16 %v1018, %v1017
  %v1034 = vpack.c.b16 %v1020, %v1019
  %v1035 = vpack.c.b16 %v1022, %v1021
  %v1036 = vpack.c.b16 %v1024, %v1023
  %v1037 = vpack.c.b16 %v1026, %v1025
  %v1038 = vpack.c.b16 %v1028, %v1027
  %v1039 = vpack.c.b16 %v1030, %v1029
  %v1040 = vpack.c.b16 %v1032, %v1031
  %1049 = vmatprep.subr.bf16.mxu0 0
  %1050 = vmatpush1.bf16.msra.mxu0 %v1040
  %1051 = vmatprep.subr.bf16.mxu0 0
  %1052 = vmatpush1.bf16.msra.mxu0 %v1039
  %1053 = vmatprep.subr.bf16.mxu0 0
  %1054 = vmatpush1.bf16.msra.mxu0 %v1038
  %1055 = vmatprep.subr.bf16.mxu0 0
  %1056 = vmatpush1.bf16.msra.mxu0 %v1037
  %1057 = vmatprep.subr.bf16.mxu0 0
  %1058 = vmatpush1.bf16.msra.mxu0 %v1036
  %1059 = vmatprep.subr.bf16.mxu0 0
  %1060 = vmatpush1.bf16.msra.mxu0 %v1035
  %1061 = vmatprep.subr.bf16.mxu0 0
  %1062 = vmatpush1.bf16.msra.mxu0 %v1034
  %1063 = vmatprep.subr.bf16.mxu0 0
  %1064 = vmatpush1.bf16.msra.mxu0 %v1033
  %1065 = vmatprep.subr.bf16.mxu0 0
  %1066 = vmatpush2.bf16.msra.mxu0 0
  %1067 = vmatprep.subr.bf16.mxu0 0
  %1068 = vmatpush2.bf16.msra.mxu0 0
  %1069 = vmatprep.subr.bf16.mxu0 0
  %1070 = vmatpush2.bf16.msra.mxu0 0
  %1071 = vmatprep.subr.bf16.mxu0 0
  %1072 = vmatpush2.bf16.msra.mxu0 0
  %1073 = vmatprep.subr.bf16.mxu0 0
  %1074 = vmatpush2.bf16.msra.mxu0 0
  %1075 = vmatprep.subr.bf16.mxu0 0
  %1076 = vmatpush2.bf16.msra.mxu0 0
  %1077 = vmatprep.subr.bf16.mxu0 0
  %1078 = vmatpush2.bf16.msra.mxu0 0
  %1079 = vmatprep.subr.bf16.mxu0 0
  %1080 = vmatpush2.bf16.msra.mxu0 0
  %1081 = vmatprep.mubr.bf16.mxu0 0
  %1082 = vmatmul.mubr.bf16.gmra.mxu0 %v985
  %v1083 = vpop.f32.mrf.mxu0
  %v1084 = vadd.f32 0.0, %v1083
  %v1085 = vpop.f32.mrf.mxu0
  %v1086 = vpop.f32.mrf.mxu0
  %v1087 = vadd.f32 0.0, %v1086
  %v1088 = vpop.f32.mrf.mxu0
  %1089 = vmatprep.mubr.bf16.mxu0 0
  %1090 = vmatmul.mubr.bf16.gmra.mxu0 %v986
  %v1091 = vpop.f32.mrf.mxu0
  %v1092 = vadd.f32 0.0, %v1091
  %v1093 = vpop.f32.mrf.mxu0
  %v1094 = vpop.f32.mrf.mxu0
  %v1095 = vadd.f32 0.0, %v1094
  %v1096 = vpop.f32.mrf.mxu0
  %1097 = vmatprep.mubr.bf16.mxu0 0
  %1098 = vmatmul.mubr.bf16.gmra.mxu0 %v987
  %v1099 = vpop.f32.mrf.mxu0
  %v1100 = vadd.f32 0.0, %v1099
  %v1101 = vpop.f32.mrf.mxu0
  %v1102 = vpop.f32.mrf.mxu0
  %v1103 = vadd.f32 0.0, %v1102
  %v1104 = vpop.f32.mrf.mxu0
  %1105 = vmatprep.mubr.bf16.mxu0 0
  %1106 = vmatmul.mubr.bf16.gmra.mxu0 %v988
  %v1107 = vpop.f32.mrf.mxu0
  %v1108 = vadd.f32 0.0, %v1107
  %v1109 = vpop.f32.mrf.mxu0
  %v1110 = vpop.f32.mrf.mxu0
  %v1111 = vadd.f32 0.0, %v1110
  %v1112 = vpop.f32.mrf.mxu0
  %1113 = vmatprep.mubr.bf16.mxu0 0
  %1114 = vmatmul.mubr.bf16.gmra.mxu0 %v989
  %v1115 = vpop.f32.mrf.mxu0
  %v1116 = vadd.f32 0.0, %v1115
  %v1117 = vpop.f32.mrf.mxu0
  %v1118 = vpop.f32.mrf.mxu0
  %v1119 = vadd.f32 0.0, %v1118
  %v1120 = vpop.f32.mrf.mxu0
  %1121 = vmatprep.mubr.bf16.mxu0 0
  %1122 = vmatmul.mubr.bf16.gmra.mxu0 %v990
  %v1123 = vpop.f32.mrf.mxu0
  %v1124 = vadd.f32 0.0, %v1123
  %v1125 = vpop.f32.mrf.mxu0
  %v1126 = vpop.f32.mrf.mxu0
  %v1127 = vadd.f32 0.0, %v1126
  %v1128 = vpop.f32.mrf.mxu0
  %1129 = vmatprep.mubr.bf16.mxu0 0
  %1130 = vmatmul.mubr.bf16.gmra.mxu0 %v991
  %v1131 = vpop.f32.mrf.mxu0
  %v1132 = vadd.f32 0.0, %v1131
  %v1133 = vpop.f32.mrf.mxu0
  %v1134 = vpop.f32.mrf.mxu0
  %v1135 = vadd.f32 0.0, %v1134
  %v1136 = vpop.f32.mrf.mxu0
  %1137 = vmatprep.mubr.bf16.mxu0 0
  %1138 = vmatmul.mubr.bf16.gmra.mxu0 %v992
  %v1139 = vpop.f32.mrf.mxu0
  %v1140 = vadd.f32 0.0, %v1139
  %v1141 = vpop.f32.mrf.mxu0
  %v1142 = vpop.f32.mrf.mxu0
  %v1143 = vadd.f32 0.0, %v1142
  %v1144 = vpop.f32.mrf.mxu0
  %1145 = vdwg.mxu0
  %v1146 = vadd.f32 %v837, %v1084
  %v1147 = vadd.f32 %v838, %v1087
  %v1148 = vadd.f32 %v839, %v1092
  %v1149 = vadd.f32 %v840, %v1095
  %v1150 = vadd.f32 %v841, %v1100
  %v1151 = vadd.f32 %v842, %v1103
  %v1152 = vadd.f32 %v843, %v1108
  %v1153 = vadd.f32 %v844, %v1111
  %v1154 = vadd.f32 %v845, %v1116
  %v1155 = vadd.f32 %v846, %v1119
  %v1156 = vadd.f32 %v847, %v1124
  %v1157 = vadd.f32 %v848, %v1127
  %v1158 = vadd.f32 %v849, %v1132
  %v1159 = vadd.f32 %v850, %v1135
  %v1160 = vadd.f32 %v851, %v1140
  %v1161 = vadd.f32 %v852, %v1143
  %1162 = vst [vmem:[#allocation2] sm:$0xff] %v1146
  %1163 = vst [vmem:[#allocation2 + $0x8] sm:$0xff] %v1147
  %1164 = vst [vmem:[#allocation2 + $0x10] sm:$0xff] %v1148
  %1165 = vst [vmem:[#allocation2 + $0x18] sm:$0xff] %v1149
  %1166 = vst [vmem:[#allocation2 + $0x20] sm:$0xff] %v1150
  %1167 = vst [vmem:[#allocation2 + $0x28] sm:$0xff] %v1151
  %1168 = vst [vmem:[#allocation2 + $0x30] sm:$0xff] %v1152
  %1169 = vst [vmem:[#allocation2 + $0x38] sm:$0xff] %v1153
  %1170 = vst [vmem:[#allocation2 + $0x40] sm:$0xff] %v1154
  %1171 = vst [vmem:[#allocation2 + $0x48] sm:$0xff] %v1155
  %1172 = vst [vmem:[#allocation2 + $0x50] sm:$0xff] %v1156
  %1173 = vst [vmem:[#allocation2 + $0x58] sm:$0xff] %v1157
  %1174 = vst [vmem:[#allocation2 + $0x60] sm:$0xff] %v1158
  %1175 = vst [vmem:[#allocation2 + $0x68] sm:$0xff] %v1159
  %1176 = vst [vmem:[#allocation2 + $0x70] sm:$0xff] %v1160
  %1177 = vst [vmem:[#allocation2 + $0x78] sm:$0xff] %v1161
  %s1178 = scalar_lea.vmem %s0, 8
  %v1179 = vld [vmem:[%s1178] sm:$0xf]
  %v1180 = vld [vmem:[%s1178 + $0x8] sm:$0xf]
  %v1181 = vld [vmem:[%s1178 + $0x10] sm:$0xf]
  %v1182 = vld [vmem:[%s1178 + $0x18] sm:$0xf]
  %v1183 = vld [vmem:[%s1178 + $0x20] sm:$0xf]
  %v1184 = vld [vmem:[%s1178 + $0x28] sm:$0xf]
  %v1185 = vld [vmem:[%s1178 + $0x30] sm:$0xf]
  %v1186 = vld [vmem:[%s1178 + $0x38] sm:$0xf]
  %v1187 = vld [vmem:[%s1178 + $0x50] sm:$0xf]
  %v1188 = vld [vmem:[%s1178 + $0x58] sm:$0xf]
  %v1189 = vld [vmem:[%s1178 + $0x60] sm:$0xf]
  %v1190 = vld [vmem:[%s1178 + $0x68] sm:$0xf]
  %v1191 = vld [vmem:[%s1178 + $0x70] sm:$0xf]
  %v1192 = vld [vmem:[%s1178 + $0x78] sm:$0xf]
  %v1193 = vld [vmem:[%s1178 + $0x80] sm:$0xf]
  %v1194 = vld [vmem:[%s1178 + $0x88] sm:$0xf]
  %v1195 = vld [vmem:[#allocation2] sm:$0xff]
  %v1196 = vld [vmem:[#allocation2 + $0x8] sm:$0xff]
  %v1197 = vld [vmem:[#allocation2 + $0x10] sm:$0xff]
  %v1198 = vld [vmem:[#allocation2 + $0x18] sm:$0xff]
  %v1199 = vld [vmem:[#allocation2 + $0x20] sm:$0xff]
  %v1200 = vld [vmem:[#allocation2 + $0x28] sm:$0xff]
  %v1201 = vld [vmem:[#allocation2 + $0x30] sm:$0xff]
  %v1202 = vld [vmem:[#allocation2 + $0x38] sm:$0xff]
  %v1203 = vld [vmem:[#allocation2 + $0x40] sm:$0xff]
  %v1204 = vld [vmem:[#allocation2 + $0x48] sm:$0xff]
  %v1205 = vld [vmem:[#allocation2 + $0x50] sm:$0xff]
  %v1206 = vld [vmem:[#allocation2 + $0x58] sm:$0xff]
  %v1207 = vld [vmem:[#allocation2 + $0x60] sm:$0xff]
  %v1208 = vld [vmem:[#allocation2 + $0x68] sm:$0xff]
  %v1209 = vld [vmem:[#allocation2 + $0x70] sm:$0xff]
  %v1210 = vld [vmem:[#allocation2 + $0x78] sm:$0xff]
  %s1211 = scalar_lea.vmem %s1, 192
  %v1212 = vld [vmem:[%s1211] sm:$0xf]
  %v1213 = vld [vmem:[%s1211 + $0x4] sm:$0xf]
  %v1214 = vld [vmem:[%s1211 + $0x8] sm:$0xf]
  %v1215 = vld [vmem:[%s1211 + $0xc] sm:$0xf]
  %v1216 = vld [vmem:[%s1211 + $0x10] sm:$0xf]
  %v1217 = vld [vmem:[%s1211 + $0x14] sm:$0xf]
  %v1218 = vld [vmem:[%s1211 + $0x18] sm:$0xf]
  %v1219 = vld [vmem:[%s1211 + $0x1c] sm:$0xf]
  %v1220 = vld [vmem:[%s1211 + $0x20] sm:$0xf]
  %v1221 = vld [vmem:[%s1211 + $0x24] sm:$0xf]
  %v1222 = vld [vmem:[%s1211 + $0x28] sm:$0xf]
  %v1223 = vld [vmem:[%s1211 + $0x2c] sm:$0xf]
  %v1224 = vld [vmem:[%s1211 + $0x30] sm:$0xf]
  %v1225 = vld [vmem:[%s1211 + $0x34] sm:$0xf]
  %v1226 = vld [vmem:[%s1211 + $0x38] sm:$0xf]
  %v1227 = vld [vmem:[%s1211 + $0x3c] sm:$0xf]
  %v1244 = vunpack.c.l.b16 %v1179
  %v1245 = vunpack.c.l.b16 %v1180
  %v1246 = vunpack.c.l.b16 %v1181
  %v1247 = vunpack.c.l.b16 %v1182
  %v1248 = vunpack.c.l.b16 %v1183
  %v1249 = vunpack.c.l.b16 %v1184
  %v1250 = vunpack.c.l.b16 %v1185
  %v1251 = vunpack.c.l.b16 %v1186
  %v1252 = vunpack.c.l.b16 %v1187
  %v1253 = vunpack.c.l.b16 %v1188
  %v1254 = vunpack.c.l.b16 %v1189
  %v1255 = vunpack.c.l.b16 %v1190
  %v1256 = vunpack.c.l.b16 %v1191
  %v1257 = vunpack.c.l.b16 %v1192
  %v1258 = vunpack.c.l.b16 %v1193
  %v1259 = vunpack.c.l.b16 %v1194
  %v1260 = vpack.c.b16 %v1245, %v1244
  %v1261 = vpack.c.b16 %v1247, %v1246
  %v1262 = vpack.c.b16 %v1249, %v1248
  %v1263 = vpack.c.b16 %v1251, %v1250
  %v1264 = vpack.c.b16 %v1253, %v1252
  %v1265 = vpack.c.b16 %v1255, %v1254
  %v1266 = vpack.c.b16 %v1257, %v1256
  %v1267 = vpack.c.b16 %v1259, %v1258
  %v1292 = vunpack.c.l.b16 %v1212
  %v1293 = vunpack.c.l.b16 %v1213
  %v1294 = vunpack.c.l.b16 %v1214
  %v1295 = vunpack.c.l.b16 %v1215
  %v1296 = vunpack.c.l.b16 %v1216
  %v1297 = vunpack.c.l.b16 %v1217
  %v1298 = vunpack.c.l.b16 %v1218
  %v1299 = vunpack.c.l.b16 %v1219
  %v1300 = vunpack.c.l.b16 %v1220
  %v1301 = vunpack.c.l.b16 %v1221
  %v1302 = vunpack.c.l.b16 %v1222
  %v1303 = vunpack.c.l.b16 %v1223
  %v1304 = vunpack.c.l.b16 %v1224
  %v1305 = vunpack.c.l.b16 %v1225
  %v1306 = vunpack.c.l.b16 %v1226
  %v1307 = vunpack.c.l.b16 %v1227
  %v1308 = vpack.c.b16 %v1293, %v1292
  %v1309 = vpack.c.b16 %v1295, %v1294
  %v1310 = vpack.c.b16 %v1297, %v1296
  %v1311 = vpack.c.b16 %v1299, %v1298
  %v1312 = vpack.c.b16 %v1301, %v1300
  %v1313 = vpack.c.b16 %v1303, %v1302
  %v1314 = vpack.c.b16 %v1305, %v1304
  %v1315 = vpack.c.b16 %v1307, %v1306
  %1324 = vmatprep.subr.bf16.mxu0 0
  %1325 = vmatpush1.bf16.msra.mxu0 %v1315
  %1326 = vmatprep.subr.bf16.mxu0 0
  %1327 = vmatpush1.bf16.msra.mxu0 %v1314
  %1328 = vmatprep.subr.bf16.mxu0 0
  %1329 = vmatpush1.bf16.msra.mxu0 %v1313
  %1330 = vmatprep.subr.bf16.mxu0 0
  %1331 = vmatpush1.bf16.msra.mxu0 %v1312
  %1332 = vmatprep.subr.bf16.mxu0 0
  %1333 = vmatpush1.bf16.msra.mxu0 %v1311
  %1334 = vmatprep.subr.bf16.mxu0 0
  %1335 = vmatpush1.bf16.msra.mxu0 %v1310
  %1336 = vmatprep.subr.bf16.mxu0 0
  %1337 = vmatpush1.bf16.msra.mxu0 %v1309
  %1338 = vmatprep.subr.bf16.mxu0 0
  %1339 = vmatpush1.bf16.msra.mxu0 %v1308
  %1340 = vmatprep.subr.bf16.mxu0 0
  %1341 = vmatpush2.bf16.msra.mxu0 0
  %1342 = vmatprep.subr.bf16.mxu0 0
  %1343 = vmatpush2.bf16.msra.mxu0 0
  %1344 = vmatprep.subr.bf16.mxu0 0
  %1345 = vmatpush2.bf16.msra.mxu0 0
  %1346 = vmatprep.subr.bf16.mxu0 0
  %1347 = vmatpush2.bf16.msra.mxu0 0
  %1348 = vmatprep.subr.bf16.mxu0 0
  %1349 = vmatpush2.bf16.msra.mxu0 0
  %1350 = vmatprep.subr.bf16.mxu0 0
  %1351 = vmatpush2.bf16.msra.mxu0 0
  %1352 = vmatprep.subr.bf16.mxu0 0
  %1353 = vmatpush2.bf16.msra.mxu0 0
  %1354 = vmatprep.subr.bf16.mxu0 0
  %1355 = vmatpush2.bf16.msra.mxu0 0
  %1356 = vmatprep.mubr.bf16.mxu0 0
  %1357 = vmatmul.mubr.bf16.gmra.mxu0 %v1260
  %v1358 = vpop.f32.mrf.mxu0
  %v1359 = vadd.f32 0.0, %v1358
  %v1360 = vpop.f32.mrf.mxu0
  %v1361 = vpop.f32.mrf.mxu0
  %v1362 = vadd.f32 0.0, %v1361
  %v1363 = vpop.f32.mrf.mxu0
  %1364 = vmatprep.mubr.bf16.mxu0 0
  %1365 = vmatmul.mubr.bf16.gmra.mxu0 %v1261
  %v1366 = vpop.f32.mrf.mxu0
  %v1367 = vadd.f32 0.0, %v1366
  %v1368 = vpop.f32.mrf.mxu0
  %v1369 = vpop.f32.mrf.mxu0
  %v1370 = vadd.f32 0.0, %v1369
  %v1371 = vpop.f32.mrf.mxu0
  %1372 = vmatprep.mubr.bf16.mxu0 0
  %1373 = vmatmul.mubr.bf16.gmra.mxu0 %v1262
  %v1374 = vpop.f32.mrf.mxu0
  %v1375 = vadd.f32 0.0, %v1374
  %v1376 = vpop.f32.mrf.mxu0
  %v1377 = vpop.f32.mrf.mxu0
  %v1378 = vadd.f32 0.0, %v1377
  %v1379 = vpop.f32.mrf.mxu0
  %1380 = vmatprep.mubr.bf16.mxu0 0
  %1381 = vmatmul.mubr.bf16.gmra.mxu0 %v1263
  %v1382 = vpop.f32.mrf.mxu0
  %v1383 = vadd.f32 0.0, %v1382
  %v1384 = vpop.f32.mrf.mxu0
  %v1385 = vpop.f32.mrf.mxu0
  %v1386 = vadd.f32 0.0, %v1385
  %v1387 = vpop.f32.mrf.mxu0
  %1388 = vmatprep.mubr.bf16.mxu0 0
  %1389 = vmatmul.mubr.bf16.gmra.mxu0 %v1264
  %v1390 = vpop.f32.mrf.mxu0
  %v1391 = vadd.f32 0.0, %v1390
  %v1392 = vpop.f32.mrf.mxu0
  %v1393 = vpop.f32.mrf.mxu0
  %v1394 = vadd.f32 0.0, %v1393
  %v1395 = vpop.f32.mrf.mxu0
  %1396 = vmatprep.mubr.bf16.mxu0 0
  %1397 = vmatmul.mubr.bf16.gmra.mxu0 %v1265
  %v1398 = vpop.f32.mrf.mxu0
  %v1399 = vadd.f32 0.0, %v1398
  %v1400 = vpop.f32.mrf.mxu0
  %v1401 = vpop.f32.mrf.mxu0
  %v1402 = vadd.f32 0.0, %v1401
  %v1403 = vpop.f32.mrf.mxu0
  %1404 = vmatprep.mubr.bf16.mxu0 0
  %1405 = vmatmul.mubr.bf16.gmra.mxu0 %v1266
  %v1406 = vpop.f32.mrf.mxu0
  %v1407 = vadd.f32 0.0, %v1406
  %v1408 = vpop.f32.mrf.mxu0
  %v1409 = vpop.f32.mrf.mxu0
  %v1410 = vadd.f32 0.0, %v1409
  %v1411 = vpop.f32.mrf.mxu0
  %1412 = vmatprep.mubr.bf16.mxu0 0
  %1413 = vmatmul.mubr.bf16.gmra.mxu0 %v1267
  %v1414 = vpop.f32.mrf.mxu0
  %v1415 = vadd.f32 0.0, %v1414
  %v1416 = vpop.f32.mrf.mxu0
  %v1417 = vpop.f32.mrf.mxu0
  %v1418 = vadd.f32 0.0, %v1417
  %v1419 = vpop.f32.mrf.mxu0
  %1420 = vdwg.mxu0
  %v1421 = vadd.f32 %v1195, %v1359
  %v1422 = vadd.f32 %v1196, %v1362
  %v1423 = vadd.f32 %v1197, %v1367
  %v1424 = vadd.f32 %v1198, %v1370
  %v1425 = vadd.f32 %v1199, %v1375
  %v1426 = vadd.f32 %v1200, %v1378
  %v1427 = vadd.f32 %v1201, %v1383
  %v1428 = vadd.f32 %v1202, %v1386
  %v1429 = vadd.f32 %v1203, %v1391
  %v1430 = vadd.f32 %v1204, %v1394
  %v1431 = vadd.f32 %v1205, %v1399
  %v1432 = vadd.f32 %v1206, %v1402
  %v1433 = vadd.f32 %v1207, %v1407
  %v1434 = vadd.f32 %v1208, %v1410
  %v1435 = vadd.f32 %v1209, %v1415
  %v1436 = vadd.f32 %v1210, %v1418
  %1437 = vst [vmem:[#allocation2] sm:$0xff] %v1421
  %1438 = vst [vmem:[#allocation2 + $0x8] sm:$0xff] %v1422
  %1439 = vst [vmem:[#allocation2 + $0x10] sm:$0xff] %v1423
  %1440 = vst [vmem:[#allocation2 + $0x18] sm:$0xff] %v1424
  %1441 = vst [vmem:[#allocation2 + $0x20] sm:$0xff] %v1425
  %1442 = vst [vmem:[#allocation2 + $0x28] sm:$0xff] %v1426
  %1443 = vst [vmem:[#allocation2 + $0x30] sm:$0xff] %v1427
  %1444 = vst [vmem:[#allocation2 + $0x38] sm:$0xff] %v1428
  %1445 = vst [vmem:[#allocation2 + $0x40] sm:$0xff] %v1429
  %1446 = vst [vmem:[#allocation2 + $0x48] sm:$0xff] %v1430
  %1447 = vst [vmem:[#allocation2 + $0x50] sm:$0xff] %v1431
  %1448 = vst [vmem:[#allocation2 + $0x58] sm:$0xff] %v1432
  %1449 = vst [vmem:[#allocation2 + $0x60] sm:$0xff] %v1433
  %1450 = vst [vmem:[#allocation2 + $0x68] sm:$0xff] %v1434
  %1451 = vst [vmem:[#allocation2 + $0x70] sm:$0xff] %v1435
  %1452 = vst [vmem:[#allocation2 + $0x78] sm:$0xff] %v1436
  %v1453 = vld [vmem:[%s1178] sm:$0xf]
  %v1454 = vld [vmem:[%s1178 + $0x4] sm:$0x1]
  %v1455 = vld [vmem:[%s1178 + $0x8] sm:$0xf]
  %v1456 = vld [vmem:[%s1178 + $0xc] sm:$0x1]
  %v1457 = vld [vmem:[%s1178 + $0x10] sm:$0xf]
  %v1458 = vld [vmem:[%s1178 + $0x14] sm:$0x1]
  %v1459 = vld [vmem:[%s1178 + $0x18] sm:$0xf]
  %v1460 = vld [vmem:[%s1178 + $0x1c] sm:$0x1]
  %v1461 = vld [vmem:[%s1178 + $0x20] sm:$0xf]
  %v1462 = vld [vmem:[%s1178 + $0x24] sm:$0x1]
  %v1463 = vld [vmem:[%s1178 + $0x28] sm:$0xf]
  %v1464 = vld [vmem:[%s1178 + $0x2c] sm:$0x1]
  %v1465 = vld [vmem:[%s1178 + $0x30] sm:$0xf]
  %v1466 = vld [vmem:[%s1178 + $0x34] sm:$0x1]
  %v1467 = vld [vmem:[%s1178 + $0x38] sm:$0xf]
  %v1468 = vld [vmem:[%s1178 + $0x3c] sm:$0x1]
  %v1469 = vld [vmem:[%s1178 + $0x50] sm:$0xf]
  %v1470 = vld [vmem:[%s1178 + $0x54] sm:$0x1]
  %v1471 = vld [vmem:[%s1178 + $0x58] sm:$0xf]
  %v1472 = vld [vmem:[%s1178 + $0x5c] sm:$0x1]
  %v1473 = vld [vmem:[%s1178 + $0x60] sm:$0xf]
  %v1474 = vld [vmem:[%s1178 + $0x64] sm:$0x1]
  %v1475 = vld [vmem:[%s1178 + $0x68] sm:$0xf]
  %v1476 = vld [vmem:[%s1178 + $0x6c] sm:$0x1]
  %v1477 = vld [vmem:[%s1178 + $0x70] sm:$0xf]
  %v1478 = vld [vmem:[%s1178 + $0x74] sm:$0x1]
  %v1479 = vld [vmem:[%s1178 + $0x78] sm:$0xf]
  %v1480 = vld [vmem:[%s1178 + $0x7c] sm:$0x1]
  %v1481 = vld [vmem:[%s1178 + $0x80] sm:$0xf]
  %v1482 = vld [vmem:[%s1178 + $0x84] sm:$0x1]
  %v1483 = vld [vmem:[%s1178 + $0x88] sm:$0xf]
  %v1484 = vld [vmem:[%s1178 + $0x8c] sm:$0x1]
  %v1485 = vld [vmem:[#allocation2] sm:$0xff]
  %v1486 = vld [vmem:[#allocation2 + $0x8] sm:$0xff]
  %v1487 = vld [vmem:[#allocation2 + $0x10] sm:$0xff]
  %v1488 = vld [vmem:[#allocation2 + $0x18] sm:$0xff]
  %v1489 = vld [vmem:[#allocation2 + $0x20] sm:$0xff]
  %v1490 = vld [vmem:[#allocation2 + $0x28] sm:$0xff]
  %v1491 = vld [vmem:[#allocation2 + $0x30] sm:$0xff]
  %v1492 = vld [vmem:[#allocation2 + $0x38] sm:$0xff]
  %v1493 = vld [vmem:[#allocation2 + $0x40] sm:$0xff]
  %v1494 = vld [vmem:[#allocation2 + $0x48] sm:$0xff]
  %v1495 = vld [vmem:[#allocation2 + $0x50] sm:$0xff]
  %v1496 = vld [vmem:[#allocation2 + $0x58] sm:$0xff]
  %v1497 = vld [vmem:[#allocation2 + $0x60] sm:$0xff]
  %v1498 = vld [vmem:[#allocation2 + $0x68] sm:$0xff]
  %v1499 = vld [vmem:[#allocation2 + $0x70] sm:$0xff]
  %v1500 = vld [vmem:[#allocation2 + $0x78] sm:$0xff]
  %v1502 = vshrl.u32 %v1453, 16
  %v1504 = vrot.slane %v1502, 4
  %v1505 = vshll.u32 %v1453, 16
  %v1507 = vrot.slane %v1505, 5
  %v1508 = vor.u32 %v1504, %v1507
  %v1509 = vrot.slane %v1508, 4
  %v1511 = vshll.u32 %v1454, 16
  %v1513 = vrot.slane %v1511, 5
  %v1514 = vsel %vm354, %v1509, %v1513
  %v1516 = vshrl.u32 %v1455, 16
  %v1518 = vrot.slane %v1516, 4
  %v1519 = vshll.u32 %v1455, 16
  %v1521 = vrot.slane %v1519, 5
  %v1522 = vor.u32 %v1518, %v1521
  %v1523 = vrot.slane %v1522, 4
  %v1525 = vshll.u32 %v1456, 16
  %v1527 = vrot.slane %v1525, 5
  %v1528 = vsel %vm354, %v1523, %v1527
  %v1530 = vshrl.u32 %v1457, 16
  %v1532 = vrot.slane %v1530, 4
  %v1533 = vshll.u32 %v1457, 16
  %v1535 = vrot.slane %v1533, 5
  %v1536 = vor.u32 %v1532, %v1535
  %v1537 = vrot.slane %v1536, 4
  %v1539 = vshll.u32 %v1458, 16
  %v1541 = vrot.slane %v1539, 5
  %v1542 = vsel %vm354, %v1537, %v1541
  %v1544 = vshrl.u32 %v1459, 16
  %v1546 = vrot.slane %v1544, 4
  %v1547 = vshll.u32 %v1459, 16
  %v1549 = vrot.slane %v1547, 5
  %v1550 = vor.u32 %v1546, %v1549
  %v1551 = vrot.slane %v1550, 4
  %v1553 = vshll.u32 %v1460, 16
  %v1555 = vrot.slane %v1553, 5
  %v1556 = vsel %vm354, %v1551, %v1555
  %v1558 = vshrl.u32 %v1461, 16
  %v1560 = vrot.slane %v1558, 4
  %v1561 = vshll.u32 %v1461, 16
  %v1563 = vrot.slane %v1561, 5
  %v1564 = vor.u32 %v1560, %v1563
  %v1565 = vrot.slane %v1564, 4
  %v1567 = vshll.u32 %v1462, 16
  %v1569 = vrot.slane %v1567, 5
  %v1570 = vsel %vm354, %v1565, %v1569
  %v1572 = vshrl.u32 %v1463, 16
  %v1574 = vrot.slane %v1572, 4
  %v1575 = vshll.u32 %v1463, 16
  %v1577 = vrot.slane %v1575, 5
  %v1578 = vor.u32 %v1574, %v1577
  %v1579 = vrot.slane %v1578, 4
  %v1581 = vshll.u32 %v1464, 16
  %v1583 = vrot.slane %v1581, 5
  %v1584 = vsel %vm354, %v1579, %v1583
  %v1586 = vshrl.u32 %v1465, 16
  %v1588 = vrot.slane %v1586, 4
  %v1589 = vshll.u32 %v1465, 16
  %v1591 = vrot.slane %v1589, 5
  %v1592 = vor.u32 %v1588, %v1591
  %v1593 = vrot.slane %v1592, 4
  %v1595 = vshll.u32 %v1466, 16
  %v1597 = vrot.slane %v1595, 5
  %v1598 = vsel %vm354, %v1593, %v1597
  %v1600 = vshrl.u32 %v1467, 16
  %v1602 = vrot.slane %v1600, 4
  %v1603 = vshll.u32 %v1467, 16
  %v1605 = vrot.slane %v1603, 5
  %v1606 = vor.u32 %v1602, %v1605
  %v1607 = vrot.slane %v1606, 4
  %v1609 = vshll.u32 %v1468, 16
  %v1611 = vrot.slane %v1609, 5
  %v1612 = vsel %vm354, %v1607, %v1611
  %v1614 = vshrl.u32 %v1469, 16
  %v1616 = vrot.slane %v1614, 4
  %v1617 = vshll.u32 %v1469, 16
  %v1619 = vrot.slane %v1617, 5
  %v1620 = vor.u32 %v1616, %v1619
  %v1621 = vrot.slane %v1620, 4
  %v1623 = vshll.u32 %v1470, 16
  %v1625 = vrot.slane %v1623, 5
  %v1626 = vsel %vm354, %v1621, %v1625
  %v1628 = vshrl.u32 %v1471, 16
  %v1630 = vrot.slane %v1628, 4
  %v1631 = vshll.u32 %v1471, 16
  %v1633 = vrot.slane %v1631, 5
  %v1634 = vor.u32 %v1630, %v1633
  %v1635 = vrot.slane %v1634, 4
  %v1637 = vshll.u32 %v1472, 16
  %v1639 = vrot.slane %v1637, 5
  %v1640 = vsel %vm354, %v1635, %v1639
  %v1642 = vshrl.u32 %v1473, 16
  %v1644 = vrot.slane %v1642, 4
  %v1645 = vshll.u32 %v1473, 16
  %v1647 = vrot.slane %v1645, 5
  %v1648 = vor.u32 %v1644, %v1647
  %v1649 = vrot.slane %v1648, 4
  %v1651 = vshll.u32 %v1474, 16
  %v1653 = vrot.slane %v1651, 5
  %v1654 = vsel %vm354, %v1649, %v1653
  %v1656 = vshrl.u32 %v1475, 16
  %v1658 = vrot.slane %v1656, 4
  %v1659 = vshll.u32 %v1475, 16
  %v1661 = vrot.slane %v1659, 5
  %v1662 = vor.u32 %v1658, %v1661
  %v1663 = vrot.slane %v1662, 4
  %v1665 = vshll.u32 %v1476, 16
  %v1667 = vrot.slane %v1665, 5
  %v1668 = vsel %vm354, %v1663, %v1667
  %v1670 = vshrl.u32 %v1477, 16
  %v1672 = vrot.slane %v1670, 4
  %v1673 = vshll.u32 %v1477, 16
  %v1675 = vrot.slane %v1673, 5
  %v1676 = vor.u32 %v1672, %v1675
  %v1677 = vrot.slane %v1676, 4
  %v1679 = vshll.u32 %v1478, 16
  %v1681 = vrot.slane %v1679, 5
  %v1682 = vsel %vm354, %v1677, %v1681
  %v1684 = vshrl.u32 %v1479, 16
  %v1686 = vrot.slane %v1684, 4
  %v1687 = vshll.u32 %v1479, 16
  %v1689 = vrot.slane %v1687, 5
  %v1690 = vor.u32 %v1686, %v1689
  %v1691 = vrot.slane %v1690, 4
  %v1693 = vshll.u32 %v1480, 16
  %v1695 = vrot.slane %v1693, 5
  %v1696 = vsel %vm354, %v1691, %v1695
  %v1698 = vshrl.u32 %v1481, 16
  %v1700 = vrot.slane %v1698, 4
  %v1701 = vshll.u32 %v1481, 16
  %v1703 = vrot.slane %v1701, 5
  %v1704 = vor.u32 %v1700, %v1703
  %v1705 = vrot.slane %v1704, 4
  %v1707 = vshll.u32 %v1482, 16
  %v1709 = vrot.slane %v1707, 5
  %v1710 = vsel %vm354, %v1705, %v1709
  %v1712 = vshrl.u32 %v1483, 16
  %v1714 = vrot.slane %v1712, 4
  %v1715 = vshll.u32 %v1483, 16
  %v1717 = vrot.slane %v1715, 5
  %v1718 = vor.u32 %v1714, %v1717
  %v1719 = vrot.slane %v1718, 4
  %v1721 = vshll.u32 %v1484, 16
  %v1723 = vrot.slane %v1721, 5
  %v1724 = vsel %vm354, %v1719, %v1723
  %s1725 = scalar_lea.vmem %s1, 256
  %v1726 = vld [vmem:[%s1725] sm:$0xf]
  %v1727 = vld [vmem:[%s1725 + $0x4] sm:$0xf]
  %v1728 = vld [vmem:[%s1725 + $0x8] sm:$0xf]
  %v1729 = vld [vmem:[%s1725 + $0xc] sm:$0xf]
  %v1730 = vld [vmem:[%s1725 + $0x10] sm:$0xf]
  %v1731 = vld [vmem:[%s1725 + $0x14] sm:$0xf]
  %v1732 = vld [vmem:[%s1725 + $0x18] sm:$0xf]
  %v1733 = vld [vmem:[%s1725 + $0x1c] sm:$0xf]
  %v1734 = vld [vmem:[%s1725 + $0x20] sm:$0xf]
  %v1735 = vld [vmem:[%s1725 + $0x24] sm:$0xf]
  %v1736 = vld [vmem:[%s1725 + $0x28] sm:$0xf]
  %v1737 = vld [vmem:[%s1725 + $0x2c] sm:$0xf]
  %v1738 = vld [vmem:[%s1725 + $0x30] sm:$0xf]
  %v1739 = vld [vmem:[%s1725 + $0x34] sm:$0xf]
  %v1740 = vld [vmem:[%s1725 + $0x38] sm:$0xf]
  %v1741 = vld [vmem:[%s1725 + $0x3c] sm:$0xf]
  %v1742 = vunpack.c.l.b16 %v1514
  %v1743 = vunpack.c.l.b16 %v1528
  %v1744 = vunpack.c.l.b16 %v1542
  %v1745 = vunpack.c.l.b16 %v1556
  %v1746 = vunpack.c.l.b16 %v1570
  %v1747 = vunpack.c.l.b16 %v1584
  %v1748 = vunpack.c.l.b16 %v1598
  %v1749 = vunpack.c.l.b16 %v1612
  %v1750 = vunpack.c.l.b16 %v1626
  %v1751 = vunpack.c.l.b16 %v1640
  %v1752 = vunpack.c.l.b16 %v1654
  %v1753 = vunpack.c.l.b16 %v1668
  %v1754 = vunpack.c.l.b16 %v1682
  %v1755 = vunpack.c.l.b16 %v1696
  %v1756 = vunpack.c.l.b16 %v1710
  %v1757 = vunpack.c.l.b16 %v1724
  %v1758 = vpack.c.b16 %v1743, %v1742
  %v1759 = vpack.c.b16 %v1745, %v1744
  %v1760 = vpack.c.b16 %v1747, %v1746
  %v1761 = vpack.c.b16 %v1749, %v1748
  %v1762 = vpack.c.b16 %v1751, %v1750
  %v1763 = vpack.c.b16 %v1753, %v1752
  %v1764 = vpack.c.b16 %v1755, %v1754
  %v1765 = vpack.c.b16 %v1757, %v1756
  %v1790 = vunpack.c.l.b16 %v1726
  %v1791 = vunpack.c.l.b16 %v1727
  %v1792 = vunpack.c.l.b16 %v1728
  %v1793 = vunpack.c.l.b16 %v1729
  %v1794 = vunpack.c.l.b16 %v1730
  %v1795 = vunpack.c.l.b16 %v1731
  %v1796 = vunpack.c.l.b16 %v1732
  %v1797 = vunpack.c.l.b16 %v1733
  %v1798 = vunpack.c.l.b16 %v1734
  %v1799 = vunpack.c.l.b16 %v1735
  %v1800 = vunpack.c.l.b16 %v1736
  %v1801 = vunpack.c.l.b16 %v1737
  %v1802 = vunpack.c.l.b16 %v1738
  %v1803 = vunpack.c.l.b16 %v1739
  %v1804 = vunpack.c.l.b16 %v1740
  %v1805 = vunpack.c.l.b16 %v1741
  %v1806 = vpack.c.b16 %v1791, %v1790
  %v1807 = vpack.c.b16 %v1793, %v1792
  %v1808 = vpack.c.b16 %v1795, %v1794
  %v1809 = vpack.c.b16 %v1797, %v1796
  %v1810 = vpack.c.b16 %v1799, %v1798
  %v1811 = vpack.c.b16 %v1801, %v1800
  %v1812 = vpack.c.b16 %v1803, %v1802
  %v1813 = vpack.c.b16 %v1805, %v1804
  %1822 = vmatprep.subr.bf16.mxu0 0
  %1823 = vmatpush1.bf16.msra.mxu0 %v1813
  %1824 = vmatprep.subr.bf16.mxu0 0
  %1825 = vmatpush1.bf16.msra.mxu0 %v1812
  %1826 = vmatprep.subr.bf16.mxu0 0
  %1827 = vmatpush1.bf16.msra.mxu0 %v1811
  %1828 = vmatprep.subr.bf16.mxu0 0
  %1829 = vmatpush1.bf16.msra.mxu0 %v1810
  %1830 = vmatprep.subr.bf16.mxu0 0
  %1831 = vmatpush1.bf16.msra.mxu0 %v1809
  %1832 = vmatprep.subr.bf16.mxu0 0
  %1833 = vmatpush1.bf16.msra.mxu0 %v1808
  %1834 = vmatprep.subr.bf16.mxu0 0
  %1835 = vmatpush1.bf16.msra.mxu0 %v1807
  %1836 = vmatprep.subr.bf16.mxu0 0
  %1837 = vmatpush1.bf16.msra.mxu0 %v1806
  %1838 = vmatprep.subr.bf16.mxu0 0
  %1839 = vmatpush2.bf16.msra.mxu0 0
  %1840 = vmatprep.subr.bf16.mxu0 0
  %1841 = vmatpush2.bf16.msra.mxu0 0
  %1842 = vmatprep.subr.bf16.mxu0 0
  %1843 = vmatpush2.bf16.msra.mxu0 0
  %1844 = vmatprep.subr.bf16.mxu0 0
  %1845 = vmatpush2.bf16.msra.mxu0 0
  %1846 = vmatprep.subr.bf16.mxu0 0
  %1847 = vmatpush2.bf16.msra.mxu0 0
  %1848 = vmatprep.subr.bf16.mxu0 0
  %1849 = vmatpush2.bf16.msra.mxu0 0
  %1850 = vmatprep.subr.bf16.mxu0 0
  %1851 = vmatpush2.bf16.msra.mxu0 0
  %1852 = vmatprep.subr.bf16.mxu0 0
  %1853 = vmatpush2.bf16.msra.mxu0 0
  %1854 = vmatprep.mubr.bf16.mxu0 0
  %1855 = vmatmul.mubr.bf16.gmra.mxu0 %v1758
  %v1856 = vpop.f32.mrf.mxu0
  %v1857 = vadd.f32 0.0, %v1856
  %v1858 = vpop.f32.mrf.mxu0
  %v1859 = vpop.f32.mrf.mxu0
  %v1860 = vadd.f32 0.0, %v1859
  %v1861 = vpop.f32.mrf.mxu0
  %1862 = vmatprep.mubr.bf16.mxu0 0
  %1863 = vmatmul.mubr.bf16.gmra.mxu0 %v1759
  %v1864 = vpop.f32.mrf.mxu0
  %v1865 = vadd.f32 0.0, %v1864
  %v1866 = vpop.f32.mrf.mxu0
  %v1867 = vpop.f32.mrf.mxu0
  %v1868 = vadd.f32 0.0, %v1867
  %v1869 = vpop.f32.mrf.mxu0
  %1870 = vmatprep.mubr.bf16.mxu0 0
  %1871 = vmatmul.mubr.bf16.gmra.mxu0 %v1760
  %v1872 = vpop.f32.mrf.mxu0
  %v1873 = vadd.f32 0.0, %v1872
  %v1874 = vpop.f32.mrf.mxu0
  %v1875 = vpop.f32.mrf.mxu0
  %v1876 = vadd.f32 0.0, %v1875
  %v1877 = vpop.f32.mrf.mxu0
  %1878 = vmatprep.mubr.bf16.mxu0 0
  %1879 = vmatmul.mubr.bf16.gmra.mxu0 %v1761
  %v1880 = vpop.f32.mrf.mxu0
  %v1881 = vadd.f32 0.0, %v1880
  %v1882 = vpop.f32.mrf.mxu0
  %v1883 = vpop.f32.mrf.mxu0
  %v1884 = vadd.f32 0.0, %v1883
  %v1885 = vpop.f32.mrf.mxu0
  %1886 = vmatprep.mubr.bf16.mxu0 0
  %1887 = vmatmul.mubr.bf16.gmra.mxu0 %v1762
  %v1888 = vpop.f32.mrf.mxu0
  %v1889 = vadd.f32 0.0, %v1888
  %v1890 = vpop.f32.mrf.mxu0
  %v1891 = vpop.f32.mrf.mxu0
  %v1892 = vadd.f32 0.0, %v1891
  %v1893 = vpop.f32.mrf.mxu0
  %1894 = vmatprep.mubr.bf16.mxu0 0
  %1895 = vmatmul.mubr.bf16.gmra.mxu0 %v1763
  %v1896 = vpop.f32.mrf.mxu0
  %v1897 = vadd.f32 0.0, %v1896
  %v1898 = vpop.f32.mrf.mxu0
  %v1899 = vpop.f32.mrf.mxu0
  %v1900 = vadd.f32 0.0, %v1899
  %v1901 = vpop.f32.mrf.mxu0
  %1902 = vmatprep.mubr.bf16.mxu0 0
  %1903 = vmatmul.mubr.bf16.gmra.mxu0 %v1764
  %v1904 = vpop.f32.mrf.mxu0
  %v1905 = vadd.f32 0.0, %v1904
  %v1906 = vpop.f32.mrf.mxu0
  %v1907 = vpop.f32.mrf.mxu0
  %v1908 = vadd.f32 0.0, %v1907
  %v1909 = vpop.f32.mrf.mxu0
  %1910 = vmatprep.mubr.bf16.mxu0 0
  %1911 = vmatmul.mubr.bf16.gmra.mxu0 %v1765
  %v1912 = vpop.f32.mrf.mxu0
  %v1913 = vadd.f32 0.0, %v1912
  %v1914 = vpop.f32.mrf.mxu0
  %v1915 = vpop.f32.mrf.mxu0
  %v1916 = vadd.f32 0.0, %v1915
  %v1917 = vpop.f32.mrf.mxu0
  %1918 = vdwg.mxu0
  %v1919 = vadd.f32 %v1485, %v1857
  %v1920 = vadd.f32 %v1486, %v1860
  %v1921 = vadd.f32 %v1487, %v1865
  %v1922 = vadd.f32 %v1488, %v1868
  %v1923 = vadd.f32 %v1489, %v1873
  %v1924 = vadd.f32 %v1490, %v1876
  %v1925 = vadd.f32 %v1491, %v1881
  %v1926 = vadd.f32 %v1492, %v1884
  %v1927 = vadd.f32 %v1493, %v1889
  %v1928 = vadd.f32 %v1494, %v1892
  %v1929 = vadd.f32 %v1495, %v1897
  %v1930 = vadd.f32 %v1496, %v1900
  %v1931 = vadd.f32 %v1497, %v1905
  %v1932 = vadd.f32 %v1498, %v1908
  %v1933 = vadd.f32 %v1499, %v1913
  %v1934 = vadd.f32 %v1500, %v1916
  %1935 = vst [vmem:[#allocation2] sm:$0xff] %v1919
  %1936 = vst [vmem:[#allocation2 + $0x8] sm:$0xff] %v1920
  %1937 = vst [vmem:[#allocation2 + $0x10] sm:$0xff] %v1921
  %1938 = vst [vmem:[#allocation2 + $0x18] sm:$0xff] %v1922
  %1939 = vst [vmem:[#allocation2 + $0x20] sm:$0xff] %v1923
  %1940 = vst [vmem:[#allocation2 + $0x28] sm:$0xff] %v1924
  %1941 = vst [vmem:[#allocation2 + $0x30] sm:$0xff] %v1925
  %1942 = vst [vmem:[#allocation2 + $0x38] sm:$0xff] %v1926
  %1943 = vst [vmem:[#allocation2 + $0x40] sm:$0xff] %v1927
  %1944 = vst [vmem:[#allocation2 + $0x48] sm:$0xff] %v1928
  %1945 = vst [vmem:[#allocation2 + $0x50] sm:$0xff] %v1929
  %1946 = vst [vmem:[#allocation2 + $0x58] sm:$0xff] %v1930
  %1947 = vst [vmem:[#allocation2 + $0x60] sm:$0xff] %v1931
  %1948 = vst [vmem:[#allocation2 + $0x68] sm:$0xff] %v1932
  %1949 = vst [vmem:[#allocation2 + $0x70] sm:$0xff] %v1933
  %1950 = vst [vmem:[#allocation2 + $0x78] sm:$0xff] %v1934
  %v1951 = vld [vmem:[%s1178] sm:$0xe]
  %v1952 = vld [vmem:[%s1178 + $0x4] sm:$0x1]
  %v1953 = vld [vmem:[%s1178 + $0x8] sm:$0xe]
  %v1954 = vld [vmem:[%s1178 + $0xc] sm:$0x1]
  %v1955 = vld [vmem:[%s1178 + $0x10] sm:$0xe]
  %v1956 = vld [vmem:[%s1178 + $0x14] sm:$0x1]
  %v1957 = vld [vmem:[%s1178 + $0x18] sm:$0xe]
  %v1958 = vld [vmem:[%s1178 + $0x1c] sm:$0x1]
  %v1959 = vld [vmem:[%s1178 + $0x20] sm:$0xe]
  %v1960 = vld [vmem:[%s1178 + $0x24] sm:$0x1]
  %v1961 = vld [vmem:[%s1178 + $0x28] sm:$0xe]
  %v1962 = vld [vmem:[%s1178 + $0x2c] sm:$0x1]
  %v1963 = vld [vmem:[%s1178 + $0x30] sm:$0xe]
  %v1964 = vld [vmem:[%s1178 + $0x34] sm:$0x1]
  %v1965 = vld [vmem:[%s1178 + $0x38] sm:$0xe]
  %v1966 = vld [vmem:[%s1178 + $0x3c] sm:$0x1]
  %v1967 = vld [vmem:[%s1178 + $0x50] sm:$0xe]
  %v1968 = vld [vmem:[%s1178 + $0x54] sm:$0x1]
  %v1969 = vld [vmem:[%s1178 + $0x58] sm:$0xe]
  %v1970 = vld [vmem:[%s1178 + $0x5c] sm:$0x1]
  %v1971 = vld [vmem:[%s1178 + $0x60] sm:$0xe]
  %v1972 = vld [vmem:[%s1178 + $0x64] sm:$0x1]
  %v1973 = vld [vmem:[%s1178 + $0x68] sm:$0xe]
  %v1974 = vld [vmem:[%s1178 + $0x6c] sm:$0x1]
  %v1975 = vld [vmem:[%s1178 + $0x70] sm:$0xe]
  %v1976 = vld [vmem:[%s1178 + $0x74] sm:$0x1]
  %v1977 = vld [vmem:[%s1178 + $0x78] sm:$0xe]
  %v1978 = vld [vmem:[%s1178 + $0x7c] sm:$0x1]
  %v1979 = vld [vmem:[%s1178 + $0x80] sm:$0xe]
  %v1980 = vld [vmem:[%s1178 + $0x84] sm:$0x1]
  %v1981 = vld [vmem:[%s1178 + $0x88] sm:$0xe]
  %v1982 = vld [vmem:[%s1178 + $0x8c] sm:$0x1]
  %v1983 = vld [vmem:[#allocation2] sm:$0xff]
  %v1984 = vld [vmem:[#allocation2 + $0x8] sm:$0xff]
  %v1985 = vld [vmem:[#allocation2 + $0x10] sm:$0xff]
  %v1986 = vld [vmem:[#allocation2 + $0x18] sm:$0xff]
  %v1987 = vld [vmem:[#allocation2 + $0x20] sm:$0xff]
  %v1988 = vld [vmem:[#allocation2 + $0x28] sm:$0xff]
  %v1989 = vld [vmem:[#allocation2 + $0x30] sm:$0xff]
  %v1990 = vld [vmem:[#allocation2 + $0x38] sm:$0xff]
  %v1991 = vld [vmem:[#allocation2 + $0x40] sm:$0xff]
  %v1992 = vld [vmem:[#allocation2 + $0x48] sm:$0xff]
  %v1993 = vld [vmem:[#allocation2 + $0x50] sm:$0xff]
  %v1994 = vld [vmem:[#allocation2 + $0x58] sm:$0xff]
  %v1995 = vld [vmem:[#allocation2 + $0x60] sm:$0xff]
  %v1996 = vld [vmem:[#allocation2 + $0x68] sm:$0xff]
  %v1997 = vld [vmem:[#allocation2 + $0x70] sm:$0xff]
  %v1998 = vld [vmem:[#allocation2 + $0x78] sm:$0xff]
  %v2031 = vrot.slane %v1951, 5
  %v2032 = vrot.slane %v2031, 4
  %v2033 = vrot.slane %v1952, 5
  %v2034 = vsel %vm887, %v2032, %v2033
  %v2035 = vrot.slane %v1953, 5
  %v2036 = vrot.slane %v2035, 4
  %v2037 = vrot.slane %v1954, 5
  %v2038 = vsel %vm887, %v2036, %v2037
  %v2039 = vrot.slane %v1955, 5
  %v2040 = vrot.slane %v2039, 4
  %v2041 = vrot.slane %v1956, 5
  %v2042 = vsel %vm887, %v2040, %v2041
  %v2043 = vrot.slane %v1957, 5
  %v2044 = vrot.slane %v2043, 4
  %v2045 = vrot.slane %v1958, 5
  %v2046 = vsel %vm887, %v2044, %v2045
  %v2047 = vrot.slane %v1959, 5
  %v2048 = vrot.slane %v2047, 4
  %v2049 = vrot.slane %v1960, 5
  %v2050 = vsel %vm887, %v2048, %v2049
  %v2051 = vrot.slane %v1961, 5
  %v2052 = vrot.slane %v2051, 4
  %v2053 = vrot.slane %v1962, 5
  %v2054 = vsel %vm887, %v2052, %v2053
  %v2055 = vrot.slane %v1963, 5
  %v2056 = vrot.slane %v2055, 4
  %v2057 = vrot.slane %v1964, 5
  %v2058 = vsel %vm887, %v2056, %v2057
  %v2059 = vrot.slane %v1965, 5
  %v2060 = vrot.slane %v2059, 4
  %v2061 = vrot.slane %v1966, 5
  %v2062 = vsel %vm887, %v2060, %v2061
  %v2063 = vrot.slane %v1967, 5
  %v2064 = vrot.slane %v2063, 4
  %v2065 = vrot.slane %v1968, 5
  %v2066 = vsel %vm887, %v2064, %v2065
  %v2067 = vrot.slane %v1969, 5
  %v2068 = vrot.slane %v2067, 4
  %v2069 = vrot.slane %v1970, 5
  %v2070 = vsel %vm887, %v2068, %v2069
  %v2071 = vrot.slane %v1971, 5
  %v2072 = vrot.slane %v2071, 4
  %v2073 = vrot.slane %v1972, 5
  %v2074 = vsel %vm887, %v2072, %v2073
  %v2075 = vrot.slane %v1973, 5
  %v2076 = vrot.slane %v2075, 4
  %v2077 = vrot.slane %v1974, 5
  %v2078 = vsel %vm887, %v2076, %v2077
  %v2079 = vrot.slane %v1975, 5
  %v2080 = vrot.slane %v2079, 4
  %v2081 = vrot.slane %v1976, 5
  %v2082 = vsel %vm887, %v2080, %v2081
  %v2083 = vrot.slane %v1977, 5
  %v2084 = vrot.slane %v2083, 4
  %v2085 = vrot.slane %v1978, 5
  %v2086 = vsel %vm887, %v2084, %v2085
  %v2087 = vrot.slane %v1979, 5
  %v2088 = vrot.slane %v2087, 4
  %v2089 = vrot.slane %v1980, 5
  %v2090 = vsel %vm887, %v2088, %v2089
  %v2091 = vrot.slane %v1981, 5
  %v2092 = vrot.slane %v2091, 4
  %v2093 = vrot.slane %v1982, 5
  %v2094 = vsel %vm887, %v2092, %v2093
  %s2095 = scalar_lea.vmem %s1, 320
  %v2096 = vld [vmem:[%s2095] sm:$0xf]
  %v2097 = vld [vmem:[%s2095 + $0x4] sm:$0xf]
  %v2098 = vld [vmem:[%s2095 + $0x8] sm:$0xf]
  %v2099 = vld [vmem:[%s2095 + $0xc] sm:$0xf]
  %v2100 = vld [vmem:[%s2095 + $0x10] sm:$0xf]
  %v2101 = vld [vmem:[%s2095 + $0x14] sm:$0xf]
  %v2102 = vld [vmem:[%s2095 + $0x18] sm:$0xf]
  %v2103 = vld [vmem:[%s2095 + $0x1c] sm:$0xf]
  %v2104 = vld [vmem:[%s2095 + $0x20] sm:$0xf]
  %v2105 = vld [vmem:[%s2095 + $0x24] sm:$0xf]
  %v2106 = vld [vmem:[%s2095 + $0x28] sm:$0xf]
  %v2107 = vld [vmem:[%s2095 + $0x2c] sm:$0xf]
  %v2108 = vld [vmem:[%s2095 + $0x30] sm:$0xf]
  %v2109 = vld [vmem:[%s2095 + $0x34] sm:$0xf]
  %v2110 = vld [vmem:[%s2095 + $0x38] sm:$0xf]
  %v2111 = vld [vmem:[%s2095 + $0x3c] sm:$0xf]
  %v2112 = vunpack.c.l.b16 %v2034
  %v2113 = vunpack.c.l.b16 %v2038
  %v2114 = vunpack.c.l.b16 %v2042
  %v2115 = vunpack.c.l.b16 %v2046
  %v2116 = vunpack.c.l.b16 %v2050
  %v2117 = vunpack.c.l.b16 %v2054
  %v2118 = vunpack.c.l.b16 %v2058
  %v2119 = vunpack.c.l.b16 %v2062
  %v2120 = vunpack.c.l.b16 %v2066
  %v2121 = vunpack.c.l.b16 %v2070
  %v2122 = vunpack.c.l.b16 %v2074
  %v2123 = vunpack.c.l.b16 %v2078
  %v2124 = vunpack.c.l.b16 %v2082
  %v2125 = vunpack.c.l.b16 %v2086
  %v2126 = vunpack.c.l.b16 %v2090
  %v2127 = vunpack.c.l.b16 %v2094
  %v2128 = vpack.c.b16 %v2113, %v2112
  %v2129 = vpack.c.b16 %v2115, %v2114
  %v2130 = vpack.c.b16 %v2117, %v2116
  %v2131 = vpack.c.b16 %v2119, %v2118
  %v2132 = vpack.c.b16 %v2121, %v2120
  %v2133 = vpack.c.b16 %v2123, %v2122
  %v2134 = vpack.c.b16 %v2125, %v2124
  %v2135 = vpack.c.b16 %v2127, %v2126
  %v2160 = vunpack.c.l.b16 %v2096
  %v2161 = vunpack.c.l.b16 %v2097
  %v2162 = vunpack.c.l.b16 %v2098
  %v2163 = vunpack.c.l.b16 %v2099
  %v2164 = vunpack.c.l.b16 %v2100
  %v2165 = vunpack.c.l.b16 %v2101
  %v2166 = vunpack.c.l.b16 %v2102
  %v2167 = vunpack.c.l.b16 %v2103
  %v2168 = vunpack.c.l.b16 %v2104
  %v2169 = vunpack.c.l.b16 %v2105
  %v2170 = vunpack.c.l.b16 %v2106
  %v2171 = vunpack.c.l.b16 %v2107
  %v2172 = vunpack.c.l.b16 %v2108
  %v2173 = vunpack.c.l.b16 %v2109
  %v2174 = vunpack.c.l.b16 %v2110
  %v2175 = vunpack.c.l.b16 %v2111
  %v2176 = vpack.c.b16 %v2161, %v2160
  %v2177 = vpack.c.b16 %v2163, %v2162
  %v2178 = vpack.c.b16 %v2165, %v2164
  %v2179 = vpack.c.b16 %v2167, %v2166
  %v2180 = vpack.c.b16 %v2169, %v2168
  %v2181 = vpack.c.b16 %v2171, %v2170
  %v2182 = vpack.c.b16 %v2173, %v2172
  %v2183 = vpack.c.b16 %v2175, %v2174
  %2192 = vmatprep.subr.bf16.mxu0 0
  %2193 = vmatpush1.bf16.msra.mxu0 %v2183
  %2194 = vmatprep.subr.bf16.mxu0 0
  %2195 = vmatpush1.bf16.msra.mxu0 %v2182
  %2196 = vmatprep.subr.bf16.mxu0 0
  %2197 = vmatpush1.bf16.msra.mxu0 %v2181
  %2198 = vmatprep.subr.bf16.mxu0 0
  %2199 = vmatpush1.bf16.msra.mxu0 %v2180
  %2200 = vmatprep.subr.bf16.mxu0 0
  %2201 = vmatpush1.bf16.msra.mxu0 %v2179
  %2202 = vmatprep.subr.bf16.mxu0 0
  %2203 = vmatpush1.bf16.msra.mxu0 %v2178
  %2204 = vmatprep.subr.bf16.mxu0 0
  %2205 = vmatpush1.bf16.msra.mxu0 %v2177
  %2206 = vmatprep.subr.bf16.mxu0 0
  %2207 = vmatpush1.bf16.msra.mxu0 %v2176
  %2208 = vmatprep.subr.bf16.mxu0 0
  %2209 = vmatpush2.bf16.msra.mxu0 0
  %2210 = vmatprep.subr.bf16.mxu0 0
  %2211 = vmatpush2.bf16.msra.mxu0 0
  %2212 = vmatprep.subr.bf16.mxu0 0
  %2213 = vmatpush2.bf16.msra.mxu0 0
  %2214 = vmatprep.subr.bf16.mxu0 0
  %2215 = vmatpush2.bf16.msra.mxu0 0
  %2216 = vmatprep.subr.bf16.mxu0 0
  %2217 = vmatpush2.bf16.msra.mxu0 0
  %2218 = vmatprep.subr.bf16.mxu0 0
  %2219 = vmatpush2.bf16.msra.mxu0 0
  %2220 = vmatprep.subr.bf16.mxu0 0
  %2221 = vmatpush2.bf16.msra.mxu0 0
  %2222 = vmatprep.subr.bf16.mxu0 0
  %2223 = vmatpush2.bf16.msra.mxu0 0
  %2224 = vmatprep.mubr.bf16.mxu0 0
  %2225 = vmatmul.mubr.bf16.gmra.mxu0 %v2128
  %v2226 = vpop.f32.mrf.mxu0
  %v2227 = vadd.f32 0.0, %v2226
  %v2228 = vpop.f32.mrf.mxu0
  %v2229 = vpop.f32.mrf.mxu0
  %v2230 = vadd.f32 0.0, %v2229
  %v2231 = vpop.f32.mrf.mxu0
  %2232 = vmatprep.mubr.bf16.mxu0 0
  %2233 = vmatmul.mubr.bf16.gmra.mxu0 %v2129
  %v2234 = vpop.f32.mrf.mxu0
  %v2235 = vadd.f32 0.0, %v2234
  %v2236 = vpop.f32.mrf.mxu0
  %v2237 = vpop.f32.mrf.mxu0
  %v2238 = vadd.f32 0.0, %v2237
  %v2239 = vpop.f32.mrf.mxu0
  %2240 = vmatprep.mubr.bf16.mxu0 0
  %2241 = vmatmul.mubr.bf16.gmra.mxu0 %v2130
  %v2242 = vpop.f32.mrf.mxu0
  %v2243 = vadd.f32 0.0, %v2242
  %v2244 = vpop.f32.mrf.mxu0
  %v2245 = vpop.f32.mrf.mxu0
  %v2246 = vadd.f32 0.0, %v2245
  %v2247 = vpop.f32.mrf.mxu0
  %2248 = vmatprep.mubr.bf16.mxu0 0
  %2249 = vmatmul.mubr.bf16.gmra.mxu0 %v2131
  %v2250 = vpop.f32.mrf.mxu0
  %v2251 = vadd.f32 0.0, %v2250
  %v2252 = vpop.f32.mrf.mxu0
  %v2253 = vpop.f32.mrf.mxu0
  %v2254 = vadd.f32 0.0, %v2253
  %v2255 = vpop.f32.mrf.mxu0
  %2256 = vmatprep.mubr.bf16.mxu0 0
  %2257 = vmatmul.mubr.bf16.gmra.mxu0 %v2132
  %v2258 = vpop.f32.mrf.mxu0
  %v2259 = vadd.f32 0.0, %v2258
  %v2260 = vpop.f32.mrf.mxu0
  %v2261 = vpop.f32.mrf.mxu0
  %v2262 = vadd.f32 0.0, %v2261
  %v2263 = vpop.f32.mrf.mxu0
  %2264 = vmatprep.mubr.bf16.mxu0 0
  %2265 = vmatmul.mubr.bf16.gmra.mxu0 %v2133
  %v2266 = vpop.f32.mrf.mxu0
  %v2267 = vadd.f32 0.0, %v2266
  %v2268 = vpop.f32.mrf.mxu0
  %v2269 = vpop.f32.mrf.mxu0
  %v2270 = vadd.f32 0.0, %v2269
  %v2271 = vpop.f32.mrf.mxu0
  %2272 = vmatprep.mubr.bf16.mxu0 0
  %2273 = vmatmul.mubr.bf16.gmra.mxu0 %v2134
  %v2274 = vpop.f32.mrf.mxu0
  %v2275 = vadd.f32 0.0, %v2274
  %v2276 = vpop.f32.mrf.mxu0
  %v2277 = vpop.f32.mrf.mxu0
  %v2278 = vadd.f32 0.0, %v2277
  %v2279 = vpop.f32.mrf.mxu0
  %2280 = vmatprep.mubr.bf16.mxu0 0
  %2281 = vmatmul.mubr.bf16.gmra.mxu0 %v2135
  %v2282 = vpop.f32.mrf.mxu0
  %v2283 = vadd.f32 0.0, %v2282
  %v2284 = vpop.f32.mrf.mxu0
  %v2285 = vpop.f32.mrf.mxu0
  %v2286 = vadd.f32 0.0, %v2285
  %v2287 = vpop.f32.mrf.mxu0
  %2288 = vdwg.mxu0
  %v2289 = vadd.f32 %v1983, %v2227
  %v2290 = vadd.f32 %v1984, %v2230
  %v2291 = vadd.f32 %v1985, %v2235
  %v2292 = vadd.f32 %v1986, %v2238
  %v2293 = vadd.f32 %v1987, %v2243
  %v2294 = vadd.f32 %v1988, %v2246
  %v2295 = vadd.f32 %v1989, %v2251
  %v2296 = vadd.f32 %v1990, %v2254
  %v2297 = vadd.f32 %v1991, %v2259
  %v2298 = vadd.f32 %v1992, %v2262
  %v2299 = vadd.f32 %v1993, %v2267
  %v2300 = vadd.f32 %v1994, %v2270
  %v2301 = vadd.f32 %v1995, %v2275
  %v2302 = vadd.f32 %v1996, %v2278
  %v2303 = vadd.f32 %v1997, %v2283
  %v2304 = vadd.f32 %v1998, %v2286
  %2305 = vst [vmem:[#allocation2] sm:$0xff] %v2289
  %2306 = vst [vmem:[#allocation2 + $0x8] sm:$0xff] %v2290
  %2307 = vst [vmem:[#allocation2 + $0x10] sm:$0xff] %v2291
  %2308 = vst [vmem:[#allocation2 + $0x18] sm:$0xff] %v2292
  %2309 = vst [vmem:[#allocation2 + $0x20] sm:$0xff] %v2293
  %2310 = vst [vmem:[#allocation2 + $0x28] sm:$0xff] %v2294
  %2311 = vst [vmem:[#allocation2 + $0x30] sm:$0xff] %v2295
  %2312 = vst [vmem:[#allocation2 + $0x38] sm:$0xff] %v2296
  %2313 = vst [vmem:[#allocation2 + $0x40] sm:$0xff] %v2297
  %2314 = vst [vmem:[#allocation2 + $0x48] sm:$0xff] %v2298
  %2315 = vst [vmem:[#allocation2 + $0x50] sm:$0xff] %v2299
  %2316 = vst [vmem:[#allocation2 + $0x58] sm:$0xff] %v2300
  %2317 = vst [vmem:[#allocation2 + $0x60] sm:$0xff] %v2301
  %2318 = vst [vmem:[#allocation2 + $0x68] sm:$0xff] %v2302
  %2319 = vst [vmem:[#allocation2 + $0x70] sm:$0xff] %v2303
  %2320 = vst [vmem:[#allocation2 + $0x78] sm:$0xff] %v2304
  %s2321 = scalar_lea.vmem %s0, 16
  %v2322 = vld [vmem:[%s2321] sm:$0xf]
  %v2323 = vld [vmem:[%s2321 + $0x8] sm:$0xf]
  %v2324 = vld [vmem:[%s2321 + $0x10] sm:$0xf]
  %v2325 = vld [vmem:[%s2321 + $0x18] sm:$0xf]
  %v2326 = vld [vmem:[%s2321 + $0x20] sm:$0xf]
  %v2327 = vld [vmem:[%s2321 + $0x28] sm:$0xf]
  %v2328 = vld [vmem:[%s2321 + $0x30] sm:$0xf]
  %v2329 = vld [vmem:[%s2321 + $0x38] sm:$0xf]
  %v2330 = vld [vmem:[%s2321 + $0x50] sm:$0xf]
  %v2331 = vld [vmem:[%s2321 + $0x58] sm:$0xf]
  %v2332 = vld [vmem:[%s2321 + $0x60] sm:$0xf]
  %v2333 = vld [vmem:[%s2321 + $0x68] sm:$0xf]
  %v2334 = vld [vmem:[%s2321 + $0x70] sm:$0xf]
  %v2335 = vld [vmem:[%s2321 + $0x78] sm:$0xf]
  %v2336 = vld [vmem:[%s2321 + $0x80] sm:$0xf]
  %v2337 = vld [vmem:[%s2321 + $0x88] sm:$0xf]
  %v2338 = vld [vmem:[#allocation2] sm:$0xff]
  %v2339 = vld [vmem:[#allocation2 + $0x8] sm:$0xff]
  %v2340 = vld [vmem:[#allocation2 + $0x10] sm:$0xff]
  %v2341 = vld [vmem:[#allocation2 + $0x18] sm:$0xff]
  %v2342 = vld [vmem:[#allocation2 + $0x20] sm:$0xff]
  %v2343 = vld [vmem:[#allocation2 + $0x28] sm:$0xff]
  %v2344 = vld [vmem:[#allocation2 + $0x30] sm:$0xff]
  %v2345 = vld [vmem:[#allocation2 + $0x38] sm:$0xff]
  %v2346 = vld [vmem:[#allocation2 + $0x40] sm:$0xff]
  %v2347 = vld [vmem:[#allocation2 + $0x48] sm:$0xff]
  %v2348 = vld [vmem:[#allocation2 + $0x50] sm:$0xff]
  %v2349 = vld [vmem:[#allocation2 + $0x58] sm:$0xff]
  %v2350 = vld [vmem:[#allocation2 + $0x60] sm:$0xff]
  %v2351 = vld [vmem:[#allocation2 + $0x68] sm:$0xff]
  %v2352 = vld [vmem:[#allocation2 + $0x70] sm:$0xff]
  %v2353 = vld [vmem:[#allocation2 + $0x78] sm:$0xff]
  %s2354 = scalar_lea.vmem %s1, 384
  %v2355 = vld [vmem:[%s2354] sm:$0xf]
  %v2356 = vld [vmem:[%s2354 + $0x4] sm:$0xf]
  %v2357 = vld [vmem:[%s2354 + $0x8] sm:$0xf]
  %v2358 = vld [vmem:[%s2354 + $0xc] sm:$0xf]
  %v2359 = vld [vmem:[%s2354 + $0x10] sm:$0xf]
  %v2360 = vld [vmem:[%s2354 + $0x14] sm:$0xf]
  %v2361 = vld [vmem:[%s2354 + $0x18] sm:$0xf]
  %v2362 = vld [vmem:[%s2354 + $0x1c] sm:$0xf]
  %v2363 = vld [vmem:[%s2354 + $0x20] sm:$0xf]
  %v2364 = vld [vmem:[%s2354 + $0x24] sm:$0xf]
  %v2365 = vld [vmem:[%s2354 + $0x28] sm:$0xf]
  %v2366 = vld [vmem:[%s2354 + $0x2c] sm:$0xf]
  %v2367 = vld [vmem:[%s2354 + $0x30] sm:$0xf]
  %v2368 = vld [vmem:[%s2354 + $0x34] sm:$0xf]
  %v2369 = vld [vmem:[%s2354 + $0x38] sm:$0xf]
  %v2370 = vld [vmem:[%s2354 + $0x3c] sm:$0xf]
  %v2387 = vunpack.c.l.b16 %v2322
  %v2388 = vunpack.c.l.b16 %v2323
  %v2389 = vunpack.c.l.b16 %v2324
  %v2390 = vunpack.c.l.b16 %v2325
  %v2391 = vunpack.c.l.b16 %v2326
  %v2392 = vunpack.c.l.b16 %v2327
  %v2393 = vunpack.c.l.b16 %v2328
  %v2394 = vunpack.c.l.b16 %v2329
  %v2395 = vunpack.c.l.b16 %v2330
  %v2396 = vunpack.c.l.b16 %v2331
  %v2397 = vunpack.c.l.b16 %v2332
  %v2398 = vunpack.c.l.b16 %v2333
  %v2399 = vunpack.c.l.b16 %v2334
  %v2400 = vunpack.c.l.b16 %v2335
  %v2401 = vunpack.c.l.b16 %v2336
  %v2402 = vunpack.c.l.b16 %v2337
  %v2403 = vpack.c.b16 %v2388, %v2387
  %v2404 = vpack.c.b16 %v2390, %v2389
  %v2405 = vpack.c.b16 %v2392, %v2391
  %v2406 = vpack.c.b16 %v2394, %v2393
  %v2407 = vpack.c.b16 %v2396, %v2395
  %v2408 = vpack.c.b16 %v2398, %v2397
  %v2409 = vpack.c.b16 %v2400, %v2399
  %v2410 = vpack.c.b16 %v2402, %v2401
  %v2435 = vunpack.c.l.b16 %v2355
  %v2436 = vunpack.c.l.b16 %v2356
  %v2437 = vunpack.c.l.b16 %v2357
  %v2438 = vunpack.c.l.b16 %v2358
  %v2439 = vunpack.c.l.b16 %v2359
  %v2440 = vunpack.c.l.b16 %v2360
  %v2441 = vunpack.c.l.b16 %v2361
  %v2442 = vunpack.c.l.b16 %v2362
  %v2443 = vunpack.c.l.b16 %v2363
  %v2444 = vunpack.c.l.b16 %v2364
  %v2445 = vunpack.c.l.b16 %v2365
  %v2446 = vunpack.c.l.b16 %v2366
  %v2447 = vunpack.c.l.b16 %v2367
  %v2448 = vunpack.c.l.b16 %v2368
  %v2449 = vunpack.c.l.b16 %v2369
  %v2450 = vunpack.c.l.b16 %v2370
  %v2451 = vpack.c.b16 %v2436, %v2435
  %v2452 = vpack.c.b16 %v2438, %v2437
  %v2453 = vpack.c.b16 %v2440, %v2439
  %v2454 = vpack.c.b16 %v2442, %v2441
  %v2455 = vpack.c.b16 %v2444, %v2443
  %v2456 = vpack.c.b16 %v2446, %v2445
  %v2457 = vpack.c.b16 %v2448, %v2447
  %v2458 = vpack.c.b16 %v2450, %v2449
  %2467 = vmatprep.subr.bf16.mxu0 0
  %2468 = vmatpush1.bf16.msra.mxu0 %v2458
  %2469 = vmatprep.subr.bf16.mxu0 0
  %2470 = vmatpush1.bf16.msra.mxu0 %v2457
  %2471 = vmatprep.subr.bf16.mxu0 0
  %2472 = vmatpush1.bf16.msra.mxu0 %v2456
  %2473 = vmatprep.subr.bf16.mxu0 0
  %2474 = vmatpush1.bf16.msra.mxu0 %v2455
  %2475 = vmatprep.subr.bf16.mxu0 0
  %2476 = vmatpush1.bf16.msra.mxu0 %v2454
  %2477 = vmatprep.subr.bf16.mxu0 0
  %2478 = vmatpush1.bf16.msra.mxu0 %v2453
  %2479 = vmatprep.subr.bf16.mxu0 0
  %2480 = vmatpush1.bf16.msra.mxu0 %v2452
  %2481 = vmatprep.subr.bf16.mxu0 0
  %2482 = vmatpush1.bf16.msra.mxu0 %v2451
  %2483 = vmatprep.subr.bf16.mxu0 0
  %2484 = vmatpush2.bf16.msra.mxu0 0
  %2485 = vmatprep.subr.bf16.mxu0 0
  %2486 = vmatpush2.bf16.msra.mxu0 0
  %2487 = vmatprep.subr.bf16.mxu0 0
  %2488 = vmatpush2.bf16.msra.mxu0 0
  %2489 = vmatprep.subr.bf16.mxu0 0
  %2490 = vmatpush2.bf16.msra.mxu0 0
  %2491 = vmatprep.subr.bf16.mxu0 0
  %2492 = vmatpush2.bf16.msra.mxu0 0
  %2493 = vmatprep.subr.bf16.mxu0 0
  %2494 = vmatpush2.bf16.msra.mxu0 0
  %2495 = vmatprep.subr.bf16.mxu0 0
  %2496 = vmatpush2.bf16.msra.mxu0 0
  %2497 = vmatprep.subr.bf16.mxu0 0
  %2498 = vmatpush2.bf16.msra.mxu0 0
  %2499 = vmatprep.mubr.bf16.mxu0 0
  %2500 = vmatmul.mubr.bf16.gmra.mxu0 %v2403
  %v2501 = vpop.f32.mrf.mxu0
  %v2502 = vadd.f32 0.0, %v2501
  %v2503 = vpop.f32.mrf.mxu0
  %v2504 = vpop.f32.mrf.mxu0
  %v2505 = vadd.f32 0.0, %v2504
  %v2506 = vpop.f32.mrf.mxu0
  %2507 = vmatprep.mubr.bf16.mxu0 0
  %2508 = vmatmul.mubr.bf16.gmra.mxu0 %v2404
  %v2509 = vpop.f32.mrf.mxu0
  %v2510 = vadd.f32 0.0, %v2509
  %v2511 = vpop.f32.mrf.mxu0
  %v2512 = vpop.f32.mrf.mxu0
  %v2513 = vadd.f32 0.0, %v2512
  %v2514 = vpop.f32.mrf.mxu0
  %2515 = vmatprep.mubr.bf16.mxu0 0
  %2516 = vmatmul.mubr.bf16.gmra.mxu0 %v2405
  %v2517 = vpop.f32.mrf.mxu0
  %v2518 = vadd.f32 0.0, %v2517
  %v2519 = vpop.f32.mrf.mxu0
  %v2520 = vpop.f32.mrf.mxu0
  %v2521 = vadd.f32 0.0, %v2520
  %v2522 = vpop.f32.mrf.mxu0
  %2523 = vmatprep.mubr.bf16.mxu0 0
  %2524 = vmatmul.mubr.bf16.gmra.mxu0 %v2406
  %v2525 = vpop.f32.mrf.mxu0
  %v2526 = vadd.f32 0.0, %v2525
  %v2527 = vpop.f32.mrf.mxu0
  %v2528 = vpop.f32.mrf.mxu0
  %v2529 = vadd.f32 0.0, %v2528
  %v2530 = vpop.f32.mrf.mxu0
  %2531 = vmatprep.mubr.bf16.mxu0 0
  %2532 = vmatmul.mubr.bf16.gmra.mxu0 %v2407
  %v2533 = vpop.f32.mrf.mxu0
  %v2534 = vadd.f32 0.0, %v2533
  %v2535 = vpop.f32.mrf.mxu0
  %v2536 = vpop.f32.mrf.mxu0
  %v2537 = vadd.f32 0.0, %v2536
  %v2538 = vpop.f32.mrf.mxu0
  %2539 = vmatprep.mubr.bf16.mxu0 0
  %2540 = vmatmul.mubr.bf16.gmra.mxu0 %v2408
  %v2541 = vpop.f32.mrf.mxu0
  %v2542 = vadd.f32 0.0, %v2541
  %v2543 = vpop.f32.mrf.mxu0
  %v2544 = vpop.f32.mrf.mxu0
  %v2545 = vadd.f32 0.0, %v2544
  %v2546 = vpop.f32.mrf.mxu0
  %2547 = vmatprep.mubr.bf16.mxu0 0
  %2548 = vmatmul.mubr.bf16.gmra.mxu0 %v2409
  %v2549 = vpop.f32.mrf.mxu0
  %v2550 = vadd.f32 0.0, %v2549
  %v2551 = vpop.f32.mrf.mxu0
  %v2552 = vpop.f32.mrf.mxu0
  %v2553 = vadd.f32 0.0, %v2552
  %v2554 = vpop.f32.mrf.mxu0
  %2555 = vmatprep.mubr.bf16.mxu0 0
  %2556 = vmatmul.mubr.bf16.gmra.mxu0 %v2410
  %v2557 = vpop.f32.mrf.mxu0
  %v2558 = vadd.f32 0.0, %v2557
  %v2559 = vpop.f32.mrf.mxu0
  %v2560 = vpop.f32.mrf.mxu0
  %v2561 = vadd.f32 0.0, %v2560
  %v2562 = vpop.f32.mrf.mxu0
  %2563 = vdwg.mxu0
  %v2564 = vadd.f32 %v2338, %v2502
  %v2565 = vadd.f32 %v2339, %v2505
  %v2566 = vadd.f32 %v2340, %v2510
  %v2567 = vadd.f32 %v2341, %v2513
  %v2568 = vadd.f32 %v2342, %v2518
  %v2569 = vadd.f32 %v2343, %v2521
  %v2570 = vadd.f32 %v2344, %v2526
  %v2571 = vadd.f32 %v2345, %v2529
  %v2572 = vadd.f32 %v2346, %v2534
  %v2573 = vadd.f32 %v2347, %v2537
  %v2574 = vadd.f32 %v2348, %v2542
  %v2575 = vadd.f32 %v2349, %v2545
  %v2576 = vadd.f32 %v2350, %v2550
  %v2577 = vadd.f32 %v2351, %v2553
  %v2578 = vadd.f32 %v2352, %v2558
  %v2579 = vadd.f32 %v2353, %v2561
  %2580 = vst [vmem:[#allocation2] sm:$0xff] %v2564
  %2581 = vst [vmem:[#allocation2 + $0x8] sm:$0xff] %v2565
  %2582 = vst [vmem:[#allocation2 + $0x10] sm:$0xff] %v2566
  %2583 = vst [vmem:[#allocation2 + $0x18] sm:$0xff] %v2567
  %2584 = vst [vmem:[#allocation2 + $0x20] sm:$0xff] %v2568
  %2585 = vst [vmem:[#allocation2 + $0x28] sm:$0xff] %v2569
  %2586 = vst [vmem:[#allocation2 + $0x30] sm:$0xff] %v2570
  %2587 = vst [vmem:[#allocation2 + $0x38] sm:$0xff] %v2571
  %2588 = vst [vmem:[#allocation2 + $0x40] sm:$0xff] %v2572
  %2589 = vst [vmem:[#allocation2 + $0x48] sm:$0xff] %v2573
  %2590 = vst [vmem:[#allocation2 + $0x50] sm:$0xff] %v2574
  %2591 = vst [vmem:[#allocation2 + $0x58] sm:$0xff] %v2575
  %2592 = vst [vmem:[#allocation2 + $0x60] sm:$0xff] %v2576
  %2593 = vst [vmem:[#allocation2 + $0x68] sm:$0xff] %v2577
  %2594 = vst [vmem:[#allocation2 + $0x70] sm:$0xff] %v2578
  %2595 = vst [vmem:[#allocation2 + $0x78] sm:$0xff] %v2579
  %v2596 = vld [vmem:[%s2321] sm:$0xf]
  %v2597 = vld [vmem:[%s2321 + $0x4] sm:$0x1]
  %v2598 = vld [vmem:[%s2321 + $0x8] sm:$0xf]
  %v2599 = vld [vmem:[%s2321 + $0xc] sm:$0x1]
  %v2600 = vld [vmem:[%s2321 + $0x10] sm:$0xf]
  %v2601 = vld [vmem:[%s2321 + $0x14] sm:$0x1]
  %v2602 = vld [vmem:[%s2321 + $0x18] sm:$0xf]
  %v2603 = vld [vmem:[%s2321 + $0x1c] sm:$0x1]
  %v2604 = vld [vmem:[%s2321 + $0x20] sm:$0xf]
  %v2605 = vld [vmem:[%s2321 + $0x24] sm:$0x1]
  %v2606 = vld [vmem:[%s2321 + $0x28] sm:$0xf]
  %v2607 = vld [vmem:[%s2321 + $0x2c] sm:$0x1]
  %v2608 = vld [vmem:[%s2321 + $0x30] sm:$0xf]
  %v2609 = vld [vmem:[%s2321 + $0x34] sm:$0x1]
  %v2610 = vld [vmem:[%s2321 + $0x38] sm:$0xf]
  %v2611 = vld [vmem:[%s2321 + $0x3c] sm:$0x1]
  %v2612 = vld [vmem:[%s2321 + $0x50] sm:$0xf]
  %v2613 = vld [vmem:[%s2321 + $0x54] sm:$0x1]
  %v2614 = vld [vmem:[%s2321 + $0x58] sm:$0xf]
  %v2615 = vld [vmem:[%s2321 + $0x5c] sm:$0x1]
  %v2616 = vld [vmem:[%s2321 + $0x60] sm:$0xf]
  %v2617 = vld [vmem:[%s2321 + $0x64] sm:$0x1]
  %v2618 = vld [vmem:[%s2321 + $0x68] sm:$0xf]
  %v2619 = vld [vmem:[%s2321 + $0x6c] sm:$0x1]
  %v2620 = vld [vmem:[%s2321 + $0x70] sm:$0xf]
  %v2621 = vld [vmem:[%s2321 + $0x74] sm:$0x1]
  %v2622 = vld [vmem:[%s2321 + $0x78] sm:$0xf]
  %v2623 = vld [vmem:[%s2321 + $0x7c] sm:$0x1]
  %v2624 = vld [vmem:[%s2321 + $0x80] sm:$0xf]
  %v2625 = vld [vmem:[%s2321 + $0x84] sm:$0x1]
  %v2626 = vld [vmem:[%s2321 + $0x88] sm:$0xf]
  %v2627 = vld [vmem:[%s2321 + $0x8c] sm:$0x1]
  %v2628 = vld [vmem:[#allocation2] sm:$0xff]
  %v2629 = vld [vmem:[#allocation2 + $0x8] sm:$0xff]
  %v2630 = vld [vmem:[#allocation2 + $0x10] sm:$0xff]
  %v2631 = vld [vmem:[#allocation2 + $0x18] sm:$0xff]
  %v2632 = vld [vmem:[#allocation2 + $0x20] sm:$0xff]
  %v2633 = vld [vmem:[#allocation2 + $0x28] sm:$0xff]
  %v2634 = vld [vmem:[#allocation2 + $0x30] sm:$0xff]
  %v2635 = vld [vmem:[#allocation2 + $0x38] sm:$0xff]
  %v2636 = vld [vmem:[#allocation2 + $0x40] sm:$0xff]
  %v2637 = vld [vmem:[#allocation2 + $0x48] sm:$0xff]
  %v2638 = vld [vmem:[#allocation2 + $0x50] sm:$0xff]
  %v2639 = vld [vmem:[#allocation2 + $0x58] sm:$0xff]
  %v2640 = vld [vmem:[#allocation2 + $0x60] sm:$0xff]
  %v2641 = vld [vmem:[#allocation2 + $0x68] sm:$0xff]
  %v2642 = vld [vmem:[#allocation2 + $0x70] sm:$0xff]
  %v2643 = vld [vmem:[#allocation2 + $0x78] sm:$0xff]
  %v2645 = vshrl.u32 %v2596, 16
  %v2647 = vrot.slane %v2645, 4
  %v2648 = vshll.u32 %v2596, 16
  %v2650 = vrot.slane %v2648, 5
  %v2651 = vor.u32 %v2647, %v2650
  %v2652 = vrot.slane %v2651, 4
  %v2654 = vshll.u32 %v2597, 16
  %v2656 = vrot.slane %v2654, 5
  %v2657 = vsel %vm354, %v2652, %v2656
  %v2659 = vshrl.u32 %v2598, 16
  %v2661 = vrot.slane %v2659, 4
  %v2662 = vshll.u32 %v2598, 16
  %v2664 = vrot.slane %v2662, 5
  %v2665 = vor.u32 %v2661, %v2664
  %v2666 = vrot.slane %v2665, 4
  %v2668 = vshll.u32 %v2599, 16
  %v2670 = vrot.slane %v2668, 5
  %v2671 = vsel %vm354, %v2666, %v2670
  %v2673 = vshrl.u32 %v2600, 16
  %v2675 = vrot.slane %v2673, 4
  %v2676 = vshll.u32 %v2600, 16
  %v2678 = vrot.slane %v2676, 5
  %v2679 = vor.u32 %v2675, %v2678
  %v2680 = vrot.slane %v2679, 4
  %v2682 = vshll.u32 %v2601, 16
  %v2684 = vrot.slane %v2682, 5
  %v2685 = vsel %vm354, %v2680, %v2684
  %v2687 = vshrl.u32 %v2602, 16
  %v2689 = vrot.slane %v2687, 4
  %v2690 = vshll.u32 %v2602, 16
  %v2692 = vrot.slane %v2690, 5
  %v2693 = vor.u32 %v2689, %v2692
  %v2694 = vrot.slane %v2693, 4
  %v2696 = vshll.u32 %v2603, 16
  %v2698 = vrot.slane %v2696, 5
  %v2699 = vsel %vm354, %v2694, %v2698
  %v2701 = vshrl.u32 %v2604, 16
  %v2703 = vrot.slane %v2701, 4
  %v2704 = vshll.u32 %v2604, 16
  %v2706 = vrot.slane %v2704, 5
  %v2707 = vor.u32 %v2703, %v2706
  %v2708 = vrot.slane %v2707, 4
  %v2710 = vshll.u32 %v2605, 16
  %v2712 = vrot.slane %v2710, 5
  %v2713 = vsel %vm354, %v2708, %v2712
  %v2715 = vshrl.u32 %v2606, 16
  %v2717 = vrot.slane %v2715, 4
  %v2718 = vshll.u32 %v2606, 16
  %v2720 = vrot.slane %v2718, 5
  %v2721 = vor.u32 %v2717, %v2720
  %v2722 = vrot.slane %v2721, 4
  %v2724 = vshll.u32 %v2607, 16
  %v2726 = vrot.slane %v2724, 5
  %v2727 = vsel %vm354, %v2722, %v2726
  %v2729 = vshrl.u32 %v2608, 16
  %v2731 = vrot.slane %v2729, 4
  %v2732 = vshll.u32 %v2608, 16
  %v2734 = vrot.slane %v2732, 5
  %v2735 = vor.u32 %v2731, %v2734
  %v2736 = vrot.slane %v2735, 4
  %v2738 = vshll.u32 %v2609, 16
  %v2740 = vrot.slane %v2738, 5
  %v2741 = vsel %vm354, %v2736, %v2740
  %v2743 = vshrl.u32 %v2610, 16
  %v2745 = vrot.slane %v2743, 4
  %v2746 = vshll.u32 %v2610, 16
  %v2748 = vrot.slane %v2746, 5
  %v2749 = vor.u32 %v2745, %v2748
  %v2750 = vrot.slane %v2749, 4
  %v2752 = vshll.u32 %v2611, 16
  %v2754 = vrot.slane %v2752, 5
  %v2755 = vsel %vm354, %v2750, %v2754
  %v2757 = vshrl.u32 %v2612, 16
  %v2759 = vrot.slane %v2757, 4
  %v2760 = vshll.u32 %v2612, 16
  %v2762 = vrot.slane %v2760, 5
  %v2763 = vor.u32 %v2759, %v2762
  %v2764 = vrot.slane %v2763, 4
  %v2766 = vshll.u32 %v2613, 16
  %v2768 = vrot.slane %v2766, 5
  %v2769 = vsel %vm354, %v2764, %v2768
  %v2771 = vshrl.u32 %v2614, 16
  %v2773 = vrot.slane %v2771, 4
  %v2774 = vshll.u32 %v2614, 16
  %v2776 = vrot.slane %v2774, 5
  %v2777 = vor.u32 %v2773, %v2776
  %v2778 = vrot.slane %v2777, 4
  %v2780 = vshll.u32 %v2615, 16
  %v2782 = vrot.slane %v2780, 5
  %v2783 = vsel %vm354, %v2778, %v2782
  %v2785 = vshrl.u32 %v2616, 16
  %v2787 = vrot.slane %v2785, 4
  %v2788 = vshll.u32 %v2616, 16
  %v2790 = vrot.slane %v2788, 5
  %v2791 = vor.u32 %v2787, %v2790
  %v2792 = vrot.slane %v2791, 4
  %v2794 = vshll.u32 %v2617, 16
  %v2796 = vrot.slane %v2794, 5
  %v2797 = vsel %vm354, %v2792, %v2796
  %v2799 = vshrl.u32 %v2618, 16
  %v2801 = vrot.slane %v2799, 4
  %v2802 = vshll.u32 %v2618, 16
  %v2804 = vrot.slane %v2802, 5
  %v2805 = vor.u32 %v2801, %v2804
  %v2806 = vrot.slane %v2805, 4
  %v2808 = vshll.u32 %v2619, 16
  %v2810 = vrot.slane %v2808, 5
  %v2811 = vsel %vm354, %v2806, %v2810
  %v2813 = vshrl.u32 %v2620, 16
  %v2815 = vrot.slane %v2813, 4
  %v2816 = vshll.u32 %v2620, 16
  %v2818 = vrot.slane %v2816, 5
  %v2819 = vor.u32 %v2815, %v2818
  %v2820 = vrot.slane %v2819, 4
  %v2822 = vshll.u32 %v2621, 16
  %v2824 = vrot.slane %v2822, 5
  %v2825 = vsel %vm354, %v2820, %v2824
  %v2827 = vshrl.u32 %v2622, 16
  %v2829 = vrot.slane %v2827, 4
  %v2830 = vshll.u32 %v2622, 16
  %v2832 = vrot.slane %v2830, 5
  %v2833 = vor.u32 %v2829, %v2832
  %v2834 = vrot.slane %v2833, 4
  %v2836 = vshll.u32 %v2623, 16
  %v2838 = vrot.slane %v2836, 5
  %v2839 = vsel %vm354, %v2834, %v2838
  %v2841 = vshrl.u32 %v2624, 16
  %v2843 = vrot.slane %v2841, 4
  %v2844 = vshll.u32 %v2624, 16
  %v2846 = vrot.slane %v2844, 5
  %v2847 = vor.u32 %v2843, %v2846
  %v2848 = vrot.slane %v2847, 4
  %v2850 = vshll.u32 %v2625, 16
  %v2852 = vrot.slane %v2850, 5
  %v2853 = vsel %vm354, %v2848, %v2852
  %v2855 = vshrl.u32 %v2626, 16
  %v2857 = vrot.slane %v2855, 4
  %v2858 = vshll.u32 %v2626, 16
  %v2860 = vrot.slane %v2858, 5
  %v2861 = vor.u32 %v2857, %v2860
  %v2862 = vrot.slane %v2861, 4
  %v2864 = vshll.u32 %v2627, 16
  %v2866 = vrot.slane %v2864, 5
  %v2867 = vsel %vm354, %v2862, %v2866
  %s2868 = scalar_lea.vmem %s1, 448
  %v2869 = vld [vmem:[%s2868] sm:$0xf]
  %v2870 = vld [vmem:[%s2868 + $0x4] sm:$0xf]
  %v2871 = vld [vmem:[%s2868 + $0x8] sm:$0xf]
  %v2872 = vld [vmem:[%s2868 + $0xc] sm:$0xf]
  %v2873 = vld [vmem:[%s2868 + $0x10] sm:$0xf]
  %v2874 = vld [vmem:[%s2868 + $0x14] sm:$0xf]
  %v2875 = vld [vmem:[%s2868 + $0x18] sm:$0xf]
  %v2876 = vld [vmem:[%s2868 + $0x1c] sm:$0xf]
  %v2877 = vld [vmem:[%s2868 + $0x20] sm:$0xf]
  %v2878 = vld [vmem:[%s2868 + $0x24] sm:$0xf]
  %v2879 = vld [vmem:[%s2868 + $0x28] sm:$0xf]
  %v2880 = vld [vmem:[%s2868 + $0x2c] sm:$0xf]
  %v2881 = vld [vmem:[%s2868 + $0x30] sm:$0xf]
  %v2882 = vld [vmem:[%s2868 + $0x34] sm:$0xf]
  %v2883 = vld [vmem:[%s2868 + $0x38] sm:$0xf]
  %v2884 = vld [vmem:[%s2868 + $0x3c] sm:$0xf]
  %v2885 = vunpack.c.l.b16 %v2657
  %v2886 = vunpack.c.l.b16 %v2671
  %v2887 = vunpack.c.l.b16 %v2685
  %v2888 = vunpack.c.l.b16 %v2699
  %v2889 = vunpack.c.l.b16 %v2713
  %v2890 = vunpack.c.l.b16 %v2727
  %v2891 = vunpack.c.l.b16 %v2741
  %v2892 = vunpack.c.l.b16 %v2755
  %v2893 = vunpack.c.l.b16 %v2769
  %v2894 = vunpack.c.l.b16 %v2783
  %v2895 = vunpack.c.l.b16 %v2797
  %v2896 = vunpack.c.l.b16 %v2811
  %v2897 = vunpack.c.l.b16 %v2825
  %v2898 = vunpack.c.l.b16 %v2839
  %v2899 = vunpack.c.l.b16 %v2853
  %v2900 = vunpack.c.l.b16 %v2867
  %v2901 = vpack.c.b16 %v2886, %v2885
  %v2902 = vpack.c.b16 %v2888, %v2887
  %v2903 = vpack.c.b16 %v2890, %v2889
  %v2904 = vpack.c.b16 %v2892, %v2891
  %v2905 = vpack.c.b16 %v2894, %v2893
  %v2906 = vpack.c.b16 %v2896, %v2895
  %v2907 = vpack.c.b16 %v2898, %v2897
  %v2908 = vpack.c.b16 %v2900, %v2899
  %v2933 = vunpack.c.l.b16 %v2869
  %v2934 = vunpack.c.l.b16 %v2870
  %v2935 = vunpack.c.l.b16 %v2871
  %v2936 = vunpack.c.l.b16 %v2872
  %v2937 = vunpack.c.l.b16 %v2873
  %v2938 = vunpack.c.l.b16 %v2874
  %v2939 = vunpack.c.l.b16 %v2875
  %v2940 = vunpack.c.l.b16 %v2876
  %v2941 = vunpack.c.l.b16 %v2877
  %v2942 = vunpack.c.l.b16 %v2878
  %v2943 = vunpack.c.l.b16 %v2879
  %v2944 = vunpack.c.l.b16 %v2880
  %v2945 = vunpack.c.l.b16 %v2881
  %v2946 = vunpack.c.l.b16 %v2882
  %v2947 = vunpack.c.l.b16 %v2883
  %v2948 = vunpack.c.l.b16 %v2884
  %v2949 = vpack.c.b16 %v2934, %v2933
  %v2950 = vpack.c.b16 %v2936, %v2935
  %v2951 = vpack.c.b16 %v2938, %v2937
  %v2952 = vpack.c.b16 %v2940, %v2939
  %v2953 = vpack.c.b16 %v2942, %v2941
  %v2954 = vpack.c.b16 %v2944, %v2943
  %v2955 = vpack.c.b16 %v2946, %v2945
  %v2956 = vpack.c.b16 %v2948, %v2947
  %2965 = vmatprep.subr.bf16.mxu0 0
  %2966 = vmatpush1.bf16.msra.mxu0 %v2956
  %2967 = vmatprep.subr.bf16.mxu0 0
  %2968 = vmatpush1.bf16.msra.mxu0 %v2955
  %2969 = vmatprep.subr.bf16.mxu0 0
  %2970 = vmatpush1.bf16.msra.mxu0 %v2954
  %2971 = vmatprep.subr.bf16.mxu0 0
  %2972 = vmatpush1.bf16.msra.mxu0 %v2953
  %2973 = vmatprep.subr.bf16.mxu0 0
  %2974 = vmatpush1.bf16.msra.mxu0 %v2952
  %2975 = vmatprep.subr.bf16.mxu0 0
  %2976 = vmatpush1.bf16.msra.mxu0 %v2951
  %2977 = vmatprep.subr.bf16.mxu0 0
  %2978 = vmatpush1.bf16.msra.mxu0 %v2950
  %2979 = vmatprep.subr.bf16.mxu0 0
  %2980 = vmatpush1.bf16.msra.mxu0 %v2949
  %2981 = vmatprep.subr.bf16.mxu0 0
  %2982 = vmatpush2.bf16.msra.mxu0 0
  %2983 = vmatprep.subr.bf16.mxu0 0
  %2984 = vmatpush2.bf16.msra.mxu0 0
  %2985 = vmatprep.subr.bf16.mxu0 0
  %2986 = vmatpush2.bf16.msra.mxu0 0
  %2987 = vmatprep.subr.bf16.mxu0 0
  %2988 = vmatpush2.bf16.msra.mxu0 0
  %2989 = vmatprep.subr.bf16.mxu0 0
  %2990 = vmatpush2.bf16.msra.mxu0 0
  %2991 = vmatprep.subr.bf16.mxu0 0
  %2992 = vmatpush2.bf16.msra.mxu0 0
  %2993 = vmatprep.subr.bf16.mxu0 0
  %2994 = vmatpush2.bf16.msra.mxu0 0
  %2995 = vmatprep.subr.bf16.mxu0 0
  %2996 = vmatpush2.bf16.msra.mxu0 0
  %2997 = vmatprep.mubr.bf16.mxu0 0
  %2998 = vmatmul.mubr.bf16.gmra.mxu0 %v2901
  %v2999 = vpop.f32.mrf.mxu0
  %v3000 = vadd.f32 0.0, %v2999
  %v3001 = vpop.f32.mrf.mxu0
  %v3002 = vpop.f32.mrf.mxu0
  %v3003 = vadd.f32 0.0, %v3002
  %v3004 = vpop.f32.mrf.mxu0
  %3005 = vmatprep.mubr.bf16.mxu0 0
  %3006 = vmatmul.mubr.bf16.gmra.mxu0 %v2902
  %v3007 = vpop.f32.mrf.mxu0
  %v3008 = vadd.f32 0.0, %v3007
  %v3009 = vpop.f32.mrf.mxu0
  %v3010 = vpop.f32.mrf.mxu0
  %v3011 = vadd.f32 0.0, %v3010
  %v3012 = vpop.f32.mrf.mxu0
  %3013 = vmatprep.mubr.bf16.mxu0 0
  %3014 = vmatmul.mubr.bf16.gmra.mxu0 %v2903
  %v3015 = vpop.f32.mrf.mxu0
  %v3016 = vadd.f32 0.0, %v3015
  %v3017 = vpop.f32.mrf.mxu0
  %v3018 = vpop.f32.mrf.mxu0
  %v3019 = vadd.f32 0.0, %v3018
  %v3020 = vpop.f32.mrf.mxu0
  %3021 = vmatprep.mubr.bf16.mxu0 0
  %3022 = vmatmul.mubr.bf16.gmra.mxu0 %v2904
  %v3023 = vpop.f32.mrf.mxu0
  %v3024 = vadd.f32 0.0, %v3023
  %v3025 = vpop.f32.mrf.mxu0
  %v3026 = vpop.f32.mrf.mxu0
  %v3027 = vadd.f32 0.0, %v3026
  %v3028 = vpop.f32.mrf.mxu0
  %3029 = vmatprep.mubr.bf16.mxu0 0
  %3030 = vmatmul.mubr.bf16.gmra.mxu0 %v2905
  %v3031 = vpop.f32.mrf.mxu0
  %v3032 = vadd.f32 0.0, %v3031
  %v3033 = vpop.f32.mrf.mxu0
  %v3034 = vpop.f32.mrf.mxu0
  %v3035 = vadd.f32 0.0, %v3034
  %v3036 = vpop.f32.mrf.mxu0
  %3037 = vmatprep.mubr.bf16.mxu0 0
  %3038 = vmatmul.mubr.bf16.gmra.mxu0 %v2906
  %v3039 = vpop.f32.mrf.mxu0
  %v3040 = vadd.f32 0.0, %v3039
  %v3041 = vpop.f32.mrf.mxu0
  %v3042 = vpop.f32.mrf.mxu0
  %v3043 = vadd.f32 0.0, %v3042
  %v3044 = vpop.f32.mrf.mxu0
  %3045 = vmatprep.mubr.bf16.mxu0 0
  %3046 = vmatmul.mubr.bf16.gmra.mxu0 %v2907
  %v3047 = vpop.f32.mrf.mxu0
  %v3048 = vadd.f32 0.0, %v3047
  %v3049 = vpop.f32.mrf.mxu0
  %v3050 = vpop.f32.mrf.mxu0
  %v3051 = vadd.f32 0.0, %v3050
  %v3052 = vpop.f32.mrf.mxu0
  %3053 = vmatprep.mubr.bf16.mxu0 0
  %3054 = vmatmul.mubr.bf16.gmra.mxu0 %v2908
  %v3055 = vpop.f32.mrf.mxu0
  %v3056 = vadd.f32 0.0, %v3055
  %v3057 = vpop.f32.mrf.mxu0
  %v3058 = vpop.f32.mrf.mxu0
  %v3059 = vadd.f32 0.0, %v3058
  %v3060 = vpop.f32.mrf.mxu0
  %3061 = vdwg.mxu0
  %v3062 = vadd.f32 %v2628, %v3000
  %v3063 = vadd.f32 %v2629, %v3003
  %v3064 = vadd.f32 %v2630, %v3008
  %v3065 = vadd.f32 %v2631, %v3011
  %v3066 = vadd.f32 %v2632, %v3016
  %v3067 = vadd.f32 %v2633, %v3019
  %v3068 = vadd.f32 %v2634, %v3024
  %v3069 = vadd.f32 %v2635, %v3027
  %v3070 = vadd.f32 %v2636, %v3032
  %v3071 = vadd.f32 %v2637, %v3035
  %v3072 = vadd.f32 %v2638, %v3040
  %v3073 = vadd.f32 %v2639, %v3043
  %v3074 = vadd.f32 %v2640, %v3048
  %v3075 = vadd.f32 %v2641, %v3051
  %v3076 = vadd.f32 %v2642, %v3056
  %v3077 = vadd.f32 %v2643, %v3059
  %3078 = vst [vmem:[#allocation2] sm:$0xff] %v3062
  %3079 = vst [vmem:[#allocation2 + $0x8] sm:$0xff] %v3063
  %3080 = vst [vmem:[#allocation2 + $0x10] sm:$0xff] %v3064
  %3081 = vst [vmem:[#allocation2 + $0x18] sm:$0xff] %v3065
  %3082 = vst [vmem:[#allocation2 + $0x20] sm:$0xff] %v3066
  %3083 = vst [vmem:[#allocation2 + $0x28] sm:$0xff] %v3067
  %3084 = vst [vmem:[#allocation2 + $0x30] sm:$0xff] %v3068
  %3085 = vst [vmem:[#allocation2 + $0x38] sm:$0xff] %v3069
  %3086 = vst [vmem:[#allocation2 + $0x40] sm:$0xff] %v3070
  %3087 = vst [vmem:[#allocation2 + $0x48] sm:$0xff] %v3071
  %3088 = vst [vmem:[#allocation2 + $0x50] sm:$0xff] %v3072
  %3089 = vst [vmem:[#allocation2 + $0x58] sm:$0xff] %v3073
  %3090 = vst [vmem:[#allocation2 + $0x60] sm:$0xff] %v3074
  %3091 = vst [vmem:[#allocation2 + $0x68] sm:$0xff] %v3075
  %3092 = vst [vmem:[#allocation2 + $0x70] sm:$0xff] %v3076
  %3093 = vst [vmem:[#allocation2 + $0x78] sm:$0xff] %v3077
  %v3094 = vld [vmem:[%s2321] sm:$0xe]
  %v3095 = vld [vmem:[%s2321 + $0x4] sm:$0x1]
  %v3096 = vld [vmem:[%s2321 + $0x8] sm:$0xe]
  %v3097 = vld [vmem:[%s2321 + $0xc] sm:$0x1]
  %v3098 = vld [vmem:[%s2321 + $0x10] sm:$0xe]
  %v3099 = vld [vmem:[%s2321 + $0x14] sm:$0x1]
  %v3100 = vld [vmem:[%s2321 + $0x18] sm:$0xe]
  %v3101 = vld [vmem:[%s2321 + $0x1c] sm:$0x1]
  %v3102 = vld [vmem:[%s2321 + $0x20] sm:$0xe]
  %v3103 = vld [vmem:[%s2321 + $0x24] sm:$0x1]
  %v3104 = vld [vmem:[%s2321 + $0x28] sm:$0xe]
  %v3105 = vld [vmem:[%s2321 + $0x2c] sm:$0x1]
  %v3106 = vld [vmem:[%s2321 + $0x30] sm:$0xe]
  %v3107 = vld [vmem:[%s2321 + $0x34] sm:$0x1]
  %v3108 = vld [vmem:[%s2321 + $0x38] sm:$0xe]
  %v3109 = vld [vmem:[%s2321 + $0x3c] sm:$0x1]
  %v3110 = vld [vmem:[%s2321 + $0x50] sm:$0xe]
  %v3111 = vld [vmem:[%s2321 + $0x54] sm:$0x1]
  %v3112 = vld [vmem:[%s2321 + $0x58] sm:$0xe]
  %v3113 = vld [vmem:[%s2321 + $0x5c] sm:$0x1]
  %v3114 = vld [vmem:[%s2321 + $0x60] sm:$0xe]
  %v3115 = vld [vmem:[%s2321 + $0x64] sm:$0x1]
  %v3116 = vld [vmem:[%s2321 + $0x68] sm:$0xe]
  %v3117 = vld [vmem:[%s2321 + $0x6c] sm:$0x1]
  %v3118 = vld [vmem:[%s2321 + $0x70] sm:$0xe]
  %v3119 = vld [vmem:[%s2321 + $0x74] sm:$0x1]
  %v3120 = vld [vmem:[%s2321 + $0x78] sm:$0xe]
  %v3121 = vld [vmem:[%s2321 + $0x7c] sm:$0x1]
  %v3122 = vld [vmem:[%s2321 + $0x80] sm:$0xe]
  %v3123 = vld [vmem:[%s2321 + $0x84] sm:$0x1]
  %v3124 = vld [vmem:[%s2321 + $0x88] sm:$0xe]
  %v3125 = vld [vmem:[%s2321 + $0x8c] sm:$0x1]
  %v3126 = vld [vmem:[#allocation2] sm:$0xff]
  %v3127 = vld [vmem:[#allocation2 + $0x8] sm:$0xff]
  %v3128 = vld [vmem:[#allocation2 + $0x10] sm:$0xff]
  %v3129 = vld [vmem:[#allocation2 + $0x18] sm:$0xff]
  %v3130 = vld [vmem:[#allocation2 + $0x20] sm:$0xff]
  %v3131 = vld [vmem:[#allocation2 + $0x28] sm:$0xff]
  %v3132 = vld [vmem:[#allocation2 + $0x30] sm:$0xff]
  %v3133 = vld [vmem:[#allocation2 + $0x38] sm:$0xff]
  %v3134 = vld [vmem:[#allocation2 + $0x40] sm:$0xff]
  %v3135 = vld [vmem:[#allocation2 + $0x48] sm:$0xff]
  %v3136 = vld [vmem:[#allocation2 + $0x50] sm:$0xff]
  %v3137 = vld [vmem:[#allocation2 + $0x58] sm:$0xff]
  %v3138 = vld [vmem:[#allocation2 + $0x60] sm:$0xff]
  %v3139 = vld [vmem:[#allocation2 + $0x68] sm:$0xff]
  %v3140 = vld [vmem:[#allocation2 + $0x70] sm:$0xff]
  %v3141 = vld [vmem:[#allocation2 + $0x78] sm:$0xff]
  %v3174 = vrot.slane %v3094, 5
  %v3175 = vrot.slane %v3174, 4
  %v3176 = vrot.slane %v3095, 5
  %v3177 = vsel %vm887, %v3175, %v3176
  %v3178 = vrot.slane %v3096, 5
  %v3179 = vrot.slane %v3178, 4
  %v3180 = vrot.slane %v3097, 5
  %v3181 = vsel %vm887, %v3179, %v3180
  %v3182 = vrot.slane %v3098, 5
  %v3183 = vrot.slane %v3182, 4
  %v3184 = vrot.slane %v3099, 5
  %v3185 = vsel %vm887, %v3183, %v3184
  %v3186 = vrot.slane %v3100, 5
  %v3187 = vrot.slane %v3186, 4
  %v3188 = vrot.slane %v3101, 5
  %v3189 = vsel %vm887, %v3187, %v3188
  %v3190 = vrot.slane %v3102, 5
  %v3191 = vrot.slane %v3190, 4
  %v3192 = vrot.slane %v3103, 5
  %v3193 = vsel %vm887, %v3191, %v3192
  %v3194 = vrot.slane %v3104, 5
  %v3195 = vrot.slane %v3194, 4
  %v3196 = vrot.slane %v3105, 5
  %v3197 = vsel %vm887, %v3195, %v3196
  %v3198 = vrot.slane %v3106, 5
  %v3199 = vrot.slane %v3198, 4
  %v3200 = vrot.slane %v3107, 5
  %v3201 = vsel %vm887, %v3199, %v3200
  %v3202 = vrot.slane %v3108, 5
  %v3203 = vrot.slane %v3202, 4
  %v3204 = vrot.slane %v3109, 5
  %v3205 = vsel %vm887, %v3203, %v3204
  %v3206 = vrot.slane %v3110, 5
  %v3207 = vrot.slane %v3206, 4
  %v3208 = vrot.slane %v3111, 5
  %v3209 = vsel %vm887, %v3207, %v3208
  %v3210 = vrot.slane %v3112, 5
  %v3211 = vrot.slane %v3210, 4
  %v3212 = vrot.slane %v3113, 5
  %v3213 = vsel %vm887, %v3211, %v3212
  %v3214 = vrot.slane %v3114, 5
  %v3215 = vrot.slane %v3214, 4
  %v3216 = vrot.slane %v3115, 5
  %v3217 = vsel %vm887, %v3215, %v3216
  %v3218 = vrot.slane %v3116, 5
  %v3219 = vrot.slane %v3218, 4
  %v3220 = vrot.slane %v3117, 5
  %v3221 = vsel %vm887, %v3219, %v3220
  %v3222 = vrot.slane %v3118, 5
  %v3223 = vrot.slane %v3222, 4
  %v3224 = vrot.slane %v3119, 5
  %v3225 = vsel %vm887, %v3223, %v3224
  %v3226 = vrot.slane %v3120, 5
  %v3227 = vrot.slane %v3226, 4
  %v3228 = vrot.slane %v3121, 5
  %v3229 = vsel %vm887, %v3227, %v3228
  %v3230 = vrot.slane %v3122, 5
  %v3231 = vrot.slane %v3230, 4
  %v3232 = vrot.slane %v3123, 5
  %v3233 = vsel %vm887, %v3231, %v3232
  %v3234 = vrot.slane %v3124, 5
  %v3235 = vrot.slane %v3234, 4
  %v3236 = vrot.slane %v3125, 5
  %v3237 = vsel %vm887, %v3235, %v3236
  %s3238 = scalar_lea.vmem %s1, 512
  %v3239 = vld [vmem:[%s3238] sm:$0xf]
  %v3240 = vld [vmem:[%s3238 + $0x4] sm:$0xf]
  %v3241 = vld [vmem:[%s3238 + $0x8] sm:$0xf]
  %v3242 = vld [vmem:[%s3238 + $0xc] sm:$0xf]
  %v3243 = vld [vmem:[%s3238 + $0x10] sm:$0xf]
  %v3244 = vld [vmem:[%s3238 + $0x14] sm:$0xf]
  %v3245 = vld [vmem:[%s3238 + $0x18] sm:$0xf]
  %v3246 = vld [vmem:[%s3238 + $0x1c] sm:$0xf]
  %v3247 = vld [vmem:[%s3238 + $0x20] sm:$0xf]
  %v3248 = vld [vmem:[%s3238 + $0x24] sm:$0xf]
  %v3249 = vld [vmem:[%s3238 + $0x28] sm:$0xf]
  %v3250 = vld [vmem:[%s3238 + $0x2c] sm:$0xf]
  %v3251 = vld [vmem:[%s3238 + $0x30] sm:$0xf]
  %v3252 = vld [vmem:[%s3238 + $0x34] sm:$0xf]
  %v3253 = vld [vmem:[%s3238 + $0x38] sm:$0xf]
  %v3254 = vld [vmem:[%s3238 + $0x3c] sm:$0xf]
  %v3255 = vunpack.c.l.b16 %v3177
  %v3256 = vunpack.c.l.b16 %v3181
  %v3257 = vunpack.c.l.b16 %v3185
  %v3258 = vunpack.c.l.b16 %v3189
  %v3259 = vunpack.c.l.b16 %v3193
  %v3260 = vunpack.c.l.b16 %v3197
  %v3261 = vunpack.c.l.b16 %v3201
  %v3262 = vunpack.c.l.b16 %v3205
  %v3263 = vunpack.c.l.b16 %v3209
  %v3264 = vunpack.c.l.b16 %v3213
  %v3265 = vunpack.c.l.b16 %v3217
  %v3266 = vunpack.c.l.b16 %v3221
  %v3267 = vunpack.c.l.b16 %v3225
  %v3268 = vunpack.c.l.b16 %v3229
  %v3269 = vunpack.c.l.b16 %v3233
  %v3270 = vunpack.c.l.b16 %v3237
  %v3271 = vpack.c.b16 %v3256, %v3255
  %v3272 = vpack.c.b16 %v3258, %v3257
  %v3273 = vpack.c.b16 %v3260, %v3259
  %v3274 = vpack.c.b16 %v3262, %v3261
  %v3275 = vpack.c.b16 %v3264, %v3263
  %v3276 = vpack.c.b16 %v3266, %v3265
  %v3277 = vpack.c.b16 %v3268, %v3267
  %v3278 = vpack.c.b16 %v3270, %v3269
  %v3303 = vunpack.c.l.b16 %v3239
  %v3304 = vunpack.c.l.b16 %v3240
  %v3305 = vunpack.c.l.b16 %v3241
  %v3306 = vunpack.c.l.b16 %v3242
  %v3307 = vunpack.c.l.b16 %v3243
  %v3308 = vunpack.c.l.b16 %v3244
  %v3309 = vunpack.c.l.b16 %v3245
  %v3310 = vunpack.c.l.b16 %v3246
  %v3311 = vunpack.c.l.b16 %v3247
  %v3312 = vunpack.c.l.b16 %v3248
  %v3313 = vunpack.c.l.b16 %v3249
  %v3314 = vunpack.c.l.b16 %v3250
  %v3315 = vunpack.c.l.b16 %v3251
  %v3316 = vunpack.c.l.b16 %v3252
  %v3317 = vunpack.c.l.b16 %v3253
  %v3318 = vunpack.c.l.b16 %v3254
  %v3319 = vpack.c.b16 %v3304, %v3303
  %v3320 = vpack.c.b16 %v3306, %v3305
  %v3321 = vpack.c.b16 %v3308, %v3307
  %v3322 = vpack.c.b16 %v3310, %v3309
  %v3323 = vpack.c.b16 %v3312, %v3311
  %v3324 = vpack.c.b16 %v3314, %v3313
  %v3325 = vpack.c.b16 %v3316, %v3315
  %v3326 = vpack.c.b16 %v3318, %v3317
  %3335 = vmatprep.subr.bf16.mxu0 0
  %3336 = vmatpush1.bf16.msra.mxu0 %v3326
  %3337 = vmatprep.subr.bf16.mxu0 0
  %3338 = vmatpush1.bf16.msra.mxu0 %v3325
  %3339 = vmatprep.subr.bf16.mxu0 0
  %3340 = vmatpush1.bf16.msra.mxu0 %v3324
  %3341 = vmatprep.subr.bf16.mxu0 0
  %3342 = vmatpush1.bf16.msra.mxu0 %v3323
  %3343 = vmatprep.subr.bf16.mxu0 0
  %3344 = vmatpush1.bf16.msra.mxu0 %v3322
  %3345 = vmatprep.subr.bf16.mxu0 0
  %3346 = vmatpush1.bf16.msra.mxu0 %v3321
  %3347 = vmatprep.subr.bf16.mxu0 0
  %3348 = vmatpush1.bf16.msra.mxu0 %v3320
  %3349 = vmatprep.subr.bf16.mxu0 0
  %3350 = vmatpush1.bf16.msra.mxu0 %v3319
  %3351 = vmatprep.subr.bf16.mxu0 0
  %3352 = vmatpush2.bf16.msra.mxu0 0
  %3353 = vmatprep.subr.bf16.mxu0 0
  %3354 = vmatpush2.bf16.msra.mxu0 0
  %3355 = vmatprep.subr.bf16.mxu0 0
  %3356 = vmatpush2.bf16.msra.mxu0 0
  %3357 = vmatprep.subr.bf16.mxu0 0
  %3358 = vmatpush2.bf16.msra.mxu0 0
  %3359 = vmatprep.subr.bf16.mxu0 0
  %3360 = vmatpush2.bf16.msra.mxu0 0
  %3361 = vmatprep.subr.bf16.mxu0 0
  %3362 = vmatpush2.bf16.msra.mxu0 0
  %3363 = vmatprep.subr.bf16.mxu0 0
  %3364 = vmatpush2.bf16.msra.mxu0 0
  %3365 = vmatprep.subr.bf16.mxu0 0
  %3366 = vmatpush2.bf16.msra.mxu0 0
  %3367 = vmatprep.mubr.bf16.mxu0 0
  %3368 = vmatmul.mubr.bf16.gmra.mxu0 %v3271
  %v3369 = vpop.f32.mrf.mxu0
  %v3370 = vadd.f32 0.0, %v3369
  %v3371 = vpop.f32.mrf.mxu0
  %v3372 = vpop.f32.mrf.mxu0
  %v3373 = vadd.f32 0.0, %v3372
  %v3374 = vpop.f32.mrf.mxu0
  %3375 = vmatprep.mubr.bf16.mxu0 0
  %3376 = vmatmul.mubr.bf16.gmra.mxu0 %v3272
  %v3377 = vpop.f32.mrf.mxu0
  %v3378 = vadd.f32 0.0, %v3377
  %v3379 = vpop.f32.mrf.mxu0
  %v3380 = vpop.f32.mrf.mxu0
  %v3381 = vadd.f32 0.0, %v3380
  %v3382 = vpop.f32.mrf.mxu0
  %3383 = vmatprep.mubr.bf16.mxu0 0
  %3384 = vmatmul.mubr.bf16.gmra.mxu0 %v3273
  %v3385 = vpop.f32.mrf.mxu0
  %v3386 = vadd.f32 0.0, %v3385
  %v3387 = vpop.f32.mrf.mxu0
  %v3388 = vpop.f32.mrf.mxu0
  %v3389 = vadd.f32 0.0, %v3388
  %v3390 = vpop.f32.mrf.mxu0
  %3391 = vmatprep.mubr.bf16.mxu0 0
  %3392 = vmatmul.mubr.bf16.gmra.mxu0 %v3274
  %v3393 = vpop.f32.mrf.mxu0
  %v3394 = vadd.f32 0.0, %v3393
  %v3395 = vpop.f32.mrf.mxu0
  %v3396 = vpop.f32.mrf.mxu0
  %v3397 = vadd.f32 0.0, %v3396
  %v3398 = vpop.f32.mrf.mxu0
  %3399 = vmatprep.mubr.bf16.mxu0 0
  %3400 = vmatmul.mubr.bf16.gmra.mxu0 %v3275
  %v3401 = vpop.f32.mrf.mxu0
  %v3402 = vadd.f32 0.0, %v3401
  %v3403 = vpop.f32.mrf.mxu0
  %v3404 = vpop.f32.mrf.mxu0
  %v3405 = vadd.f32 0.0, %v3404
  %v3406 = vpop.f32.mrf.mxu0
  %3407 = vmatprep.mubr.bf16.mxu0 0
  %3408 = vmatmul.mubr.bf16.gmra.mxu0 %v3276
  %v3409 = vpop.f32.mrf.mxu0
  %v3410 = vadd.f32 0.0, %v3409
  %v3411 = vpop.f32.mrf.mxu0
  %v3412 = vpop.f32.mrf.mxu0
  %v3413 = vadd.f32 0.0, %v3412
  %v3414 = vpop.f32.mrf.mxu0
  %3415 = vmatprep.mubr.bf16.mxu0 0
  %3416 = vmatmul.mubr.bf16.gmra.mxu0 %v3277
  %v3417 = vpop.f32.mrf.mxu0
  %v3418 = vadd.f32 0.0, %v3417
  %v3419 = vpop.f32.mrf.mxu0
  %v3420 = vpop.f32.mrf.mxu0
  %v3421 = vadd.f32 0.0, %v3420
  %v3422 = vpop.f32.mrf.mxu0
  %3423 = vmatprep.mubr.bf16.mxu0 0
  %3424 = vmatmul.mubr.bf16.gmra.mxu0 %v3278
  %v3425 = vpop.f32.mrf.mxu0
  %v3426 = vadd.f32 0.0, %v3425
  %v3427 = vpop.f32.mrf.mxu0
  %v3428 = vpop.f32.mrf.mxu0
  %v3429 = vadd.f32 0.0, %v3428
  %v3430 = vpop.f32.mrf.mxu0
  %3431 = vdwg.mxu0
  %v3432 = vadd.f32 %v3126, %v3370
  %v3433 = vadd.f32 %v3127, %v3373
  %v3434 = vadd.f32 %v3128, %v3378
  %v3435 = vadd.f32 %v3129, %v3381
  %v3436 = vadd.f32 %v3130, %v3386
  %v3437 = vadd.f32 %v3131, %v3389
  %v3438 = vadd.f32 %v3132, %v3394
  %v3439 = vadd.f32 %v3133, %v3397
  %v3440 = vadd.f32 %v3134, %v3402
  %v3441 = vadd.f32 %v3135, %v3405
  %v3442 = vadd.f32 %v3136, %v3410
  %v3443 = vadd.f32 %v3137, %v3413
  %v3444 = vadd.f32 %v3138, %v3418
  %v3445 = vadd.f32 %v3139, %v3421
  %v3446 = vadd.f32 %v3140, %v3426
  %v3447 = vadd.f32 %v3141, %v3429
  %3448 = vst [vmem:[#allocation2] sm:$0xff] %v3432
  %3449 = vst [vmem:[#allocation2 + $0x8] sm:$0xff] %v3433
  %3450 = vst [vmem:[#allocation2 + $0x10] sm:$0xff] %v3434
  %3451 = vst [vmem:[#allocation2 + $0x18] sm:$0xff] %v3435
  %3452 = vst [vmem:[#allocation2 + $0x20] sm:$0xff] %v3436
  %3453 = vst [vmem:[#allocation2 + $0x28] sm:$0xff] %v3437
  %3454 = vst [vmem:[#allocation2 + $0x30] sm:$0xff] %v3438
  %3455 = vst [vmem:[#allocation2 + $0x38] sm:$0xff] %v3439
  %3456 = vst [vmem:[#allocation2 + $0x40] sm:$0xff] %v3440
  %3457 = vst [vmem:[#allocation2 + $0x48] sm:$0xff] %v3441
  %3458 = vst [vmem:[#allocation2 + $0x50] sm:$0xff] %v3442
  %3459 = vst [vmem:[#allocation2 + $0x58] sm:$0xff] %v3443
  %3460 = vst [vmem:[#allocation2 + $0x60] sm:$0xff] %v3444
  %3461 = vst [vmem:[#allocation2 + $0x68] sm:$0xff] %v3445
  %3462 = vst [vmem:[#allocation2 + $0x70] sm:$0xff] %v3446
  %3463 = vst [vmem:[#allocation2 + $0x78] sm:$0xff] %v3447
  %v3464 = vld [vmem:[#allocation2] sm:$0xff]
  %v3465 = vld [vmem:[#allocation2 + $0x8] sm:$0xff]
  %v3466 = vld [vmem:[#allocation2 + $0x10] sm:$0xff]
  %v3467 = vld [vmem:[#allocation2 + $0x18] sm:$0xff]
  %v3468 = vld [vmem:[#allocation2 + $0x20] sm:$0xff]
  %v3469 = vld [vmem:[#allocation2 + $0x28] sm:$0xff]
  %v3470 = vld [vmem:[#allocation2 + $0x30] sm:$0xff]
  %v3471 = vld [vmem:[#allocation2 + $0x38] sm:$0xff]
  %v3472 = vld [vmem:[#allocation2 + $0x40] sm:$0xff]
  %v3473 = vld [vmem:[#allocation2 + $0x48] sm:$0xff]
  %v3474 = vld [vmem:[#allocation2 + $0x50] sm:$0xff]
  %v3475 = vld [vmem:[#allocation2 + $0x58] sm:$0xff]
  %v3476 = vld [vmem:[#allocation2 + $0x60] sm:$0xff]
  %v3477 = vld [vmem:[#allocation2 + $0x68] sm:$0xff]
  %v3478 = vld [vmem:[#allocation2 + $0x70] sm:$0xff]
  %v3479 = vld [vmem:[#allocation2 + $0x78] sm:$0xff]
  %v3480 = vld [vmem:[%s2] sm:$0x1]
  %v3482 = vlaneseq
  %v3483 = vshrl.u32 %v3482, 7
  %v3484 = vsub.s32 0, %v3483
  %v3485 = vrot.slane %v3480, %v3484
  %v3487 = vadd.f32 %v3464, %v3485
  %v3488 = vadd.f32 %v3465, %v3485
  %v3489 = vadd.f32 %v3466, %v3485
  %v3490 = vadd.f32 %v3467, %v3485
  %v3491 = vadd.f32 %v3468, %v3485
  %v3492 = vadd.f32 %v3469, %v3485
  %v3493 = vadd.f32 %v3470, %v3485
  %v3494 = vadd.f32 %v3471, %v3485
  %v3495 = vadd.f32 %v3472, %v3485
  %v3496 = vadd.f32 %v3473, %v3485
  %v3497 = vadd.f32 %v3474, %v3485
  %v3498 = vadd.f32 %v3475, %v3485
  %v3499 = vadd.f32 %v3476, %v3485
  %v3500 = vadd.f32 %v3477, %v3485
  %v3501 = vadd.f32 %v3478, %v3485
  %v3502 = vadd.f32 %v3479, %v3485
  %v3503 = vmax.f32 %v3487, 0.0
  %v3504 = vmax.f32 %v3488, 0.0
  %v3505 = vmax.f32 %v3489, 0.0
  %v3506 = vmax.f32 %v3490, 0.0
  %v3507 = vmax.f32 %v3491, 0.0
  %v3508 = vmax.f32 %v3492, 0.0
  %v3509 = vmax.f32 %v3493, 0.0
  %v3510 = vmax.f32 %v3494, 0.0
  %v3511 = vmax.f32 %v3495, 0.0
  %v3512 = vmax.f32 %v3496, 0.0
  %v3513 = vmax.f32 %v3497, 0.0
  %v3514 = vmax.f32 %v3498, 0.0
  %v3515 = vmax.f32 %v3499, 0.0
  %v3516 = vmax.f32 %v3500, 0.0
  %v3517 = vmax.f32 %v3501, 0.0
  %v3518 = vmax.f32 %v3502, 0.0
  %v3519 = vpack.c.bf16 %v3503, %v3503
  %v3520 = vpack.c.bf16 %v3504, %v3504
  %v3521 = vpack.c.bf16 %v3505, %v3505
  %v3522 = vpack.c.bf16 %v3506, %v3506
  %v3523 = vpack.c.bf16 %v3507, %v3507
  %v3524 = vpack.c.bf16 %v3508, %v3508
  %v3525 = vpack.c.bf16 %v3509, %v3509
  %v3526 = vpack.c.bf16 %v3510, %v3510
  %v3527 = vpack.c.bf16 %v3511, %v3511
  %v3528 = vpack.c.bf16 %v3512, %v3512
  %v3529 = vpack.c.bf16 %v3513, %v3513
  %v3530 = vpack.c.bf16 %v3514, %v3514
  %v3531 = vpack.c.bf16 %v3515, %v3515
  %v3532 = vpack.c.bf16 %v3516, %v3516
  %v3533 = vpack.c.bf16 %v3517, %v3517
  %v3534 = vpack.c.bf16 %v3518, %v3518
  %3535 = vst [vmem:[%s3] sm:$0xf] %v3519
  %3536 = vst [vmem:[%s3 + $0x4] sm:$0xf] %v3520
  %3537 = vst [vmem:[%s3 + $0x8] sm:$0xf] %v3521
  %3538 = vst [vmem:[%s3 + $0xc] sm:$0xf] %v3522
  %3539 = vst [vmem:[%s3 + $0x10] sm:$0xf] %v3523
  %3540 = vst [vmem:[%s3 + $0x14] sm:$0xf] %v3524
  %3541 = vst [vmem:[%s3 + $0x18] sm:$0xf] %v3525
  %3542 = vst [vmem:[%s3 + $0x1c] sm:$0xf] %v3526
  %3543 = vst [vmem:[%s3 + $0x20] sm:$0xf] %v3527
  %3544 = vst [vmem:[%s3 + $0x24] sm:$0xf] %v3528
  %3545 = vst [vmem:[%s3 + $0x28] sm:$0xf] %v3529
  %3546 = vst [vmem:[%s3 + $0x2c] sm:$0xf] %v3530
  %3547 = vst [vmem:[%s3 + $0x30] sm:$0xf] %v3531
  %3548 = vst [vmem:[%s3 + $0x34] sm:$0xf] %v3532
  %3549 = vst [vmem:[%s3 + $0x38] sm:$0xf] %v3533
  %3550 = vst [vmem:[%s3 + $0x3c] sm:$0xf] %v3534
  // Predicated region
  $region14: #{ts_net_forward.17} parent=0 // pred_check
    _
  $region15: #{ts_net_forward.17} parent=0 // pred_check_branch
    %3552 = sbr.rel (0) target = $region17
  $region16: #{ts_net_forward.17} parent=0 // pred_region
    _
  $region17: #{ts_net_forward.17} parent=0 // pred_fallthru
    _
  // Predicated region
  $region18: #{ts_net_forward.17} parent=0 // pred_check
    _
  $region19: #{ts_net_forward.17} parent=0 // pred_check_branch
    %3554 = sbr.rel (0) target = $region21
  $region20: #{ts_net_forward.17} parent=0 // pred_region
    _
  $region21: #{ts_net_forward.17} parent=0 // pred_fallthru
    _

</llo_original>
